<compile_context>
chip_gen: v7x
topology: tpu7x:2x2x1
jax: 0.10.0
libtpu: 0.0.40
codegen_flags: <defaults>
</compile_context>

<pallas_src>
import functools

import jax
import jax.numpy as jnp
from jax.experimental import pallas as pl
from jax.experimental.pallas import tpu as pltpu

KERNEL_SET = [2, 3, 6, 7]
MAX_K = max(KERNEL_SET)
VMEM_LIMIT = 64 * 1024 * 1024      # safe on v5e/v6e (128 MiB) and v7x (64 MiB)


def _row_tile(m, cap=512):
    """Row tile for M-tiled matmul kernels: multiple of 8 sublanes, capped."""
    if m <= cap:
        return m                    # full-extent block is always legal
    return max(8, (cap // 8) * 8)


# ----------------------------------------------------------------------------------
# Pallas kernels
# ----------------------------------------------------------------------------------
def _skip0_kernel(x_ref, w_ref, b_ref, o_ref):
    o_ref[...] = (jnp.dot(x_ref[...], w_ref[...], preferred_element_type=jnp.float32)
                  + b_ref[...]).astype(o_ref.dtype)


def _skip_acc_kernel(x_ref, w_ref, b_ref, s_ref, o_ref):
    # skip <- x @ w + b + skip   (skip aliased in place via input_output_aliases)
    o_ref[...] = (jnp.dot(x_ref[...], w_ref[...], preferred_element_type=jnp.float32)
                  + b_ref[...] + s_ref[...]).astype(o_ref.dtype)


def _final_kernel(x_ref, w_ref, b_ref, s_ref, ew_ref, eb_ref, o_ref):
    # fused: skipE conv + skip add -> ReLU -> end 1x1 conv -> ReLU
    s = (jnp.dot(x_ref[...], w_ref[...], preferred_element_type=jnp.float32)
         + b_ref[...] + s_ref[...])
    s = jnp.maximum(s, 0.0)
    y = jnp.dot(s, ew_ref[...], preferred_element_type=jnp.float32) + eb_ref[...]
    o_ref[...] = jnp.maximum(y, 0.0).astype(o_ref.dtype)


def _layer_kernel(x_ref, wfg_ref, bfg_ref, rw_ref, rb_ref, y_ref, xo_ref, im_ref,
                  *, dilation, t_out, c, eps):
    """Fused per-layer kernel (one batch element per grid step).

    x_ref  : (1, N, Tin, C)
    wfg    : (7*C, 2*C)   concatenated zero-padded inception weights [filter | gate]
    bfg    : (1, 2*C)
    rw/rb  : residual 1x1 conv weights
    y_ref  : (1, N, Tout, C)  gated activation (feeds the skip conv)
    xo_ref : (1, N, Tout, C)  layer output (post residual + LayerNorm)
    im_ref : VMEM scratch (N*Tout, 7*C) im2col tile
    """
    n = x_ref.shape[1]

    # Build the im2col tile once in VMEM scratch: rows (node, t), cols (tap, cin).
    # Windows are loaded straight from the input ref (static offsets).
    for tau in range(MAX_K):
        win = x_ref[0, :, tau * dilation: tau * dilation + t_out, :]   # (N, Tout, C)
        im_ref[:, tau * c:(tau + 1) * c] = win.reshape(n * t_out, c)

    # Single wide-K MXU matmul for filter|gate (output columns: [filter C | gate C]).
    fg = (jnp.dot(im_ref[...], wfg_ref[...], preferred_element_type=jnp.float32)
          + bfg_ref[...])
    y2 = jnp.tanh(fg[:, :c]) * jax.nn.sigmoid(fg[:, c:])               # (N*Tout, C)
    y_ref[...] = y2.reshape(n, t_out, c)[None].astype(y_ref.dtype)

    # Residual 1x1 conv + residual tail; the tail equals the last inception tap window.
    res_tail = im_ref[:, (MAX_K - 1) * c:]
    z = (jnp.dot(y2, rw_ref[...], preferred_element_type=jnp.float32)
         + rb_ref[...] + res_tail)

    # LayerNorm over (C, N, T) of this batch element: one-pass stats, biased var, no affine.
    cnt = float(n * t_out * c)
    mean = jnp.sum(z) / cnt
    var = jnp.sum(z * z) / cnt - mean * mean
    zn = (z - mean) * jax.lax.rsqrt(var + eps)
    xo_ref[...] = zn.reshape(n, t_out, c)[None].astype(xo_ref.dtype)


# ----------------------------------------------------------------------------------
# Pallas wrappers
# ----------------------------------------------------------------------------------
def skip0_conv(x2d, w, b):
    m, k = x2d.shape
    c = w.shape[1]
    tm = _row_tile(m)
    return pl.pallas_call(
        _skip0_kernel,
        out_shape=jax.ShapeDtypeStruct((m, c), jnp.float32),
        grid=(pl.cdiv(m, tm),),
        in_specs=[pl.BlockSpec((tm, k), lambda i: (i, 0)),
                  pl.BlockSpec((k, c), lambda i: (0, 0)),
                  pl.BlockSpec((1, c), lambda i: (0, 0))],
        out_specs=pl.BlockSpec((tm, c), lambda i: (i, 0)),
        compiler_params=pltpu.CompilerParams(
            dimension_semantics=("parallel",), vmem_limit_bytes=VMEM_LIMIT),
    )(x2d, w, b)


def skip_accumulate(y2d, w, b, skip):
    m, k = y2d.shape
    c = w.shape[1]
    tm = _row_tile(m)
    return pl.pallas_call(
        _skip_acc_kernel,
        out_shape=jax.ShapeDtypeStruct((m, c), jnp.float32),
        grid=(pl.cdiv(m, tm),),
        in_specs=[pl.BlockSpec((tm, k), lambda i: (i, 0)),
                  pl.BlockSpec((k, c), lambda i: (0, 0)),
                  pl.BlockSpec((1, c), lambda i: (0, 0)),
                  pl.BlockSpec((tm, c), lambda i: (i, 0))],
        out_specs=pl.BlockSpec((tm, c), lambda i: (i, 0)),
        input_output_aliases={3: 0},       # update skip in place
        compiler_params=pltpu.CompilerParams(
            dimension_semantics=("parallel",), vmem_limit_bytes=VMEM_LIMIT),
    )(y2d, w, b, skip)


def final_head(x2d, skE_w, skE_b, skip, end_w, end_b):
    m, k = x2d.shape
    c = end_w.shape[1]
    tm = _row_tile(m)
    return pl.pallas_call(
        _final_kernel,
        out_shape=jax.ShapeDtypeStruct((m, c), jnp.float32),
        grid=(pl.cdiv(m, tm),),
        in_specs=[pl.BlockSpec((tm, k), lambda i: (i, 0)),
                  pl.BlockSpec((k, c), lambda i: (0, 0)),
                  pl.BlockSpec((1, c), lambda i: (0, 0)),
                  pl.BlockSpec((tm, c), lambda i: (i, 0)),
                  pl.BlockSpec((c, c), lambda i: (0, 0)),
                  pl.BlockSpec((1, c), lambda i: (0, 0))],
        out_specs=pl.BlockSpec((tm, c), lambda i: (i, 0)),
        input_output_aliases={3: 0},       # reuse the skip buffer for the head output
        compiler_params=pltpu.CompilerParams(
            dimension_semantics=("parallel",), vmem_limit_bytes=VMEM_LIMIT),
    )(x2d, skE_w, skE_b, skip, end_w, end_b)


def fused_layer(x, wfg, bfg, rw, rb, dilation):
    # TODO(synk): at very large N*T on v7x (64 MiB VMEM), additionally tile N inside the
    # layer (needs a two-pass cross-block LayerNorm); one batch element per grid step is
    # fine at these shapes.
    b, n, t_in, c = x.shape
    t_out = t_in - (MAX_K - 1) * dilation
    kern = functools.partial(_layer_kernel, dilation=dilation, t_out=t_out, c=c, eps=1e-5)
    y, x_out = pl.pallas_call(
        kern,
        out_shape=(jax.ShapeDtypeStruct((b, n, t_out, c), jnp.float32),
                   jax.ShapeDtypeStruct((b, n, t_out, c), jnp.float32)),
        grid=(b,),
        in_specs=[
            pl.BlockSpec((1, n, t_in, c), lambda i: (i, 0, 0, 0)),
            pl.BlockSpec((MAX_K * c, 2 * c), lambda i: (0, 0)),
            pl.BlockSpec((1, 2 * c), lambda i: (0, 0)),
            pl.BlockSpec((c, c), lambda i: (0, 0)),
            pl.BlockSpec((1, c), lambda i: (0, 0)),
        ],
        out_specs=(pl.BlockSpec((1, n, t_out, c), lambda i: (i, 0, 0, 0)),
                   pl.BlockSpec((1, n, t_out, c), lambda i: (i, 0, 0, 0))),
        scratch_shapes=[pltpu.VMEM((n * t_out, MAX_K * c), jnp.float32)],
        compiler_params=pltpu.CompilerParams(
            dimension_semantics=("parallel",), vmem_limit_bytes=VMEM_LIMIT),
    )(x, wfg, bfg, rw, rb)
    return y, x_out


# ----------------------------------------------------------------------------------
# TCN forward (Pallas)
# ----------------------------------------------------------------------------------
def tcn_pallas(x_nchw, params, *, num_layers, d0, dilated_factor, receptive_field):
    b, c, n, t = x_nchw.shape
    x = jnp.transpose(x_nchw, (0, 2, 3, 1)).astype(jnp.float32)       # (B, N, T, C)
    if t < receptive_field:
        x = jnp.pad(x, ((0, 0), (0, 0), (receptive_field - t, 0), (0, 0)))
    t_cur = x.shape[2]

    # skip0: conv over the full (padded) time axis, tiled over B*N rows.
    skip = skip0_conv(x.reshape(b * n, t_cur * c), params["skip0_w"],
                      params["skip0_b"].reshape(1, c))

    d = d0
    for lp in params["layers"]:
        # fused: inception filter|gate (single wide-K matmul) + gating + residual + LN
        y, x = fused_layer(x, lp["wfg"], lp["bfg"],
                           lp["res_w"], lp["res_b"].reshape(1, c), d)
        t_cur = x.shape[2]
        # skip conv (reduces remaining time to 1) + in-place skip accumulation
        skip = skip_accumulate(y.reshape(b * n, t_cur * c), lp["skip_w"],
                               lp["skip_b"].reshape(1, c), skip)
        d *= dilated_factor

    # skipE + ReLU + end 1x1 conv + ReLU, fused & tiled over B*N rows
    out = final_head(x.reshape(b * n, t_cur * c), params["skipE_w"],
                     params["skipE_b"].reshape(1, c), skip,
                     params["end_w"], params["end_b"].reshape(1, c))
    return jnp.transpose(out.reshape(b, n, 1, c), (0, 3, 1, 2))        # (B, Cout, N, 1)


# ----------------------------------------------------------------------------------
# Deterministic parameter init (synthetic)
# ----------------------------------------------------------------------------------
def init_params(key, c, t0, num_layers, d0, dilated_factor):
    keys = iter(jax.random.split(key, 512))
    nrm = lambda shape: 0.1 * jax.random.normal(next(keys), shape, jnp.float32)
    c4 = c // len(KERNEL_SET)
    params = {"skip0_w": nrm((t0 * c, c)), "skip0_b": nrm((c,)), "layers": []}
    d, t_cur = d0, t0
    for _ in range(num_layers):
        t_out = t_cur - (MAX_K - 1) * d
        layer = {}
        w7s, bs = [], []
        for name in ("f", "g"):
            wks, bks = [], []
            for k in KERNEL_SET:
                wks.append(nrm((k, c, c4)))
                bks.append(nrm((c4,)))
            w7 = jnp.zeros((MAX_K, c, c), jnp.float32)
            for g_idx, k in enumerate(KERNEL_SET):
                w7 = w7.at[MAX_K - k:, :, g_idx * c4:(g_idx + 1) * c4].set(wks[g_idx])
            layer[f"{name}_wk"] = wks       # kept for the pure-JAX reference
            layer[f"{name}_bk"] = bks
            w7s.append(w7)
            bs.append(jnp.concatenate(bks))
        # concatenated [filter | gate] wide-K weight for the fused kernel
        layer["wfg"] = jnp.concatenate(w7s, axis=-1).reshape(MAX_K * c, 2 * c)
        layer["bfg"] = jnp.concatenate(bs).reshape(1, 2 * c)
        layer["res_w"] = nrm((c, c))
        layer["res_b"] = nrm((c,))
        layer["skip_w"] = nrm((t_out * c, c))
        layer["skip_b"] = nrm((c,))
        params["layers"].append(layer)
        t_cur = t_out
        d *= dilated_factor
    params["skipE_w"] = nrm((t_cur * c, c))
    params["skipE_b"] = nrm((c,))
    params["end_w"] = nrm((c, c))
    params["end_b"] = nrm((c,))
    return params


# ----------------------------------------------------------------------------------
# Pure-JAX reference (mirrors the PyTorch forward, NCHW layout) for correctness check
# ----------------------------------------------------------------------------------
def _conv_nchw(x, w_oihw, b, dilation=1):
    y = jax.lax.conv_general_dilated(
        x, w_oihw, window_strides=(1, 1), padding="VALID",
        rhs_dilation=(1, dilation), dimension_numbers=("NCHW", "OIHW", "NCHW"),
        precision=jax.lax.Precision.HIGHEST)
    return y + b.reshape(1, -1, 1, 1)


def _inception_ref(x, wks, bks, d):
    outs = []
    for wk, bk in zip(wks, bks):
        w_oihw = jnp.transpose(wk, (2, 1, 0))[:, :, None, :]
        outs.append(_conv_nchw(x, w_oihw, bk, d))
    t_min = outs[-1].shape[3]
    return jnp.concatenate([o[:, :, :, -t_min:] for o in outs], axis=1)


def _full_time_conv_ref(x, w_flat, b):
    c = x.shape[1]
    t = x.shape[3]
    w_oihw = jnp.transpose(w_flat.reshape(t, c, -1), (2, 1, 0))[:, :, None, :]
    return _conv_nchw(x, w_oihw, b)


def _conv1x1_ref(x, w_cin_cout, b):
    return _conv_nchw(x, w_cin_cout.T[:, :, None, None], b)


def _layernorm_ref(x, eps=1e-5):
    mean = x.mean(axis=(1, 2, 3), keepdims=True)
    var = ((x - mean) ** 2).mean(axis=(1, 2, 3), keepdims=True)
    return (x - mean) * jax.lax.rsqrt(var + eps)


def tcn_ref(x, params, *, num_layers, d0, dilated_factor, receptive_field):
    _, _, _, t = x.shape
    if t < receptive_field:
        x = jnp.pad(x, ((0, 0), (0, 0), (0, 0), (receptive_field - t, 0)))
    skip = _full_time_conv_ref(x, params["skip0_w"], params["skip0_b"])
    d = d0
    for lp in params["layers"]:
        residual = x
        filt = jnp.tanh(_inception_ref(x, lp["f_wk"], lp["f_bk"], d))
        gate = jax.nn.sigmoid(_inception_ref(x, lp["g_wk"], lp["g_bk"], d))
        x = filt * gate
        skip = _full_time_conv_ref(x, lp["skip_w"], lp["skip_b"]) + skip
        x = _conv1x1_ref(x, lp["res_w"], lp["res_b"])
        x = x + residual[:, :, :, -x.shape[3]:]
        x = _layernorm_ref(x)
        d *= dilated_factor
    skip = _full_time_conv_ref(x, params["skipE_w"], params["skipE_b"]) + skip
    x = jnp.maximum(skip, 0.0)
    x = jnp.maximum(_conv1x1_ref(x, params["end_w"], params["end_b"]), 0.0)
    return x


# ----------------------------------------------------------------------------------
if __name__ == "__main__":
    # Small config: in_channels == hidden_channels (required by the module's forward).
    B, N, C, T = 2, 4, 8, 16
    num_layers, d0, dilated_factor = 2, 1, 2
    receptive_field = int(1 + d0 * (MAX_K - 1) * (dilated_factor ** num_layers - 1)
                          / (dilated_factor - 1))          # = 19

    key = jax.random.PRNGKey(0)
    kx, kp = jax.random.split(key)
    x = jax.random.normal(kx, (B, C, N, T), jnp.float32)    # (B, Cin, N, T), NCHW

    t0 = max(T, receptive_field)
    params = init_params(kp, C, t0, num_layers, d0, dilated_factor)

    fwd = jax.jit(functools.partial(
        tcn_pallas, num_layers=num_layers, d0=d0,
        dilated_factor=dilated_factor, receptive_field=receptive_field))
    out = jax.block_until_ready(fwd(x, params))

    ref = tcn_ref(x, params, num_layers=num_layers, d0=d0,
                  dilated_factor=dilated_factor, receptive_field=receptive_field)

    assert out.shape == (B, C, N, 1), out.shape
    err = jnp.max(jnp.abs(out - ref))
    assert jnp.allclose(out, ref, rtol=2e-3, atol=2e-3), f"max abs err {err}"
    print("KERNEL_OK")
</pallas_src>

<mosaic_0001>
module attributes {stable_mosaic.version = 11 : i64} {
  func.func @_layer_kernel(%arg0: i32, %arg1: memref<1x4x19x8xf32, #tpu.memory_space<vmem>>, %arg2: memref<56x16xf32, #tpu.memory_space<vmem>>, %arg3: memref<1x16xf32, #tpu.memory_space<vmem>>, %arg4: memref<8x8xf32, #tpu.memory_space<vmem>>, %arg5: memref<1x8xf32, #tpu.memory_space<vmem>>, %arg6: memref<1x4x13x8xf32, #tpu.memory_space<vmem>>, %arg7: memref<1x4x13x8xf32, #tpu.memory_space<vmem>>, %arg8: memref<52x56xf32, #tpu.memory_space<vmem>>) attributes {dimension_semantics = [#tpu.dimension_semantics<parallel>], iteration_bounds = array<i64: 2>, scalar_prefetch = 0 : i64, scratch_operands = 1 : i64, tpu.core_type = #tpu.core_type<tc>, window_params = [{transform_indices = @transform_0, window_bounds = array<i64: 1, 4, 19, 8>}, {pipeline_mode = #tpu.pipeline_mode<synchronous>, transform_indices = @transform_1, window_bounds = array<i64: 56, 16>}, {pipeline_mode = #tpu.pipeline_mode<synchronous>, transform_indices = @transform_2, window_bounds = array<i64: 1, 16>}, {pipeline_mode = #tpu.pipeline_mode<synchronous>, transform_indices = @transform_3, window_bounds = array<i64: 8, 8>}, {pipeline_mode = #tpu.pipeline_mode<synchronous>, transform_indices = @transform_4, window_bounds = array<i64: 1, 8>}, {transform_indices = @transform_5, window_bounds = array<i64: 1, 4, 13, 8>}, {transform_indices = @transform_6, window_bounds = array<i64: 1, 4, 13, 8>}]} {
    %c0 = arith.constant 0 : index
    %c0_0 = arith.constant 0 : index
    %c0_1 = arith.constant 0 : index
    %c0_2 = arith.constant 0 : index
    %0 = vector.load %arg1[%c0, %c0_0, %c0_1, %c0_2] : memref<1x4x19x8xf32, #tpu.memory_space<vmem>>, vector<1x4x13x8xf32>
    %1 = vector.shape_cast %0 : vector<1x4x13x8xf32> to vector<4x13x8xf32>
    %2 = vector.shape_cast %1 : vector<4x13x8xf32> to vector<52x8xf32>
    %c0_3 = arith.constant 0 : index
    %c0_4 = arith.constant 0 : index
    %3 = vector.load %arg8[%c0_3, %c0_4] : memref<52x56xf32, #tpu.memory_space<vmem>>, vector<52x8xf32>
    tpu.vector_store %arg8[%c0_3, %c0_4], %2 {strides = array<i32>} : memref<52x56xf32, #tpu.memory_space<vmem>>, vector<52x8xf32>,
    %c0_5 = arith.constant 0 : index
    %c0_6 = arith.constant 0 : index
    %c1 = arith.constant 1 : index
    %c0_7 = arith.constant 0 : index
    %4 = vector.load %arg1[%c0_5, %c0_6, %c1, %c0_7] : memref<1x4x19x8xf32, #tpu.memory_space<vmem>>, vector<1x4x13x8xf32>
    %5 = vector.shape_cast %4 : vector<1x4x13x8xf32> to vector<4x13x8xf32>
    %6 = vector.shape_cast %5 : vector<4x13x8xf32> to vector<52x8xf32>
    %c0_8 = arith.constant 0 : index
    %c8 = arith.constant 8 : index
    %7 = vector.load %arg8[%c0_8, %c8] : memref<52x56xf32, #tpu.memory_space<vmem>>, vector<52x8xf32>
    tpu.vector_store %arg8[%c0_8, %c8], %6 {strides = array<i32>} : memref<52x56xf32, #tpu.memory_space<vmem>>, vector<52x8xf32>,
    %c0_9 = arith.constant 0 : index
    %c0_10 = arith.constant 0 : index
    %c2 = arith.constant 2 : index
    %c0_11 = arith.constant 0 : index
    %8 = vector.load %arg1[%c0_9, %c0_10, %c2, %c0_11] : memref<1x4x19x8xf32, #tpu.memory_space<vmem>>, vector<1x4x13x8xf32>
    %9 = vector.shape_cast %8 : vector<1x4x13x8xf32> to vector<4x13x8xf32>
    %10 = vector.shape_cast %9 : vector<4x13x8xf32> to vector<52x8xf32>
    %c0_12 = arith.constant 0 : index
    %c16 = arith.constant 16 : index
    %11 = vector.load %arg8[%c0_12, %c16] : memref<52x56xf32, #tpu.memory_space<vmem>>, vector<52x8xf32>
    tpu.vector_store %arg8[%c0_12, %c16], %10 {strides = array<i32>} : memref<52x56xf32, #tpu.memory_space<vmem>>, vector<52x8xf32>,
    %c0_13 = arith.constant 0 : index
    %c0_14 = arith.constant 0 : index
    %c3 = arith.constant 3 : index
    %c0_15 = arith.constant 0 : index
    %12 = vector.load %arg1[%c0_13, %c0_14, %c3, %c0_15] : memref<1x4x19x8xf32, #tpu.memory_space<vmem>>, vector<1x4x13x8xf32>
    %13 = vector.shape_cast %12 : vector<1x4x13x8xf32> to vector<4x13x8xf32>
    %14 = vector.shape_cast %13 : vector<4x13x8xf32> to vector<52x8xf32>
    %c0_16 = arith.constant 0 : index
    %c24 = arith.constant 24 : index
    %15 = vector.load %arg8[%c0_16, %c24] : memref<52x56xf32, #tpu.memory_space<vmem>>, vector<52x8xf32>
    tpu.vector_store %arg8[%c0_16, %c24], %14 {strides = array<i32>} : memref<52x56xf32, #tpu.memory_space<vmem>>, vector<52x8xf32>,
    %c0_17 = arith.constant 0 : index
    %c0_18 = arith.constant 0 : index
    %c4 = arith.constant 4 : index
    %c0_19 = arith.constant 0 : index
    %16 = vector.load %arg1[%c0_17, %c0_18, %c4, %c0_19] : memref<1x4x19x8xf32, #tpu.memory_space<vmem>>, vector<1x4x13x8xf32>
    %17 = vector.shape_cast %16 : vector<1x4x13x8xf32> to vector<4x13x8xf32>
    %18 = vector.shape_cast %17 : vector<4x13x8xf32> to vector<52x8xf32>
    %c0_20 = arith.constant 0 : index
    %c32 = arith.constant 32 : index
    %19 = vector.load %arg8[%c0_20, %c32] : memref<52x56xf32, #tpu.memory_space<vmem>>, vector<52x8xf32>
    tpu.vector_store %arg8[%c0_20, %c32], %18 {strides = array<i32>} : memref<52x56xf32, #tpu.memory_space<vmem>>, vector<52x8xf32>,
    %c0_21 = arith.constant 0 : index
    %c0_22 = arith.constant 0 : index
    %c5 = arith.constant 5 : index
    %c0_23 = arith.constant 0 : index
    %20 = vector.load %arg1[%c0_21, %c0_22, %c5, %c0_23] : memref<1x4x19x8xf32, #tpu.memory_space<vmem>>, vector<1x4x13x8xf32>
    %21 = vector.shape_cast %20 : vector<1x4x13x8xf32> to vector<4x13x8xf32>
    %22 = vector.shape_cast %21 : vector<4x13x8xf32> to vector<52x8xf32>
    %c0_24 = arith.constant 0 : index
    %c40 = arith.constant 40 : index
    %23 = vector.load %arg8[%c0_24, %c40] : memref<52x56xf32, #tpu.memory_space<vmem>>, vector<52x8xf32>
    tpu.vector_store %arg8[%c0_24, %c40], %22 {strides = array<i32>} : memref<52x56xf32, #tpu.memory_space<vmem>>, vector<52x8xf32>,
    %c0_25 = arith.constant 0 : index
    %c0_26 = arith.constant 0 : index
    %c6 = arith.constant 6 : index
    %c0_27 = arith.constant 0 : index
    %24 = vector.load %arg1[%c0_25, %c0_26, %c6, %c0_27] : memref<1x4x19x8xf32, #tpu.memory_space<vmem>>, vector<1x4x13x8xf32>
    %25 = vector.shape_cast %24 : vector<1x4x13x8xf32> to vector<4x13x8xf32>
    %26 = vector.shape_cast %25 : vector<4x13x8xf32> to vector<52x8xf32>
    %c0_28 = arith.constant 0 : index
    %c48 = arith.constant 48 : index
    %27 = vector.load %arg8[%c0_28, %c48] : memref<52x56xf32, #tpu.memory_space<vmem>>, vector<52x8xf32>
    tpu.vector_store %arg8[%c0_28, %c48], %26 {strides = array<i32>} : memref<52x56xf32, #tpu.memory_space<vmem>>, vector<52x8xf32>,
    %c0_29 = arith.constant 0 : index
    %c0_30 = arith.constant 0 : index
    %28 = vector.load %arg8[%c0_29, %c0_30] : memref<52x56xf32, #tpu.memory_space<vmem>>, vector<52x56xf32>
    %c0_31 = arith.constant 0 : index
    %c0_32 = arith.constant 0 : index
    %29 = vector.load %arg2[%c0_31, %c0_32] : memref<56x16xf32, #tpu.memory_space<vmem>>, vector<56x16xf32>
    %cst = arith.constant dense<0.000000e+00> : vector<52x16xf32>
    %30 = tpu.matmul %28, %29, %cst {dimension_numbers = #tpu.dot_dimension_numbers<[1], [0], [0], [1], [0, 0, 1, 1], [], []>} : vector<52x56xf32>, vector<56x16xf32>, vector<52x16xf32> -> vector<52x16xf32>
    %c0_33 = arith.constant 0 : index
    %c0_34 = arith.constant 0 : index
    %31 = vector.load %arg3[%c0_33, %c0_34] : memref<1x16xf32, #tpu.memory_space<vmem>>, vector<1x16xf32>
    %32 = vector.broadcast %31 : vector<1x16xf32> to vector<52x16xf32>
    %33 = arith.addf %30, %32 : vector<52x16xf32>
    %34 = vector.extract_strided_slice %33 {offsets = [0, 0], sizes = [52, 8], strides = [1, 1]} : vector<52x16xf32> to vector<52x8xf32>
    %35 = math.tanh %34 : vector<52x8xf32>
    %36 = vector.extract_strided_slice %33 {offsets = [0, 8], sizes = [52, 8], strides = [1, 1]} : vector<52x16xf32> to vector<52x8xf32>
    %37 = arith.negf %36 : vector<52x8xf32>
    %38 = math.exp %37 : vector<52x8xf32>
    %cst_35 = arith.constant 1.000000e+00 : f32
    %39 = vector.broadcast %cst_35 : f32 to vector<52x8xf32>
    %40 = arith.addf %39, %38 : vector<52x8xf32>
    %41 = arith.divf %39, %40 : vector<52x8xf32>
    %42 = arith.mulf %35, %41 : vector<52x8xf32>
    %43 = vector.shape_cast %42 : vector<52x8xf32> to vector<4x13x8xf32>
    %44 = vector.shape_cast %43 : vector<4x13x8xf32> to vector<1x4x13x8xf32>
    %c0_36 = arith.constant 0 : index
    %c0_37 = arith.constant 0 : index
    %c0_38 = arith.constant 0 : index
    %c0_39 = arith.constant 0 : index
    %45 = vector.load %arg6[%c0_36, %c0_37, %c0_38, %c0_39] : memref<1x4x13x8xf32, #tpu.memory_space<vmem>>, vector<1x4x13x8xf32>
    tpu.vector_store %arg6[%c0_36, %c0_37, %c0_38, %c0_39], %44 {strides = array<i32>} : memref<1x4x13x8xf32, #tpu.memory_space<vmem>>, vector<1x4x13x8xf32>,
    %c0_40 = arith.constant 0 : index
    %c48_41 = arith.constant 48 : index
    %46 = vector.load %arg8[%c0_40, %c48_41] : memref<52x56xf32, #tpu.memory_space<vmem>>, vector<52x8xf32>
    %c0_42 = arith.constant 0 : index
    %c0_43 = arith.constant 0 : index
    %47 = vector.load %arg4[%c0_42, %c0_43] : memref<8x8xf32, #tpu.memory_space<vmem>>, vector<8x8xf32>
    %cst_44 = arith.constant dense<0.000000e+00> : vector<52x8xf32>
    %48 = tpu.matmul %42, %47, %cst_44 {dimension_numbers = #tpu.dot_dimension_numbers<[1], [0], [0], [1], [0, 0, 1, 1], [], []>} : vector<52x8xf32>, vector<8x8xf32>, vector<52x8xf32> -> vector<52x8xf32>
    %c0_45 = arith.constant 0 : index
    %c0_46 = arith.constant 0 : index
    %49 = vector.load %arg5[%c0_45, %c0_46] : memref<1x8xf32, #tpu.memory_space<vmem>>, vector<1x8xf32>
    %50 = vector.broadcast %49 : vector<1x8xf32> to vector<52x8xf32>
    %51 = arith.addf %48, %50 : vector<52x8xf32>
    %52 = arith.addf %51, %46 : vector<52x8xf32>
    %53 = vector.shape_cast %52 : vector<52x8xf32> to vector<1x52x8xf32>
    %cst_47 = arith.constant dense<0.000000e+00> : vector<1xf32>
    %54 = vector.multi_reduction <add>, %53, %cst_47 [1, 2] : vector<1x52x8xf32> to vector<1xf32>
    %55 = vector.shape_cast %54 : vector<1xf32> to vector<1x1x1xf32>
    %56 = vector.extract %55[0, 0, 0] : f32 from vector<1x1x1xf32>
    %cst_48 = arith.constant 4.160000e+02 : f32
    %57 = arith.divf %56, %cst_48 : f32
    %58 = arith.mulf %52, %52 : vector<52x8xf32>
    %59 = vector.shape_cast %58 : vector<52x8xf32> to vector<1x52x8xf32>
    %cst_49 = arith.constant dense<0.000000e+00> : vector<1xf32>
    %60 = vector.multi_reduction <add>, %59, %cst_49 [1, 2] : vector<1x52x8xf32> to vector<1xf32>
    %61 = vector.shape_cast %60 : vector<1xf32> to vector<1x1x1xf32>
    %62 = vector.extract %61[0, 0, 0] : f32 from vector<1x1x1xf32>
    %cst_50 = arith.constant 4.160000e+02 : f32
    %63 = arith.divf %62, %cst_50 : f32
    %64 = arith.mulf %57, %57 : f32
    %65 = arith.subf %63, %64 : f32
    %66 = vector.broadcast %57 : f32 to vector<52x8xf32>
    %67 = arith.subf %52, %66 : vector<52x8xf32>
    %cst_51 = arith.constant 9.99999974E-6 : f32
    %68 = arith.addf %65, %cst_51 : f32
    %69 = math.rsqrt %68 : f32
    %70 = vector.broadcast %69 : f32 to vector<52x8xf32>
    %71 = arith.mulf %67, %70 : vector<52x8xf32>
    %72 = vector.shape_cast %71 : vector<52x8xf32> to vector<4x13x8xf32>
    %73 = vector.shape_cast %72 : vector<4x13x8xf32> to vector<1x4x13x8xf32>
    %c0_52 = arith.constant 0 : index
    %c0_53 = arith.constant 0 : index
    %c0_54 = arith.constant 0 : index
    %c0_55 = arith.constant 0 : index
    %74 = vector.load %arg7[%c0_52, %c0_53, %c0_54, %c0_55] : memref<1x4x13x8xf32, #tpu.memory_space<vmem>>, vector<1x4x13x8xf32>
    tpu.vector_store %arg7[%c0_52, %c0_53, %c0_54, %c0_55], %73 {strides = array<i32>} : memref<1x4x13x8xf32, #tpu.memory_space<vmem>>, vector<1x4x13x8xf32>,
    return
  }
  func.func @transform_0(%arg0: i32) -> (i32, i32, i32, i32) {
    %c0_i32 = arith.constant 0 : i32
    %c0_i32_0 = arith.constant 0 : i32
    %c0_i32_1 = arith.constant 0 : i32
    %c0_i32_2 = arith.constant 0 : i32
    return %arg0, %c0_i32, %c0_i32_0, %c0_i32_1 : i32, i32, i32, i32
  }
  func.func @transform_1(%arg0: i32) -> (i32, i32) {
    %c0_i32 = arith.constant 0 : i32
    %c0_i32_0 = arith.constant 0 : i32
    %c0_i32_1 = arith.constant 0 : i32
    return %c0_i32, %c0_i32_0 : i32, i32
  }
  func.func @transform_2(%arg0: i32) -> (i32, i32) {
    %c0_i32 = arith.constant 0 : i32
    %c0_i32_0 = arith.constant 0 : i32
    %c0_i32_1 = arith.constant 0 : i32
    return %c0_i32, %c0_i32_0 : i32, i32
  }
  func.func @transform_3(%arg0: i32) -> (i32, i32) {
    %c0_i32 = arith.constant 0 : i32
    %c0_i32_0 = arith.constant 0 : i32
    %c0_i32_1 = arith.constant 0 : i32
    return %c0_i32, %c0_i32_0 : i32, i32
  }
  func.func @transform_4(%arg0: i32) -> (i32, i32) {
    %c0_i32 = arith.constant 0 : i32
    %c0_i32_0 = arith.constant 0 : i32
    %c0_i32_1 = arith.constant 0 : i32
    return %c0_i32, %c0_i32_0 : i32, i32
  }
  func.func @transform_5(%arg0: i32) -> (i32, i32, i32, i32) {
    %c0_i32 = arith.constant 0 : i32
    %c0_i32_0 = arith.constant 0 : i32
    %c0_i32_1 = arith.constant 0 : i32
    %c0_i32_2 = arith.constant 0 : i32
    return %arg0, %c0_i32, %c0_i32_0, %c0_i32_1 : i32, i32, i32, i32
  }
  func.func @transform_6(%arg0: i32) -> (i32, i32, i32, i32) {
    %c0_i32 = arith.constant 0 : i32
    %c0_i32_0 = arith.constant 0 : i32
    %c0_i32_1 = arith.constant 0 : i32
    %c0_i32_2 = arith.constant 0 : i32
    return %arg0, %c0_i32, %c0_i32_0, %c0_i32_1 : i32, i32, i32, i32
  }
}

module attributes {stable_mosaic.version = 11 : i64} {
  func.func @_skip0_kernel(%arg0: i32, %arg1: memref<8x152xf32, #tpu.memory_space<vmem>>, %arg2: memref<152x8xf32, #tpu.memory_space<vmem>>, %arg3: memref<1x8xf32, #tpu.memory_space<vmem>>, %arg4: memref<8x8xf32, #tpu.memory_space<vmem>>) attributes {dimension_semantics = [#tpu.dimension_semantics<parallel>], iteration_bounds = array<i64: 1>, scalar_prefetch = 0 : i64, scratch_operands = 0 : i64, tpu.core_type = #tpu.core_type<tc>, window_params = [{transform_indices = @transform_0, window_bounds = array<i64: 8, 152>}, {pipeline_mode = #tpu.pipeline_mode<synchronous>, transform_indices = @transform_1, window_bounds = array<i64: 152, 8>}, {pipeline_mode = #tpu.pipeline_mode<synchronous>, transform_indices = @transform_2, window_bounds = array<i64: 1, 8>}, {transform_indices = @transform_3, window_bounds = array<i64: 8, 8>}]} {
    %c0 = arith.constant 0 : index
    %c0_0 = arith.constant 0 : index
    %0 = vector.load %arg1[%c0, %c0_0] : memref<8x152xf32, #tpu.memory_space<vmem>>, vector<8x152xf32>
    %c0_1 = arith.constant 0 : index
    %c0_2 = arith.constant 0 : index
    %1 = vector.load %arg2[%c0_1, %c0_2] : memref<152x8xf32, #tpu.memory_space<vmem>>, vector<152x8xf32>
    %cst = arith.constant dense<0.000000e+00> : vector<8x8xf32>
    %2 = tpu.matmul %0, %1, %cst {dimension_numbers = #tpu.dot_dimension_numbers<[1], [0], [0], [1], [0, 0, 1, 1], [], []>} : vector<8x152xf32>, vector<152x8xf32>, vector<8x8xf32> -> vector<8x8xf32>
    %c0_3 = arith.constant 0 : index
    %c0_4 = arith.constant 0 : index
    %3 = vector.load %arg3[%c0_3, %c0_4] : memref<1x8xf32, #tpu.memory_space<vmem>>, vector<1x8xf32>
    %4 = vector.broadcast %3 : vector<1x8xf32> to vector<8x8xf32>
    %5 = arith.addf %2, %4 : vector<8x8xf32>
    %c0_5 = arith.constant 0 : index
    %c0_6 = arith.constant 0 : index
    %6 = vector.load %arg4[%c0_5, %c0_6] : memref<8x8xf32, #tpu.memory_space<vmem>>, vector<8x8xf32>
    tpu.vector_store %arg4[%c0_5, %c0_6], %5 {strides = array<i32>} : memref<8x8xf32, #tpu.memory_space<vmem>>, vector<8x8xf32>,
    return
  }
  func.func @transform_0(%arg0: i32) -> (i32, i32) {
    %c0_i32 = arith.constant 0 : i32
    %c0_i32_0 = arith.constant 0 : i32
    return %arg0, %c0_i32 : i32, i32
  }
  func.func @transform_1(%arg0: i32) -> (i32, i32) {
    %c0_i32 = arith.constant 0 : i32
    %c0_i32_0 = arith.constant 0 : i32
    %c0_i32_1 = arith.constant 0 : i32
    return %c0_i32, %c0_i32_0 : i32, i32
  }
  func.func @transform_2(%arg0: i32) -> (i32, i32) {
    %c0_i32 = arith.constant 0 : i32
    %c0_i32_0 = arith.constant 0 : i32
    %c0_i32_1 = arith.constant 0 : i32
    return %c0_i32, %c0_i32_0 : i32, i32
  }
  func.func @transform_3(%arg0: i32) -> (i32, i32) {
    %c0_i32 = arith.constant 0 : i32
    %c0_i32_0 = arith.constant 0 : i32
    return %arg0, %c0_i32 : i32, i32
  }
}

module attributes {stable_mosaic.version = 11 : i64} {
  func.func @_skip_acc_kernel(%arg0: i32, %arg1: memref<8x104xf32, #tpu.memory_space<vmem>>, %arg2: memref<104x8xf32, #tpu.memory_space<vmem>>, %arg3: memref<1x8xf32, #tpu.memory_space<vmem>>, %arg4: memref<8x8xf32, #tpu.memory_space<vmem>>, %arg5: memref<8x8xf32, #tpu.memory_space<vmem>>) attributes {dimension_semantics = [#tpu.dimension_semantics<parallel>], iteration_bounds = array<i64: 1>, scalar_prefetch = 0 : i64, scratch_operands = 0 : i64, tpu.core_type = #tpu.core_type<tc>, window_params = [{transform_indices = @transform_0, window_bounds = array<i64: 8, 104>}, {pipeline_mode = #tpu.pipeline_mode<synchronous>, transform_indices = @transform_1, window_bounds = array<i64: 104, 8>}, {pipeline_mode = #tpu.pipeline_mode<synchronous>, transform_indices = @transform_2, window_bounds = array<i64: 1, 8>}, {transform_indices = @transform_3, window_bounds = array<i64: 8, 8>}, {transform_indices = @transform_4, window_bounds = array<i64: 8, 8>}]} {
    %c0 = arith.constant 0 : index
    %c0_0 = arith.constant 0 : index
    %0 = vector.load %arg1[%c0, %c0_0] : memref<8x104xf32, #tpu.memory_space<vmem>>, vector<8x104xf32>
    %c0_1 = arith.constant 0 : index
    %c0_2 = arith.constant 0 : index
    %1 = vector.load %arg2[%c0_1, %c0_2] : memref<104x8xf32, #tpu.memory_space<vmem>>, vector<104x8xf32>
    %cst = arith.constant dense<0.000000e+00> : vector<8x8xf32>
    %2 = tpu.matmul %0, %1, %cst {dimension_numbers = #tpu.dot_dimension_numbers<[1], [0], [0], [1], [0, 0, 1, 1], [], []>} : vector<8x104xf32>, vector<104x8xf32>, vector<8x8xf32> -> vector<8x8xf32>
    %c0_3 = arith.constant 0 : index
    %c0_4 = arith.constant 0 : index
    %3 = vector.load %arg3[%c0_3, %c0_4] : memref<1x8xf32, #tpu.memory_space<vmem>>, vector<1x8xf32>
    %4 = vector.broadcast %3 : vector<1x8xf32> to vector<8x8xf32>
    %5 = arith.addf %2, %4 : vector<8x8xf32>
    %c0_5 = arith.constant 0 : index
    %c0_6 = arith.constant 0 : index
    %6 = vector.load %arg4[%c0_5, %c0_6] : memref<8x8xf32, #tpu.memory_space<vmem>>, vector<8x8xf32>
    %7 = arith.addf %5, %6 : vector<8x8xf32>
    %c0_7 = arith.constant 0 : index
    %c0_8 = arith.constant 0 : index
    %8 = vector.load %arg5[%c0_7, %c0_8] : memref<8x8xf32, #tpu.memory_space<vmem>>, vector<8x8xf32>
    tpu.vector_store %arg5[%c0_7, %c0_8], %7 {strides = array<i32>} : memref<8x8xf32, #tpu.memory_space<vmem>>, vector<8x8xf32>,
    return
  }
  func.func @transform_0(%arg0: i32) -> (i32, i32) {
    %c0_i32 = arith.constant 0 : i32
    %c0_i32_0 = arith.constant 0 : i32
    return %arg0, %c0_i32 : i32, i32
  }
  func.func @transform_1(%arg0: i32) -> (i32, i32) {
    %c0_i32 = arith.constant 0 : i32
    %c0_i32_0 = arith.constant 0 : i32
    %c0_i32_1 = arith.constant 0 : i32
    return %c0_i32, %c0_i32_0 : i32, i32
  }
  func.func @transform_2(%arg0: i32) -> (i32, i32) {
    %c0_i32 = arith.constant 0 : i32
    %c0_i32_0 = arith.constant 0 : i32
    %c0_i32_1 = arith.constant 0 : i32
    return %c0_i32, %c0_i32_0 : i32, i32
  }
  func.func @transform_3(%arg0: i32) -> (i32, i32) {
    %c0_i32 = arith.constant 0 : i32
    %c0_i32_0 = arith.constant 0 : i32
    return %arg0, %c0_i32 : i32, i32
  }
  func.func @transform_4(%arg0: i32) -> (i32, i32) {
    %c0_i32 = arith.constant 0 : i32
    %c0_i32_0 = arith.constant 0 : i32
    return %arg0, %c0_i32 : i32, i32
  }
}

module attributes {stable_mosaic.version = 11 : i64} {
  func.func @_layer_kernel(%arg0: i32, %arg1: memref<1x4x13x8xf32, #tpu.memory_space<vmem>>, %arg2: memref<56x16xf32, #tpu.memory_space<vmem>>, %arg3: memref<1x16xf32, #tpu.memory_space<vmem>>, %arg4: memref<8x8xf32, #tpu.memory_space<vmem>>, %arg5: memref<1x8xf32, #tpu.memory_space<vmem>>, %arg6: memref<1x4x1x8xf32, #tpu.memory_space<vmem>>, %arg7: memref<1x4x1x8xf32, #tpu.memory_space<vmem>>, %arg8: memref<4x56xf32, #tpu.memory_space<vmem>>) attributes {dimension_semantics = [#tpu.dimension_semantics<parallel>], iteration_bounds = array<i64: 2>, scalar_prefetch = 0 : i64, scratch_operands = 1 : i64, tpu.core_type = #tpu.core_type<tc>, window_params = [{transform_indices = @transform_0, window_bounds = array<i64: 1, 4, 13, 8>}, {pipeline_mode = #tpu.pipeline_mode<synchronous>, transform_indices = @transform_1, window_bounds = array<i64: 56, 16>}, {pipeline_mode = #tpu.pipeline_mode<synchronous>, transform_indices = @transform_2, window_bounds = array<i64: 1, 16>}, {pipeline_mode = #tpu.pipeline_mode<synchronous>, transform_indices = @transform_3, window_bounds = array<i64: 8, 8>}, {pipeline_mode = #tpu.pipeline_mode<synchronous>, transform_indices = @transform_4, window_bounds = array<i64: 1, 8>}, {transform_indices = @transform_5, window_bounds = array<i64: 1, 4, 1, 8>}, {transform_indices = @transform_6, window_bounds = array<i64: 1, 4, 1, 8>}]} {
    %c0 = arith.constant 0 : index
    %c0_0 = arith.constant 0 : index
    %c0_1 = arith.constant 0 : index
    %c0_2 = arith.constant 0 : index
    %0 = vector.load %arg1[%c0, %c0_0, %c0_1, %c0_2] : memref<1x4x13x8xf32, #tpu.memory_space<vmem>>, vector<1x4x1x8xf32>
    %1 = vector.shape_cast %0 : vector<1x4x1x8xf32> to vector<4x1x8xf32>
    %2 = vector.shape_cast %1 : vector<4x1x8xf32> to vector<4x8xf32>
    %c0_3 = arith.constant 0 : index
    %c0_4 = arith.constant 0 : index
    %3 = vector.load %arg8[%c0_3, %c0_4] : memref<4x56xf32, #tpu.memory_space<vmem>>, vector<4x8xf32>
    tpu.vector_store %arg8[%c0_3, %c0_4], %2 {strides = array<i32>} : memref<4x56xf32, #tpu.memory_space<vmem>>, vector<4x8xf32>,
    %c0_5 = arith.constant 0 : index
    %c0_6 = arith.constant 0 : index
    %c2 = arith.constant 2 : index
    %c0_7 = arith.constant 0 : index
    %4 = vector.load %arg1[%c0_5, %c0_6, %c2, %c0_7] : memref<1x4x13x8xf32, #tpu.memory_space<vmem>>, vector<1x4x1x8xf32>
    %5 = vector.shape_cast %4 : vector<1x4x1x8xf32> to vector<4x1x8xf32>
    %6 = vector.shape_cast %5 : vector<4x1x8xf32> to vector<4x8xf32>
    %c0_8 = arith.constant 0 : index
    %c8 = arith.constant 8 : index
    %7 = vector.load %arg8[%c0_8, %c8] : memref<4x56xf32, #tpu.memory_space<vmem>>, vector<4x8xf32>
    tpu.vector_store %arg8[%c0_8, %c8], %6 {strides = array<i32>} : memref<4x56xf32, #tpu.memory_space<vmem>>, vector<4x8xf32>,
    %c0_9 = arith.constant 0 : index
    %c0_10 = arith.constant 0 : index
    %c4 = arith.constant 4 : index
    %c0_11 = arith.constant 0 : index
    %8 = vector.load %arg1[%c0_9, %c0_10, %c4, %c0_11] : memref<1x4x13x8xf32, #tpu.memory_space<vmem>>, vector<1x4x1x8xf32>
    %9 = vector.shape_cast %8 : vector<1x4x1x8xf32> to vector<4x1x8xf32>
    %10 = vector.shape_cast %9 : vector<4x1x8xf32> to vector<4x8xf32>
    %c0_12 = arith.constant 0 : index
    %c16 = arith.constant 16 : index
    %11 = vector.load %arg8[%c0_12, %c16] : memref<4x56xf32, #tpu.memory_space<vmem>>, vector<4x8xf32>
    tpu.vector_store %arg8[%c0_12, %c16], %10 {strides = array<i32>} : memref<4x56xf32, #tpu.memory_space<vmem>>, vector<4x8xf32>,
    %c0_13 = arith.constant 0 : index
    %c0_14 = arith.constant 0 : index
    %c6 = arith.constant 6 : index
    %c0_15 = arith.constant 0 : index
    %12 = vector.load %arg1[%c0_13, %c0_14, %c6, %c0_15] : memref<1x4x13x8xf32, #tpu.memory_space<vmem>>, vector<1x4x1x8xf32>
    %13 = vector.shape_cast %12 : vector<1x4x1x8xf32> to vector<4x1x8xf32>
    %14 = vector.shape_cast %13 : vector<4x1x8xf32> to vector<4x8xf32>
    %c0_16 = arith.constant 0 : index
    %c24 = arith.constant 24 : index
    %15 = vector.load %arg8[%c0_16, %c24] : memref<4x56xf32, #tpu.memory_space<vmem>>, vector<4x8xf32>
    tpu.vector_store %arg8[%c0_16, %c24], %14 {strides = array<i32>} : memref<4x56xf32, #tpu.memory_space<vmem>>, vector<4x8xf32>,
    %c0_17 = arith.constant 0 : index
    %c0_18 = arith.constant 0 : index
    %c8_19 = arith.constant 8 : index
    %c0_20 = arith.constant 0 : index
    %16 = vector.load %arg1[%c0_17, %c0_18, %c8_19, %c0_20] : memref<1x4x13x8xf32, #tpu.memory_space<vmem>>, vector<1x4x1x8xf32>
    %17 = vector.shape_cast %16 : vector<1x4x1x8xf32> to vector<4x1x8xf32>
    %18 = vector.shape_cast %17 : vector<4x1x8xf32> to vector<4x8xf32>
    %c0_21 = arith.constant 0 : index
    %c32 = arith.constant 32 : index
    %19 = vector.load %arg8[%c0_21, %c32] : memref<4x56xf32, #tpu.memory_space<vmem>>, vector<4x8xf32>
    tpu.vector_store %arg8[%c0_21, %c32], %18 {strides = array<i32>} : memref<4x56xf32, #tpu.memory_space<vmem>>, vector<4x8xf32>,
    %c0_22 = arith.constant 0 : index
    %c0_23 = arith.constant 0 : index
    %c10 = arith.constant 10 : index
    %c0_24 = arith.constant 0 : index
    %20 = vector.load %arg1[%c0_22, %c0_23, %c10, %c0_24] : memref<1x4x13x8xf32, #tpu.memory_space<vmem>>, vector<1x4x1x8xf32>
    %21 = vector.shape_cast %20 : vector<1x4x1x8xf32> to vector<4x1x8xf32>
    %22 = vector.shape_cast %21 : vector<4x1x8xf32> to vector<4x8xf32>
    %c0_25 = arith.constant 0 : index
    %c40 = arith.constant 40 : index
    %23 = vector.load %arg8[%c0_25, %c40] : memref<4x56xf32, #tpu.memory_space<vmem>>, vector<4x8xf32>
    tpu.vector_store %arg8[%c0_25, %c40], %22 {strides = array<i32>} : memref<4x56xf32, #tpu.memory_space<vmem>>, vector<4x8xf32>,
    %c0_26 = arith.constant 0 : index
    %c0_27 = arith.constant 0 : index
    %c12 = arith.constant 12 : index
    %c0_28 = arith.constant 0 : index
    %24 = vector.load %arg1[%c0_26, %c0_27, %c12, %c0_28] : memref<1x4x13x8xf32, #tpu.memory_space<vmem>>, vector<1x4x1x8xf32>
    %25 = vector.shape_cast %24 : vector<1x4x1x8xf32> to vector<4x1x8xf32>
    %26 = vector.shape_cast %25 : vector<4x1x8xf32> to vector<4x8xf32>
    %c0_29 = arith.constant 0 : index
    %c48 = arith.constant 48 : index
    %27 = vector.load %arg8[%c0_29, %c48] : memref<4x56xf32, #tpu.memory_space<vmem>>, vector<4x8xf32>
    tpu.vector_store %arg8[%c0_29, %c48], %26 {strides = array<i32>} : memref<4x56xf32, #tpu.memory_space<vmem>>, vector<4x8xf32>,
    %c0_30 = arith.constant 0 : index
    %c0_31 = arith.constant 0 : index
    %28 = vector.load %arg8[%c0_30, %c0_31] : memref<4x56xf32, #tpu.memory_space<vmem>>, vector<4x56xf32>
    %c0_32 = arith.constant 0 : index
    %c0_33 = arith.constant 0 : index
    %29 = vector.load %arg2[%c0_32, %c0_33] : memref<56x16xf32, #tpu.memory_space<vmem>>, vector<56x16xf32>
    %cst = arith.constant dense<0.000000e+00> : vector<4x16xf32>
    %30 = tpu.matmul %28, %29, %cst {dimension_numbers = #tpu.dot_dimension_numbers<[1], [0], [0], [1], [0, 0, 1, 1], [], []>} : vector<4x56xf32>, vector<56x16xf32>, vector<4x16xf32> -> vector<4x16xf32>
    %c0_34 = arith.constant 0 : index
    %c0_35 = arith.constant 0 : index
    %31 = vector.load %arg3[%c0_34, %c0_35] : memref<1x16xf32, #tpu.memory_space<vmem>>, vector<1x16xf32>
    %32 = vector.broadcast %31 : vector<1x16xf32> to vector<4x16xf32>
    %33 = arith.addf %30, %32 : vector<4x16xf32>
    %34 = vector.extract_strided_slice %33 {offsets = [0, 0], sizes = [4, 8], strides = [1, 1]} : vector<4x16xf32> to vector<4x8xf32>
    %35 = math.tanh %34 : vector<4x8xf32>
    %36 = vector.extract_strided_slice %33 {offsets = [0, 8], sizes = [4, 8], strides = [1, 1]} : vector<4x16xf32> to vector<4x8xf32>
    %37 = arith.negf %36 : vector<4x8xf32>
    %38 = math.exp %37 : vector<4x8xf32>
    %cst_36 = arith.constant 1.000000e+00 : f32
    %39 = vector.broadcast %cst_36 : f32 to vector<4x8xf32>
    %40 = arith.addf %39, %38 : vector<4x8xf32>
    %41 = arith.divf %39, %40 : vector<4x8xf32>
    %42 = arith.mulf %35, %41 : vector<4x8xf32>
    %43 = vector.shape_cast %42 : vector<4x8xf32> to vector<4x1x8xf32>
    %44 = vector.shape_cast %43 : vector<4x1x8xf32> to vector<1x4x1x8xf32>
    %c0_37 = arith.constant 0 : index
    %c0_38 = arith.constant 0 : index
    %c0_39 = arith.constant 0 : index
    %c0_40 = arith.constant 0 : index
    %45 = vector.load %arg6[%c0_37, %c0_38, %c0_39, %c0_40] : memref<1x4x1x8xf32, #tpu.memory_space<vmem>>, vector<1x4x1x8xf32>
    tpu.vector_store %arg6[%c0_37, %c0_38, %c0_39, %c0_40], %44 {strides = array<i32>} : memref<1x4x1x8xf32, #tpu.memory_space<vmem>>, vector<1x4x1x8xf32>,
    %c0_41 = arith.constant 0 : index
    %c48_42 = arith.constant 48 : index
    %46 = vector.load %arg8[%c0_41, %c48_42] : memref<4x56xf32, #tpu.memory_space<vmem>>, vector<4x8xf32>
    %c0_43 = arith.constant 0 : index
    %c0_44 = arith.constant 0 : index
    %47 = vector.load %arg4[%c0_43, %c0_44] : memref<8x8xf32, #tpu.memory_space<vmem>>, vector<8x8xf32>
    %cst_45 = arith.constant dense<0.000000e+00> : vector<4x8xf32>
    %48 = tpu.matmul %42, %47, %cst_45 {dimension_numbers = #tpu.dot_dimension_numbers<[1], [0], [0], [1], [0, 0, 1, 1], [], []>} : vector<4x8xf32>, vector<8x8xf32>, vector<4x8xf32> -> vector<4x8xf32>
    %c0_46 = arith.constant 0 : index
    %c0_47 = arith.constant 0 : index
    %49 = vector.load %arg5[%c0_46, %c0_47] : memref<1x8xf32, #tpu.memory_space<vmem>>, vector<1x8xf32>
    %50 = vector.broadcast %49 : vector<1x8xf32> to vector<4x8xf32>
    %51 = arith.addf %48, %50 : vector<4x8xf32>
    %52 = arith.addf %51, %46 : vector<4x8xf32>
    %53 = vector.shape_cast %52 : vector<4x8xf32> to vector<1x4x8xf32>
    %cst_48 = arith.constant dense<0.000000e+00> : vector<1xf32>
    %54 = vector.multi_reduction <add>, %53, %cst_48 [1, 2] : vector<1x4x8xf32> to vector<1xf32>
    %55 = vector.shape_cast %54 : vector<1xf32> to vector<1x1x1xf32>
    %56 = vector.extract %55[0, 0, 0] : f32 from vector<1x1x1xf32>
    %cst_49 = arith.constant 3.200000e+01 : f32
    %57 = arith.divf %56, %cst_49 : f32
    %58 = arith.mulf %52, %52 : vector<4x8xf32>
    %59 = vector.shape_cast %58 : vector<4x8xf32> to vector<1x4x8xf32>
    %cst_50 = arith.constant dense<0.000000e+00> : vector<1xf32>
    %60 = vector.multi_reduction <add>, %59, %cst_50 [1, 2] : vector<1x4x8xf32> to vector<1xf32>
    %61 = vector.shape_cast %60 : vector<1xf32> to vector<1x1x1xf32>
    %62 = vector.extract %61[0, 0, 0] : f32 from vector<1x1x1xf32>
    %cst_51 = arith.constant 3.200000e+01 : f32
    %63 = arith.divf %62, %cst_51 : f32
    %64 = arith.mulf %57, %57 : f32
    %65 = arith.subf %63, %64 : f32
    %66 = vector.broadcast %57 : f32 to vector<4x8xf32>
    %67 = arith.subf %52, %66 : vector<4x8xf32>
    %cst_52 = arith.constant 9.99999974E-6 : f32
    %68 = arith.addf %65, %cst_52 : f32
    %69 = math.rsqrt %68 : f32
    %70 = vector.broadcast %69 : f32 to vector<4x8xf32>
    %71 = arith.mulf %67, %70 : vector<4x8xf32>
    %72 = vector.shape_cast %71 : vector<4x8xf32> to vector<4x1x8xf32>
    %73 = vector.shape_cast %72 : vector<4x1x8xf32> to vector<1x4x1x8xf32>
    %c0_53 = arith.constant 0 : index
    %c0_54 = arith.constant 0 : index
    %c0_55 = arith.constant 0 : index
    %c0_56 = arith.constant 0 : index
    %74 = vector.load %arg7[%c0_53, %c0_54, %c0_55, %c0_56] : memref<1x4x1x8xf32, #tpu.memory_space<vmem>>, vector<1x4x1x8xf32>
    tpu.vector_store %arg7[%c0_53, %c0_54, %c0_55, %c0_56], %73 {strides = array<i32>} : memref<1x4x1x8xf32, #tpu.memory_space<vmem>>, vector<1x4x1x8xf32>,
    return
  }
  func.func @transform_0(%arg0: i32) -> (i32, i32, i32, i32) {
    %c0_i32 = arith.constant 0 : i32
    %c0_i32_0 = arith.constant 0 : i32
    %c0_i32_1 = arith.constant 0 : i32
    %c0_i32_2 = arith.constant 0 : i32
    return %arg0, %c0_i32, %c0_i32_0, %c0_i32_1 : i32, i32, i32, i32
  }
  func.func @transform_1(%arg0: i32) -> (i32, i32) {
    %c0_i32 = arith.constant 0 : i32
    %c0_i32_0 = arith.constant 0 : i32
    %c0_i32_1 = arith.constant 0 : i32
    return %c0_i32, %c0_i32_0 : i32, i32
  }
  func.func @transform_2(%arg0: i32) -> (i32, i32) {
    %c0_i32 = arith.constant 0 : i32
    %c0_i32_0 = arith.constant 0 : i32
    %c0_i32_1 = arith.constant 0 : i32
    return %c0_i32, %c0_i32_0 : i32, i32
  }
  func.func @transform_3(%arg0: i32) -> (i32, i32) {
    %c0_i32 = arith.constant 0 : i32
    %c0_i32_0 = arith.constant 0 : i32
    %c0_i32_1 = arith.constant 0 : i32
    return %c0_i32, %c0_i32_0 : i32, i32
  }
  func.func @transform_4(%arg0: i32) -> (i32, i32) {
    %c0_i32 = arith.constant 0 : i32
    %c0_i32_0 = arith.constant 0 : i32
    %c0_i32_1 = arith.constant 0 : i32
    return %c0_i32, %c0_i32_0 : i32, i32
  }
  func.func @transform_5(%arg0: i32) -> (i32, i32, i32, i32) {
    %c0_i32 = arith.constant 0 : i32
    %c0_i32_0 = arith.constant 0 : i32
    %c0_i32_1 = arith.constant 0 : i32
    %c0_i32_2 = arith.constant 0 : i32
    return %arg0, %c0_i32, %c0_i32_0, %c0_i32_1 : i32, i32, i32, i32
  }
  func.func @transform_6(%arg0: i32) -> (i32, i32, i32, i32) {
    %c0_i32 = arith.constant 0 : i32
    %c0_i32_0 = arith.constant 0 : i32
    %c0_i32_1 = arith.constant 0 : i32
    %c0_i32_2 = arith.constant 0 : i32
    return %arg0, %c0_i32, %c0_i32_0, %c0_i32_1 : i32, i32, i32, i32
  }
}

module attributes {stable_mosaic.version = 11 : i64} {
  func.func @_final_kernel(%arg0: i32, %arg1: memref<8x8xf32, #tpu.memory_space<vmem>>, %arg2: memref<8x8xf32, #tpu.memory_space<vmem>>, %arg3: memref<1x8xf32, #tpu.memory_space<vmem>>, %arg4: memref<8x8xf32, #tpu.memory_space<vmem>>, %arg5: memref<8x8xf32, #tpu.memory_space<vmem>>, %arg6: memref<1x8xf32, #tpu.memory_space<vmem>>, %arg7: memref<8x8xf32, #tpu.memory_space<vmem>>) attributes {dimension_semantics = [#tpu.dimension_semantics<parallel>], iteration_bounds = array<i64: 1>, scalar_prefetch = 0 : i64, scratch_operands = 0 : i64, tpu.core_type = #tpu.core_type<tc>, window_params = [{transform_indices = @transform_0, window_bounds = array<i64: 8, 8>}, {pipeline_mode = #tpu.pipeline_mode<synchronous>, transform_indices = @transform_1, window_bounds = array<i64: 8, 8>}, {pipeline_mode = #tpu.pipeline_mode<synchronous>, transform_indices = @transform_2, window_bounds = array<i64: 1, 8>}, {transform_indices = @transform_3, window_bounds = array<i64: 8, 8>}, {pipeline_mode = #tpu.pipeline_mode<synchronous>, transform_indices = @transform_4, window_bounds = array<i64: 8, 8>}, {pipeline_mode = #tpu.pipeline_mode<synchronous>, transform_indices = @transform_5, window_bounds = array<i64: 1, 8>}, {transform_indices = @transform_6, window_bounds = array<i64: 8, 8>}]} {
    %c0 = arith.constant 0 : index
    %c0_0 = arith.constant 0 : index
    %0 = vector.load %arg1[%c0, %c0_0] : memref<8x8xf32, #tpu.memory_space<vmem>>, vector<8x8xf32>
    %c0_1 = arith.constant 0 : index
    %c0_2 = arith.constant 0 : index
    %1 = vector.load %arg2[%c0_1, %c0_2] : memref<8x8xf32, #tpu.memory_space<vmem>>, vector<8x8xf32>
    %cst = arith.constant dense<0.000000e+00> : vector<8x8xf32>
    %2 = tpu.matmul %0, %1, %cst {dimension_numbers = #tpu.dot_dimension_numbers<[1], [0], [0], [1], [0, 0, 1, 1], [], []>} : vector<8x8xf32>, vector<8x8xf32>, vector<8x8xf32> -> vector<8x8xf32>
    %c0_3 = arith.constant 0 : index
    %c0_4 = arith.constant 0 : index
    %3 = vector.load %arg3[%c0_3, %c0_4] : memref<1x8xf32, #tpu.memory_space<vmem>>, vector<1x8xf32>
    %4 = vector.broadcast %3 : vector<1x8xf32> to vector<8x8xf32>
    %5 = arith.addf %2, %4 : vector<8x8xf32>
    %c0_5 = arith.constant 0 : index
    %c0_6 = arith.constant 0 : index
    %6 = vector.load %arg4[%c0_5, %c0_6] : memref<8x8xf32, #tpu.memory_space<vmem>>, vector<8x8xf32>
    %7 = arith.addf %5, %6 : vector<8x8xf32>
    %cst_7 = arith.constant 0.000000e+00 : f32
    %8 = vector.broadcast %cst_7 : f32 to vector<8x8xf32>
    %9 = arith.maximumf %7, %8 : vector<8x8xf32>
    %c0_8 = arith.constant 0 : index
    %c0_9 = arith.constant 0 : index
    %10 = vector.load %arg5[%c0_8, %c0_9] : memref<8x8xf32, #tpu.memory_space<vmem>>, vector<8x8xf32>
    %cst_10 = arith.constant dense<0.000000e+00> : vector<8x8xf32>
    %11 = tpu.matmul %9, %10, %cst_10 {dimension_numbers = #tpu.dot_dimension_numbers<[1], [0], [0], [1], [0, 0, 1, 1], [], []>} : vector<8x8xf32>, vector<8x8xf32>, vector<8x8xf32> -> vector<8x8xf32>
    %c0_11 = arith.constant 0 : index
    %c0_12 = arith.constant 0 : index
    %12 = vector.load %arg6[%c0_11, %c0_12] : memref<1x8xf32, #tpu.memory_space<vmem>>, vector<1x8xf32>
    %13 = vector.broadcast %12 : vector<1x8xf32> to vector<8x8xf32>
    %14 = arith.addf %11, %13 : vector<8x8xf32>
    %cst_13 = arith.constant 0.000000e+00 : f32
    %15 = vector.broadcast %cst_13 : f32 to vector<8x8xf32>
    %16 = arith.maximumf %14, %15 : vector<8x8xf32>
    %c0_14 = arith.constant 0 : index
    %c0_15 = arith.constant 0 : index
    %17 = vector.load %arg7[%c0_14, %c0_15] : memref<8x8xf32, #tpu.memory_space<vmem>>, vector<8x8xf32>
    tpu.vector_store %arg7[%c0_14, %c0_15], %16 {strides = array<i32>} : memref<8x8xf32, #tpu.memory_space<vmem>>, vector<8x8xf32>,
    return
  }
  func.func @transform_0(%arg0: i32) -> (i32, i32) {
    %c0_i32 = arith.constant 0 : i32
    %c0_i32_0 = arith.constant 0 : i32
    return %arg0, %c0_i32 : i32, i32
  }
  func.func @transform_1(%arg0: i32) -> (i32, i32) {
    %c0_i32 = arith.constant 0 : i32
    %c0_i32_0 = arith.constant 0 : i32
    %c0_i32_1 = arith.constant 0 : i32
    return %c0_i32, %c0_i32_0 : i32, i32
  }
  func.func @transform_2(%arg0: i32) -> (i32, i32) {
    %c0_i32 = arith.constant 0 : i32
    %c0_i32_0 = arith.constant 0 : i32
    %c0_i32_1 = arith.constant 0 : i32
    return %c0_i32, %c0_i32_0 : i32, i32
  }
  func.func @transform_3(%arg0: i32) -> (i32, i32) {
    %c0_i32 = arith.constant 0 : i32
    %c0_i32_0 = arith.constant 0 : i32
    return %arg0, %c0_i32 : i32, i32
  }
  func.func @transform_4(%arg0: i32) -> (i32, i32) {
    %c0_i32 = arith.constant 0 : i32
    %c0_i32_0 = arith.constant 0 : i32
    %c0_i32_1 = arith.constant 0 : i32
    return %c0_i32, %c0_i32_0 : i32, i32
  }
  func.func @transform_5(%arg0: i32) -> (i32, i32) {
    %c0_i32 = arith.constant 0 : i32
    %c0_i32_0 = arith.constant 0 : i32
    %c0_i32_1 = arith.constant 0 : i32
    return %c0_i32, %c0_i32_0 : i32, i32
  }
  func.func @transform_6(%arg0: i32) -> (i32, i32) {
    %c0_i32 = arith.constant 0 : i32
    %c0_i32_0 = arith.constant 0 : i32
    return %arg0, %c0_i32 : i32, i32
  }
}

module attributes {stable_mosaic.version = 11 : i64} {
  func.func @_skip_acc_kernel(%arg0: i32, %arg1: memref<8x8xf32, #tpu.memory_space<vmem>>, %arg2: memref<8x8xf32, #tpu.memory_space<vmem>>, %arg3: memref<1x8xf32, #tpu.memory_space<vmem>>, %arg4: memref<8x8xf32, #tpu.memory_space<vmem>>, %arg5: memref<8x8xf32, #tpu.memory_space<vmem>>) attributes {dimension_semantics = [#tpu.dimension_semantics<parallel>], iteration_bounds = array<i64: 1>, scalar_prefetch = 0 : i64, scratch_operands = 0 : i64, tpu.core_type = #tpu.core_type<tc>, window_params = [{transform_indices = @transform_0, window_bounds = array<i64: 8, 8>}, {pipeline_mode = #tpu.pipeline_mode<synchronous>, transform_indices = @transform_1, window_bounds = array<i64: 8, 8>}, {pipeline_mode = #tpu.pipeline_mode<synchronous>, transform_indices = @transform_2, window_bounds = array<i64: 1, 8>}, {transform_indices = @transform_3, window_bounds = array<i64: 8, 8>}, {transform_indices = @transform_4, window_bounds = array<i64: 8, 8>}]} {
    %c0 = arith.constant 0 : index
    %c0_0 = arith.constant 0 : index
    %0 = vector.load %arg1[%c0, %c0_0] : memref<8x8xf32, #tpu.memory_space<vmem>>, vector<8x8xf32>
    %c0_1 = arith.constant 0 : index
    %c0_2 = arith.constant 0 : index
    %1 = vector.load %arg2[%c0_1, %c0_2] : memref<8x8xf32, #tpu.memory_space<vmem>>, vector<8x8xf32>
    %cst = arith.constant dense<0.000000e+00> : vector<8x8xf32>
    %2 = tpu.matmul %0, %1, %cst {dimension_numbers = #tpu.dot_dimension_numbers<[1], [0], [0], [1], [0, 0, 1, 1], [], []>} : vector<8x8xf32>, vector<8x8xf32>, vector<8x8xf32> -> vector<8x8xf32>
    %c0_3 = arith.constant 0 : index
    %c0_4 = arith.constant 0 : index
    %3 = vector.load %arg3[%c0_3, %c0_4] : memref<1x8xf32, #tpu.memory_space<vmem>>, vector<1x8xf32>
    %4 = vector.broadcast %3 : vector<1x8xf32> to vector<8x8xf32>
    %5 = arith.addf %2, %4 : vector<8x8xf32>
    %c0_5 = arith.constant 0 : index
    %c0_6 = arith.constant 0 : index
    %6 = vector.load %arg4[%c0_5, %c0_6] : memref<8x8xf32, #tpu.memory_space<vmem>>, vector<8x8xf32>
    %7 = arith.addf %5, %6 : vector<8x8xf32>
    %c0_7 = arith.constant 0 : index
    %c0_8 = arith.constant 0 : index
    %8 = vector.load %arg5[%c0_7, %c0_8] : memref<8x8xf32, #tpu.memory_space<vmem>>, vector<8x8xf32>
    tpu.vector_store %arg5[%c0_7, %c0_8], %7 {strides = array<i32>} : memref<8x8xf32, #tpu.memory_space<vmem>>, vector<8x8xf32>,
    return
  }
  func.func @transform_0(%arg0: i32) -> (i32, i32) {
    %c0_i32 = arith.constant 0 : i32
    %c0_i32_0 = arith.constant 0 : i32
    return %arg0, %c0_i32 : i32, i32
  }
  func.func @transform_1(%arg0: i32) -> (i32, i32) {
    %c0_i32 = arith.constant 0 : i32
    %c0_i32_0 = arith.constant 0 : i32
    %c0_i32_1 = arith.constant 0 : i32
    return %c0_i32, %c0_i32_0 : i32, i32
  }
  func.func @transform_2(%arg0: i32) -> (i32, i32) {
    %c0_i32 = arith.constant 0 : i32
    %c0_i32_0 = arith.constant 0 : i32
    %c0_i32_1 = arith.constant 0 : i32
    return %c0_i32, %c0_i32_0 : i32, i32
  }
  func.func @transform_3(%arg0: i32) -> (i32, i32) {
    %c0_i32 = arith.constant 0 : i32
    %c0_i32_0 = arith.constant 0 : i32
    return %arg0, %c0_i32 : i32, i32
  }
  func.func @transform_4(%arg0: i32) -> (i32, i32) {
    %c0_i32 = arith.constant 0 : i32
    %c0_i32_0 = arith.constant 0 : i32
    return %arg0, %c0_i32 : i32, i32
  }
}

</mosaic_0001>

<llo_original>
// kernel: tcn_pallas.6
$region0: #{tcn_pallas.6}
  #allocation0 [shape = 'u32[]', space=smem, size = 0x4, offset = 0x4, fixed_abs, tag = 'smem constant byte address 0x4 - core index']
  #allocation1 [shape = 'u32[144,128]{1,0:T(1,128)}', space=vmem, size = 0x12000, scoped, tag = 'internal scratch']
  %s0 = inlined_call_operand.hbm [shape: f32[8,152], index: 0, kind: input, shape index: {}]
  %s1 = inlined_call_operand.hbm [shape: f32[152,8], index: 1, kind: input, shape index: {}]
  %s2 = inlined_call_operand.hbm [shape: f32[1,8], index: 2, kind: input, shape index: {}]
  %s3 = inlined_call_operand.hbm [shape: f32[8,8], index: 3, kind: output, shape index: {}]
  %s4 = sld [smem:[#allocation0]]
  $region34: #{tcn_pallas.6} parent=0
    _
  %s6 = ssub.s32 1, %s4
  %s7 = scalar_select 0, %s6, %s4
  $region1: #{tcn_pallas.6} parent=0
    #allocation2 [shape = 'u8[8192]{0}', space=vmem, size = 0x2000, scoped, tag = 'input window, operand 0, single buffered']
    #allocation3 [shape = 's32[1]{0}', space=sflag, size = 0x4, scoped, tag = 'scoped memory for tcn_pallas.6']
    #allocation4 [shape = 's32[1]{0}', space=sflag, size = 0x4, scoped, tag = 'scoped memory for tcn_pallas.6']
    #allocation5 [shape = 'u8[77824]{0}', space=vmem, size = 0x13000, scoped, tag = 'input window, operand 1, single buffered']
    #allocation6 [shape = 's32[1]{0}', space=sflag, size = 0x4, scoped, tag = 'scoped memory for tcn_pallas.6']
    #allocation7 [shape = 'u8[512]{0}', space=vmem, size = 0x400, scoped, tag = 'input window, operand 2, single buffered']
    #allocation8 [shape = 'u8[4096]{0}', space=vmem, size = 0x1000, scoped, tag = 'output window, operand 0, single buffered']
    %8 = vsyncpa [#allocation3], 0
    %9 = vsyncpa [#allocation6], 0
    %10 = vsyncpa [#allocation4], 0
    // Predicated region
    $region2: #{tcn_pallas.6} parent=1 // pred_check
      _
    $region3: #{tcn_pallas.6} parent=1 // pred_check_branch
      %12 = sbr.rel (0) target = $region5
    $region4: #{tcn_pallas.6} parent=1 // pred_region
      %s14 = ssub.s32 256, 256
      %15 = vsyncadd [#allocation3], %s14
      %s17 = sshll.u32 [#allocation2], 4
      %s18 = int_to_ptr.vmem [resolvable:$true] %s17
      %20 = dma.hbm_to_vmem [thread:$0]  %s0, 256, %s18, [#allocation3]
    $region5: #{tcn_pallas.6} parent=1 // pred_fallthru
      _
    // Predicated region
    $region6: #{tcn_pallas.6} parent=1 // pred_check
      _
    $region7: #{tcn_pallas.6} parent=1 // pred_check_branch
      %22 = sbr.rel (0) target = $region9
    $region8: #{tcn_pallas.6} parent=1 // pred_region
      %s24 = ssub.s32 2432, 2432
      %25 = vsyncadd [#allocation6], %s24
      %s26 = sshll.u32 [#allocation5], 4
      %s27 = int_to_ptr.vmem [resolvable:$true] %s26
      %32 = dma.hbm_to_vmem [thread:$0]  %s1, 2432, %s27, [#allocation6], 128, 128, 8
    $region9: #{tcn_pallas.6} parent=1 // pred_fallthru
      _
    // Predicated region
    $region10: #{tcn_pallas.6} parent=1 // pred_check
      _
    $region11: #{tcn_pallas.6} parent=1 // pred_check_branch
      %34 = sbr.rel (0) target = $region13
    $region12: #{tcn_pallas.6} parent=1 // pred_region
      %s36 = ssub.s32 16, 16
      %37 = vsyncadd [#allocation6], %s36
      %s39 = sshll.u32 [#allocation7], 4
      %s40 = int_to_ptr.vmem [resolvable:$true] %s39
      %42 = dma.hbm_to_vmem [thread:$0]  %s2, 16, %s40, [#allocation6]
    $region13: #{tcn_pallas.6} parent=1 // pred_fallthru
      _
    // Predicated region
    $region14: #{tcn_pallas.6} parent=1 // pred_check
      _
    $region15: #{tcn_pallas.6} parent=1 // pred_check_branch
      %44 = sbr.rel (0) target = $region17
    $region16: #{tcn_pallas.6} parent=1 // pred_region
      %45 = dma.done [#allocation3], 256
    $region17: #{tcn_pallas.6} parent=1 // pred_fallthru
      _
    // Predicated region
    $region18: #{tcn_pallas.6} parent=1 // pred_check
      _
    $region19: #{tcn_pallas.6} parent=1 // pred_check_branch
      %47 = sbr.rel (0) target = $region21
    $region20: #{tcn_pallas.6} parent=1 // pred_region
      %48 = dma.done [#allocation6], 2432
    $region21: #{tcn_pallas.6} parent=1 // pred_fallthru
      _
    // Predicated region
    $region22: #{tcn_pallas.6} parent=1 // pred_check
      _
    $region23: #{tcn_pallas.6} parent=1 // pred_check_branch
      %50 = sbr.rel (0) target = $region25
    $region24: #{tcn_pallas.6} parent=1 // pred_region
      %51 = dma.done [#allocation6], 16
    $region25: #{tcn_pallas.6} parent=1 // pred_fallthru
      _
    %v52 = vld [vmem:[#allocation2] sm:$0xff]
    %v53 = vld [vmem:[#allocation2 + $0x8] sm:$0xff]
    %v54 = vld [vmem:[#allocation5] sm:$0xff]
    %v55 = vld [vmem:[#allocation5 + $0x8] sm:$0xff]
    %v56 = vld [vmem:[#allocation5 + $0x10] sm:$0xff]
    %v57 = vld [vmem:[#allocation5 + $0x18] sm:$0xff]
    %v58 = vld [vmem:[#allocation5 + $0x20] sm:$0xff]
    %v59 = vld [vmem:[#allocation5 + $0x28] sm:$0xff]
    %v60 = vld [vmem:[#allocation5 + $0x30] sm:$0xff]
    %v61 = vld [vmem:[#allocation5 + $0x38] sm:$0xff]
    %v62 = vld [vmem:[#allocation5 + $0x40] sm:$0xff]
    %v63 = vld [vmem:[#allocation5 + $0x48] sm:$0xff]
    %v64 = vld [vmem:[#allocation5 + $0x50] sm:$0xff]
    %v65 = vld [vmem:[#allocation5 + $0x58] sm:$0xff]
    %v66 = vld [vmem:[#allocation5 + $0x60] sm:$0xff]
    %v67 = vld [vmem:[#allocation5 + $0x68] sm:$0xff]
    %v68 = vld [vmem:[#allocation5 + $0x70] sm:$0xff]
    %v69 = vld [vmem:[#allocation5 + $0x78] sm:$0xff]
    %v70 = vld [vmem:[#allocation5 + $0x80] sm:$0xff]
    %v71 = vld [vmem:[#allocation5 + $0x88] sm:$0xff]
    %v72 = vld [vmem:[#allocation5 + $0x90] sm:$0xff]
    %v73 = vld [vmem:[#allocation7] sm:$0x1]
    %v75 = vlaneseq
    %v76 = vshrl.u32 %v75, 7
    %v77 = vsub.s32 0, %v76
    %v78 = vrot.slane %v73, %v77
    %vm80 = vcmask 195584
    %v82 = vsel %vm80, %v53, 0
    %84 = vmatprep.subr.mxu0 0.0
    %85 = vmatpush1.msra.mxu0 %v54
    %86 = vmatprep.subr.mxu0 0.0
    %87 = vmatpush1.msra.mxu0 %v55
    %88 = vmatprep.subr.mxu0 0.0
    %89 = vmatpush1.msra.mxu0 %v56
    %90 = vmatprep.subr.mxu0 0.0
    %91 = vmatpush1.msra.mxu0 %v57
    %92 = vmatprep.subr.mxu0 0.0
    %93 = vmatpush1.msra.mxu0 %v58
    %94 = vmatprep.subr.mxu0 0.0
    %95 = vmatpush1.msra.mxu0 %v59
    %96 = vmatprep.subr.mxu0 0.0
    %97 = vmatpush1.msra.mxu0 %v60
    %98 = vmatprep.subr.mxu0 0.0
    %99 = vmatpush1.msra.mxu0 %v61
    %100 = vmatprep.subr.mxu0 0.0
    %101 = vmatpush1.msra.mxu0 %v62
    %102 = vmatprep.subr.mxu0 0.0
    %103 = vmatpush1.msra.mxu0 %v63
    %104 = vmatprep.subr.mxu0 0.0
    %105 = vmatpush1.msra.mxu0 %v64
    %106 = vmatprep.subr.mxu0 0.0
    %107 = vmatpush1.msra.mxu0 %v65
    %108 = vmatprep.subr.mxu0 0.0
    %109 = vmatpush1.msra.mxu0 %v66
    %110 = vmatprep.subr.mxu0 0.0
    %111 = vmatpush1.msra.mxu0 %v67
    %112 = vmatprep.subr.mxu0 0.0
    %113 = vmatpush1.msra.mxu0 %v68
    %114 = vmatprep.subr.mxu0 0.0
    %115 = vmatpush1.msra.mxu0 %v69
    %116 = vmatprep.subr.mxu0 0.0
    %117 = vmatpush1.msra.mxu0 %v70
    %118 = vmatprep.subr.mxu0 0.0
    %119 = vmatpush1.msra.mxu0 %v71
    %120 = vmatprep.subr.mxu0 0.0
    %121 = vmatpush1.msra.mxu0 %v72
    %122 = vmatprep.subr.mxu0 0.0
    %123 = vmatpush1.msra.mxu0 0.0
    %124 = vmatprep.subr.mxu0 0.0
    %125 = vmatpush1.msra.mxu0 0.0
    %126 = vmatprep.subr.mxu0 0.0
    %127 = vmatpush1.msra.mxu0 0.0
    %128 = vmatprep.subr.mxu0 0.0
    %129 = vmatpush1.msra.mxu0 0.0
    %130 = vmatprep.subr.mxu0 0.0
    %131 = vmatpush1.msra.mxu0 0.0
    %132 = vmatprep.subr.mxu0 0.0
    %133 = vmatpush1.msra.mxu0 0.0
    %134 = vmatprep.subr.mxu0 0.0
    %135 = vmatpush1.msra.mxu0 0.0
    %136 = vmatprep.subr.mxu0 0.0
    %137 = vmatpush1.msra.mxu0 0.0
    %138 = vmatprep.subr.mxu0 0.0
    %139 = vmatpush1.msra.mxu0 0.0
    %140 = vmatprep.subr.mxu0 0.0
    %141 = vmatpush1.msra.mxu0 0.0
    %142 = vmatprep.subr.mxu0 0.0
    %143 = vmatpush1.msra.mxu0 0.0
    %144 = vmatprep.subr.mxu0 0.0
    %145 = vmatpush1.msra.mxu0 0.0
    %146 = vmatprep.subr.mxu0 0.0
    %147 = vmatpush1.msra.mxu0 0.0
    %148 = vmatprep.mubr.f32.mxu0 %v82
    %149 = vmatmul.mubr.f32.gmra.mrb[0].mxu0 %v52
    %v150 = vpop.f32.mrb[0].mxu0
    %v151 = vadd.f32 %v78, %v150
    %v152 = vpop.f32.mrb[0].mxu0
    %153 = vdwg.mxu0
    %vm154 = vcmask 64512
    %155 = vst.msk [vmem:[#allocation8] sm:$0xff] %vm154, %v151
    // Predicated region
    $region26: #{tcn_pallas.6} parent=1 // pred_check
      _
    $region27: #{tcn_pallas.6} parent=1 // pred_check_branch
      %157 = sbr.rel (0) target = $region29
    $region28: #{tcn_pallas.6} parent=1 // pred_region
      %s159 = ssub.s32 128, 128
      %160 = vsyncadd [#allocation4], %s159
      %s162 = sshll.u32 [#allocation8], 4
      %s163 = int_to_ptr.vmem [resolvable:$true] %s162
      %165 = dma.vmem_to_hbm [thread:$0]  %s163, 128, %s3, [#allocation4]
    $region29: #{tcn_pallas.6} parent=1 // pred_fallthru
      _
    // Predicated region
    $region30: #{tcn_pallas.6} parent=1 // pred_check
      _
    $region31: #{tcn_pallas.6} parent=1 // pred_check_branch
      %167 = sbr.rel (0) target = $region33
    $region32: #{tcn_pallas.6} parent=1 // pred_region
      %168 = dma.done [#allocation4], 128
    $region33: #{tcn_pallas.6} parent=1 // pred_fallthru
      _
    %169 = vsyncpa [#allocation3], 1
    %170 = vsyncpa [#allocation6], 1
    %171 = vsyncpa [#allocation4], 1

// kernel: tcn_pallas.8
$region0: #{tcn_pallas.8}
  #allocation0 [shape = 'u32[]', space=smem, size = 0x4, offset = 0x4, fixed_abs, tag = 'smem constant byte address 0x4 - core index']
  #allocation1 [shape = 'u32[144,128]{1,0:T(1,128)}', space=vmem, size = 0x12000, scoped, tag = 'internal scratch']
  %s0 = inlined_call_operand.hbm [shape: f32[8,104], index: 0, kind: input, shape index: {}]
  %s1 = inlined_call_operand.hbm [shape: f32[104,8], index: 1, kind: input, shape index: {}]
  %s2 = inlined_call_operand.hbm [shape: f32[1,8], index: 2, kind: input, shape index: {}]
  %s3 = inlined_call_operand.hbm [shape: f32[8,8], index: 3, kind: input, shape index: {}, may-alias: {3,4}]
  %s4 = inlined_call_operand.hbm [shape: f32[8,8], index: 4, kind: output, shape index: {}, may-alias: {3,4}]
  %s5 = sld [smem:[#allocation0]]
  $region42: #{tcn_pallas.8} parent=0
    _
  %s7 = ssub.s32 1, %s5
  %s8 = scalar_select 0, %s7, %s5
  $region1: #{tcn_pallas.8} parent=0
    #allocation2 [shape = 'u8[4096]{0}', space=vmem, size = 0x1000, scoped, tag = 'input window, operand 0, single buffered']
    #allocation3 [shape = 's32[1]{0}', space=sflag, size = 0x4, scoped, tag = 'scoped memory for tcn_pallas.8']
    #allocation4 [shape = 's32[1]{0}', space=sflag, size = 0x4, scoped, tag = 'scoped memory for tcn_pallas.8']
    #allocation5 [shape = 'u8[53248]{0}', space=vmem, size = 0xd000, scoped, tag = 'input window, operand 1, single buffered']
    #allocation6 [shape = 's32[1]{0}', space=sflag, size = 0x4, scoped, tag = 'scoped memory for tcn_pallas.8']
    #allocation7 [shape = 'u8[512]{0}', space=vmem, size = 0x400, scoped, tag = 'input window, operand 2, single buffered']
    #allocation8 [shape = 'u8[4096]{0}', space=vmem, size = 0x1000, scoped, tag = 'input window, operand 3, single buffered']
    #allocation9 [shape = 's32[1]{0}', space=sflag, size = 0x4, scoped, tag = 'scoped memory for tcn_pallas.8']
    #allocation10 [shape = 'u8[4096]{0}', space=vmem, size = 0x1000, scoped, tag = 'output window, operand 0, single buffered']
    %9 = vsyncpa [#allocation3], 0
    %10 = vsyncpa [#allocation6], 0
    %11 = vsyncpa [#allocation9], 0
    %12 = vsyncpa [#allocation4], 0
    // Predicated region
    $region2: #{tcn_pallas.8} parent=1 // pred_check
      _
    $region3: #{tcn_pallas.8} parent=1 // pred_check_branch
      %14 = sbr.rel (0) target = $region5
    $region4: #{tcn_pallas.8} parent=1 // pred_region
      %s16 = ssub.s32 128, 128
      %17 = vsyncadd [#allocation3], %s16
      %s19 = sshll.u32 [#allocation2], 4
      %s20 = int_to_ptr.vmem [resolvable:$true] %s19
      %22 = dma.hbm_to_vmem [thread:$0]  %s0, 128, %s20, [#allocation3]
    $region5: #{tcn_pallas.8} parent=1 // pred_fallthru
      _
    // Predicated region
    $region6: #{tcn_pallas.8} parent=1 // pred_check
      _
    $region7: #{tcn_pallas.8} parent=1 // pred_check_branch
      %24 = sbr.rel (0) target = $region9
    $region8: #{tcn_pallas.8} parent=1 // pred_region
      %s26 = ssub.s32 1664, 1664
      %27 = vsyncadd [#allocation6], %s26
      %s28 = sshll.u32 [#allocation5], 4
      %s29 = int_to_ptr.vmem [resolvable:$true] %s28
      %34 = dma.hbm_to_vmem [thread:$0]  %s1, 1664, %s29, [#allocation6], 128, 128, 8
    $region9: #{tcn_pallas.8} parent=1 // pred_fallthru
      _
    // Predicated region
    $region10: #{tcn_pallas.8} parent=1 // pred_check
      _
    $region11: #{tcn_pallas.8} parent=1 // pred_check_branch
      %36 = sbr.rel (0) target = $region13
    $region12: #{tcn_pallas.8} parent=1 // pred_region
      %s38 = ssub.s32 16, 16
      %39 = vsyncadd [#allocation6], %s38
      %s41 = sshll.u32 [#allocation7], 4
      %s42 = int_to_ptr.vmem [resolvable:$true] %s41
      %44 = dma.hbm_to_vmem [thread:$0]  %s2, 16, %s42, [#allocation6]
    $region13: #{tcn_pallas.8} parent=1 // pred_fallthru
      _
    // Predicated region
    $region14: #{tcn_pallas.8} parent=1 // pred_check
      _
    $region15: #{tcn_pallas.8} parent=1 // pred_check_branch
      %46 = sbr.rel (0) target = $region17
    $region16: #{tcn_pallas.8} parent=1 // pred_region
      %s48 = ssub.s32 128, 128
      %49 = vsyncadd [#allocation9], %s48
      %s51 = sshll.u32 [#allocation8], 4
      %s52 = int_to_ptr.vmem [resolvable:$true] %s51
      %54 = dma.hbm_to_vmem [thread:$0]  %s3, 128, %s52, [#allocation9]
    $region17: #{tcn_pallas.8} parent=1 // pred_fallthru
      _
    // Predicated region
    $region18: #{tcn_pallas.8} parent=1 // pred_check
      _
    $region19: #{tcn_pallas.8} parent=1 // pred_check_branch
      %56 = sbr.rel (0) target = $region21
    $region20: #{tcn_pallas.8} parent=1 // pred_region
      %57 = dma.done [#allocation3], 128
    $region21: #{tcn_pallas.8} parent=1 // pred_fallthru
      _
    // Predicated region
    $region22: #{tcn_pallas.8} parent=1 // pred_check
      _
    $region23: #{tcn_pallas.8} parent=1 // pred_check_branch
      %59 = sbr.rel (0) target = $region25
    $region24: #{tcn_pallas.8} parent=1 // pred_region
      %60 = dma.done [#allocation6], 1664
    $region25: #{tcn_pallas.8} parent=1 // pred_fallthru
      _
    // Predicated region
    $region26: #{tcn_pallas.8} parent=1 // pred_check
      _
    $region27: #{tcn_pallas.8} parent=1 // pred_check_branch
      %62 = sbr.rel (0) target = $region29
    $region28: #{tcn_pallas.8} parent=1 // pred_region
      %63 = dma.done [#allocation6], 16
    $region29: #{tcn_pallas.8} parent=1 // pred_fallthru
      _
    // Predicated region
    $region30: #{tcn_pallas.8} parent=1 // pred_check
      _
    $region31: #{tcn_pallas.8} parent=1 // pred_check_branch
      %65 = sbr.rel (0) target = $region33
    $region32: #{tcn_pallas.8} parent=1 // pred_region
      %66 = dma.done [#allocation9], 128
    $region33: #{tcn_pallas.8} parent=1 // pred_fallthru
      _
    %v67 = vld [vmem:[#allocation2] sm:$0xff]
    %v68 = vld [vmem:[#allocation5] sm:$0xff]
    %v69 = vld [vmem:[#allocation5 + $0x8] sm:$0xff]
    %v70 = vld [vmem:[#allocation5 + $0x10] sm:$0xff]
    %v71 = vld [vmem:[#allocation5 + $0x18] sm:$0xff]
    %v72 = vld [vmem:[#allocation5 + $0x20] sm:$0xff]
    %v73 = vld [vmem:[#allocation5 + $0x28] sm:$0xff]
    %v74 = vld [vmem:[#allocation5 + $0x30] sm:$0xff]
    %v75 = vld [vmem:[#allocation5 + $0x38] sm:$0xff]
    %v76 = vld [vmem:[#allocation5 + $0x40] sm:$0xff]
    %v77 = vld [vmem:[#allocation5 + $0x48] sm:$0xff]
    %v78 = vld [vmem:[#allocation5 + $0x50] sm:$0xff]
    %v79 = vld [vmem:[#allocation5 + $0x58] sm:$0xff]
    %v80 = vld [vmem:[#allocation5 + $0x60] sm:$0xff]
    %v81 = vld [vmem:[#allocation7] sm:$0x1]
    %v83 = vlaneseq
    %v84 = vshrl.u32 %v83, 7
    %v85 = vsub.s32 0, %v84
    %v86 = vrot.slane %v81, %v85
    %vm88 = vcmask 850944
    %v90 = vsel %vm88, %v67, 0
    %92 = vmatprep.subr.mxu0 0.0
    %93 = vmatpush1.msra.mxu0 %v68
    %94 = vmatprep.subr.mxu0 0.0
    %95 = vmatpush1.msra.mxu0 %v69
    %96 = vmatprep.subr.mxu0 0.0
    %97 = vmatpush1.msra.mxu0 %v70
    %98 = vmatprep.subr.mxu0 0.0
    %99 = vmatpush1.msra.mxu0 %v71
    %100 = vmatprep.subr.mxu0 0.0
    %101 = vmatpush1.msra.mxu0 %v72
    %102 = vmatprep.subr.mxu0 0.0
    %103 = vmatpush1.msra.mxu0 %v73
    %104 = vmatprep.subr.mxu0 0.0
    %105 = vmatpush1.msra.mxu0 %v74
    %106 = vmatprep.subr.mxu0 0.0
    %107 = vmatpush1.msra.mxu0 %v75
    %108 = vmatprep.subr.mxu0 0.0
    %109 = vmatpush1.msra.mxu0 %v76
    %110 = vmatprep.subr.mxu0 0.0
    %111 = vmatpush1.msra.mxu0 %v77
    %112 = vmatprep.subr.mxu0 0.0
    %113 = vmatpush1.msra.mxu0 %v78
    %114 = vmatprep.subr.mxu0 0.0
    %115 = vmatpush1.msra.mxu0 %v79
    %116 = vmatprep.subr.mxu0 0.0
    %117 = vmatpush1.msra.mxu0 %v80
    %118 = vmatprep.subr.mxu0 0.0
    %119 = vmatpush1.msra.mxu0 0.0
    %120 = vmatprep.subr.mxu0 0.0
    %121 = vmatpush1.msra.mxu0 0.0
    %122 = vmatprep.subr.mxu0 0.0
    %123 = vmatpush1.msra.mxu0 0.0
    %124 = vmatprep.subr.mxu0 0.0
    %125 = vmatpush1.msra.mxu0 0.0
    %126 = vmatprep.subr.mxu0 0.0
    %127 = vmatpush1.msra.mxu0 0.0
    %128 = vmatprep.subr.mxu0 0.0
    %129 = vmatpush1.msra.mxu0 0.0
    %130 = vmatprep.subr.mxu0 0.0
    %131 = vmatpush1.msra.mxu0 0.0
    %132 = vmatprep.subr.mxu0 0.0
    %133 = vmatpush1.msra.mxu0 0.0
    %134 = vmatprep.subr.mxu0 0.0
    %135 = vmatpush1.msra.mxu0 0.0
    %136 = vmatprep.subr.mxu0 0.0
    %137 = vmatpush1.msra.mxu0 0.0
    %138 = vmatprep.subr.mxu0 0.0
    %139 = vmatpush1.msra.mxu0 0.0
    %140 = vmatprep.subr.mxu0 0.0
    %141 = vmatpush1.msra.mxu0 0.0
    %142 = vmatprep.subr.mxu0 0.0
    %143 = vmatpush1.msra.mxu0 0.0
    %144 = vmatprep.subr.mxu0 0.0
    %145 = vmatpush1.msra.mxu0 0.0
    %146 = vmatprep.subr.mxu0 0.0
    %147 = vmatpush1.msra.mxu0 0.0
    %148 = vmatprep.subr.mxu0 0.0
    %149 = vmatpush1.msra.mxu0 0.0
    %150 = vmatprep.subr.mxu0 0.0
    %151 = vmatpush1.msra.mxu0 0.0
    %152 = vmatprep.subr.mxu0 0.0
    %153 = vmatpush1.msra.mxu0 0.0
    %154 = vmatprep.subr.mxu0 0.0
    %155 = vmatpush1.msra.mxu0 0.0
    %156 = vmatprep.mubr.f32.mxu0 0.0
    %157 = vmatmul.mubr.f32.gmra.mrb[0].mxu0 %v90
    %v158 = vpop.f32.mrb[0].mxu0
    %v159 = vadd.f32 %v86, %v158
    %v160 = vpop.f32.mrb[0].mxu0
    %161 = vdwg.mxu0
    %v162 = vld [vmem:[#allocation8] sm:$0xff]
    %v163 = vadd.f32 %v159, %v162
    %vm164 = vcmask 64512
    %165 = vst.msk [vmem:[#allocation10] sm:$0xff] %vm164, %v163
    // Predicated region
    $region34: #{tcn_pallas.8} parent=1 // pred_check
      _
    $region35: #{tcn_pallas.8} parent=1 // pred_check_branch
      %167 = sbr.rel (0) target = $region37
    $region36: #{tcn_pallas.8} parent=1 // pred_region
      %s169 = ssub.s32 128, 128
      %170 = vsyncadd [#allocation4], %s169
      %s172 = sshll.u32 [#allocation10], 4
      %s173 = int_to_ptr.vmem [resolvable:$true] %s172
      %175 = dma.vmem_to_hbm [thread:$0]  %s173, 128, %s4, [#allocation4]
    $region37: #{tcn_pallas.8} parent=1 // pred_fallthru
      _
    // Predicated region
    $region38: #{tcn_pallas.8} parent=1 // pred_check
      _
    $region39: #{tcn_pallas.8} parent=1 // pred_check_branch
      %177 = sbr.rel (0) target = $region41
    $region40: #{tcn_pallas.8} parent=1 // pred_region
      %178 = dma.done [#allocation4], 128
    $region41: #{tcn_pallas.8} parent=1 // pred_fallthru
      _
    %179 = vsyncpa [#allocation3], 1
    %180 = vsyncpa [#allocation6], 1
    %181 = vsyncpa [#allocation9], 1
    %182 = vsyncpa [#allocation4], 1

// kernel: tcn_pallas.9
$region0: #{tcn_pallas.9}
  #allocation0 [shape = 'u32[]', space=smem, size = 0x4, offset = 0x4, fixed_abs, tag = 'smem constant byte address 0x4 - core index']
  #allocation1 [shape = 'u32[144,128]{1,0:T(1,128)}', space=vmem, size = 0x12000, scoped, tag = 'internal scratch']
  #allocation2 [shape = 'f32[4,56]{1,0:T(4,128)}', space=vmem, size = 0x800, scoped, tag = 'scratch operand']
  %s0 = inlined_call_operand.hbm [shape: f32[2,4,13,8], index: 0, kind: input, shape index: {}]
  %s1 = inlined_call_operand.hbm [shape: f32[56,16], index: 1, kind: input, shape index: {}]
  %s2 = inlined_call_operand.hbm [shape: f32[1,16], index: 2, kind: input, shape index: {}]
  %s3 = inlined_call_operand.hbm [shape: f32[8,8], index: 3, kind: input, shape index: {}]
  %s4 = inlined_call_operand.hbm [shape: f32[1,8], index: 4, kind: input, shape index: {}]
  %s5 = inlined_call_operand.hbm [shape: f32[2,4,1,8], index: 5, kind: output, shape index: {0}]
  %s6 = inlined_call_operand.hbm [shape: f32[2,4,1,8], index: 6, kind: output, shape index: {1}]
  %7 = xla_tuple %s5, %s6
  %s8 = sld [smem:[#allocation0]]
  $region81: #{tcn_pallas.9} parent=0
    _
  %s10 = ssub.s32 1, %s8
  %s11 = scalar_select 0, %s10, %s8
  $region1: #{tcn_pallas.9} parent=0
    #allocation3 [shape = 'u8[65536]{0}', space=vmem, size = 0x10000, scoped, tag = 'input window, operand 0']
    #allocation4 [shape = 's32[2]{0}', space=sflag, size = 0x8, scoped, tag = 'scoped memory for tcn_pallas.9']
    #allocation5 [shape = 's32[2]{0}', space=sflag, size = 0x8, scoped, tag = 'scoped memory for tcn_pallas.9']
    #allocation6 [shape = 'u8[28672]{0}', space=vmem, size = 0x7000, scoped, tag = 'input window, operand 1, single buffered']
    #allocation7 [shape = 's32[1]{0}', space=sflag, size = 0x4, scoped, tag = 'scoped memory for tcn_pallas.9']
    #allocation8 [shape = 'u8[512]{0}', space=vmem, size = 0x400, scoped, tag = 'input window, operand 2, single buffered']
    #allocation9 [shape = 'u8[4096]{0}', space=vmem, size = 0x1000, scoped, tag = 'input window, operand 3, single buffered']
    #allocation10 [shape = 's32[1]{0}', space=sflag, size = 0x4, scoped, tag = 'scoped memory for tcn_pallas.9']
    #allocation11 [shape = 'u8[512]{0}', space=vmem, size = 0x400, scoped, tag = 'input window, operand 4, single buffered']
    #allocation12 [shape = 'u8[4096]{0}', space=vmem, size = 0x1000, scoped, tag = 'output window, operand 0']
    #allocation13 [shape = 'u8[4096]{0}', space=vmem, size = 0x1000, scoped, tag = 'output window, operand 1']
    #allocation14 [shape = 's32[2]{0}', space=sflag, size = 0x8, scoped, tag = 'scoped memory for tcn_pallas.9']
    %12 = vsyncpa [#allocation4], 0
    %s13 = scalar_lea.sflag [#allocation4], 1
    %14 = vsyncpa %s13, 0
    %15 = vsyncpa [#allocation7], 0
    %16 = vsyncpa [#allocation10], 0
    %17 = vsyncpa [#allocation5], 0
    %s18 = scalar_lea.sflag [#allocation5], 1
    %19 = vsyncpa %s18, 0
    %20 = vsyncpa [#allocation14], 0
    %s21 = scalar_lea.sflag [#allocation14], 1
    %22 = vsyncpa %s21, 0
    loop: start=0, step=1, limit=4
    $region2: #{tcn_pallas.9} parent=1 // loop_pre_header
      _
    $region3: #{tcn_pallas.9} parent=1 // loop_header
      %s24 = sphi 0, %s28
      %p25 = scmp.ge.s32.totalorder %s24, 4
      %s34 = sphi 0, %s36
      %s37 = sphi 0, %s34
      %s38 = sphi 0, %s37
      %s54 = sphi 0, %s38
      %s58 = sphi 0, %s58
      %s60 = sphi 0, %s58
      %s61 = sphi 0, %s60
      %s75 = sphi 0, %s61
      %s79 = sphi 0, %s79
      %s81 = sphi 0, %s79
      %s82 = sphi 0, %s81
      %s96 = sphi 0, %s82
      %s100 = sphi 0, %s100
      %s102 = sphi 0, %s100
      %s103 = sphi 0, %s102
      %s117 = sphi 0, %s103
      %s121 = sphi 0, %s121
      %s123 = sphi 0, %s121
      %s124 = sphi 0, %s123
      %s138 = sphi 0, %s124
      %s144 = sphi 0, %s146
      %s147 = sphi 0, %s144
      %s148 = sphi 0, %s147
      %s164 = sphi 0, %s148
      %s170 = sphi 0, %s172
      %s173 = sphi 0, %s170
      %s174 = sphi 0, %s173
      %s190 = sphi 0, %s174
    $region4: #{tcn_pallas.9} parent=1 // loop_header_branch
      %27 = sbr.rel (%p25) target = $region8
    $region5: #{tcn_pallas.9} parent=1 // loop_body
      %s29 = ssub.s32 %s24, 1
      %s30 = ssub.s32 %s24, 2
      %s31 = sadd.s32 %s24, 1
      %s32 = ssub.s32 %s24, %s31
      %p33 = scmp.eq.s32.totalorder %s32, 0
      %s35 = sadd.s32 %s34, 1
      %s36 = scalar_select %p33, %s34, %s35
      %p39 = pneg %p33
      %p40 = scmp.eq.s32.totalorder %s24, 1
      %p41 = por %p39, %p40
      %p42 = scmp.ne.s32.totalorder %s34, %s37
      %p43 = scmp.eq.s32.totalorder %s24, 0
      %p44 = por %p42, %p43
      %p45 = scmp.ne.s32.totalorder %s34, %s37
      %p46 = scmp.eq.s32.totalorder %s29, 1
      %p47 = por %p45, %p46
      %p48 = scmp.ne.s32.totalorder %s37, %s38
      %p49 = scmp.eq.s32.totalorder %s29, 0
      %p50 = por %p48, %p49
      %p51 = scmp.ne.s32.totalorder %s37, %s38
      %p52 = scmp.eq.s32.totalorder %s30, 1
      %p53 = por %p51, %p52
      %p55 = scmp.ne.s32.totalorder %s38, %s54
      %p56 = scmp.eq.s32.totalorder %s30, 0
      %p57 = por %p55, %p56
      %s59 = sadd.s32 %s58, 1
      %p62 = scmp.eq.s32.totalorder %s24, 1
      %p63 = scmp.ne.s32.totalorder %s58, %s60
      %p64 = scmp.eq.s32.totalorder %s24, 0
      %p65 = por %p63, %p64
      %p66 = scmp.ne.s32.totalorder %s58, %s60
      %p67 = scmp.eq.s32.totalorder %s29, 1
      %p68 = por %p66, %p67
      %p69 = scmp.ne.s32.totalorder %s60, %s61
      %p70 = scmp.eq.s32.totalorder %s29, 0
      %p71 = por %p69, %p70
      %p72 = scmp.ne.s32.totalorder %s60, %s61
      %p73 = scmp.eq.s32.totalorder %s30, 1
      %p74 = por %p72, %p73
      %p76 = scmp.ne.s32.totalorder %s61, %s75
      %p77 = scmp.eq.s32.totalorder %s30, 0
      %p78 = por %p76, %p77
      %s80 = sadd.s32 %s79, 1
      %p83 = scmp.eq.s32.totalorder %s24, 1
      %p84 = scmp.ne.s32.totalorder %s79, %s81
      %p85 = scmp.eq.s32.totalorder %s24, 0
      %p86 = por %p84, %p85
      %p87 = scmp.ne.s32.totalorder %s79, %s81
      %p88 = scmp.eq.s32.totalorder %s29, 1
      %p89 = por %p87, %p88
      %p90 = scmp.ne.s32.totalorder %s81, %s82
      %p91 = scmp.eq.s32.totalorder %s29, 0
      %p92 = por %p90, %p91
      %p93 = scmp.ne.s32.totalorder %s81, %s82
      %p94 = scmp.eq.s32.totalorder %s30, 1
      %p95 = por %p93, %p94
      %p97 = scmp.ne.s32.totalorder %s82, %s96
      %p98 = scmp.eq.s32.totalorder %s30, 0
      %p99 = por %p97, %p98
      %s101 = sadd.s32 %s100, 1
      %p104 = scmp.eq.s32.totalorder %s24, 1
      %p105 = scmp.ne.s32.totalorder %s100, %s102
      %p106 = scmp.eq.s32.totalorder %s24, 0
      %p107 = por %p105, %p106
      %p108 = scmp.ne.s32.totalorder %s100, %s102
      %p109 = scmp.eq.s32.totalorder %s29, 1
      %p110 = por %p108, %p109
      %p111 = scmp.ne.s32.totalorder %s102, %s103
      %p112 = scmp.eq.s32.totalorder %s29, 0
      %p113 = por %p111, %p112
      %p114 = scmp.ne.s32.totalorder %s102, %s103
      %p115 = scmp.eq.s32.totalorder %s30, 1
      %p116 = por %p114, %p115
      %p118 = scmp.ne.s32.totalorder %s103, %s117
      %p119 = scmp.eq.s32.totalorder %s30, 0
      %p120 = por %p118, %p119
      %s122 = sadd.s32 %s121, 1
      %p125 = scmp.eq.s32.totalorder %s24, 1
      %p126 = scmp.ne.s32.totalorder %s121, %s123
      %p127 = scmp.eq.s32.totalorder %s24, 0
      %p128 = por %p126, %p127
      %p129 = scmp.ne.s32.totalorder %s121, %s123
      %p130 = scmp.eq.s32.totalorder %s29, 1
      %p131 = por %p129, %p130
      %p132 = scmp.ne.s32.totalorder %s123, %s124
      %p133 = scmp.eq.s32.totalorder %s29, 0
      %p134 = por %p132, %p133
      %p135 = scmp.ne.s32.totalorder %s123, %s124
      %p136 = scmp.eq.s32.totalorder %s30, 1
      %p137 = por %p135, %p136
      %p139 = scmp.ne.s32.totalorder %s124, %s138
      %p140 = scmp.eq.s32.totalorder %s30, 0
      %p141 = por %p139, %p140
      %s142 = ssub.s32 %s24, %s31
      %p143 = scmp.eq.s32.totalorder %s142, 0
      %s145 = sadd.s32 %s144, 1
      %s146 = scalar_select %p143, %s144, %s145
      %p149 = pneg %p143
      %p150 = scmp.eq.s32.totalorder %s24, 1
      %p151 = por %p149, %p150
      %p152 = scmp.ne.s32.totalorder %s144, %s147
      %p153 = scmp.eq.s32.totalorder %s24, 0
      %p154 = por %p152, %p153
      %p155 = scmp.ne.s32.totalorder %s144, %s147
      %p156 = scmp.eq.s32.totalorder %s29, 1
      %p157 = por %p155, %p156
      %p158 = scmp.ne.s32.totalorder %s147, %s148
      %p159 = scmp.eq.s32.totalorder %s29, 0
      %p160 = por %p158, %p159
      %p161 = scmp.ne.s32.totalorder %s147, %s148
      %p162 = scmp.eq.s32.totalorder %s30, 1
      %p163 = por %p161, %p162
      %p165 = scmp.ne.s32.totalorder %s148, %s164
      %p166 = scmp.eq.s32.totalorder %s30, 0
      %p167 = por %p165, %p166
      %s168 = ssub.s32 %s24, %s31
      %p169 = scmp.eq.s32.totalorder %s168, 0
      %s171 = sadd.s32 %s170, 1
      %s172 = scalar_select %p169, %s170, %s171
      %p175 = pneg %p169
      %p176 = scmp.eq.s32.totalorder %s24, 1
      %p177 = por %p175, %p176
      %p178 = scmp.ne.s32.totalorder %s170, %s173
      %p179 = scmp.eq.s32.totalorder %s24, 0
      %p180 = por %p178, %p179
      %p181 = scmp.ne.s32.totalorder %s170, %s173
      %p182 = scmp.eq.s32.totalorder %s29, 1
      %p183 = por %p181, %p182
      %p184 = scmp.ne.s32.totalorder %s173, %s174
      %p185 = scmp.eq.s32.totalorder %s29, 0
      %p186 = por %p184, %p185
      %p187 = scmp.ne.s32.totalorder %s173, %s174
      %p188 = scmp.eq.s32.totalorder %s30, 1
      %p189 = por %p187, %p188
      %p191 = scmp.ne.s32.totalorder %s174, %s190
      %p192 = scmp.eq.s32.totalorder %s30, 0
      %p193 = por %p191, %p192
      %p194 = scmp.le.s32.totalorder 1, %s24
      %p195 = scmp.lt.s32.totalorder %s24, 3
      %p196 = pnand %p194, %p195
      %p197 = pneg %p196
      // Predicated region
      $region9: #{tcn_pallas.9} parent=5 // pred_check
        _
      $region10: #{tcn_pallas.9} parent=5 // pred_check_branch
        %199 = sbr.rel (%p196) target = $region12
      $region11: #{tcn_pallas.9} parent=5 // pred_region
        %s200 = ssub.s32 %s24, 1
        // Predicated region
        $region13: #{tcn_pallas.9} parent=11 // pred_check
          %p201 = pneg %p71
        $region14: #{tcn_pallas.9} parent=11 // pred_check_branch
          %203 = sbr.rel (%p201) target = $region16
        $region15: #{tcn_pallas.9} parent=11 // pred_region
          %s205 = ssub.s32 896, 896
          %206 = vsyncadd [#allocation7], %s205
          %s207 = sshll.u32 [#allocation6], 4
          %s208 = int_to_ptr.vmem [resolvable:$true] %s207
          %213 = dma.hbm_to_vmem [thread:$0]  %s1, 896, %s208, [#allocation7], 128, 128, 8
        $region16: #{tcn_pallas.9} parent=11 // pred_fallthru
          _
        // Predicated region
        $region17: #{tcn_pallas.9} parent=11 // pred_check
          %p214 = pneg %p92
        $region18: #{tcn_pallas.9} parent=11 // pred_check_branch
          %216 = sbr.rel (%p214) target = $region20
        $region19: #{tcn_pallas.9} parent=11 // pred_region
          %s218 = ssub.s32 16, 16
          %219 = vsyncadd [#allocation7], %s218
          %s221 = sshll.u32 [#allocation8], 4
          %s222 = int_to_ptr.vmem [resolvable:$true] %s221
          %224 = dma.hbm_to_vmem [thread:$0]  %s2, 16, %s222, [#allocation7]
        $region20: #{tcn_pallas.9} parent=11 // pred_fallthru
          _
        // Predicated region
        $region21: #{tcn_pallas.9} parent=11 // pred_check
          %p225 = pneg %p113
        $region22: #{tcn_pallas.9} parent=11 // pred_check_branch
          %227 = sbr.rel (%p225) target = $region24
        $region23: #{tcn_pallas.9} parent=11 // pred_region
          %s229 = ssub.s32 128, 128
          %230 = vsyncadd [#allocation10], %s229
          %s232 = sshll.u32 [#allocation9], 4
          %s233 = int_to_ptr.vmem [resolvable:$true] %s232
          %235 = dma.hbm_to_vmem [thread:$0]  %s3, 128, %s233, [#allocation10]
        $region24: #{tcn_pallas.9} parent=11 // pred_fallthru
          _
        // Predicated region
        $region25: #{tcn_pallas.9} parent=11 // pred_check
          %p236 = pneg %p134
        $region26: #{tcn_pallas.9} parent=11 // pred_check_branch
          %238 = sbr.rel (%p236) target = $region28
        $region27: #{tcn_pallas.9} parent=11 // pred_region
          %s240 = ssub.s32 16, 16
          %241 = vsyncadd [#allocation10], %s240
          %s243 = sshll.u32 [#allocation11], 4
          %s244 = int_to_ptr.vmem [resolvable:$true] %s243
          %246 = dma.hbm_to_vmem [thread:$0]  %s4, 16, %s244, [#allocation10]
        $region28: #{tcn_pallas.9} parent=11 // pred_fallthru
          _
      $region12: #{tcn_pallas.9} parent=5 // pred_fallthru
        _
      %p247 = scmp.lt.s32.totalorder %s24, 2
      // Predicated region
      $region29: #{tcn_pallas.9} parent=5 // pred_check
        %p248 = pneg %p247
      $region30: #{tcn_pallas.9} parent=5 // pred_check_branch
        %250 = sbr.rel (%p248) target = $region32
      $region31: #{tcn_pallas.9} parent=5 // pred_region
        // Predicated region
        $region33: #{tcn_pallas.9} parent=31 // pred_check
          %p251 = pneg %p44
        $region34: #{tcn_pallas.9} parent=31 // pred_check_branch
          %253 = sbr.rel (%p251) target = $region36
        $region35: #{tcn_pallas.9} parent=31 // pred_region
          %s254 = sand.u32 %s34, 1
          %s255 = scalar_lea.sflag [#allocation4], %s254
          %s256 = sand.u32 %s34, 1
          %s257 = smul.addr %s256, 64
          %s258 = scalar_lea.vmem [#allocation3], %s257
          %s260 = ssub.s32 1024, 1024
          %261 = vsyncadd %s255, %s260
          %s262 = smul.addr %s24, 8
          %s263 = smul.addr %s262, 128
          %s264 = scalar_lea.hbm %s0, %s263
          %s265 = sshll.u32 %s258, 4
          %s266 = int_to_ptr.vmem [resolvable:$true] %s265
          %271 = dma.hbm_to_vmem [thread:$0]  %s264, 1024, %s266, %s255, 128, 128, 8
        $region36: #{tcn_pallas.9} parent=31 // pred_fallthru
          _
      $region32: #{tcn_pallas.9} parent=5 // pred_fallthru
        _
      %p272 = scmp.le.s32.totalorder 1, %s24
      %p273 = scmp.lt.s32.totalorder %s24, 3
      %p274 = pnand %p272, %p273
      %p275 = pneg %p274
      // Predicated region
      $region37: #{tcn_pallas.9} parent=5 // pred_check
        _
      $region38: #{tcn_pallas.9} parent=5 // pred_check_branch
        %277 = sbr.rel (%p274) target = $region40
      $region39: #{tcn_pallas.9} parent=5 // pred_region
        %s278 = ssub.s32 %s24, 1
        %s279 = sand.u32 %s37, 1
        %s280 = scalar_lea.sflag [#allocation4], %s279
        %s281 = sand.u32 %s37, 1
        %s282 = smul.addr %s281, 64
        %s283 = scalar_lea.vmem [#allocation3], %s282
        // Predicated region
        $region41: #{tcn_pallas.9} parent=39 // pred_check
          %p284 = pneg %p50
        $region42: #{tcn_pallas.9} parent=39 // pred_check_branch
          %286 = sbr.rel (%p284) target = $region44
        $region43: #{tcn_pallas.9} parent=39 // pred_region
          %287 = dma.done %s280, 1024
        $region44: #{tcn_pallas.9} parent=39 // pred_fallthru
          _
        // Predicated region
        $region45: #{tcn_pallas.9} parent=39 // pred_check
          %p288 = pneg %p71
        $region46: #{tcn_pallas.9} parent=39 // pred_check_branch
          %290 = sbr.rel (%p288) target = $region48
        $region47: #{tcn_pallas.9} parent=39 // pred_region
          %291 = dma.done [#allocation7], 896
        $region48: #{tcn_pallas.9} parent=39 // pred_fallthru
          _
        // Predicated region
        $region49: #{tcn_pallas.9} parent=39 // pred_check
          %p292 = pneg %p92
        $region50: #{tcn_pallas.9} parent=39 // pred_check_branch
          %294 = sbr.rel (%p292) target = $region52
        $region51: #{tcn_pallas.9} parent=39 // pred_region
          %295 = dma.done [#allocation7], 16
        $region52: #{tcn_pallas.9} parent=39 // pred_fallthru
          _
        // Predicated region
        $region53: #{tcn_pallas.9} parent=39 // pred_check
          %p296 = pneg %p113
        $region54: #{tcn_pallas.9} parent=39 // pred_check_branch
          %298 = sbr.rel (%p296) target = $region56
        $region55: #{tcn_pallas.9} parent=39 // pred_region
          %299 = dma.done [#allocation10], 128
        $region56: #{tcn_pallas.9} parent=39 // pred_fallthru
          _
        // Predicated region
        $region57: #{tcn_pallas.9} parent=39 // pred_check
          %p300 = pneg %p134
        $region58: #{tcn_pallas.9} parent=39 // pred_check_branch
          %302 = sbr.rel (%p300) target = $region60
        $region59: #{tcn_pallas.9} parent=39 // pred_region
          %303 = dma.done [#allocation10], 16
        $region60: #{tcn_pallas.9} parent=39 // pred_fallthru
          _
        %s304 = sand.u32 %s37, 1
        %s305 = scalar_lea.sflag [#allocation4], %s304
        %s306 = sand.u32 %s37, 1
        %s307 = smul.addr %s306, 64
        %s308 = scalar_lea.vmem [#allocation3], %s307
        %p309 = pneg %p50
        %p310 = pneg %p47
        %p311 = pneg %p71
        %p312 = pneg %p68
        %p313 = pneg %p92
        %p314 = pneg %p89
        %p315 = pneg %p113
        %p316 = pneg %p110
        %p317 = pneg %p134
        %p318 = pneg %p131
        %p319 = pneg %p160
        %p320 = pneg %p157
        %s321 = sand.u32 %s147, 1
        %s322 = scalar_lea.sflag [#allocation5], %s321
        %s323 = sand.u32 %s147, 1
        %s324 = smul.addr %s323, 4
        %s325 = scalar_lea.vmem [#allocation12], %s324
        %p326 = pneg %p186
        %p327 = pneg %p183
        %s328 = sand.u32 %s173, 1
        %s329 = scalar_lea.sflag [#allocation14], %s328
        %s330 = sand.u32 %s173, 1
        %s331 = smul.addr %s330, 4
        %s332 = scalar_lea.vmem [#allocation13], %s331
        %v333 = vld [vmem:[%s283] sm:$0x1]
        %v334 = vld [vmem:[%s283 + $0x10] sm:$0x1]
        %v335 = vld [vmem:[%s283 + $0x20] sm:$0x1]
        %v336 = vld [vmem:[%s283 + $0x30] sm:$0x1]
        %v341 = vrot.slane %v334, 7
        %vm342 = vcmask 1041409
        %v343 = vsel %vm342, %v341, %v333
        %v344 = vrot.slane %v335, 6
        %vm345 = vcmask 1042434
        %v346 = vsel %vm345, %v344, %v343
        %v347 = vrot.slane %v336, 5
        %vm348 = vcmask 1043459
        %v349 = vsel %vm348, %v347, %v346
        %vm351 = vcmask 60416
        %352 = vst.msk [vmem:[#allocation2] sm:$0xf] %vm351, %v349
        %v353 = vld [vmem:[%s283 + $0x2] sm:$0x1]
        %v354 = vld [vmem:[%s283 + $0x12] sm:$0x1]
        %v355 = vld [vmem:[%s283 + $0x22] sm:$0x1]
        %v356 = vld [vmem:[%s283 + $0x32] sm:$0x1]
        %v361 = vrot.slane %v354, 7
        %v362 = vsel %vm342, %v361, %v353
        %v363 = vrot.slane %v355, 6
        %v364 = vsel %vm345, %v363, %v362
        %v365 = vrot.slane %v356, 5
        %v366 = vsel %vm348, %v365, %v364
        %367 = vrot.lane.b32.xlu0 %v366, 8
        %v368 = vpop.permute.xlu0 %367
        %vm370 = vcmask 126016
        %371 = vst.msk [vmem:[#allocation2] sm:$0xf] %vm370, %v368
        %v372 = vld [vmem:[%s283 + $0x4] sm:$0x1]
        %v373 = vld [vmem:[%s283 + $0x14] sm:$0x1]
        %v374 = vld [vmem:[%s283 + $0x24] sm:$0x1]
        %v375 = vld [vmem:[%s283 + $0x34] sm:$0x1]
        %v380 = vrot.slane %v373, 7
        %v381 = vsel %vm342, %v380, %v372
        %v382 = vrot.slane %v374, 6
        %v383 = vsel %vm345, %v382, %v381
        %v384 = vrot.slane %v375, 5
        %v385 = vsel %vm348, %v384, %v383
        %386 = vrot.lane.b32.xlu0 %v385, 16
        %v387 = vpop.permute.xlu0 %386
        %vm389 = vcmask 191616
        %390 = vst.msk [vmem:[#allocation2] sm:$0xf] %vm389, %v387
        %v391 = vld [vmem:[%s283 + $0x6] sm:$0x1]
        %v392 = vld [vmem:[%s283 + $0x16] sm:$0x1]
        %v393 = vld [vmem:[%s283 + $0x26] sm:$0x1]
        %v394 = vld [vmem:[%s283 + $0x36] sm:$0x1]
        %v399 = vrot.slane %v392, 7
        %v400 = vsel %vm342, %v399, %v391
        %v401 = vrot.slane %v393, 6
        %v402 = vsel %vm345, %v401, %v400
        %v403 = vrot.slane %v394, 5
        %v404 = vsel %vm348, %v403, %v402
        %405 = vrot.lane.b32.xlu0 %v404, 24
        %v406 = vpop.permute.xlu0 %405
        %vm408 = vcmask 257216
        %409 = vst.msk [vmem:[#allocation2] sm:$0xf] %vm408, %v406
        %v410 = vld [vmem:[%s283 + $0x8] sm:$0x1]
        %v411 = vld [vmem:[%s283 + $0x18] sm:$0x1]
        %v412 = vld [vmem:[%s283 + $0x28] sm:$0x1]
        %v413 = vld [vmem:[%s283 + $0x38] sm:$0x1]
        %v418 = vrot.slane %v411, 7
        %v419 = vsel %vm342, %v418, %v410
        %v420 = vrot.slane %v412, 6
        %v421 = vsel %vm345, %v420, %v419
        %v422 = vrot.slane %v413, 5
        %v423 = vsel %vm348, %v422, %v421
        %424 = vrot.lane.b32.xlu0 %v423, 32
        %v425 = vpop.permute.xlu0 %424
        %vm427 = vcmask 322816
        %428 = vst.msk [vmem:[#allocation2] sm:$0xf] %vm427, %v425
        %v429 = vld [vmem:[%s283 + $0xa] sm:$0x1]
        %v430 = vld [vmem:[%s283 + $0x1a] sm:$0x1]
        %v431 = vld [vmem:[%s283 + $0x2a] sm:$0x1]
        %v432 = vld [vmem:[%s283 + $0x3a] sm:$0x1]
        %v437 = vrot.slane %v430, 7
        %v438 = vsel %vm342, %v437, %v429
        %v439 = vrot.slane %v431, 6
        %v440 = vsel %vm345, %v439, %v438
        %v441 = vrot.slane %v432, 5
        %v442 = vsel %vm348, %v441, %v440
        %443 = vrot.lane.b32.xlu0 %v442, 40
        %v444 = vpop.permute.xlu0 %443
        %vm446 = vcmask 388416
        %447 = vst.msk [vmem:[#allocation2] sm:$0xf] %vm446, %v444
        %v448 = vld [vmem:[%s283 + $0xc] sm:$0x1]
        %v449 = vld [vmem:[%s283 + $0x1c] sm:$0x1]
        %v450 = vld [vmem:[%s283 + $0x2c] sm:$0x1]
        %v451 = vld [vmem:[%s283 + $0x3c] sm:$0x1]
        %v456 = vrot.slane %v449, 7
        %v457 = vsel %vm342, %v456, %v448
        %v458 = vrot.slane %v450, 6
        %v459 = vsel %vm345, %v458, %v457
        %v460 = vrot.slane %v451, 5
        %v461 = vsel %vm348, %v460, %v459
        %462 = vrot.lane.b32.xlu0 %v461, 48
        %v463 = vpop.permute.xlu0 %462
        %vm465 = vcmask 454016
        %466 = vst.msk [vmem:[#allocation2] sm:$0xf] %vm465, %v463
        %v467 = vld [vmem:[#allocation2] sm:$0xf]
        %v468 = vld [vmem:[#allocation6] sm:$0xff]
        %v469 = vld [vmem:[#allocation6 + $0x8] sm:$0xff]
        %v470 = vld [vmem:[#allocation6 + $0x10] sm:$0xff]
        %v471 = vld [vmem:[#allocation6 + $0x18] sm:$0xff]
        %v472 = vld [vmem:[#allocation6 + $0x20] sm:$0xff]
        %v473 = vld [vmem:[#allocation6 + $0x28] sm:$0xff]
        %v474 = vld [vmem:[#allocation6 + $0x30] sm:$0xff]
        %v475 = vld [vmem:[#allocation8] sm:$0x1]
        %v477 = vlaneseq
        %v478 = vshrl.u32 %v477, 7
        %v479 = vsub.s32 0, %v478
        %v480 = vrot.slane %v475, %v479
        %vm482 = vcmask 457728
        %v484 = vsel %vm482, %v467, 0
        %486 = vmatprep.subr.mxu0 0.0
        %487 = vmatpush1.msra.mxu0 %v468
        %488 = vmatprep.subr.mxu0 0.0
        %489 = vmatpush1.msra.mxu0 %v469
        %490 = vmatprep.subr.mxu0 0.0
        %491 = vmatpush1.msra.mxu0 %v470
        %492 = vmatprep.subr.mxu0 0.0
        %493 = vmatpush1.msra.mxu0 %v471
        %494 = vmatprep.subr.mxu0 0.0
        %495 = vmatpush1.msra.mxu0 %v472
        %496 = vmatprep.subr.mxu0 0.0
        %497 = vmatpush1.msra.mxu0 %v473
        %498 = vmatprep.subr.mxu0 0.0
        %499 = vmatpush1.msra.mxu0 %v474
        %500 = vmatprep.subr.mxu0 0.0
        %501 = vmatpush1.msra.mxu0 0.0
        %502 = vmatprep.subr.mxu0 0.0
        %503 = vmatpush1.msra.mxu0 0.0
        %504 = vmatprep.subr.mxu0 0.0
        %505 = vmatpush1.msra.mxu0 0.0
        %506 = vmatprep.subr.mxu0 0.0
        %507 = vmatpush1.msra.mxu0 0.0
        %508 = vmatprep.subr.mxu0 0.0
        %509 = vmatpush1.msra.mxu0 0.0
        %510 = vmatprep.subr.mxu0 0.0
        %511 = vmatpush1.msra.mxu0 0.0
        %512 = vmatprep.subr.mxu0 0.0
        %513 = vmatpush1.msra.mxu0 0.0
        %514 = vmatprep.subr.mxu0 0.0
        %515 = vmatpush1.msra.mxu0 0.0
        %516 = vmatprep.subr.mxu0 0.0
        %517 = vmatpush1.msra.mxu0 0.0
        %518 = vmatprep.subr.mxu0 0.0
        %519 = vmatpush1.msra.mxu0 0.0
        %520 = vmatprep.subr.mxu0 0.0
        %521 = vmatpush1.msra.mxu0 0.0
        %522 = vmatprep.subr.mxu0 0.0
        %523 = vmatpush1.msra.mxu0 0.0
        %524 = vmatprep.subr.mxu0 0.0
        %525 = vmatpush1.msra.mxu0 0.0
        %526 = vmatprep.subr.mxu0 0.0
        %527 = vmatpush1.msra.mxu0 0.0
        %528 = vmatprep.subr.mxu0 0.0
        %529 = vmatpush1.msra.mxu0 0.0
        %530 = vmatprep.subr.mxu0 0.0
        %531 = vmatpush1.msra.mxu0 0.0
        %532 = vmatprep.subr.mxu0 0.0
        %533 = vmatpush1.msra.mxu0 0.0
        %534 = vmatprep.subr.mxu0 0.0
        %535 = vmatpush1.msra.mxu0 0.0
        %536 = vmatprep.subr.mxu0 0.0
        %537 = vmatpush1.msra.mxu0 0.0
        %538 = vmatprep.subr.mxu0 0.0
        %539 = vmatpush1.msra.mxu0 0.0
        %540 = vmatprep.subr.mxu0 0.0
        %541 = vmatpush1.msra.mxu0 0.0
        %542 = vmatprep.subr.mxu0 0.0
        %543 = vmatpush1.msra.mxu0 0.0
        %544 = vmatprep.subr.mxu0 0.0
        %545 = vmatpush1.msra.mxu0 0.0
        %546 = vmatprep.subr.mxu0 0.0
        %547 = vmatpush1.msra.mxu0 0.0
        %548 = vmatprep.subr.mxu0 0.0
        %549 = vmatpush1.msra.mxu0 0.0
        %550 = vmatprep.mubr.f32.mxu0 0.0
        %551 = vmatmul.mubr.f32.gmra.mrb[0].mxu0 %v484
        %v552 = vpop.f32.mrb[0].mxu0
        %v553 = vadd.f32 %v480, %v552
        %v554 = vpop.f32.mrb[0].mxu0
        %555 = vdwg.mxu0
        %v556 = vtanh.pop %v553
        %v557 = vxor.u32 %v553, 2147483648
        %v558 = vmul.f32 %v557, 1.442695
        %v559 = vpow.pop %v558
        %v560 = vadd.f32 %v559, 1.0
        %v561 = vrcp.pop %v560
        %v562 = vmul.f32 1.0, %v561
        %564 = vrot.lane.b32.xlu0 %v562, 120
        %v565 = vpop.permute.xlu0 %564
        %v567 = vmul.f32 %v556, %v565
        %v570 = vunpack.c.l.s4 1966171168
        %v571 = vunpack.c.0.s8 %v570
        %v572 = vlaneseq
        %v573 = vshrl.u32 %v572, 7
        %v574 = vsub.s32 %v571, %v573
        %v575 = vrot.slane %v567, %v574
        %v576 = vcombine.high %v575, %v575
        %v578 = vunpack.c.l.s4 1966171168
        %v579 = vunpack.c.0.s8 %v578
        %v580 = vlaneseq
        %v581 = vshrl.u32 %v580, 7
        %v582 = vsub.s32 %v579, %v581
        %v583 = vrot.slane %v575, %v582
        %v585 = vunpack.c.l.s4 1966171168
        %v586 = vunpack.c.0.s8 %v585
        %v587 = vlaneseq
        %v588 = vshrl.u32 %v587, 7
        %v589 = vsub.s32 %v586, %v588
        %v590 = vrot.slane %v576, %v589
        %v591 = vcombine.high %v583, %v583
        %v592 = vcombine.high %v590, %v590
        %vm597 = vcmask 57344
        %598 = vst.msk [vmem:[%s325] sm:$0x1] %vm597, %v583
        %599 = vst.msk [vmem:[%s325 + $0x1] sm:$0x1] %vm597, %v590
        %600 = vst.msk [vmem:[%s325 + $0x2] sm:$0x1] %vm597, %v591
        %601 = vst.msk [vmem:[%s325 + $0x3] sm:$0x1] %vm597, %v592
        %v602 = vld [vmem:[#allocation2] sm:$0xf]
        %v603 = vld [vmem:[#allocation9] sm:$0xff]
        %v604 = vld [vmem:[#allocation11] sm:$0x1]
        %v606 = vlaneseq
        %v607 = vshrl.u32 %v606, 7
        %v608 = vsub.s32 0, %v607
        %v609 = vrot.slane %v604, %v608
        %vm611 = vcmask 64512
        %v612 = vsel %vm611, %v567, 0
        %614 = vmatprep.subr.mxu0 0.0
        %615 = vmatpush1.msra.mxu0 %v603
        %616 = vmatprep.subr.mxu0 0.0
        %617 = vmatpush1.msra.mxu0 0.0
        %618 = vmatprep.subr.mxu0 0.0
        %619 = vmatpush1.msra.mxu0 0.0
        %620 = vmatprep.subr.mxu0 0.0
        %621 = vmatpush1.msra.mxu0 0.0
        %622 = vmatprep.subr.mxu0 0.0
        %623 = vmatpush1.msra.mxu0 0.0
        %624 = vmatprep.subr.mxu0 0.0
        %625 = vmatpush1.msra.mxu0 0.0
        %626 = vmatprep.subr.mxu0 0.0
        %627 = vmatpush1.msra.mxu0 0.0
        %628 = vmatprep.subr.mxu0 0.0
        %629 = vmatpush1.msra.mxu0 0.0
        %630 = vmatprep.subr.mxu0 0.0
        %631 = vmatpush1.msra.mxu0 0.0
        %632 = vmatprep.subr.mxu0 0.0
        %633 = vmatpush1.msra.mxu0 0.0
        %634 = vmatprep.subr.mxu0 0.0
        %635 = vmatpush1.msra.mxu0 0.0
        %636 = vmatprep.subr.mxu0 0.0
        %637 = vmatpush1.msra.mxu0 0.0
        %638 = vmatprep.subr.mxu0 0.0
        %639 = vmatpush1.msra.mxu0 0.0
        %640 = vmatprep.subr.mxu0 0.0
        %641 = vmatpush1.msra.mxu0 0.0
        %642 = vmatprep.subr.mxu0 0.0
        %643 = vmatpush1.msra.mxu0 0.0
        %644 = vmatprep.subr.mxu0 0.0
        %645 = vmatpush1.msra.mxu0 0.0
        %646 = vmatprep.subr.mxu0 0.0
        %647 = vmatpush1.msra.mxu0 0.0
        %648 = vmatprep.subr.mxu0 0.0
        %649 = vmatpush1.msra.mxu0 0.0
        %650 = vmatprep.subr.mxu0 0.0
        %651 = vmatpush1.msra.mxu0 0.0
        %652 = vmatprep.subr.mxu0 0.0
        %653 = vmatpush1.msra.mxu0 0.0
        %654 = vmatprep.subr.mxu0 0.0
        %655 = vmatpush1.msra.mxu0 0.0
        %656 = vmatprep.subr.mxu0 0.0
        %657 = vmatpush1.msra.mxu0 0.0
        %658 = vmatprep.subr.mxu0 0.0
        %659 = vmatpush1.msra.mxu0 0.0
        %660 = vmatprep.subr.mxu0 0.0
        %661 = vmatpush1.msra.mxu0 0.0
        %662 = vmatprep.subr.mxu0 0.0
        %663 = vmatpush1.msra.mxu0 0.0
        %664 = vmatprep.subr.mxu0 0.0
        %665 = vmatpush1.msra.mxu0 0.0
        %666 = vmatprep.subr.mxu0 0.0
        %667 = vmatpush1.msra.mxu0 0.0
        %668 = vmatprep.subr.mxu0 0.0
        %669 = vmatpush1.msra.mxu0 0.0
        %670 = vmatprep.subr.mxu0 0.0
        %671 = vmatpush1.msra.mxu0 0.0
        %672 = vmatprep.subr.mxu0 0.0
        %673 = vmatpush1.msra.mxu0 0.0
        %674 = vmatprep.subr.mxu0 0.0
        %675 = vmatpush1.msra.mxu0 0.0
        %676 = vmatprep.subr.mxu0 0.0
        %677 = vmatpush1.msra.mxu0 0.0
        %678 = vmatprep.mubr.f32.mxu0 0.0
        %679 = vmatmul.mubr.f32.gmra.mrb[0].mxu0 %v612
        %v680 = vpop.f32.mrb[0].mxu0
        %v681 = vadd.f32 %v609, %v680
        %v682 = vpop.f32.mrb[0].mxu0
        %683 = vdwg.mxu0
        %685 = vrot.lane.b32.xlu0 %v602, 80
        %v686 = vpop.permute.xlu0 %685
        %v688 = vadd.f32 %v681, %v686
        %v689 = vsel %vm351, %v688, 0.0
        %690 = vadd.xlane.f32.xlu0 %v689
        %v691 = vpop.xlane.xlu0 %690
        %v692 = vrot.slane %v691, 4
        %v693 = vadd.f32 %v691, %v692
        %v694 = vrot.slane %v693, 2
        %v695 = vadd.f32 %v693, %v694
        %v696 = vrot.slane %v695, 1
        %v697 = vadd.f32 %v695, %v696
        %s698 = vtos %v697
        %v699 = vrcp.pop 32.0
        %s700 = vtos %v699
        %s701 = smul.f32 %s698, %s700
        %v702 = vmul.f32 %v688, %v688
        %v703 = vsel %vm351, %v702, 0.0
        %704 = vadd.xlane.f32.xlu0 %v703
        %v705 = vpop.xlane.xlu0 %704
        %v706 = vrot.slane %v705, 4
        %v707 = vadd.f32 %v705, %v706
        %v708 = vrot.slane %v707, 2
        %v709 = vadd.f32 %v707, %v708
        %v710 = vrot.slane %v709, 1
        %v711 = vadd.f32 %v709, %v710
        %s712 = vtos %v711
        %v713 = vrcp.pop 32.0
        %s714 = vtos %v713
        %s715 = smul.f32 %s712, %s714
        %s716 = smul.f32 %s701, %s701
        %s717 = ssub.f32 %s715, %s716
        %v718 = vstv %s701
        %v719 = vsub.f32 %v688, %v718
        %s720 = sadd.f32 %s717, 1e-05
        %v721 = vstv %s720
        %v722 = vrsqrt.pop %v721
        %s723 = vtos %v722
        %v724 = vstv %s723
        %v725 = vmul.f32 %v719, %v724
        %v728 = vunpack.c.l.s4 1966171168
        %v729 = vunpack.c.0.s8 %v728
        %v730 = vlaneseq
        %v731 = vshrl.u32 %v730, 7
        %v732 = vsub.s32 %v729, %v731
        %v733 = vrot.slane %v725, %v732
        %v734 = vcombine.high %v733, %v733
        %v736 = vunpack.c.l.s4 1966171168
        %v737 = vunpack.c.0.s8 %v736
        %v738 = vlaneseq
        %v739 = vshrl.u32 %v738, 7
        %v740 = vsub.s32 %v737, %v739
        %v741 = vrot.slane %v733, %v740
        %v743 = vunpack.c.l.s4 1966171168
        %v744 = vunpack.c.0.s8 %v743
        %v745 = vlaneseq
        %v746 = vshrl.u32 %v745, 7
        %v747 = vsub.s32 %v744, %v746
        %v748 = vrot.slane %v734, %v747
        %v749 = vcombine.high %v741, %v741
        %v750 = vcombine.high %v748, %v748
        %755 = vst.msk [vmem:[%s332] sm:$0x1] %vm597, %v741
        %756 = vst.msk [vmem:[%s332 + $0x1] sm:$0x1] %vm597, %v748
        %757 = vst.msk [vmem:[%s332 + $0x2] sm:$0x1] %vm597, %v749
        %758 = vst.msk [vmem:[%s332 + $0x3] sm:$0x1] %vm597, %v750
        %s759 = sand.u32 %s147, 1
        %s760 = scalar_lea.sflag [#allocation5], %s759
        %s761 = sand.u32 %s147, 1
        %s762 = smul.addr %s761, 4
        %s763 = scalar_lea.vmem [#allocation12], %s762
        %s764 = sand.u32 %s173, 1
        %s765 = scalar_lea.sflag [#allocation14], %s764
        %s766 = sand.u32 %s173, 1
        %s767 = smul.addr %s766, 4
        %s768 = scalar_lea.vmem [#allocation13], %s767
        // Predicated region
        $region61: #{tcn_pallas.9} parent=39 // pred_check
          %p769 = pneg %p157
        $region62: #{tcn_pallas.9} parent=39 // pred_check_branch
          %771 = sbr.rel (%p769) target = $region64
        $region63: #{tcn_pallas.9} parent=39 // pred_region
          %s773 = ssub.s32 64, 64
          %774 = vsyncadd %s760, %s773
          %s775 = smul.addr %s29, 4
          %s776 = smul.addr %s775, 16
          %s777 = scalar_lea.hbm %s5, %s776
          %s778 = sshll.u32 %s763, 4
          %s779 = int_to_ptr.vmem [resolvable:$true] %s778
          %784 = dma.vmem_to_hbm [thread:$0]  %s779, 64, %s777, %s760, 16, 16, 1
        $region64: #{tcn_pallas.9} parent=39 // pred_fallthru
          _
        // Predicated region
        $region65: #{tcn_pallas.9} parent=39 // pred_check
          %p785 = pneg %p183
        $region66: #{tcn_pallas.9} parent=39 // pred_check_branch
          %787 = sbr.rel (%p785) target = $region68
        $region67: #{tcn_pallas.9} parent=39 // pred_region
          %s789 = ssub.s32 64, 64
          %790 = vsyncadd %s765, %s789
          %s791 = smul.addr %s29, 4
          %s792 = smul.addr %s791, 16
          %s793 = scalar_lea.hbm %s6, %s792
          %s794 = sshll.u32 %s768, 4
          %s795 = int_to_ptr.vmem [resolvable:$true] %s794
          %800 = dma.vmem_to_hbm [thread:$0]  %s795, 64, %s793, %s765, 16, 16, 1
        $region68: #{tcn_pallas.9} parent=39 // pred_fallthru
          _
      $region40: #{tcn_pallas.9} parent=5 // pred_fallthru
        _
      %p801 = scmp.le.s32.totalorder 2, %s24
      // Predicated region
      $region69: #{tcn_pallas.9} parent=5 // pred_check
        %p802 = pneg %p801
      $region70: #{tcn_pallas.9} parent=5 // pred_check_branch
        %804 = sbr.rel (%p802) target = $region72
      $region71: #{tcn_pallas.9} parent=5 // pred_region
        %s805 = ssub.s32 %s24, 2
        // Predicated region
        $region73: #{tcn_pallas.9} parent=71 // pred_check
          %p806 = pneg %p163
        $region74: #{tcn_pallas.9} parent=71 // pred_check_branch
          %808 = sbr.rel (%p806) target = $region76
        $region75: #{tcn_pallas.9} parent=71 // pred_region
          %s809 = sand.u32 %s148, 1
          %s810 = scalar_lea.sflag [#allocation5], %s809
          %s811 = sand.u32 %s148, 1
          %s812 = smul.addr %s811, 4
          %s813 = scalar_lea.vmem [#allocation12], %s812
          %814 = dma.done %s810, 64
        $region76: #{tcn_pallas.9} parent=71 // pred_fallthru
          _
        // Predicated region
        $region77: #{tcn_pallas.9} parent=71 // pred_check
          %p815 = pneg %p189
        $region78: #{tcn_pallas.9} parent=71 // pred_check_branch
          %817 = sbr.rel (%p815) target = $region80
        $region79: #{tcn_pallas.9} parent=71 // pred_region
          %s818 = sand.u32 %s174, 1
          %s819 = scalar_lea.sflag [#allocation14], %s818
          %s820 = sand.u32 %s174, 1
          %s821 = smul.addr %s820, 4
          %s822 = scalar_lea.vmem [#allocation13], %s821
          %823 = dma.done %s819, 64
        $region80: #{tcn_pallas.9} parent=71 // pred_fallthru
          _
      $region72: #{tcn_pallas.9} parent=5 // pred_fallthru
        _
    $region6: #{tcn_pallas.9} parent=1 // loop_footer
      %s28 = sadd.s32 1, %s24
    $region7: #{tcn_pallas.9} parent=1 // loop_footer_branch
      %23 = sbr.rel target = $region3
    $region8: #{tcn_pallas.9} parent=1 // loop_exit
      _
    %824 = vsyncpa [#allocation4], 1
    %s825 = scalar_lea.sflag [#allocation4], 1
    %826 = vsyncpa %s825, 1
    %827 = vsyncpa [#allocation7], 1
    %828 = vsyncpa [#allocation10], 1
    %829 = vsyncpa [#allocation5], 1
    %s830 = scalar_lea.sflag [#allocation5], 1
    %831 = vsyncpa %s830, 1
    %832 = vsyncpa [#allocation14], 1
    %s833 = scalar_lea.sflag [#allocation14], 1
    %834 = vsyncpa %s833, 1

// kernel: tcn_pallas.10
$region0: #{tcn_pallas.10}
  #allocation0 [shape = 'u32[]', space=smem, size = 0x4, offset = 0x4, fixed_abs, tag = 'smem constant byte address 0x4 - core index']
  #allocation1 [shape = 'u32[144,128]{1,0:T(1,128)}', space=vmem, size = 0x12000, scoped, tag = 'internal scratch']
  %s0 = inlined_call_operand.hbm [shape: f32[8,8], index: 0, kind: input, shape index: {}]
  %s1 = inlined_call_operand.hbm [shape: f32[8,8], index: 1, kind: input, shape index: {}]
  %s2 = inlined_call_operand.hbm [shape: f32[1,8], index: 2, kind: input, shape index: {}]
  %s3 = inlined_call_operand.hbm [shape: f32[8,8], index: 3, kind: input, shape index: {}, may-alias: {3,4}]
  %s4 = inlined_call_operand.hbm [shape: f32[8,8], index: 4, kind: output, shape index: {}, may-alias: {3,4}]
  %s5 = sld [smem:[#allocation0]]
  $region42: #{tcn_pallas.10} parent=0
    _
  %s7 = ssub.s32 1, %s5
  %s8 = scalar_select 0, %s7, %s5
  $region1: #{tcn_pallas.10} parent=0
    #allocation2 [shape = 'u8[4096]{0}', space=vmem, size = 0x1000, scoped, tag = 'input window, operand 0, single buffered']
    #allocation3 [shape = 's32[1]{0}', space=sflag, size = 0x4, scoped, tag = 'scoped memory for tcn_pallas.10']
    #allocation4 [shape = 's32[1]{0}', space=sflag, size = 0x4, scoped, tag = 'scoped memory for tcn_pallas.10']
    #allocation5 [shape = 'u8[4096]{0}', space=vmem, size = 0x1000, scoped, tag = 'input window, operand 1, single buffered']
    #allocation6 [shape = 's32[1]{0}', space=sflag, size = 0x4, scoped, tag = 'scoped memory for tcn_pallas.10']
    #allocation7 [shape = 'u8[512]{0}', space=vmem, size = 0x400, scoped, tag = 'input window, operand 2, single buffered']
    #allocation8 [shape = 'u8[4096]{0}', space=vmem, size = 0x1000, scoped, tag = 'input window, operand 3, single buffered']
    #allocation9 [shape = 's32[1]{0}', space=sflag, size = 0x4, scoped, tag = 'scoped memory for tcn_pallas.10']
    #allocation10 [shape = 'u8[4096]{0}', space=vmem, size = 0x1000, scoped, tag = 'output window, operand 0, single buffered']
    %9 = vsyncpa [#allocation3], 0
    %10 = vsyncpa [#allocation6], 0
    %11 = vsyncpa [#allocation9], 0
    %12 = vsyncpa [#allocation4], 0
    // Predicated region
    $region2: #{tcn_pallas.10} parent=1 // pred_check
      _
    $region3: #{tcn_pallas.10} parent=1 // pred_check_branch
      %14 = sbr.rel (0) target = $region5
    $region4: #{tcn_pallas.10} parent=1 // pred_region
      %s16 = ssub.s32 128, 128
      %17 = vsyncadd [#allocation3], %s16
      %s19 = sshll.u32 [#allocation2], 4
      %s20 = int_to_ptr.vmem [resolvable:$true] %s19
      %22 = dma.hbm_to_vmem [thread:$0]  %s0, 128, %s20, [#allocation3]
    $region5: #{tcn_pallas.10} parent=1 // pred_fallthru
      _
    // Predicated region
    $region6: #{tcn_pallas.10} parent=1 // pred_check
      _
    $region7: #{tcn_pallas.10} parent=1 // pred_check_branch
      %24 = sbr.rel (0) target = $region9
    $region8: #{tcn_pallas.10} parent=1 // pred_region
      %s26 = ssub.s32 128, 128
      %27 = vsyncadd [#allocation6], %s26
      %s29 = sshll.u32 [#allocation5], 4
      %s30 = int_to_ptr.vmem [resolvable:$true] %s29
      %32 = dma.hbm_to_vmem [thread:$0]  %s1, 128, %s30, [#allocation6]
    $region9: #{tcn_pallas.10} parent=1 // pred_fallthru
      _
    // Predicated region
    $region10: #{tcn_pallas.10} parent=1 // pred_check
      _
    $region11: #{tcn_pallas.10} parent=1 // pred_check_branch
      %34 = sbr.rel (0) target = $region13
    $region12: #{tcn_pallas.10} parent=1 // pred_region
      %s36 = ssub.s32 16, 16
      %37 = vsyncadd [#allocation6], %s36
      %s39 = sshll.u32 [#allocation7], 4
      %s40 = int_to_ptr.vmem [resolvable:$true] %s39
      %42 = dma.hbm_to_vmem [thread:$0]  %s2, 16, %s40, [#allocation6]
    $region13: #{tcn_pallas.10} parent=1 // pred_fallthru
      _
    // Predicated region
    $region14: #{tcn_pallas.10} parent=1 // pred_check
      _
    $region15: #{tcn_pallas.10} parent=1 // pred_check_branch
      %44 = sbr.rel (0) target = $region17
    $region16: #{tcn_pallas.10} parent=1 // pred_region
      %s46 = ssub.s32 128, 128
      %47 = vsyncadd [#allocation9], %s46
      %s49 = sshll.u32 [#allocation8], 4
      %s50 = int_to_ptr.vmem [resolvable:$true] %s49
      %52 = dma.hbm_to_vmem [thread:$0]  %s3, 128, %s50, [#allocation9]
    $region17: #{tcn_pallas.10} parent=1 // pred_fallthru
      _
    // Predicated region
    $region18: #{tcn_pallas.10} parent=1 // pred_check
      _
    $region19: #{tcn_pallas.10} parent=1 // pred_check_branch
      %54 = sbr.rel (0) target = $region21
    $region20: #{tcn_pallas.10} parent=1 // pred_region
      %55 = dma.done [#allocation3], 128
    $region21: #{tcn_pallas.10} parent=1 // pred_fallthru
      _
    // Predicated region
    $region22: #{tcn_pallas.10} parent=1 // pred_check
      _
    $region23: #{tcn_pallas.10} parent=1 // pred_check_branch
      %57 = sbr.rel (0) target = $region25
    $region24: #{tcn_pallas.10} parent=1 // pred_region
      %58 = dma.done [#allocation6], 128
    $region25: #{tcn_pallas.10} parent=1 // pred_fallthru
      _
    // Predicated region
    $region26: #{tcn_pallas.10} parent=1 // pred_check
      _
    $region27: #{tcn_pallas.10} parent=1 // pred_check_branch
      %60 = sbr.rel (0) target = $region29
    $region28: #{tcn_pallas.10} parent=1 // pred_region
      %61 = dma.done [#allocation6], 16
    $region29: #{tcn_pallas.10} parent=1 // pred_fallthru
      _
    // Predicated region
    $region30: #{tcn_pallas.10} parent=1 // pred_check
      _
    $region31: #{tcn_pallas.10} parent=1 // pred_check_branch
      %63 = sbr.rel (0) target = $region33
    $region32: #{tcn_pallas.10} parent=1 // pred_region
      %64 = dma.done [#allocation9], 128
    $region33: #{tcn_pallas.10} parent=1 // pred_fallthru
      _
    %v65 = vld [vmem:[#allocation2] sm:$0xff]
    %v66 = vld [vmem:[#allocation5] sm:$0xff]
    %v67 = vld [vmem:[#allocation7] sm:$0x1]
    %v69 = vlaneseq
    %v70 = vshrl.u32 %v69, 7
    %v71 = vsub.s32 0, %v70
    %v72 = vrot.slane %v67, %v71
    %vm74 = vcmask 64512
    %v76 = vsel %vm74, %v65, 0
    %78 = vmatprep.subr.mxu0 0.0
    %79 = vmatpush1.msra.mxu0 %v66
    %80 = vmatprep.subr.mxu0 0.0
    %81 = vmatpush1.msra.mxu0 0.0
    %82 = vmatprep.subr.mxu0 0.0
    %83 = vmatpush1.msra.mxu0 0.0
    %84 = vmatprep.subr.mxu0 0.0
    %85 = vmatpush1.msra.mxu0 0.0
    %86 = vmatprep.subr.mxu0 0.0
    %87 = vmatpush1.msra.mxu0 0.0
    %88 = vmatprep.subr.mxu0 0.0
    %89 = vmatpush1.msra.mxu0 0.0
    %90 = vmatprep.subr.mxu0 0.0
    %91 = vmatpush1.msra.mxu0 0.0
    %92 = vmatprep.subr.mxu0 0.0
    %93 = vmatpush1.msra.mxu0 0.0
    %94 = vmatprep.subr.mxu0 0.0
    %95 = vmatpush1.msra.mxu0 0.0
    %96 = vmatprep.subr.mxu0 0.0
    %97 = vmatpush1.msra.mxu0 0.0
    %98 = vmatprep.subr.mxu0 0.0
    %99 = vmatpush1.msra.mxu0 0.0
    %100 = vmatprep.subr.mxu0 0.0
    %101 = vmatpush1.msra.mxu0 0.0
    %102 = vmatprep.subr.mxu0 0.0
    %103 = vmatpush1.msra.mxu0 0.0
    %104 = vmatprep.subr.mxu0 0.0
    %105 = vmatpush1.msra.mxu0 0.0
    %106 = vmatprep.subr.mxu0 0.0
    %107 = vmatpush1.msra.mxu0 0.0
    %108 = vmatprep.subr.mxu0 0.0
    %109 = vmatpush1.msra.mxu0 0.0
    %110 = vmatprep.subr.mxu0 0.0
    %111 = vmatpush1.msra.mxu0 0.0
    %112 = vmatprep.subr.mxu0 0.0
    %113 = vmatpush1.msra.mxu0 0.0
    %114 = vmatprep.subr.mxu0 0.0
    %115 = vmatpush1.msra.mxu0 0.0
    %116 = vmatprep.subr.mxu0 0.0
    %117 = vmatpush1.msra.mxu0 0.0
    %118 = vmatprep.subr.mxu0 0.0
    %119 = vmatpush1.msra.mxu0 0.0
    %120 = vmatprep.subr.mxu0 0.0
    %121 = vmatpush1.msra.mxu0 0.0
    %122 = vmatprep.subr.mxu0 0.0
    %123 = vmatpush1.msra.mxu0 0.0
    %124 = vmatprep.subr.mxu0 0.0
    %125 = vmatpush1.msra.mxu0 0.0
    %126 = vmatprep.subr.mxu0 0.0
    %127 = vmatpush1.msra.mxu0 0.0
    %128 = vmatprep.subr.mxu0 0.0
    %129 = vmatpush1.msra.mxu0 0.0
    %130 = vmatprep.subr.mxu0 0.0
    %131 = vmatpush1.msra.mxu0 0.0
    %132 = vmatprep.subr.mxu0 0.0
    %133 = vmatpush1.msra.mxu0 0.0
    %134 = vmatprep.subr.mxu0 0.0
    %135 = vmatpush1.msra.mxu0 0.0
    %136 = vmatprep.subr.mxu0 0.0
    %137 = vmatpush1.msra.mxu0 0.0
    %138 = vmatprep.subr.mxu0 0.0
    %139 = vmatpush1.msra.mxu0 0.0
    %140 = vmatprep.subr.mxu0 0.0
    %141 = vmatpush1.msra.mxu0 0.0
    %142 = vmatprep.mubr.f32.mxu0 0.0
    %143 = vmatmul.mubr.f32.gmra.mrb[0].mxu0 %v76
    %v144 = vpop.f32.mrb[0].mxu0
    %v145 = vadd.f32 %v72, %v144
    %v146 = vpop.f32.mrb[0].mxu0
    %147 = vdwg.mxu0
    %v148 = vld [vmem:[#allocation8] sm:$0xff]
    %v149 = vadd.f32 %v145, %v148
    %150 = vst.msk [vmem:[#allocation10] sm:$0xff] %vm74, %v149
    // Predicated region
    $region34: #{tcn_pallas.10} parent=1 // pred_check
      _
    $region35: #{tcn_pallas.10} parent=1 // pred_check_branch
      %152 = sbr.rel (0) target = $region37
    $region36: #{tcn_pallas.10} parent=1 // pred_region
      %s154 = ssub.s32 128, 128
      %155 = vsyncadd [#allocation4], %s154
      %s157 = sshll.u32 [#allocation10], 4
      %s158 = int_to_ptr.vmem [resolvable:$true] %s157
      %160 = dma.vmem_to_hbm [thread:$0]  %s158, 128, %s4, [#allocation4]
    $region37: #{tcn_pallas.10} parent=1 // pred_fallthru
      _
    // Predicated region
    $region38: #{tcn_pallas.10} parent=1 // pred_check
      _
    $region39: #{tcn_pallas.10} parent=1 // pred_check_branch
      %162 = sbr.rel (0) target = $region41
    $region40: #{tcn_pallas.10} parent=1 // pred_region
      %163 = dma.done [#allocation4], 128
    $region41: #{tcn_pallas.10} parent=1 // pred_fallthru
      _
    %164 = vsyncpa [#allocation3], 1
    %165 = vsyncpa [#allocation6], 1
    %166 = vsyncpa [#allocation9], 1
    %167 = vsyncpa [#allocation4], 1

// kernel: tcn_pallas.11
$region0: #{tcn_pallas.11}
  #allocation0 [shape = 'u32[]', space=smem, size = 0x4, offset = 0x4, fixed_abs, tag = 'smem constant byte address 0x4 - core index']
  #allocation1 [shape = 'u32[144,128]{1,0:T(1,128)}', space=vmem, size = 0x12000, scoped, tag = 'internal scratch']
  %s0 = inlined_call_operand.hbm [shape: f32[8,8], index: 0, kind: input, shape index: {}]
  %s1 = inlined_call_operand.hbm [shape: f32[8,8], index: 1, kind: input, shape index: {}]
  %s2 = inlined_call_operand.hbm [shape: f32[1,8], index: 2, kind: input, shape index: {}]
  %s3 = inlined_call_operand.hbm [shape: f32[8,8], index: 3, kind: input, shape index: {}, may-alias: {3,6}]
  %s4 = inlined_call_operand.hbm [shape: f32[8,8], index: 4, kind: input, shape index: {}]
  %s5 = inlined_call_operand.hbm [shape: f32[1,8], index: 5, kind: input, shape index: {}]
  %s6 = inlined_call_operand.hbm [shape: f32[8,8], index: 6, kind: output, shape index: {}, may-alias: {3,6}]
  %s7 = sld [smem:[#allocation0]]
  $region58: #{tcn_pallas.11} parent=0
    _
  %s9 = ssub.s32 1, %s7
  %s10 = scalar_select 0, %s9, %s7
  $region1: #{tcn_pallas.11} parent=0
    #allocation2 [shape = 'u8[4096]{0}', space=vmem, size = 0x1000, scoped, tag = 'input window, operand 0, single buffered']
    #allocation3 [shape = 's32[1]{0}', space=sflag, size = 0x4, scoped, tag = 'scoped memory for tcn_pallas.11']
    #allocation4 [shape = 's32[1]{0}', space=sflag, size = 0x4, scoped, tag = 'scoped memory for tcn_pallas.11']
    #allocation5 [shape = 'u8[4096]{0}', space=vmem, size = 0x1000, scoped, tag = 'input window, operand 1, single buffered']
    #allocation6 [shape = 's32[1]{0}', space=sflag, size = 0x4, scoped, tag = 'scoped memory for tcn_pallas.11']
    #allocation7 [shape = 'u8[512]{0}', space=vmem, size = 0x400, scoped, tag = 'input window, operand 2, single buffered']
    #allocation8 [shape = 'u8[4096]{0}', space=vmem, size = 0x1000, scoped, tag = 'input window, operand 3, single buffered']
    #allocation9 [shape = 's32[1]{0}', space=sflag, size = 0x4, scoped, tag = 'scoped memory for tcn_pallas.11']
    #allocation10 [shape = 'u8[4096]{0}', space=vmem, size = 0x1000, scoped, tag = 'input window, operand 4, single buffered']
    #allocation11 [shape = 'u8[512]{0}', space=vmem, size = 0x400, scoped, tag = 'input window, operand 5, single buffered']
    #allocation12 [shape = 's32[1]{0}', space=sflag, size = 0x4, scoped, tag = 'scoped memory for tcn_pallas.11']
    #allocation13 [shape = 'u8[4096]{0}', space=vmem, size = 0x1000, scoped, tag = 'output window, operand 0, single buffered']
    %11 = vsyncpa [#allocation3], 0
    %12 = vsyncpa [#allocation6], 0
    %13 = vsyncpa [#allocation9], 0
    %14 = vsyncpa [#allocation12], 0
    %15 = vsyncpa [#allocation4], 0
    // Predicated region
    $region2: #{tcn_pallas.11} parent=1 // pred_check
      _
    $region3: #{tcn_pallas.11} parent=1 // pred_check_branch
      %17 = sbr.rel (0) target = $region5
    $region4: #{tcn_pallas.11} parent=1 // pred_region
      %s19 = ssub.s32 128, 128
      %20 = vsyncadd [#allocation3], %s19
      %s22 = sshll.u32 [#allocation2], 4
      %s23 = int_to_ptr.vmem [resolvable:$true] %s22
      %25 = dma.hbm_to_vmem [thread:$0]  %s0, 128, %s23, [#allocation3]
    $region5: #{tcn_pallas.11} parent=1 // pred_fallthru
      _
    // Predicated region
    $region6: #{tcn_pallas.11} parent=1 // pred_check
      _
    $region7: #{tcn_pallas.11} parent=1 // pred_check_branch
      %27 = sbr.rel (0) target = $region9
    $region8: #{tcn_pallas.11} parent=1 // pred_region
      %s29 = ssub.s32 128, 128
      %30 = vsyncadd [#allocation6], %s29
      %s32 = sshll.u32 [#allocation5], 4
      %s33 = int_to_ptr.vmem [resolvable:$true] %s32
      %35 = dma.hbm_to_vmem [thread:$0]  %s1, 128, %s33, [#allocation6]
    $region9: #{tcn_pallas.11} parent=1 // pred_fallthru
      _
    // Predicated region
    $region10: #{tcn_pallas.11} parent=1 // pred_check
      _
    $region11: #{tcn_pallas.11} parent=1 // pred_check_branch
      %37 = sbr.rel (0) target = $region13
    $region12: #{tcn_pallas.11} parent=1 // pred_region
      %s39 = ssub.s32 16, 16
      %40 = vsyncadd [#allocation6], %s39
      %s42 = sshll.u32 [#allocation7], 4
      %s43 = int_to_ptr.vmem [resolvable:$true] %s42
      %45 = dma.hbm_to_vmem [thread:$0]  %s2, 16, %s43, [#allocation6]
    $region13: #{tcn_pallas.11} parent=1 // pred_fallthru
      _
    // Predicated region
    $region14: #{tcn_pallas.11} parent=1 // pred_check
      _
    $region15: #{tcn_pallas.11} parent=1 // pred_check_branch
      %47 = sbr.rel (0) target = $region17
    $region16: #{tcn_pallas.11} parent=1 // pred_region
      %s49 = ssub.s32 128, 128
      %50 = vsyncadd [#allocation9], %s49
      %s52 = sshll.u32 [#allocation8], 4
      %s53 = int_to_ptr.vmem [resolvable:$true] %s52
      %55 = dma.hbm_to_vmem [thread:$0]  %s3, 128, %s53, [#allocation9]
    $region17: #{tcn_pallas.11} parent=1 // pred_fallthru
      _
    // Predicated region
    $region18: #{tcn_pallas.11} parent=1 // pred_check
      _
    $region19: #{tcn_pallas.11} parent=1 // pred_check_branch
      %57 = sbr.rel (0) target = $region21
    $region20: #{tcn_pallas.11} parent=1 // pred_region
      %s59 = ssub.s32 128, 128
      %60 = vsyncadd [#allocation9], %s59
      %s62 = sshll.u32 [#allocation10], 4
      %s63 = int_to_ptr.vmem [resolvable:$true] %s62
      %65 = dma.hbm_to_vmem [thread:$0]  %s4, 128, %s63, [#allocation9]
    $region21: #{tcn_pallas.11} parent=1 // pred_fallthru
      _
    // Predicated region
    $region22: #{tcn_pallas.11} parent=1 // pred_check
      _
    $region23: #{tcn_pallas.11} parent=1 // pred_check_branch
      %67 = sbr.rel (0) target = $region25
    $region24: #{tcn_pallas.11} parent=1 // pred_region
      %s69 = ssub.s32 16, 16
      %70 = vsyncadd [#allocation12], %s69
      %s72 = sshll.u32 [#allocation11], 4
      %s73 = int_to_ptr.vmem [resolvable:$true] %s72
      %75 = dma.hbm_to_vmem [thread:$0]  %s5, 16, %s73, [#allocation12]
    $region25: #{tcn_pallas.11} parent=1 // pred_fallthru
      _
    // Predicated region
    $region26: #{tcn_pallas.11} parent=1 // pred_check
      _
    $region27: #{tcn_pallas.11} parent=1 // pred_check_branch
      %77 = sbr.rel (0) target = $region29
    $region28: #{tcn_pallas.11} parent=1 // pred_region
      %78 = dma.done [#allocation3], 128
    $region29: #{tcn_pallas.11} parent=1 // pred_fallthru
      _
    // Predicated region
    $region30: #{tcn_pallas.11} parent=1 // pred_check
      _
    $region31: #{tcn_pallas.11} parent=1 // pred_check_branch
      %80 = sbr.rel (0) target = $region33
    $region32: #{tcn_pallas.11} parent=1 // pred_region
      %81 = dma.done [#allocation6], 128
    $region33: #{tcn_pallas.11} parent=1 // pred_fallthru
      _
    // Predicated region
    $region34: #{tcn_pallas.11} parent=1 // pred_check
      _
    $region35: #{tcn_pallas.11} parent=1 // pred_check_branch
      %83 = sbr.rel (0) target = $region37
    $region36: #{tcn_pallas.11} parent=1 // pred_region
      %84 = dma.done [#allocation6], 16
    $region37: #{tcn_pallas.11} parent=1 // pred_fallthru
      _
    // Predicated region
    $region38: #{tcn_pallas.11} parent=1 // pred_check
      _
    $region39: #{tcn_pallas.11} parent=1 // pred_check_branch
      %86 = sbr.rel (0) target = $region41
    $region40: #{tcn_pallas.11} parent=1 // pred_region
      %87 = dma.done [#allocation9], 128
    $region41: #{tcn_pallas.11} parent=1 // pred_fallthru
      _
    // Predicated region
    $region42: #{tcn_pallas.11} parent=1 // pred_check
      _
    $region43: #{tcn_pallas.11} parent=1 // pred_check_branch
      %89 = sbr.rel (0) target = $region45
    $region44: #{tcn_pallas.11} parent=1 // pred_region
      %90 = dma.done [#allocation9], 128
    $region45: #{tcn_pallas.11} parent=1 // pred_fallthru
      _
    // Predicated region
    $region46: #{tcn_pallas.11} parent=1 // pred_check
      _
    $region47: #{tcn_pallas.11} parent=1 // pred_check_branch
      %92 = sbr.rel (0) target = $region49
    $region48: #{tcn_pallas.11} parent=1 // pred_region
      %93 = dma.done [#allocation12], 16
    $region49: #{tcn_pallas.11} parent=1 // pred_fallthru
      _
    %v94 = vld [vmem:[#allocation2] sm:$0xff]
    %v95 = vld [vmem:[#allocation5] sm:$0xff]
    %v96 = vld [vmem:[#allocation7] sm:$0x1]
    %v98 = vlaneseq
    %v99 = vshrl.u32 %v98, 7
    %v100 = vsub.s32 0, %v99
    %v101 = vrot.slane %v96, %v100
    %vm103 = vcmask 64512
    %v105 = vsel %vm103, %v94, 0
    %107 = vmatprep.subr.mxu0 0.0
    %108 = vmatpush1.msra.mxu0 %v95
    %109 = vmatprep.subr.mxu0 0.0
    %110 = vmatpush1.msra.mxu0 0.0
    %111 = vmatprep.subr.mxu0 0.0
    %112 = vmatpush1.msra.mxu0 0.0
    %113 = vmatprep.subr.mxu0 0.0
    %114 = vmatpush1.msra.mxu0 0.0
    %115 = vmatprep.subr.mxu0 0.0
    %116 = vmatpush1.msra.mxu0 0.0
    %117 = vmatprep.subr.mxu0 0.0
    %118 = vmatpush1.msra.mxu0 0.0
    %119 = vmatprep.subr.mxu0 0.0
    %120 = vmatpush1.msra.mxu0 0.0
    %121 = vmatprep.subr.mxu0 0.0
    %122 = vmatpush1.msra.mxu0 0.0
    %123 = vmatprep.subr.mxu0 0.0
    %124 = vmatpush1.msra.mxu0 0.0
    %125 = vmatprep.subr.mxu0 0.0
    %126 = vmatpush1.msra.mxu0 0.0
    %127 = vmatprep.subr.mxu0 0.0
    %128 = vmatpush1.msra.mxu0 0.0
    %129 = vmatprep.subr.mxu0 0.0
    %130 = vmatpush1.msra.mxu0 0.0
    %131 = vmatprep.subr.mxu0 0.0
    %132 = vmatpush1.msra.mxu0 0.0
    %133 = vmatprep.subr.mxu0 0.0
    %134 = vmatpush1.msra.mxu0 0.0
    %135 = vmatprep.subr.mxu0 0.0
    %136 = vmatpush1.msra.mxu0 0.0
    %137 = vmatprep.subr.mxu0 0.0
    %138 = vmatpush1.msra.mxu0 0.0
    %139 = vmatprep.subr.mxu0 0.0
    %140 = vmatpush1.msra.mxu0 0.0
    %141 = vmatprep.subr.mxu0 0.0
    %142 = vmatpush1.msra.mxu0 0.0
    %143 = vmatprep.subr.mxu0 0.0
    %144 = vmatpush1.msra.mxu0 0.0
    %145 = vmatprep.subr.mxu0 0.0
    %146 = vmatpush1.msra.mxu0 0.0
    %147 = vmatprep.subr.mxu0 0.0
    %148 = vmatpush1.msra.mxu0 0.0
    %149 = vmatprep.subr.mxu0 0.0
    %150 = vmatpush1.msra.mxu0 0.0
    %151 = vmatprep.subr.mxu0 0.0
    %152 = vmatpush1.msra.mxu0 0.0
    %153 = vmatprep.subr.mxu0 0.0
    %154 = vmatpush1.msra.mxu0 0.0
    %155 = vmatprep.subr.mxu0 0.0
    %156 = vmatpush1.msra.mxu0 0.0
    %157 = vmatprep.subr.mxu0 0.0
    %158 = vmatpush1.msra.mxu0 0.0
    %159 = vmatprep.subr.mxu0 0.0
    %160 = vmatpush1.msra.mxu0 0.0
    %161 = vmatprep.subr.mxu0 0.0
    %162 = vmatpush1.msra.mxu0 0.0
    %163 = vmatprep.subr.mxu0 0.0
    %164 = vmatpush1.msra.mxu0 0.0
    %165 = vmatprep.subr.mxu0 0.0
    %166 = vmatpush1.msra.mxu0 0.0
    %167 = vmatprep.subr.mxu0 0.0
    %168 = vmatpush1.msra.mxu0 0.0
    %169 = vmatprep.subr.mxu0 0.0
    %170 = vmatpush1.msra.mxu0 0.0
    %171 = vmatprep.mubr.f32.mxu0 0.0
    %172 = vmatmul.mubr.f32.gmra.mrb[0].mxu0 %v105
    %v173 = vpop.f32.mrb[0].mxu0
    %v174 = vadd.f32 %v101, %v173
    %v175 = vpop.f32.mrb[0].mxu0
    %176 = vdwg.mxu0
    %v177 = vld [vmem:[#allocation8] sm:$0xff]
    %v178 = vadd.f32 %v174, %v177
    %v179 = vmax.f32 %v178, 0.0
    %v180 = vld [vmem:[#allocation10] sm:$0xff]
    %v181 = vld [vmem:[#allocation11] sm:$0x1]
    %v183 = vlaneseq
    %v184 = vshrl.u32 %v183, 7
    %v185 = vsub.s32 0, %v184
    %v186 = vrot.slane %v181, %v185
    %v189 = vsel %vm103, %v179, 0
    %191 = vmatprep.subr.mxu0 0.0
    %192 = vmatpush1.msra.mxu0 %v180
    %193 = vmatprep.subr.mxu0 0.0
    %194 = vmatpush1.msra.mxu0 0.0
    %195 = vmatprep.subr.mxu0 0.0
    %196 = vmatpush1.msra.mxu0 0.0
    %197 = vmatprep.subr.mxu0 0.0
    %198 = vmatpush1.msra.mxu0 0.0
    %199 = vmatprep.subr.mxu0 0.0
    %200 = vmatpush1.msra.mxu0 0.0
    %201 = vmatprep.subr.mxu0 0.0
    %202 = vmatpush1.msra.mxu0 0.0
    %203 = vmatprep.subr.mxu0 0.0
    %204 = vmatpush1.msra.mxu0 0.0
    %205 = vmatprep.subr.mxu0 0.0
    %206 = vmatpush1.msra.mxu0 0.0
    %207 = vmatprep.subr.mxu0 0.0
    %208 = vmatpush1.msra.mxu0 0.0
    %209 = vmatprep.subr.mxu0 0.0
    %210 = vmatpush1.msra.mxu0 0.0
    %211 = vmatprep.subr.mxu0 0.0
    %212 = vmatpush1.msra.mxu0 0.0
    %213 = vmatprep.subr.mxu0 0.0
    %214 = vmatpush1.msra.mxu0 0.0
    %215 = vmatprep.subr.mxu0 0.0
    %216 = vmatpush1.msra.mxu0 0.0
    %217 = vmatprep.subr.mxu0 0.0
    %218 = vmatpush1.msra.mxu0 0.0
    %219 = vmatprep.subr.mxu0 0.0
    %220 = vmatpush1.msra.mxu0 0.0
    %221 = vmatprep.subr.mxu0 0.0
    %222 = vmatpush1.msra.mxu0 0.0
    %223 = vmatprep.subr.mxu0 0.0
    %224 = vmatpush1.msra.mxu0 0.0
    %225 = vmatprep.subr.mxu0 0.0
    %226 = vmatpush1.msra.mxu0 0.0
    %227 = vmatprep.subr.mxu0 0.0
    %228 = vmatpush1.msra.mxu0 0.0
    %229 = vmatprep.subr.mxu0 0.0
    %230 = vmatpush1.msra.mxu0 0.0
    %231 = vmatprep.subr.mxu0 0.0
    %232 = vmatpush1.msra.mxu0 0.0
    %233 = vmatprep.subr.mxu0 0.0
    %234 = vmatpush1.msra.mxu0 0.0
    %235 = vmatprep.subr.mxu0 0.0
    %236 = vmatpush1.msra.mxu0 0.0
    %237 = vmatprep.subr.mxu0 0.0
    %238 = vmatpush1.msra.mxu0 0.0
    %239 = vmatprep.subr.mxu0 0.0
    %240 = vmatpush1.msra.mxu0 0.0
    %241 = vmatprep.subr.mxu0 0.0
    %242 = vmatpush1.msra.mxu0 0.0
    %243 = vmatprep.subr.mxu0 0.0
    %244 = vmatpush1.msra.mxu0 0.0
    %245 = vmatprep.subr.mxu0 0.0
    %246 = vmatpush1.msra.mxu0 0.0
    %247 = vmatprep.subr.mxu0 0.0
    %248 = vmatpush1.msra.mxu0 0.0
    %249 = vmatprep.subr.mxu0 0.0
    %250 = vmatpush1.msra.mxu0 0.0
    %251 = vmatprep.subr.mxu0 0.0
    %252 = vmatpush1.msra.mxu0 0.0
    %253 = vmatprep.subr.mxu0 0.0
    %254 = vmatpush1.msra.mxu0 0.0
    %255 = vmatprep.mubr.f32.mxu0 0.0
    %256 = vmatmul.mubr.f32.gmra.mrb[0].mxu0 %v189
    %v257 = vpop.f32.mrb[0].mxu0
    %v258 = vadd.f32 %v186, %v257
    %v259 = vpop.f32.mrb[0].mxu0
    %260 = vdwg.mxu0
    %v261 = vmax.f32 %v258, 0.0
    %262 = vst.msk [vmem:[#allocation13] sm:$0xff] %vm103, %v261
    // Predicated region
    $region50: #{tcn_pallas.11} parent=1 // pred_check
      _
    $region51: #{tcn_pallas.11} parent=1 // pred_check_branch
      %264 = sbr.rel (0) target = $region53
    $region52: #{tcn_pallas.11} parent=1 // pred_region
      %s266 = ssub.s32 128, 128
      %267 = vsyncadd [#allocation4], %s266
      %s269 = sshll.u32 [#allocation13], 4
      %s270 = int_to_ptr.vmem [resolvable:$true] %s269
      %272 = dma.vmem_to_hbm [thread:$0]  %s270, 128, %s6, [#allocation4]
    $region53: #{tcn_pallas.11} parent=1 // pred_fallthru
      _
    // Predicated region
    $region54: #{tcn_pallas.11} parent=1 // pred_check
      _
    $region55: #{tcn_pallas.11} parent=1 // pred_check_branch
      %274 = sbr.rel (0) target = $region57
    $region56: #{tcn_pallas.11} parent=1 // pred_region
      %275 = dma.done [#allocation4], 128
    $region57: #{tcn_pallas.11} parent=1 // pred_fallthru
      _
    %276 = vsyncpa [#allocation3], 1
    %277 = vsyncpa [#allocation6], 1
    %278 = vsyncpa [#allocation9], 1
    %279 = vsyncpa [#allocation12], 1
    %280 = vsyncpa [#allocation4], 1

// kernel: tcn_pallas.7
$region0: #{tcn_pallas.7}
  #allocation0 [shape = 'u32[]', space=smem, size = 0x4, offset = 0x4, fixed_abs, tag = 'smem constant byte address 0x4 - core index']
  #allocation1 [shape = 'u32[144,128]{1,0:T(1,128)}', space=vmem, size = 0x12000, scoped, tag = 'internal scratch']
  #allocation2 [shape = 'f32[52,56]{1,0:T(8,128)}', space=vmem, size = 0x7000, scoped, tag = 'scratch operand']
  %s0 = inlined_call_operand.hbm [shape: f32[2,4,19,8], index: 0, kind: input, shape index: {}]
  %s1 = inlined_call_operand.hbm [shape: f32[56,16], index: 1, kind: input, shape index: {}]
  %s2 = inlined_call_operand.hbm [shape: f32[1,16], index: 2, kind: input, shape index: {}]
  %s3 = inlined_call_operand.hbm [shape: f32[8,8], index: 3, kind: input, shape index: {}]
  %s4 = inlined_call_operand.hbm [shape: f32[1,8], index: 4, kind: input, shape index: {}]
  %s5 = inlined_call_operand.hbm [shape: f32[2,4,13,8], index: 5, kind: output, shape index: {0}]
  %s6 = inlined_call_operand.hbm [shape: f32[2,4,13,8], index: 6, kind: output, shape index: {1}]
  %7 = xla_tuple %s5, %s6
  %s8 = sld [smem:[#allocation0]]
  $region81: #{tcn_pallas.7} parent=0
    _
  %s10 = ssub.s32 1, %s8
  %s11 = scalar_select 0, %s10, %s8
  $region1: #{tcn_pallas.7} parent=0
    #allocation3 [shape = 'u8[98304]{0}', space=vmem, size = 0x18000, scoped, tag = 'input window, operand 0']
    #allocation4 [shape = 's32[2]{0}', space=sflag, size = 0x8, scoped, tag = 'scoped memory for tcn_pallas.7']
    #allocation5 [shape = 's32[2]{0}', space=sflag, size = 0x8, scoped, tag = 'scoped memory for tcn_pallas.7']
    #allocation6 [shape = 'u8[28672]{0}', space=vmem, size = 0x7000, scoped, tag = 'input window, operand 1, single buffered']
    #allocation7 [shape = 's32[1]{0}', space=sflag, size = 0x4, scoped, tag = 'scoped memory for tcn_pallas.7']
    #allocation8 [shape = 'u8[512]{0}', space=vmem, size = 0x400, scoped, tag = 'input window, operand 2, single buffered']
    #allocation9 [shape = 'u8[4096]{0}', space=vmem, size = 0x1000, scoped, tag = 'input window, operand 3, single buffered']
    #allocation10 [shape = 's32[1]{0}', space=sflag, size = 0x4, scoped, tag = 'scoped memory for tcn_pallas.7']
    #allocation11 [shape = 'u8[512]{0}', space=vmem, size = 0x400, scoped, tag = 'input window, operand 4, single buffered']
    #allocation12 [shape = 'u8[65536]{0}', space=vmem, size = 0x10000, scoped, tag = 'output window, operand 0']
    #allocation13 [shape = 'u8[65536]{0}', space=vmem, size = 0x10000, scoped, tag = 'output window, operand 1']
    #allocation14 [shape = 's32[2]{0}', space=sflag, size = 0x8, scoped, tag = 'scoped memory for tcn_pallas.7']
    %12 = vsyncpa [#allocation4], 0
    %s13 = scalar_lea.sflag [#allocation4], 1
    %14 = vsyncpa %s13, 0
    %15 = vsyncpa [#allocation7], 0
    %16 = vsyncpa [#allocation10], 0
    %17 = vsyncpa [#allocation5], 0
    %s18 = scalar_lea.sflag [#allocation5], 1
    %19 = vsyncpa %s18, 0
    %20 = vsyncpa [#allocation14], 0
    %s21 = scalar_lea.sflag [#allocation14], 1
    %22 = vsyncpa %s21, 0
    loop: start=0, step=1, limit=4
    $region2: #{tcn_pallas.7} parent=1 // loop_pre_header
      _
    $region3: #{tcn_pallas.7} parent=1 // loop_header
      %s24 = sphi 0, %s28
      %p25 = scmp.ge.s32.totalorder %s24, 4
      %s34 = sphi 0, %s36
      %s37 = sphi 0, %s34
      %s38 = sphi 0, %s37
      %s54 = sphi 0, %s38
      %s58 = sphi 0, %s58
      %s60 = sphi 0, %s58
      %s61 = sphi 0, %s60
      %s75 = sphi 0, %s61
      %s79 = sphi 0, %s79
      %s81 = sphi 0, %s79
      %s82 = sphi 0, %s81
      %s96 = sphi 0, %s82
      %s100 = sphi 0, %s100
      %s102 = sphi 0, %s100
      %s103 = sphi 0, %s102
      %s117 = sphi 0, %s103
      %s121 = sphi 0, %s121
      %s123 = sphi 0, %s121
      %s124 = sphi 0, %s123
      %s138 = sphi 0, %s124
      %s144 = sphi 0, %s146
      %s147 = sphi 0, %s144
      %s148 = sphi 0, %s147
      %s164 = sphi 0, %s148
      %s170 = sphi 0, %s172
      %s173 = sphi 0, %s170
      %s174 = sphi 0, %s173
      %s190 = sphi 0, %s174
    $region4: #{tcn_pallas.7} parent=1 // loop_header_branch
      %27 = sbr.rel (%p25) target = $region8
    $region5: #{tcn_pallas.7} parent=1 // loop_body
      %s29 = ssub.s32 %s24, 1
      %s30 = ssub.s32 %s24, 2
      %s31 = sadd.s32 %s24, 1
      %s32 = ssub.s32 %s24, %s31
      %p33 = scmp.eq.s32.totalorder %s32, 0
      %s35 = sadd.s32 %s34, 1
      %s36 = scalar_select %p33, %s34, %s35
      %p39 = pneg %p33
      %p40 = scmp.eq.s32.totalorder %s24, 1
      %p41 = por %p39, %p40
      %p42 = scmp.ne.s32.totalorder %s34, %s37
      %p43 = scmp.eq.s32.totalorder %s24, 0
      %p44 = por %p42, %p43
      %p45 = scmp.ne.s32.totalorder %s34, %s37
      %p46 = scmp.eq.s32.totalorder %s29, 1
      %p47 = por %p45, %p46
      %p48 = scmp.ne.s32.totalorder %s37, %s38
      %p49 = scmp.eq.s32.totalorder %s29, 0
      %p50 = por %p48, %p49
      %p51 = scmp.ne.s32.totalorder %s37, %s38
      %p52 = scmp.eq.s32.totalorder %s30, 1
      %p53 = por %p51, %p52
      %p55 = scmp.ne.s32.totalorder %s38, %s54
      %p56 = scmp.eq.s32.totalorder %s30, 0
      %p57 = por %p55, %p56
      %s59 = sadd.s32 %s58, 1
      %p62 = scmp.eq.s32.totalorder %s24, 1
      %p63 = scmp.ne.s32.totalorder %s58, %s60
      %p64 = scmp.eq.s32.totalorder %s24, 0
      %p65 = por %p63, %p64
      %p66 = scmp.ne.s32.totalorder %s58, %s60
      %p67 = scmp.eq.s32.totalorder %s29, 1
      %p68 = por %p66, %p67
      %p69 = scmp.ne.s32.totalorder %s60, %s61
      %p70 = scmp.eq.s32.totalorder %s29, 0
      %p71 = por %p69, %p70
      %p72 = scmp.ne.s32.totalorder %s60, %s61
      %p73 = scmp.eq.s32.totalorder %s30, 1
      %p74 = por %p72, %p73
      %p76 = scmp.ne.s32.totalorder %s61, %s75
      %p77 = scmp.eq.s32.totalorder %s30, 0
      %p78 = por %p76, %p77
      %s80 = sadd.s32 %s79, 1
      %p83 = scmp.eq.s32.totalorder %s24, 1
      %p84 = scmp.ne.s32.totalorder %s79, %s81
      %p85 = scmp.eq.s32.totalorder %s24, 0
      %p86 = por %p84, %p85
      %p87 = scmp.ne.s32.totalorder %s79, %s81
      %p88 = scmp.eq.s32.totalorder %s29, 1
      %p89 = por %p87, %p88
      %p90 = scmp.ne.s32.totalorder %s81, %s82
      %p91 = scmp.eq.s32.totalorder %s29, 0
      %p92 = por %p90, %p91
      %p93 = scmp.ne.s32.totalorder %s81, %s82
      %p94 = scmp.eq.s32.totalorder %s30, 1
      %p95 = por %p93, %p94
      %p97 = scmp.ne.s32.totalorder %s82, %s96
      %p98 = scmp.eq.s32.totalorder %s30, 0
      %p99 = por %p97, %p98
      %s101 = sadd.s32 %s100, 1
      %p104 = scmp.eq.s32.totalorder %s24, 1
      %p105 = scmp.ne.s32.totalorder %s100, %s102
      %p106 = scmp.eq.s32.totalorder %s24, 0
      %p107 = por %p105, %p106
      %p108 = scmp.ne.s32.totalorder %s100, %s102
      %p109 = scmp.eq.s32.totalorder %s29, 1
      %p110 = por %p108, %p109
      %p111 = scmp.ne.s32.totalorder %s102, %s103
      %p112 = scmp.eq.s32.totalorder %s29, 0
      %p113 = por %p111, %p112
      %p114 = scmp.ne.s32.totalorder %s102, %s103
      %p115 = scmp.eq.s32.totalorder %s30, 1
      %p116 = por %p114, %p115
      %p118 = scmp.ne.s32.totalorder %s103, %s117
      %p119 = scmp.eq.s32.totalorder %s30, 0
      %p120 = por %p118, %p119
      %s122 = sadd.s32 %s121, 1
      %p125 = scmp.eq.s32.totalorder %s24, 1
      %p126 = scmp.ne.s32.totalorder %s121, %s123
      %p127 = scmp.eq.s32.totalorder %s24, 0
      %p128 = por %p126, %p127
      %p129 = scmp.ne.s32.totalorder %s121, %s123
      %p130 = scmp.eq.s32.totalorder %s29, 1
      %p131 = por %p129, %p130
      %p132 = scmp.ne.s32.totalorder %s123, %s124
      %p133 = scmp.eq.s32.totalorder %s29, 0
      %p134 = por %p132, %p133
      %p135 = scmp.ne.s32.totalorder %s123, %s124
      %p136 = scmp.eq.s32.totalorder %s30, 1
      %p137 = por %p135, %p136
      %p139 = scmp.ne.s32.totalorder %s124, %s138
      %p140 = scmp.eq.s32.totalorder %s30, 0
      %p141 = por %p139, %p140
      %s142 = ssub.s32 %s24, %s31
      %p143 = scmp.eq.s32.totalorder %s142, 0
      %s145 = sadd.s32 %s144, 1
      %s146 = scalar_select %p143, %s144, %s145
      %p149 = pneg %p143
      %p150 = scmp.eq.s32.totalorder %s24, 1
      %p151 = por %p149, %p150
      %p152 = scmp.ne.s32.totalorder %s144, %s147
      %p153 = scmp.eq.s32.totalorder %s24, 0
      %p154 = por %p152, %p153
      %p155 = scmp.ne.s32.totalorder %s144, %s147
      %p156 = scmp.eq.s32.totalorder %s29, 1
      %p157 = por %p155, %p156
      %p158 = scmp.ne.s32.totalorder %s147, %s148
      %p159 = scmp.eq.s32.totalorder %s29, 0
      %p160 = por %p158, %p159
      %p161 = scmp.ne.s32.totalorder %s147, %s148
      %p162 = scmp.eq.s32.totalorder %s30, 1
      %p163 = por %p161, %p162
      %p165 = scmp.ne.s32.totalorder %s148, %s164
      %p166 = scmp.eq.s32.totalorder %s30, 0
      %p167 = por %p165, %p166
      %s168 = ssub.s32 %s24, %s31
      %p169 = scmp.eq.s32.totalorder %s168, 0
      %s171 = sadd.s32 %s170, 1
      %s172 = scalar_select %p169, %s170, %s171
      %p175 = pneg %p169
      %p176 = scmp.eq.s32.totalorder %s24, 1
      %p177 = por %p175, %p176
      %p178 = scmp.ne.s32.totalorder %s170, %s173
      %p179 = scmp.eq.s32.totalorder %s24, 0
      %p180 = por %p178, %p179
      %p181 = scmp.ne.s32.totalorder %s170, %s173
      %p182 = scmp.eq.s32.totalorder %s29, 1
      %p183 = por %p181, %p182
      %p184 = scmp.ne.s32.totalorder %s173, %s174
      %p185 = scmp.eq.s32.totalorder %s29, 0
      %p186 = por %p184, %p185
      %p187 = scmp.ne.s32.totalorder %s173, %s174
      %p188 = scmp.eq.s32.totalorder %s30, 1
      %p189 = por %p187, %p188
      %p191 = scmp.ne.s32.totalorder %s174, %s190
      %p192 = scmp.eq.s32.totalorder %s30, 0
      %p193 = por %p191, %p192
      %p194 = scmp.le.s32.totalorder 1, %s24
      %p195 = scmp.lt.s32.totalorder %s24, 3
      %p196 = pnand %p194, %p195
      %p197 = pneg %p196
      // Predicated region
      $region9: #{tcn_pallas.7} parent=5 // pred_check
        _
      $region10: #{tcn_pallas.7} parent=5 // pred_check_branch
        %199 = sbr.rel (%p196) target = $region12
      $region11: #{tcn_pallas.7} parent=5 // pred_region
        %s200 = ssub.s32 %s24, 1
        // Predicated region
        $region13: #{tcn_pallas.7} parent=11 // pred_check
          %p201 = pneg %p71
        $region14: #{tcn_pallas.7} parent=11 // pred_check_branch
          %203 = sbr.rel (%p201) target = $region16
        $region15: #{tcn_pallas.7} parent=11 // pred_region
          %s205 = ssub.s32 896, 896
          %206 = vsyncadd [#allocation7], %s205
          %s207 = sshll.u32 [#allocation6], 4
          %s208 = int_to_ptr.vmem [resolvable:$true] %s207
          %213 = dma.hbm_to_vmem [thread:$0]  %s1, 896, %s208, [#allocation7], 128, 128, 8
        $region16: #{tcn_pallas.7} parent=11 // pred_fallthru
          _
        // Predicated region
        $region17: #{tcn_pallas.7} parent=11 // pred_check
          %p214 = pneg %p92
        $region18: #{tcn_pallas.7} parent=11 // pred_check_branch
          %216 = sbr.rel (%p214) target = $region20
        $region19: #{tcn_pallas.7} parent=11 // pred_region
          %s218 = ssub.s32 16, 16
          %219 = vsyncadd [#allocation7], %s218
          %s221 = sshll.u32 [#allocation8], 4
          %s222 = int_to_ptr.vmem [resolvable:$true] %s221
          %224 = dma.hbm_to_vmem [thread:$0]  %s2, 16, %s222, [#allocation7]
        $region20: #{tcn_pallas.7} parent=11 // pred_fallthru
          _
        // Predicated region
        $region21: #{tcn_pallas.7} parent=11 // pred_check
          %p225 = pneg %p113
        $region22: #{tcn_pallas.7} parent=11 // pred_check_branch
          %227 = sbr.rel (%p225) target = $region24
        $region23: #{tcn_pallas.7} parent=11 // pred_region
          %s229 = ssub.s32 128, 128
          %230 = vsyncadd [#allocation10], %s229
          %s232 = sshll.u32 [#allocation9], 4
          %s233 = int_to_ptr.vmem [resolvable:$true] %s232
          %235 = dma.hbm_to_vmem [thread:$0]  %s3, 128, %s233, [#allocation10]
        $region24: #{tcn_pallas.7} parent=11 // pred_fallthru
          _
        // Predicated region
        $region25: #{tcn_pallas.7} parent=11 // pred_check
          %p236 = pneg %p134
        $region26: #{tcn_pallas.7} parent=11 // pred_check_branch
          %238 = sbr.rel (%p236) target = $region28
        $region27: #{tcn_pallas.7} parent=11 // pred_region
          %s240 = ssub.s32 16, 16
          %241 = vsyncadd [#allocation10], %s240
          %s243 = sshll.u32 [#allocation11], 4
          %s244 = int_to_ptr.vmem [resolvable:$true] %s243
          %246 = dma.hbm_to_vmem [thread:$0]  %s4, 16, %s244, [#allocation10]
        $region28: #{tcn_pallas.7} parent=11 // pred_fallthru
          _
      $region12: #{tcn_pallas.7} parent=5 // pred_fallthru
        _
      %p247 = scmp.lt.s32.totalorder %s24, 2
      // Predicated region
      $region29: #{tcn_pallas.7} parent=5 // pred_check
        %p248 = pneg %p247
      $region30: #{tcn_pallas.7} parent=5 // pred_check_branch
        %250 = sbr.rel (%p248) target = $region32
      $region31: #{tcn_pallas.7} parent=5 // pred_region
        // Predicated region
        $region33: #{tcn_pallas.7} parent=31 // pred_check
          %p251 = pneg %p44
        $region34: #{tcn_pallas.7} parent=31 // pred_check_branch
          %253 = sbr.rel (%p251) target = $region36
        $region35: #{tcn_pallas.7} parent=31 // pred_region
          %s254 = sand.u32 %s34, 1
          %s255 = scalar_lea.sflag [#allocation4], %s254
          %s256 = sand.u32 %s34, 1
          %s257 = smul.addr %s256, 96
          %s258 = scalar_lea.vmem [#allocation3], %s257
          %s260 = ssub.s32 1536, 1536
          %261 = vsyncadd %s255, %s260
          %s262 = smul.addr %s24, 12
          %s263 = smul.addr %s262, 128
          %s264 = scalar_lea.hbm %s0, %s263
          %s265 = sshll.u32 %s258, 4
          %s266 = int_to_ptr.vmem [resolvable:$true] %s265
          %271 = dma.hbm_to_vmem [thread:$0]  %s264, 1536, %s266, %s255, 128, 128, 8
        $region36: #{tcn_pallas.7} parent=31 // pred_fallthru
          _
      $region32: #{tcn_pallas.7} parent=5 // pred_fallthru
        _
      %p272 = scmp.le.s32.totalorder 1, %s24
      %p273 = scmp.lt.s32.totalorder %s24, 3
      %p274 = pnand %p272, %p273
      %p275 = pneg %p274
      // Predicated region
      $region37: #{tcn_pallas.7} parent=5 // pred_check
        _
      $region38: #{tcn_pallas.7} parent=5 // pred_check_branch
        %277 = sbr.rel (%p274) target = $region40
      $region39: #{tcn_pallas.7} parent=5 // pred_region
        %s278 = ssub.s32 %s24, 1
        %s279 = sand.u32 %s37, 1
        %s280 = scalar_lea.sflag [#allocation4], %s279
        %s281 = sand.u32 %s37, 1
        %s282 = smul.addr %s281, 96
        %s283 = scalar_lea.vmem [#allocation3], %s282
        // Predicated region
        $region41: #{tcn_pallas.7} parent=39 // pred_check
          %p284 = pneg %p50
        $region42: #{tcn_pallas.7} parent=39 // pred_check_branch
          %286 = sbr.rel (%p284) target = $region44
        $region43: #{tcn_pallas.7} parent=39 // pred_region
          %287 = dma.done %s280, 1536
        $region44: #{tcn_pallas.7} parent=39 // pred_fallthru
          _
        // Predicated region
        $region45: #{tcn_pallas.7} parent=39 // pred_check
          %p288 = pneg %p71
        $region46: #{tcn_pallas.7} parent=39 // pred_check_branch
          %290 = sbr.rel (%p288) target = $region48
        $region47: #{tcn_pallas.7} parent=39 // pred_region
          %291 = dma.done [#allocation7], 896
        $region48: #{tcn_pallas.7} parent=39 // pred_fallthru
          _
        // Predicated region
        $region49: #{tcn_pallas.7} parent=39 // pred_check
          %p292 = pneg %p92
        $region50: #{tcn_pallas.7} parent=39 // pred_check_branch
          %294 = sbr.rel (%p292) target = $region52
        $region51: #{tcn_pallas.7} parent=39 // pred_region
          %295 = dma.done [#allocation7], 16
        $region52: #{tcn_pallas.7} parent=39 // pred_fallthru
          _
        // Predicated region
        $region53: #{tcn_pallas.7} parent=39 // pred_check
          %p296 = pneg %p113
        $region54: #{tcn_pallas.7} parent=39 // pred_check_branch
          %298 = sbr.rel (%p296) target = $region56
        $region55: #{tcn_pallas.7} parent=39 // pred_region
          %299 = dma.done [#allocation10], 128
        $region56: #{tcn_pallas.7} parent=39 // pred_fallthru
          _
        // Predicated region
        $region57: #{tcn_pallas.7} parent=39 // pred_check
          %p300 = pneg %p134
        $region58: #{tcn_pallas.7} parent=39 // pred_check_branch
          %302 = sbr.rel (%p300) target = $region60
        $region59: #{tcn_pallas.7} parent=39 // pred_region
          %303 = dma.done [#allocation10], 16
        $region60: #{tcn_pallas.7} parent=39 // pred_fallthru
          _
        %s304 = sand.u32 %s37, 1
        %s305 = scalar_lea.sflag [#allocation4], %s304
        %s306 = sand.u32 %s37, 1
        %s307 = smul.addr %s306, 96
        %s308 = scalar_lea.vmem [#allocation3], %s307
        %p309 = pneg %p50
        %p310 = pneg %p47
        %p311 = pneg %p71
        %p312 = pneg %p68
        %p313 = pneg %p92
        %p314 = pneg %p89
        %p315 = pneg %p113
        %p316 = pneg %p110
        %p317 = pneg %p134
        %p318 = pneg %p131
        %p319 = pneg %p160
        %p320 = pneg %p157
        %s321 = sand.u32 %s147, 1
        %s322 = scalar_lea.sflag [#allocation5], %s321
        %s323 = sand.u32 %s147, 1
        %s324 = smul.addr %s323, 64
        %s325 = scalar_lea.vmem [#allocation12], %s324
        %p326 = pneg %p186
        %p327 = pneg %p183
        %s328 = sand.u32 %s173, 1
        %s329 = scalar_lea.sflag [#allocation14], %s328
        %s330 = sand.u32 %s173, 1
        %s331 = smul.addr %s330, 64
        %s332 = scalar_lea.vmem [#allocation13], %s331
        %v333 = vld [vmem:[%s283] sm:$0xff]
        %v334 = vld [vmem:[%s283 + $0x8] sm:$0x1f]
        %v335 = vld [vmem:[%s283 + $0x18] sm:$0xff]
        %v336 = vld [vmem:[%s283 + $0x20] sm:$0x1f]
        %v337 = vld [vmem:[%s283 + $0x30] sm:$0xff]
        %v338 = vld [vmem:[%s283 + $0x38] sm:$0x1f]
        %v339 = vld [vmem:[%s283 + $0x48] sm:$0xff]
        %v340 = vld [vmem:[%s283 + $0x50] sm:$0x1f]
        %v349 = vcombine.high %v333, %v333
        %v351 = vunpack.c.l.s4 1966171168
        %v352 = vunpack.c.0.s8 %v351
        %v353 = vlaneseq
        %v354 = vshrl.u32 %v353, 7
        %v355 = vsub.s32 %v352, %v354
        %v356 = vrot.slane %v333, %v355
        %v358 = vunpack.c.l.s4 1966171168
        %v359 = vunpack.c.0.s8 %v358
        %v360 = vlaneseq
        %v361 = vshrl.u32 %v360, 7
        %v362 = vsub.s32 %v359, %v361
        %v363 = vrot.slane %v349, %v362
        %v364 = vcombine.high %v356, %v356
        %v365 = vcombine.high %v363, %v363
        %v367 = vunpack.c.l.s4 1966171168
        %v368 = vunpack.c.0.s8 %v367
        %v369 = vlaneseq
        %v370 = vshrl.u32 %v369, 7
        %v371 = vsub.s32 %v368, %v370
        %v372 = vrot.slane %v356, %v371
        %v374 = vunpack.c.l.s4 1966171168
        %v375 = vunpack.c.0.s8 %v374
        %v376 = vlaneseq
        %v377 = vshrl.u32 %v376, 7
        %v378 = vsub.s32 %v375, %v377
        %v379 = vrot.slane %v363, %v378
        %v381 = vunpack.c.l.s4 1966171168
        %v382 = vunpack.c.0.s8 %v381
        %v383 = vlaneseq
        %v384 = vshrl.u32 %v383, 7
        %v385 = vsub.s32 %v382, %v384
        %v386 = vrot.slane %v364, %v385
        %v388 = vunpack.c.l.s4 1966171168
        %v389 = vunpack.c.0.s8 %v388
        %v390 = vlaneseq
        %v391 = vshrl.u32 %v390, 7
        %v392 = vsub.s32 %v389, %v391
        %v393 = vrot.slane %v365, %v392
        %v394 = vcombine.high %v372, %v372
        %v395 = vcombine.high %v379, %v379
        %v396 = vcombine.high %v386, %v386
        %v397 = vcombine.high %v393, %v393
        %v398 = vcombine.high %v334, %v334
        %v400 = vunpack.c.l.s4 1966171168
        %v401 = vunpack.c.0.s8 %v400
        %v402 = vlaneseq
        %v403 = vshrl.u32 %v402, 7
        %v404 = vsub.s32 %v401, %v403
        %v405 = vrot.slane %v334, %v404
        %v407 = vunpack.c.l.s4 1966171168
        %v408 = vunpack.c.0.s8 %v407
        %v409 = vlaneseq
        %v410 = vshrl.u32 %v409, 7
        %v411 = vsub.s32 %v408, %v410
        %v412 = vrot.slane %v398, %v411
        %v413 = vcombine.high %v405, %v405
        %v415 = vunpack.c.l.s4 1966171168
        %v416 = vunpack.c.0.s8 %v415
        %v417 = vlaneseq
        %v418 = vshrl.u32 %v417, 7
        %v419 = vsub.s32 %v416, %v418
        %v420 = vrot.slane %v405, %v419
        %v422 = vunpack.c.l.s4 1966171168
        %v423 = vunpack.c.0.s8 %v422
        %v424 = vlaneseq
        %v425 = vshrl.u32 %v424, 7
        %v426 = vsub.s32 %v423, %v425
        %v427 = vrot.slane %v412, %v426
        %v429 = vunpack.c.l.s4 1966171168
        %v430 = vunpack.c.0.s8 %v429
        %v431 = vlaneseq
        %v432 = vshrl.u32 %v431, 7
        %v433 = vsub.s32 %v430, %v432
        %v434 = vrot.slane %v413, %v433
        %v435 = vcombine.high %v420, %v420
        %v436 = vcombine.high %v434, %v434
        %v437 = vcombine.high %v335, %v335
        %v439 = vunpack.c.l.s4 1966171168
        %v440 = vunpack.c.0.s8 %v439
        %v441 = vlaneseq
        %v442 = vshrl.u32 %v441, 7
        %v443 = vsub.s32 %v440, %v442
        %v444 = vrot.slane %v335, %v443
        %v446 = vunpack.c.l.s4 1966171168
        %v447 = vunpack.c.0.s8 %v446
        %v448 = vlaneseq
        %v449 = vshrl.u32 %v448, 7
        %v450 = vsub.s32 %v447, %v449
        %v451 = vrot.slane %v437, %v450
        %v452 = vcombine.high %v444, %v444
        %v453 = vcombine.high %v451, %v451
        %v455 = vunpack.c.l.s4 1966171168
        %v456 = vunpack.c.0.s8 %v455
        %v457 = vlaneseq
        %v458 = vshrl.u32 %v457, 7
        %v459 = vsub.s32 %v456, %v458
        %v460 = vrot.slane %v444, %v459
        %v462 = vunpack.c.l.s4 1966171168
        %v463 = vunpack.c.0.s8 %v462
        %v464 = vlaneseq
        %v465 = vshrl.u32 %v464, 7
        %v466 = vsub.s32 %v463, %v465
        %v467 = vrot.slane %v451, %v466
        %v469 = vunpack.c.l.s4 1966171168
        %v470 = vunpack.c.0.s8 %v469
        %v471 = vlaneseq
        %v472 = vshrl.u32 %v471, 7
        %v473 = vsub.s32 %v470, %v472
        %v474 = vrot.slane %v452, %v473
        %v476 = vunpack.c.l.s4 1966171168
        %v477 = vunpack.c.0.s8 %v476
        %v478 = vlaneseq
        %v479 = vshrl.u32 %v478, 7
        %v480 = vsub.s32 %v477, %v479
        %v481 = vrot.slane %v453, %v480
        %v482 = vcombine.high %v460, %v460
        %v483 = vcombine.high %v467, %v467
        %v484 = vcombine.high %v474, %v474
        %v485 = vcombine.high %v481, %v481
        %v486 = vcombine.high %v336, %v336
        %v488 = vunpack.c.l.s4 1966171168
        %v489 = vunpack.c.0.s8 %v488
        %v490 = vlaneseq
        %v491 = vshrl.u32 %v490, 7
        %v492 = vsub.s32 %v489, %v491
        %v493 = vrot.slane %v336, %v492
        %v495 = vunpack.c.l.s4 1966171168
        %v496 = vunpack.c.0.s8 %v495
        %v497 = vlaneseq
        %v498 = vshrl.u32 %v497, 7
        %v499 = vsub.s32 %v496, %v498
        %v500 = vrot.slane %v486, %v499
        %v501 = vcombine.high %v493, %v493
        %v503 = vunpack.c.l.s4 1966171168
        %v504 = vunpack.c.0.s8 %v503
        %v505 = vlaneseq
        %v506 = vshrl.u32 %v505, 7
        %v507 = vsub.s32 %v504, %v506
        %v508 = vrot.slane %v493, %v507
        %v510 = vunpack.c.l.s4 1966171168
        %v511 = vunpack.c.0.s8 %v510
        %v512 = vlaneseq
        %v513 = vshrl.u32 %v512, 7
        %v514 = vsub.s32 %v511, %v513
        %v515 = vrot.slane %v500, %v514
        %v517 = vunpack.c.l.s4 1966171168
        %v518 = vunpack.c.0.s8 %v517
        %v519 = vlaneseq
        %v520 = vshrl.u32 %v519, 7
        %v521 = vsub.s32 %v518, %v520
        %v522 = vrot.slane %v501, %v521
        %v523 = vcombine.high %v508, %v508
        %v524 = vcombine.high %v522, %v522
        %v525 = vcombine.high %v337, %v337
        %v527 = vunpack.c.l.s4 1966171168
        %v528 = vunpack.c.0.s8 %v527
        %v529 = vlaneseq
        %v530 = vshrl.u32 %v529, 7
        %v531 = vsub.s32 %v528, %v530
        %v532 = vrot.slane %v337, %v531
        %v534 = vunpack.c.l.s4 1966171168
        %v535 = vunpack.c.0.s8 %v534
        %v536 = vlaneseq
        %v537 = vshrl.u32 %v536, 7
        %v538 = vsub.s32 %v535, %v537
        %v539 = vrot.slane %v525, %v538
        %v540 = vcombine.high %v532, %v532
        %v541 = vcombine.high %v539, %v539
        %v543 = vunpack.c.l.s4 1966171168
        %v544 = vunpack.c.0.s8 %v543
        %v545 = vlaneseq
        %v546 = vshrl.u32 %v545, 7
        %v547 = vsub.s32 %v544, %v546
        %v548 = vrot.slane %v532, %v547
        %v550 = vunpack.c.l.s4 1966171168
        %v551 = vunpack.c.0.s8 %v550
        %v552 = vlaneseq
        %v553 = vshrl.u32 %v552, 7
        %v554 = vsub.s32 %v551, %v553
        %v555 = vrot.slane %v539, %v554
        %v557 = vunpack.c.l.s4 1966171168
        %v558 = vunpack.c.0.s8 %v557
        %v559 = vlaneseq
        %v560 = vshrl.u32 %v559, 7
        %v561 = vsub.s32 %v558, %v560
        %v562 = vrot.slane %v540, %v561
        %v564 = vunpack.c.l.s4 1966171168
        %v565 = vunpack.c.0.s8 %v564
        %v566 = vlaneseq
        %v567 = vshrl.u32 %v566, 7
        %v568 = vsub.s32 %v565, %v567
        %v569 = vrot.slane %v541, %v568
        %v570 = vcombine.high %v548, %v548
        %v571 = vcombine.high %v555, %v555
        %v572 = vcombine.high %v562, %v562
        %v573 = vcombine.high %v569, %v569
        %v574 = vcombine.high %v338, %v338
        %v576 = vunpack.c.l.s4 1966171168
        %v577 = vunpack.c.0.s8 %v576
        %v578 = vlaneseq
        %v579 = vshrl.u32 %v578, 7
        %v580 = vsub.s32 %v577, %v579
        %v581 = vrot.slane %v338, %v580
        %v583 = vunpack.c.l.s4 1966171168
        %v584 = vunpack.c.0.s8 %v583
        %v585 = vlaneseq
        %v586 = vshrl.u32 %v585, 7
        %v587 = vsub.s32 %v584, %v586
        %v588 = vrot.slane %v574, %v587
        %v589 = vcombine.high %v581, %v581
        %v591 = vunpack.c.l.s4 1966171168
        %v592 = vunpack.c.0.s8 %v591
        %v593 = vlaneseq
        %v594 = vshrl.u32 %v593, 7
        %v595 = vsub.s32 %v592, %v594
        %v596 = vrot.slane %v581, %v595
        %v598 = vunpack.c.l.s4 1966171168
        %v599 = vunpack.c.0.s8 %v598
        %v600 = vlaneseq
        %v601 = vshrl.u32 %v600, 7
        %v602 = vsub.s32 %v599, %v601
        %v603 = vrot.slane %v588, %v602
        %v605 = vunpack.c.l.s4 1966171168
        %v606 = vunpack.c.0.s8 %v605
        %v607 = vlaneseq
        %v608 = vshrl.u32 %v607, 7
        %v609 = vsub.s32 %v606, %v608
        %v610 = vrot.slane %v589, %v609
        %v611 = vcombine.high %v596, %v596
        %v612 = vcombine.high %v610, %v610
        %v613 = vcombine.high %v339, %v339
        %v615 = vunpack.c.l.s4 1966171168
        %v616 = vunpack.c.0.s8 %v615
        %v617 = vlaneseq
        %v618 = vshrl.u32 %v617, 7
        %v619 = vsub.s32 %v616, %v618
        %v620 = vrot.slane %v339, %v619
        %v622 = vunpack.c.l.s4 1966171168
        %v623 = vunpack.c.0.s8 %v622
        %v624 = vlaneseq
        %v625 = vshrl.u32 %v624, 7
        %v626 = vsub.s32 %v623, %v625
        %v627 = vrot.slane %v613, %v626
        %v628 = vcombine.high %v620, %v620
        %v629 = vcombine.high %v627, %v627
        %v631 = vunpack.c.l.s4 1966171168
        %v632 = vunpack.c.0.s8 %v631
        %v633 = vlaneseq
        %v634 = vshrl.u32 %v633, 7
        %v635 = vsub.s32 %v632, %v634
        %v636 = vrot.slane %v620, %v635
        %v638 = vunpack.c.l.s4 1966171168
        %v639 = vunpack.c.0.s8 %v638
        %v640 = vlaneseq
        %v641 = vshrl.u32 %v640, 7
        %v642 = vsub.s32 %v639, %v641
        %v643 = vrot.slane %v627, %v642
        %v645 = vunpack.c.l.s4 1966171168
        %v646 = vunpack.c.0.s8 %v645
        %v647 = vlaneseq
        %v648 = vshrl.u32 %v647, 7
        %v649 = vsub.s32 %v646, %v648
        %v650 = vrot.slane %v628, %v649
        %v652 = vunpack.c.l.s4 1966171168
        %v653 = vunpack.c.0.s8 %v652
        %v654 = vlaneseq
        %v655 = vshrl.u32 %v654, 7
        %v656 = vsub.s32 %v653, %v655
        %v657 = vrot.slane %v629, %v656
        %v658 = vcombine.high %v636, %v636
        %v659 = vcombine.high %v643, %v643
        %v660 = vcombine.high %v650, %v650
        %v661 = vcombine.high %v657, %v657
        %v662 = vcombine.high %v340, %v340
        %v664 = vunpack.c.l.s4 1966171168
        %v665 = vunpack.c.0.s8 %v664
        %v666 = vlaneseq
        %v667 = vshrl.u32 %v666, 7
        %v668 = vsub.s32 %v665, %v667
        %v669 = vrot.slane %v340, %v668
        %v671 = vunpack.c.l.s4 1966171168
        %v672 = vunpack.c.0.s8 %v671
        %v673 = vlaneseq
        %v674 = vshrl.u32 %v673, 7
        %v675 = vsub.s32 %v672, %v674
        %v676 = vrot.slane %v662, %v675
        %v677 = vcombine.high %v669, %v669
        %v679 = vunpack.c.l.s4 1966171168
        %v680 = vunpack.c.0.s8 %v679
        %v681 = vlaneseq
        %v682 = vshrl.u32 %v681, 7
        %v683 = vsub.s32 %v680, %v682
        %v684 = vrot.slane %v669, %v683
        %v686 = vunpack.c.l.s4 1966171168
        %v687 = vunpack.c.0.s8 %v686
        %v688 = vlaneseq
        %v689 = vshrl.u32 %v688, 7
        %v690 = vsub.s32 %v687, %v689
        %v691 = vrot.slane %v676, %v690
        %v693 = vunpack.c.l.s4 1966171168
        %v694 = vunpack.c.0.s8 %v693
        %v695 = vlaneseq
        %v696 = vshrl.u32 %v695, 7
        %v697 = vsub.s32 %v694, %v696
        %v698 = vrot.slane %v677, %v697
        %v699 = vcombine.high %v684, %v684
        %v700 = vcombine.high %v698, %v698
        %v701 = vcombine.low %v372, %v386
        %v702 = vcombine.low %v394, %v396
        %v703 = vcombine.low %v379, %v393
        %v704 = vcombine.low %v395, %v397
        %v706 = vunpack.c.l.s4 1966171168
        %v707 = vunpack.c.0.s8 %v706
        %v708 = vlaneseq
        %v709 = vshrl.u32 %v708, 7
        %v710 = vsub.s32 %v707, %v709
        %v711 = vrot.slane %v701, %v710
        %v713 = vunpack.c.l.s4 1966171168
        %v714 = vunpack.c.0.s8 %v713
        %v715 = vlaneseq
        %v716 = vshrl.u32 %v715, 7
        %v717 = vsub.s32 %v714, %v716
        %v718 = vrot.slane %v702, %v717
        %v720 = vunpack.c.l.s4 1966171168
        %v721 = vunpack.c.0.s8 %v720
        %v722 = vlaneseq
        %v723 = vshrl.u32 %v722, 7
        %v724 = vsub.s32 %v721, %v723
        %v725 = vrot.slane %v703, %v724
        %v727 = vunpack.c.l.s4 1966171168
        %v728 = vunpack.c.0.s8 %v727
        %v729 = vlaneseq
        %v730 = vshrl.u32 %v729, 7
        %v731 = vsub.s32 %v728, %v730
        %v732 = vrot.slane %v704, %v731
        %v733 = vcombine.low %v711, %v718
        %v734 = vcombine.low %v725, %v732
        %v736 = vunpack.c.l.s4 1966171168
        %v737 = vunpack.c.0.s8 %v736
        %v738 = vlaneseq
        %v739 = vshrl.u32 %v738, 7
        %v740 = vsub.s32 %v737, %v739
        %v741 = vrot.slane %v733, %v740
        %v743 = vunpack.c.l.s4 1966171168
        %v744 = vunpack.c.0.s8 %v743
        %v745 = vlaneseq
        %v746 = vshrl.u32 %v745, 7
        %v747 = vsub.s32 %v744, %v746
        %v748 = vrot.slane %v734, %v747
        %v749 = vcombine.low %v741, %v748
        %v750 = vcombine.low %v420, %v434
        %v751 = vcombine.low %v435, %v436
        %v752 = vcombine.low %v427, %v460
        %v753 = vcombine.low %v474, %v482
        %v755 = vunpack.c.l.s4 1966171168
        %v756 = vunpack.c.0.s8 %v755
        %v757 = vlaneseq
        %v758 = vshrl.u32 %v757, 7
        %v759 = vsub.s32 %v756, %v758
        %v760 = vrot.slane %v750, %v759
        %v762 = vunpack.c.l.s4 1966171168
        %v763 = vunpack.c.0.s8 %v762
        %v764 = vlaneseq
        %v765 = vshrl.u32 %v764, 7
        %v766 = vsub.s32 %v763, %v765
        %v767 = vrot.slane %v751, %v766
        %v769 = vunpack.c.l.s4 1966171168
        %v770 = vunpack.c.0.s8 %v769
        %v771 = vlaneseq
        %v772 = vshrl.u32 %v771, 7
        %v773 = vsub.s32 %v770, %v772
        %v774 = vrot.slane %v752, %v773
        %v776 = vunpack.c.l.s4 1966171168
        %v777 = vunpack.c.0.s8 %v776
        %v778 = vlaneseq
        %v779 = vshrl.u32 %v778, 7
        %v780 = vsub.s32 %v777, %v779
        %v781 = vrot.slane %v753, %v780
        %v782 = vcombine.low %v760, %v767
        %v783 = vcombine.low %v774, %v781
        %v785 = vunpack.c.l.s4 1966171168
        %v786 = vunpack.c.0.s8 %v785
        %v787 = vlaneseq
        %v788 = vshrl.u32 %v787, 7
        %v789 = vsub.s32 %v786, %v788
        %v790 = vrot.slane %v782, %v789
        %v792 = vunpack.c.l.s4 1966171168
        %v793 = vunpack.c.0.s8 %v792
        %v794 = vlaneseq
        %v795 = vshrl.u32 %v794, 7
        %v796 = vsub.s32 %v793, %v795
        %v797 = vrot.slane %v783, %v796
        %v798 = vcombine.low %v790, %v797
        %v799 = vcombine.low %v484, %v467
        %v800 = vcombine.low %v481, %v483
        %v801 = vcombine.low %v485, %v508
        %v802 = vcombine.low %v522, %v523
        %v804 = vunpack.c.l.s4 1966171168
        %v805 = vunpack.c.0.s8 %v804
        %v806 = vlaneseq
        %v807 = vshrl.u32 %v806, 7
        %v808 = vsub.s32 %v805, %v807
        %v809 = vrot.slane %v799, %v808
        %v811 = vunpack.c.l.s4 1966171168
        %v812 = vunpack.c.0.s8 %v811
        %v813 = vlaneseq
        %v814 = vshrl.u32 %v813, 7
        %v815 = vsub.s32 %v812, %v814
        %v816 = vrot.slane %v800, %v815
        %v818 = vunpack.c.l.s4 1966171168
        %v819 = vunpack.c.0.s8 %v818
        %v820 = vlaneseq
        %v821 = vshrl.u32 %v820, 7
        %v822 = vsub.s32 %v819, %v821
        %v823 = vrot.slane %v801, %v822
        %v825 = vunpack.c.l.s4 1966171168
        %v826 = vunpack.c.0.s8 %v825
        %v827 = vlaneseq
        %v828 = vshrl.u32 %v827, 7
        %v829 = vsub.s32 %v826, %v828
        %v830 = vrot.slane %v802, %v829
        %v831 = vcombine.low %v809, %v816
        %v832 = vcombine.low %v823, %v830
        %v834 = vunpack.c.l.s4 1966171168
        %v835 = vunpack.c.0.s8 %v834
        %v836 = vlaneseq
        %v837 = vshrl.u32 %v836, 7
        %v838 = vsub.s32 %v835, %v837
        %v839 = vrot.slane %v831, %v838
        %v841 = vunpack.c.l.s4 1966171168
        %v842 = vunpack.c.0.s8 %v841
        %v843 = vlaneseq
        %v844 = vshrl.u32 %v843, 7
        %v845 = vsub.s32 %v842, %v844
        %v846 = vrot.slane %v832, %v845
        %v847 = vcombine.low %v839, %v846
        %v848 = vcombine.low %v524, %v515
        %v849 = vcombine.low %v548, %v562
        %v850 = vcombine.low %v570, %v572
        %v851 = vcombine.low %v555, %v569
        %v853 = vunpack.c.l.s4 1966171168
        %v854 = vunpack.c.0.s8 %v853
        %v855 = vlaneseq
        %v856 = vshrl.u32 %v855, 7
        %v857 = vsub.s32 %v854, %v856
        %v858 = vrot.slane %v848, %v857
        %v860 = vunpack.c.l.s4 1966171168
        %v861 = vunpack.c.0.s8 %v860
        %v862 = vlaneseq
        %v863 = vshrl.u32 %v862, 7
        %v864 = vsub.s32 %v861, %v863
        %v865 = vrot.slane %v849, %v864
        %v867 = vunpack.c.l.s4 1966171168
        %v868 = vunpack.c.0.s8 %v867
        %v869 = vlaneseq
        %v870 = vshrl.u32 %v869, 7
        %v871 = vsub.s32 %v868, %v870
        %v872 = vrot.slane %v850, %v871
        %v874 = vunpack.c.l.s4 1966171168
        %v875 = vunpack.c.0.s8 %v874
        %v876 = vlaneseq
        %v877 = vshrl.u32 %v876, 7
        %v878 = vsub.s32 %v875, %v877
        %v879 = vrot.slane %v851, %v878
        %v880 = vcombine.low %v858, %v865
        %v881 = vcombine.low %v872, %v879
        %v883 = vunpack.c.l.s4 1966171168
        %v884 = vunpack.c.0.s8 %v883
        %v885 = vlaneseq
        %v886 = vshrl.u32 %v885, 7
        %v887 = vsub.s32 %v884, %v886
        %v888 = vrot.slane %v880, %v887
        %v890 = vunpack.c.l.s4 1966171168
        %v891 = vunpack.c.0.s8 %v890
        %v892 = vlaneseq
        %v893 = vshrl.u32 %v892, 7
        %v894 = vsub.s32 %v891, %v893
        %v895 = vrot.slane %v881, %v894
        %v896 = vcombine.low %v888, %v895
        %v897 = vcombine.low %v571, %v573
        %v898 = vcombine.low %v596, %v610
        %v899 = vcombine.low %v611, %v612
        %v900 = vcombine.low %v603, %v636
        %v902 = vunpack.c.l.s4 1966171168
        %v903 = vunpack.c.0.s8 %v902
        %v904 = vlaneseq
        %v905 = vshrl.u32 %v904, 7
        %v906 = vsub.s32 %v903, %v905
        %v907 = vrot.slane %v897, %v906
        %v909 = vunpack.c.l.s4 1966171168
        %v910 = vunpack.c.0.s8 %v909
        %v911 = vlaneseq
        %v912 = vshrl.u32 %v911, 7
        %v913 = vsub.s32 %v910, %v912
        %v914 = vrot.slane %v898, %v913
        %v916 = vunpack.c.l.s4 1966171168
        %v917 = vunpack.c.0.s8 %v916
        %v918 = vlaneseq
        %v919 = vshrl.u32 %v918, 7
        %v920 = vsub.s32 %v917, %v919
        %v921 = vrot.slane %v899, %v920
        %v923 = vunpack.c.l.s4 1966171168
        %v924 = vunpack.c.0.s8 %v923
        %v925 = vlaneseq
        %v926 = vshrl.u32 %v925, 7
        %v927 = vsub.s32 %v924, %v926
        %v928 = vrot.slane %v900, %v927
        %v929 = vcombine.low %v907, %v914
        %v930 = vcombine.low %v921, %v928
        %v932 = vunpack.c.l.s4 1966171168
        %v933 = vunpack.c.0.s8 %v932
        %v934 = vlaneseq
        %v935 = vshrl.u32 %v934, 7
        %v936 = vsub.s32 %v933, %v935
        %v937 = vrot.slane %v929, %v936
        %v939 = vunpack.c.l.s4 1966171168
        %v940 = vunpack.c.0.s8 %v939
        %v941 = vlaneseq
        %v942 = vshrl.u32 %v941, 7
        %v943 = vsub.s32 %v940, %v942
        %v944 = vrot.slane %v930, %v943
        %v945 = vcombine.low %v937, %v944
        %v946 = vcombine.low %v650, %v658
        %v947 = vcombine.low %v660, %v643
        %v948 = vcombine.low %v657, %v659
        %v949 = vcombine.low %v661, %v684
        %v951 = vunpack.c.l.s4 1966171168
        %v952 = vunpack.c.0.s8 %v951
        %v953 = vlaneseq
        %v954 = vshrl.u32 %v953, 7
        %v955 = vsub.s32 %v952, %v954
        %v956 = vrot.slane %v946, %v955
        %v958 = vunpack.c.l.s4 1966171168
        %v959 = vunpack.c.0.s8 %v958
        %v960 = vlaneseq
        %v961 = vshrl.u32 %v960, 7
        %v962 = vsub.s32 %v959, %v961
        %v963 = vrot.slane %v947, %v962
        %v965 = vunpack.c.l.s4 1966171168
        %v966 = vunpack.c.0.s8 %v965
        %v967 = vlaneseq
        %v968 = vshrl.u32 %v967, 7
        %v969 = vsub.s32 %v966, %v968
        %v970 = vrot.slane %v948, %v969
        %v972 = vunpack.c.l.s4 1966171168
        %v973 = vunpack.c.0.s8 %v972
        %v974 = vlaneseq
        %v975 = vshrl.u32 %v974, 7
        %v976 = vsub.s32 %v973, %v975
        %v977 = vrot.slane %v949, %v976
        %v978 = vcombine.low %v956, %v963
        %v979 = vcombine.low %v970, %v977
        %v981 = vunpack.c.l.s4 1966171168
        %v982 = vunpack.c.0.s8 %v981
        %v983 = vlaneseq
        %v984 = vshrl.u32 %v983, 7
        %v985 = vsub.s32 %v982, %v984
        %v986 = vrot.slane %v978, %v985
        %v988 = vunpack.c.l.s4 1966171168
        %v989 = vunpack.c.0.s8 %v988
        %v990 = vlaneseq
        %v991 = vshrl.u32 %v990, 7
        %v992 = vsub.s32 %v989, %v991
        %v993 = vrot.slane %v979, %v992
        %v994 = vcombine.low %v986, %v993
        %v995 = vcombine.low %v698, %v699
        %v996 = vcombine.low %v700, %v691
        %v998 = vunpack.c.l.s4 1966171168
        %v999 = vunpack.c.0.s8 %v998
        %v1000 = vlaneseq
        %v1001 = vshrl.u32 %v1000, 7
        %v1002 = vsub.s32 %v999, %v1001
        %v1003 = vrot.slane %v995, %v1002
        %v1005 = vunpack.c.l.s4 1966171168
        %v1006 = vunpack.c.0.s8 %v1005
        %v1007 = vlaneseq
        %v1008 = vshrl.u32 %v1007, 7
        %v1009 = vsub.s32 %v1006, %v1008
        %v1010 = vrot.slane %v996, %v1009
        %v1011 = vcombine.low %v1003, %v1010
        %v1013 = vunpack.c.l.s4 1966171168
        %v1014 = vunpack.c.0.s8 %v1013
        %v1015 = vlaneseq
        %v1016 = vshrl.u32 %v1015, 7
        %v1017 = vsub.s32 %v1014, %v1016
        %v1018 = vrot.slane %v1011, %v1017
        %vm1026 = vcmask 64512
        %1027 = vst.msk [vmem:[#allocation2] sm:$0xff] %vm1026, %v749
        %1028 = vst.msk [vmem:[#allocation2 + $0x8] sm:$0xff] %vm1026, %v798
        %1029 = vst.msk [vmem:[#allocation2 + $0x10] sm:$0xff] %vm1026, %v847
        %1030 = vst.msk [vmem:[#allocation2 + $0x18] sm:$0xff] %vm1026, %v896
        %1031 = vst.msk [vmem:[#allocation2 + $0x20] sm:$0xff] %vm1026, %v945
        %1032 = vst.msk [vmem:[#allocation2 + $0x28] sm:$0xff] %vm1026, %v994
        %vm1033 = vcmask 60416
        %1034 = vst.msk [vmem:[#allocation2 + $0x30] sm:$0xf] %vm1033, %v1018
        %v1035 = vld [vmem:[%s283 + $0x1] sm:$0xff]
        %v1036 = vld [vmem:[%s283 + $0x9] sm:$0x1f]
        %v1037 = vld [vmem:[%s283 + $0x19] sm:$0xff]
        %v1038 = vld [vmem:[%s283 + $0x21] sm:$0x1f]
        %v1039 = vld [vmem:[%s283 + $0x31] sm:$0xff]
        %v1040 = vld [vmem:[%s283 + $0x39] sm:$0x1f]
        %v1041 = vld [vmem:[%s283 + $0x49] sm:$0xff]
        %v1042 = vld [vmem:[%s283 + $0x51] sm:$0x1f]
        %v1051 = vcombine.high %v1035, %v1035
        %v1053 = vunpack.c.l.s4 1966171168
        %v1054 = vunpack.c.0.s8 %v1053
        %v1055 = vlaneseq
        %v1056 = vshrl.u32 %v1055, 7
        %v1057 = vsub.s32 %v1054, %v1056
        %v1058 = vrot.slane %v1035, %v1057
        %v1060 = vunpack.c.l.s4 1966171168
        %v1061 = vunpack.c.0.s8 %v1060
        %v1062 = vlaneseq
        %v1063 = vshrl.u32 %v1062, 7
        %v1064 = vsub.s32 %v1061, %v1063
        %v1065 = vrot.slane %v1051, %v1064
        %v1066 = vcombine.high %v1058, %v1058
        %v1067 = vcombine.high %v1065, %v1065
        %v1069 = vunpack.c.l.s4 1966171168
        %v1070 = vunpack.c.0.s8 %v1069
        %v1071 = vlaneseq
        %v1072 = vshrl.u32 %v1071, 7
        %v1073 = vsub.s32 %v1070, %v1072
        %v1074 = vrot.slane %v1058, %v1073
        %v1076 = vunpack.c.l.s4 1966171168
        %v1077 = vunpack.c.0.s8 %v1076
        %v1078 = vlaneseq
        %v1079 = vshrl.u32 %v1078, 7
        %v1080 = vsub.s32 %v1077, %v1079
        %v1081 = vrot.slane %v1065, %v1080
        %v1083 = vunpack.c.l.s4 1966171168
        %v1084 = vunpack.c.0.s8 %v1083
        %v1085 = vlaneseq
        %v1086 = vshrl.u32 %v1085, 7
        %v1087 = vsub.s32 %v1084, %v1086
        %v1088 = vrot.slane %v1066, %v1087
        %v1090 = vunpack.c.l.s4 1966171168
        %v1091 = vunpack.c.0.s8 %v1090
        %v1092 = vlaneseq
        %v1093 = vshrl.u32 %v1092, 7
        %v1094 = vsub.s32 %v1091, %v1093
        %v1095 = vrot.slane %v1067, %v1094
        %v1096 = vcombine.high %v1074, %v1074
        %v1097 = vcombine.high %v1081, %v1081
        %v1098 = vcombine.high %v1088, %v1088
        %v1099 = vcombine.high %v1095, %v1095
        %v1100 = vcombine.high %v1036, %v1036
        %v1102 = vunpack.c.l.s4 1966171168
        %v1103 = vunpack.c.0.s8 %v1102
        %v1104 = vlaneseq
        %v1105 = vshrl.u32 %v1104, 7
        %v1106 = vsub.s32 %v1103, %v1105
        %v1107 = vrot.slane %v1036, %v1106
        %v1109 = vunpack.c.l.s4 1966171168
        %v1110 = vunpack.c.0.s8 %v1109
        %v1111 = vlaneseq
        %v1112 = vshrl.u32 %v1111, 7
        %v1113 = vsub.s32 %v1110, %v1112
        %v1114 = vrot.slane %v1100, %v1113
        %v1115 = vcombine.high %v1107, %v1107
        %v1117 = vunpack.c.l.s4 1966171168
        %v1118 = vunpack.c.0.s8 %v1117
        %v1119 = vlaneseq
        %v1120 = vshrl.u32 %v1119, 7
        %v1121 = vsub.s32 %v1118, %v1120
        %v1122 = vrot.slane %v1107, %v1121
        %v1124 = vunpack.c.l.s4 1966171168
        %v1125 = vunpack.c.0.s8 %v1124
        %v1126 = vlaneseq
        %v1127 = vshrl.u32 %v1126, 7
        %v1128 = vsub.s32 %v1125, %v1127
        %v1129 = vrot.slane %v1114, %v1128
        %v1131 = vunpack.c.l.s4 1966171168
        %v1132 = vunpack.c.0.s8 %v1131
        %v1133 = vlaneseq
        %v1134 = vshrl.u32 %v1133, 7
        %v1135 = vsub.s32 %v1132, %v1134
        %v1136 = vrot.slane %v1115, %v1135
        %v1137 = vcombine.high %v1122, %v1122
        %v1138 = vcombine.high %v1136, %v1136
        %v1139 = vcombine.high %v1037, %v1037
        %v1141 = vunpack.c.l.s4 1966171168
        %v1142 = vunpack.c.0.s8 %v1141
        %v1143 = vlaneseq
        %v1144 = vshrl.u32 %v1143, 7
        %v1145 = vsub.s32 %v1142, %v1144
        %v1146 = vrot.slane %v1037, %v1145
        %v1148 = vunpack.c.l.s4 1966171168
        %v1149 = vunpack.c.0.s8 %v1148
        %v1150 = vlaneseq
        %v1151 = vshrl.u32 %v1150, 7
        %v1152 = vsub.s32 %v1149, %v1151
        %v1153 = vrot.slane %v1139, %v1152
        %v1154 = vcombine.high %v1146, %v1146
        %v1155 = vcombine.high %v1153, %v1153
        %v1157 = vunpack.c.l.s4 1966171168
        %v1158 = vunpack.c.0.s8 %v1157
        %v1159 = vlaneseq
        %v1160 = vshrl.u32 %v1159, 7
        %v1161 = vsub.s32 %v1158, %v1160
        %v1162 = vrot.slane %v1146, %v1161
        %v1164 = vunpack.c.l.s4 1966171168
        %v1165 = vunpack.c.0.s8 %v1164
        %v1166 = vlaneseq
        %v1167 = vshrl.u32 %v1166, 7
        %v1168 = vsub.s32 %v1165, %v1167
        %v1169 = vrot.slane %v1153, %v1168
        %v1171 = vunpack.c.l.s4 1966171168
        %v1172 = vunpack.c.0.s8 %v1171
        %v1173 = vlaneseq
        %v1174 = vshrl.u32 %v1173, 7
        %v1175 = vsub.s32 %v1172, %v1174
        %v1176 = vrot.slane %v1154, %v1175
        %v1178 = vunpack.c.l.s4 1966171168
        %v1179 = vunpack.c.0.s8 %v1178
        %v1180 = vlaneseq
        %v1181 = vshrl.u32 %v1180, 7
        %v1182 = vsub.s32 %v1179, %v1181
        %v1183 = vrot.slane %v1155, %v1182
        %v1184 = vcombine.high %v1162, %v1162
        %v1185 = vcombine.high %v1169, %v1169
        %v1186 = vcombine.high %v1176, %v1176
        %v1187 = vcombine.high %v1183, %v1183
        %v1188 = vcombine.high %v1038, %v1038
        %v1190 = vunpack.c.l.s4 1966171168
        %v1191 = vunpack.c.0.s8 %v1190
        %v1192 = vlaneseq
        %v1193 = vshrl.u32 %v1192, 7
        %v1194 = vsub.s32 %v1191, %v1193
        %v1195 = vrot.slane %v1038, %v1194
        %v1197 = vunpack.c.l.s4 1966171168
        %v1198 = vunpack.c.0.s8 %v1197
        %v1199 = vlaneseq
        %v1200 = vshrl.u32 %v1199, 7
        %v1201 = vsub.s32 %v1198, %v1200
        %v1202 = vrot.slane %v1188, %v1201
        %v1203 = vcombine.high %v1195, %v1195
        %v1205 = vunpack.c.l.s4 1966171168
        %v1206 = vunpack.c.0.s8 %v1205
        %v1207 = vlaneseq
        %v1208 = vshrl.u32 %v1207, 7
        %v1209 = vsub.s32 %v1206, %v1208
        %v1210 = vrot.slane %v1195, %v1209
        %v1212 = vunpack.c.l.s4 1966171168
        %v1213 = vunpack.c.0.s8 %v1212
        %v1214 = vlaneseq
        %v1215 = vshrl.u32 %v1214, 7
        %v1216 = vsub.s32 %v1213, %v1215
        %v1217 = vrot.slane %v1202, %v1216
        %v1219 = vunpack.c.l.s4 1966171168
        %v1220 = vunpack.c.0.s8 %v1219
        %v1221 = vlaneseq
        %v1222 = vshrl.u32 %v1221, 7
        %v1223 = vsub.s32 %v1220, %v1222
        %v1224 = vrot.slane %v1203, %v1223
        %v1225 = vcombine.high %v1210, %v1210
        %v1226 = vcombine.high %v1224, %v1224
        %v1227 = vcombine.high %v1039, %v1039
        %v1229 = vunpack.c.l.s4 1966171168
        %v1230 = vunpack.c.0.s8 %v1229
        %v1231 = vlaneseq
        %v1232 = vshrl.u32 %v1231, 7
        %v1233 = vsub.s32 %v1230, %v1232
        %v1234 = vrot.slane %v1039, %v1233
        %v1236 = vunpack.c.l.s4 1966171168
        %v1237 = vunpack.c.0.s8 %v1236
        %v1238 = vlaneseq
        %v1239 = vshrl.u32 %v1238, 7
        %v1240 = vsub.s32 %v1237, %v1239
        %v1241 = vrot.slane %v1227, %v1240
        %v1242 = vcombine.high %v1234, %v1234
        %v1243 = vcombine.high %v1241, %v1241
        %v1245 = vunpack.c.l.s4 1966171168
        %v1246 = vunpack.c.0.s8 %v1245
        %v1247 = vlaneseq
        %v1248 = vshrl.u32 %v1247, 7
        %v1249 = vsub.s32 %v1246, %v1248
        %v1250 = vrot.slane %v1234, %v1249
        %v1252 = vunpack.c.l.s4 1966171168
        %v1253 = vunpack.c.0.s8 %v1252
        %v1254 = vlaneseq
        %v1255 = vshrl.u32 %v1254, 7
        %v1256 = vsub.s32 %v1253, %v1255
        %v1257 = vrot.slane %v1241, %v1256
        %v1259 = vunpack.c.l.s4 1966171168
        %v1260 = vunpack.c.0.s8 %v1259
        %v1261 = vlaneseq
        %v1262 = vshrl.u32 %v1261, 7
        %v1263 = vsub.s32 %v1260, %v1262
        %v1264 = vrot.slane %v1242, %v1263
        %v1266 = vunpack.c.l.s4 1966171168
        %v1267 = vunpack.c.0.s8 %v1266
        %v1268 = vlaneseq
        %v1269 = vshrl.u32 %v1268, 7
        %v1270 = vsub.s32 %v1267, %v1269
        %v1271 = vrot.slane %v1243, %v1270
        %v1272 = vcombine.high %v1250, %v1250
        %v1273 = vcombine.high %v1257, %v1257
        %v1274 = vcombine.high %v1264, %v1264
        %v1275 = vcombine.high %v1271, %v1271
        %v1276 = vcombine.high %v1040, %v1040
        %v1278 = vunpack.c.l.s4 1966171168
        %v1279 = vunpack.c.0.s8 %v1278
        %v1280 = vlaneseq
        %v1281 = vshrl.u32 %v1280, 7
        %v1282 = vsub.s32 %v1279, %v1281
        %v1283 = vrot.slane %v1040, %v1282
        %v1285 = vunpack.c.l.s4 1966171168
        %v1286 = vunpack.c.0.s8 %v1285
        %v1287 = vlaneseq
        %v1288 = vshrl.u32 %v1287, 7
        %v1289 = vsub.s32 %v1286, %v1288
        %v1290 = vrot.slane %v1276, %v1289
        %v1291 = vcombine.high %v1283, %v1283
        %v1293 = vunpack.c.l.s4 1966171168
        %v1294 = vunpack.c.0.s8 %v1293
        %v1295 = vlaneseq
        %v1296 = vshrl.u32 %v1295, 7
        %v1297 = vsub.s32 %v1294, %v1296
        %v1298 = vrot.slane %v1283, %v1297
        %v1300 = vunpack.c.l.s4 1966171168
        %v1301 = vunpack.c.0.s8 %v1300
        %v1302 = vlaneseq
        %v1303 = vshrl.u32 %v1302, 7
        %v1304 = vsub.s32 %v1301, %v1303
        %v1305 = vrot.slane %v1290, %v1304
        %v1307 = vunpack.c.l.s4 1966171168
        %v1308 = vunpack.c.0.s8 %v1307
        %v1309 = vlaneseq
        %v1310 = vshrl.u32 %v1309, 7
        %v1311 = vsub.s32 %v1308, %v1310
        %v1312 = vrot.slane %v1291, %v1311
        %v1313 = vcombine.high %v1298, %v1298
        %v1314 = vcombine.high %v1312, %v1312
        %v1315 = vcombine.high %v1041, %v1041
        %v1317 = vunpack.c.l.s4 1966171168
        %v1318 = vunpack.c.0.s8 %v1317
        %v1319 = vlaneseq
        %v1320 = vshrl.u32 %v1319, 7
        %v1321 = vsub.s32 %v1318, %v1320
        %v1322 = vrot.slane %v1041, %v1321
        %v1324 = vunpack.c.l.s4 1966171168
        %v1325 = vunpack.c.0.s8 %v1324
        %v1326 = vlaneseq
        %v1327 = vshrl.u32 %v1326, 7
        %v1328 = vsub.s32 %v1325, %v1327
        %v1329 = vrot.slane %v1315, %v1328
        %v1330 = vcombine.high %v1322, %v1322
        %v1331 = vcombine.high %v1329, %v1329
        %v1333 = vunpack.c.l.s4 1966171168
        %v1334 = vunpack.c.0.s8 %v1333
        %v1335 = vlaneseq
        %v1336 = vshrl.u32 %v1335, 7
        %v1337 = vsub.s32 %v1334, %v1336
        %v1338 = vrot.slane %v1322, %v1337
        %v1340 = vunpack.c.l.s4 1966171168
        %v1341 = vunpack.c.0.s8 %v1340
        %v1342 = vlaneseq
        %v1343 = vshrl.u32 %v1342, 7
        %v1344 = vsub.s32 %v1341, %v1343
        %v1345 = vrot.slane %v1329, %v1344
        %v1347 = vunpack.c.l.s4 1966171168
        %v1348 = vunpack.c.0.s8 %v1347
        %v1349 = vlaneseq
        %v1350 = vshrl.u32 %v1349, 7
        %v1351 = vsub.s32 %v1348, %v1350
        %v1352 = vrot.slane %v1330, %v1351
        %v1354 = vunpack.c.l.s4 1966171168
        %v1355 = vunpack.c.0.s8 %v1354
        %v1356 = vlaneseq
        %v1357 = vshrl.u32 %v1356, 7
        %v1358 = vsub.s32 %v1355, %v1357
        %v1359 = vrot.slane %v1331, %v1358
        %v1360 = vcombine.high %v1338, %v1338
        %v1361 = vcombine.high %v1345, %v1345
        %v1362 = vcombine.high %v1352, %v1352
        %v1363 = vcombine.high %v1359, %v1359
        %v1364 = vcombine.high %v1042, %v1042
        %v1366 = vunpack.c.l.s4 1966171168
        %v1367 = vunpack.c.0.s8 %v1366
        %v1368 = vlaneseq
        %v1369 = vshrl.u32 %v1368, 7
        %v1370 = vsub.s32 %v1367, %v1369
        %v1371 = vrot.slane %v1042, %v1370
        %v1373 = vunpack.c.l.s4 1966171168
        %v1374 = vunpack.c.0.s8 %v1373
        %v1375 = vlaneseq
        %v1376 = vshrl.u32 %v1375, 7
        %v1377 = vsub.s32 %v1374, %v1376
        %v1378 = vrot.slane %v1364, %v1377
        %v1379 = vcombine.high %v1371, %v1371
        %v1381 = vunpack.c.l.s4 1966171168
        %v1382 = vunpack.c.0.s8 %v1381
        %v1383 = vlaneseq
        %v1384 = vshrl.u32 %v1383, 7
        %v1385 = vsub.s32 %v1382, %v1384
        %v1386 = vrot.slane %v1371, %v1385
        %v1388 = vunpack.c.l.s4 1966171168
        %v1389 = vunpack.c.0.s8 %v1388
        %v1390 = vlaneseq
        %v1391 = vshrl.u32 %v1390, 7
        %v1392 = vsub.s32 %v1389, %v1391
        %v1393 = vrot.slane %v1378, %v1392
        %v1395 = vunpack.c.l.s4 1966171168
        %v1396 = vunpack.c.0.s8 %v1395
        %v1397 = vlaneseq
        %v1398 = vshrl.u32 %v1397, 7
        %v1399 = vsub.s32 %v1396, %v1398
        %v1400 = vrot.slane %v1379, %v1399
        %v1401 = vcombine.high %v1386, %v1386
        %v1402 = vcombine.high %v1400, %v1400
        %v1403 = vcombine.low %v1074, %v1088
        %v1404 = vcombine.low %v1096, %v1098
        %v1405 = vcombine.low %v1081, %v1095
        %v1406 = vcombine.low %v1097, %v1099
        %v1408 = vunpack.c.l.s4 1966171168
        %v1409 = vunpack.c.0.s8 %v1408
        %v1410 = vlaneseq
        %v1411 = vshrl.u32 %v1410, 7
        %v1412 = vsub.s32 %v1409, %v1411
        %v1413 = vrot.slane %v1403, %v1412
        %v1415 = vunpack.c.l.s4 1966171168
        %v1416 = vunpack.c.0.s8 %v1415
        %v1417 = vlaneseq
        %v1418 = vshrl.u32 %v1417, 7
        %v1419 = vsub.s32 %v1416, %v1418
        %v1420 = vrot.slane %v1404, %v1419
        %v1422 = vunpack.c.l.s4 1966171168
        %v1423 = vunpack.c.0.s8 %v1422
        %v1424 = vlaneseq
        %v1425 = vshrl.u32 %v1424, 7
        %v1426 = vsub.s32 %v1423, %v1425
        %v1427 = vrot.slane %v1405, %v1426
        %v1429 = vunpack.c.l.s4 1966171168
        %v1430 = vunpack.c.0.s8 %v1429
        %v1431 = vlaneseq
        %v1432 = vshrl.u32 %v1431, 7
        %v1433 = vsub.s32 %v1430, %v1432
        %v1434 = vrot.slane %v1406, %v1433
        %v1435 = vcombine.low %v1413, %v1420
        %v1436 = vcombine.low %v1427, %v1434
        %v1438 = vunpack.c.l.s4 1966171168
        %v1439 = vunpack.c.0.s8 %v1438
        %v1440 = vlaneseq
        %v1441 = vshrl.u32 %v1440, 7
        %v1442 = vsub.s32 %v1439, %v1441
        %v1443 = vrot.slane %v1435, %v1442
        %v1445 = vunpack.c.l.s4 1966171168
        %v1446 = vunpack.c.0.s8 %v1445
        %v1447 = vlaneseq
        %v1448 = vshrl.u32 %v1447, 7
        %v1449 = vsub.s32 %v1446, %v1448
        %v1450 = vrot.slane %v1436, %v1449
        %v1451 = vcombine.low %v1443, %v1450
        %v1452 = vcombine.low %v1122, %v1136
        %v1453 = vcombine.low %v1137, %v1138
        %v1454 = vcombine.low %v1129, %v1162
        %v1455 = vcombine.low %v1176, %v1184
        %v1457 = vunpack.c.l.s4 1966171168
        %v1458 = vunpack.c.0.s8 %v1457
        %v1459 = vlaneseq
        %v1460 = vshrl.u32 %v1459, 7
        %v1461 = vsub.s32 %v1458, %v1460
        %v1462 = vrot.slane %v1452, %v1461
        %v1464 = vunpack.c.l.s4 1966171168
        %v1465 = vunpack.c.0.s8 %v1464
        %v1466 = vlaneseq
        %v1467 = vshrl.u32 %v1466, 7
        %v1468 = vsub.s32 %v1465, %v1467
        %v1469 = vrot.slane %v1453, %v1468
        %v1471 = vunpack.c.l.s4 1966171168
        %v1472 = vunpack.c.0.s8 %v1471
        %v1473 = vlaneseq
        %v1474 = vshrl.u32 %v1473, 7
        %v1475 = vsub.s32 %v1472, %v1474
        %v1476 = vrot.slane %v1454, %v1475
        %v1478 = vunpack.c.l.s4 1966171168
        %v1479 = vunpack.c.0.s8 %v1478
        %v1480 = vlaneseq
        %v1481 = vshrl.u32 %v1480, 7
        %v1482 = vsub.s32 %v1479, %v1481
        %v1483 = vrot.slane %v1455, %v1482
        %v1484 = vcombine.low %v1462, %v1469
        %v1485 = vcombine.low %v1476, %v1483
        %v1487 = vunpack.c.l.s4 1966171168
        %v1488 = vunpack.c.0.s8 %v1487
        %v1489 = vlaneseq
        %v1490 = vshrl.u32 %v1489, 7
        %v1491 = vsub.s32 %v1488, %v1490
        %v1492 = vrot.slane %v1484, %v1491
        %v1494 = vunpack.c.l.s4 1966171168
        %v1495 = vunpack.c.0.s8 %v1494
        %v1496 = vlaneseq
        %v1497 = vshrl.u32 %v1496, 7
        %v1498 = vsub.s32 %v1495, %v1497
        %v1499 = vrot.slane %v1485, %v1498
        %v1500 = vcombine.low %v1492, %v1499
        %v1501 = vcombine.low %v1186, %v1169
        %v1502 = vcombine.low %v1183, %v1185
        %v1503 = vcombine.low %v1187, %v1210
        %v1504 = vcombine.low %v1224, %v1225
        %v1506 = vunpack.c.l.s4 1966171168
        %v1507 = vunpack.c.0.s8 %v1506
        %v1508 = vlaneseq
        %v1509 = vshrl.u32 %v1508, 7
        %v1510 = vsub.s32 %v1507, %v1509
        %v1511 = vrot.slane %v1501, %v1510
        %v1513 = vunpack.c.l.s4 1966171168
        %v1514 = vunpack.c.0.s8 %v1513
        %v1515 = vlaneseq
        %v1516 = vshrl.u32 %v1515, 7
        %v1517 = vsub.s32 %v1514, %v1516
        %v1518 = vrot.slane %v1502, %v1517
        %v1520 = vunpack.c.l.s4 1966171168
        %v1521 = vunpack.c.0.s8 %v1520
        %v1522 = vlaneseq
        %v1523 = vshrl.u32 %v1522, 7
        %v1524 = vsub.s32 %v1521, %v1523
        %v1525 = vrot.slane %v1503, %v1524
        %v1527 = vunpack.c.l.s4 1966171168
        %v1528 = vunpack.c.0.s8 %v1527
        %v1529 = vlaneseq
        %v1530 = vshrl.u32 %v1529, 7
        %v1531 = vsub.s32 %v1528, %v1530
        %v1532 = vrot.slane %v1504, %v1531
        %v1533 = vcombine.low %v1511, %v1518
        %v1534 = vcombine.low %v1525, %v1532
        %v1536 = vunpack.c.l.s4 1966171168
        %v1537 = vunpack.c.0.s8 %v1536
        %v1538 = vlaneseq
        %v1539 = vshrl.u32 %v1538, 7
        %v1540 = vsub.s32 %v1537, %v1539
        %v1541 = vrot.slane %v1533, %v1540
        %v1543 = vunpack.c.l.s4 1966171168
        %v1544 = vunpack.c.0.s8 %v1543
        %v1545 = vlaneseq
        %v1546 = vshrl.u32 %v1545, 7
        %v1547 = vsub.s32 %v1544, %v1546
        %v1548 = vrot.slane %v1534, %v1547
        %v1549 = vcombine.low %v1541, %v1548
        %v1550 = vcombine.low %v1226, %v1217
        %v1551 = vcombine.low %v1250, %v1264
        %v1552 = vcombine.low %v1272, %v1274
        %v1553 = vcombine.low %v1257, %v1271
        %v1555 = vunpack.c.l.s4 1966171168
        %v1556 = vunpack.c.0.s8 %v1555
        %v1557 = vlaneseq
        %v1558 = vshrl.u32 %v1557, 7
        %v1559 = vsub.s32 %v1556, %v1558
        %v1560 = vrot.slane %v1550, %v1559
        %v1562 = vunpack.c.l.s4 1966171168
        %v1563 = vunpack.c.0.s8 %v1562
        %v1564 = vlaneseq
        %v1565 = vshrl.u32 %v1564, 7
        %v1566 = vsub.s32 %v1563, %v1565
        %v1567 = vrot.slane %v1551, %v1566
        %v1569 = vunpack.c.l.s4 1966171168
        %v1570 = vunpack.c.0.s8 %v1569
        %v1571 = vlaneseq
        %v1572 = vshrl.u32 %v1571, 7
        %v1573 = vsub.s32 %v1570, %v1572
        %v1574 = vrot.slane %v1552, %v1573
        %v1576 = vunpack.c.l.s4 1966171168
        %v1577 = vunpack.c.0.s8 %v1576
        %v1578 = vlaneseq
        %v1579 = vshrl.u32 %v1578, 7
        %v1580 = vsub.s32 %v1577, %v1579
        %v1581 = vrot.slane %v1553, %v1580
        %v1582 = vcombine.low %v1560, %v1567
        %v1583 = vcombine.low %v1574, %v1581
        %v1585 = vunpack.c.l.s4 1966171168
        %v1586 = vunpack.c.0.s8 %v1585
        %v1587 = vlaneseq
        %v1588 = vshrl.u32 %v1587, 7
        %v1589 = vsub.s32 %v1586, %v1588
        %v1590 = vrot.slane %v1582, %v1589
        %v1592 = vunpack.c.l.s4 1966171168
        %v1593 = vunpack.c.0.s8 %v1592
        %v1594 = vlaneseq
        %v1595 = vshrl.u32 %v1594, 7
        %v1596 = vsub.s32 %v1593, %v1595
        %v1597 = vrot.slane %v1583, %v1596
        %v1598 = vcombine.low %v1590, %v1597
        %v1599 = vcombine.low %v1273, %v1275
        %v1600 = vcombine.low %v1298, %v1312
        %v1601 = vcombine.low %v1313, %v1314
        %v1602 = vcombine.low %v1305, %v1338
        %v1604 = vunpack.c.l.s4 1966171168
        %v1605 = vunpack.c.0.s8 %v1604
        %v1606 = vlaneseq
        %v1607 = vshrl.u32 %v1606, 7
        %v1608 = vsub.s32 %v1605, %v1607
        %v1609 = vrot.slane %v1599, %v1608
        %v1611 = vunpack.c.l.s4 1966171168
        %v1612 = vunpack.c.0.s8 %v1611
        %v1613 = vlaneseq
        %v1614 = vshrl.u32 %v1613, 7
        %v1615 = vsub.s32 %v1612, %v1614
        %v1616 = vrot.slane %v1600, %v1615
        %v1618 = vunpack.c.l.s4 1966171168
        %v1619 = vunpack.c.0.s8 %v1618
        %v1620 = vlaneseq
        %v1621 = vshrl.u32 %v1620, 7
        %v1622 = vsub.s32 %v1619, %v1621
        %v1623 = vrot.slane %v1601, %v1622
        %v1625 = vunpack.c.l.s4 1966171168
        %v1626 = vunpack.c.0.s8 %v1625
        %v1627 = vlaneseq
        %v1628 = vshrl.u32 %v1627, 7
        %v1629 = vsub.s32 %v1626, %v1628
        %v1630 = vrot.slane %v1602, %v1629
        %v1631 = vcombine.low %v1609, %v1616
        %v1632 = vcombine.low %v1623, %v1630
        %v1634 = vunpack.c.l.s4 1966171168
        %v1635 = vunpack.c.0.s8 %v1634
        %v1636 = vlaneseq
        %v1637 = vshrl.u32 %v1636, 7
        %v1638 = vsub.s32 %v1635, %v1637
        %v1639 = vrot.slane %v1631, %v1638
        %v1641 = vunpack.c.l.s4 1966171168
        %v1642 = vunpack.c.0.s8 %v1641
        %v1643 = vlaneseq
        %v1644 = vshrl.u32 %v1643, 7
        %v1645 = vsub.s32 %v1642, %v1644
        %v1646 = vrot.slane %v1632, %v1645
        %v1647 = vcombine.low %v1639, %v1646
        %v1648 = vcombine.low %v1352, %v1360
        %v1649 = vcombine.low %v1362, %v1345
        %v1650 = vcombine.low %v1359, %v1361
        %v1651 = vcombine.low %v1363, %v1386
        %v1653 = vunpack.c.l.s4 1966171168
        %v1654 = vunpack.c.0.s8 %v1653
        %v1655 = vlaneseq
        %v1656 = vshrl.u32 %v1655, 7
        %v1657 = vsub.s32 %v1654, %v1656
        %v1658 = vrot.slane %v1648, %v1657
        %v1660 = vunpack.c.l.s4 1966171168
        %v1661 = vunpack.c.0.s8 %v1660
        %v1662 = vlaneseq
        %v1663 = vshrl.u32 %v1662, 7
        %v1664 = vsub.s32 %v1661, %v1663
        %v1665 = vrot.slane %v1649, %v1664
        %v1667 = vunpack.c.l.s4 1966171168
        %v1668 = vunpack.c.0.s8 %v1667
        %v1669 = vlaneseq
        %v1670 = vshrl.u32 %v1669, 7
        %v1671 = vsub.s32 %v1668, %v1670
        %v1672 = vrot.slane %v1650, %v1671
        %v1674 = vunpack.c.l.s4 1966171168
        %v1675 = vunpack.c.0.s8 %v1674
        %v1676 = vlaneseq
        %v1677 = vshrl.u32 %v1676, 7
        %v1678 = vsub.s32 %v1675, %v1677
        %v1679 = vrot.slane %v1651, %v1678
        %v1680 = vcombine.low %v1658, %v1665
        %v1681 = vcombine.low %v1672, %v1679
        %v1683 = vunpack.c.l.s4 1966171168
        %v1684 = vunpack.c.0.s8 %v1683
        %v1685 = vlaneseq
        %v1686 = vshrl.u32 %v1685, 7
        %v1687 = vsub.s32 %v1684, %v1686
        %v1688 = vrot.slane %v1680, %v1687
        %v1690 = vunpack.c.l.s4 1966171168
        %v1691 = vunpack.c.0.s8 %v1690
        %v1692 = vlaneseq
        %v1693 = vshrl.u32 %v1692, 7
        %v1694 = vsub.s32 %v1691, %v1693
        %v1695 = vrot.slane %v1681, %v1694
        %v1696 = vcombine.low %v1688, %v1695
        %v1697 = vcombine.low %v1400, %v1401
        %v1698 = vcombine.low %v1402, %v1393
        %v1700 = vunpack.c.l.s4 1966171168
        %v1701 = vunpack.c.0.s8 %v1700
        %v1702 = vlaneseq
        %v1703 = vshrl.u32 %v1702, 7
        %v1704 = vsub.s32 %v1701, %v1703
        %v1705 = vrot.slane %v1697, %v1704
        %v1707 = vunpack.c.l.s4 1966171168
        %v1708 = vunpack.c.0.s8 %v1707
        %v1709 = vlaneseq
        %v1710 = vshrl.u32 %v1709, 7
        %v1711 = vsub.s32 %v1708, %v1710
        %v1712 = vrot.slane %v1698, %v1711
        %v1713 = vcombine.low %v1705, %v1712
        %v1715 = vunpack.c.l.s4 1966171168
        %v1716 = vunpack.c.0.s8 %v1715
        %v1717 = vlaneseq
        %v1718 = vshrl.u32 %v1717, 7
        %v1719 = vsub.s32 %v1716, %v1718
        %v1720 = vrot.slane %v1713, %v1719
        %1721 = vrot.lane.b32.xlu0 %v1451, 8
        %v1722 = vpop.permute.xlu0 %1721
        %1723 = vrot.lane.b32.xlu0 %v1500, 8
        %v1724 = vpop.permute.xlu0 %1723
        %1725 = vrot.lane.b32.xlu0 %v1549, 8
        %v1726 = vpop.permute.xlu0 %1725
        %1727 = vrot.lane.b32.xlu0 %v1598, 8
        %v1728 = vpop.permute.xlu0 %1727
        %1729 = vrot.lane.b32.xlu0 %v1647, 8
        %v1730 = vpop.permute.xlu0 %1729
        %1731 = vrot.lane.b32.xlu0 %v1696, 8
        %v1732 = vpop.permute.xlu0 %1731
        %1733 = vrot.lane.b32.xlu0 %v1720, 8
        %v1734 = vpop.permute.xlu0 %1733
        %vm1742 = vcmask 130112
        %1743 = vst.msk [vmem:[#allocation2] sm:$0xff] %vm1742, %v1722
        %1744 = vst.msk [vmem:[#allocation2 + $0x8] sm:$0xff] %vm1742, %v1724
        %1745 = vst.msk [vmem:[#allocation2 + $0x10] sm:$0xff] %vm1742, %v1726
        %1746 = vst.msk [vmem:[#allocation2 + $0x18] sm:$0xff] %vm1742, %v1728
        %1747 = vst.msk [vmem:[#allocation2 + $0x20] sm:$0xff] %vm1742, %v1730
        %1748 = vst.msk [vmem:[#allocation2 + $0x28] sm:$0xff] %vm1742, %v1732
        %vm1749 = vcmask 126016
        %1750 = vst.msk [vmem:[#allocation2 + $0x30] sm:$0xf] %vm1749, %v1734
        %v1751 = vld [vmem:[%s283 + $0x2] sm:$0xff]
        %v1752 = vld [vmem:[%s283 + $0xa] sm:$0x1f]
        %v1753 = vld [vmem:[%s283 + $0x1a] sm:$0xff]
        %v1754 = vld [vmem:[%s283 + $0x22] sm:$0x1f]
        %v1755 = vld [vmem:[%s283 + $0x32] sm:$0xff]
        %v1756 = vld [vmem:[%s283 + $0x3a] sm:$0x1f]
        %v1757 = vld [vmem:[%s283 + $0x4a] sm:$0xff]
        %v1758 = vld [vmem:[%s283 + $0x52] sm:$0x1f]
        %v1767 = vcombine.high %v1751, %v1751
        %v1769 = vunpack.c.l.s4 1966171168
        %v1770 = vunpack.c.0.s8 %v1769
        %v1771 = vlaneseq
        %v1772 = vshrl.u32 %v1771, 7
        %v1773 = vsub.s32 %v1770, %v1772
        %v1774 = vrot.slane %v1751, %v1773
        %v1776 = vunpack.c.l.s4 1966171168
        %v1777 = vunpack.c.0.s8 %v1776
        %v1778 = vlaneseq
        %v1779 = vshrl.u32 %v1778, 7
        %v1780 = vsub.s32 %v1777, %v1779
        %v1781 = vrot.slane %v1767, %v1780
        %v1782 = vcombine.high %v1774, %v1774
        %v1783 = vcombine.high %v1781, %v1781
        %v1785 = vunpack.c.l.s4 1966171168
        %v1786 = vunpack.c.0.s8 %v1785
        %v1787 = vlaneseq
        %v1788 = vshrl.u32 %v1787, 7
        %v1789 = vsub.s32 %v1786, %v1788
        %v1790 = vrot.slane %v1774, %v1789
        %v1792 = vunpack.c.l.s4 1966171168
        %v1793 = vunpack.c.0.s8 %v1792
        %v1794 = vlaneseq
        %v1795 = vshrl.u32 %v1794, 7
        %v1796 = vsub.s32 %v1793, %v1795
        %v1797 = vrot.slane %v1781, %v1796
        %v1799 = vunpack.c.l.s4 1966171168
        %v1800 = vunpack.c.0.s8 %v1799
        %v1801 = vlaneseq
        %v1802 = vshrl.u32 %v1801, 7
        %v1803 = vsub.s32 %v1800, %v1802
        %v1804 = vrot.slane %v1782, %v1803
        %v1806 = vunpack.c.l.s4 1966171168
        %v1807 = vunpack.c.0.s8 %v1806
        %v1808 = vlaneseq
        %v1809 = vshrl.u32 %v1808, 7
        %v1810 = vsub.s32 %v1807, %v1809
        %v1811 = vrot.slane %v1783, %v1810
        %v1812 = vcombine.high %v1790, %v1790
        %v1813 = vcombine.high %v1797, %v1797
        %v1814 = vcombine.high %v1804, %v1804
        %v1815 = vcombine.high %v1811, %v1811
        %v1816 = vcombine.high %v1752, %v1752
        %v1818 = vunpack.c.l.s4 1966171168
        %v1819 = vunpack.c.0.s8 %v1818
        %v1820 = vlaneseq
        %v1821 = vshrl.u32 %v1820, 7
        %v1822 = vsub.s32 %v1819, %v1821
        %v1823 = vrot.slane %v1752, %v1822
        %v1825 = vunpack.c.l.s4 1966171168
        %v1826 = vunpack.c.0.s8 %v1825
        %v1827 = vlaneseq
        %v1828 = vshrl.u32 %v1827, 7
        %v1829 = vsub.s32 %v1826, %v1828
        %v1830 = vrot.slane %v1816, %v1829
        %v1831 = vcombine.high %v1823, %v1823
        %v1833 = vunpack.c.l.s4 1966171168
        %v1834 = vunpack.c.0.s8 %v1833
        %v1835 = vlaneseq
        %v1836 = vshrl.u32 %v1835, 7
        %v1837 = vsub.s32 %v1834, %v1836
        %v1838 = vrot.slane %v1823, %v1837
        %v1840 = vunpack.c.l.s4 1966171168
        %v1841 = vunpack.c.0.s8 %v1840
        %v1842 = vlaneseq
        %v1843 = vshrl.u32 %v1842, 7
        %v1844 = vsub.s32 %v1841, %v1843
        %v1845 = vrot.slane %v1830, %v1844
        %v1847 = vunpack.c.l.s4 1966171168
        %v1848 = vunpack.c.0.s8 %v1847
        %v1849 = vlaneseq
        %v1850 = vshrl.u32 %v1849, 7
        %v1851 = vsub.s32 %v1848, %v1850
        %v1852 = vrot.slane %v1831, %v1851
        %v1853 = vcombine.high %v1838, %v1838
        %v1854 = vcombine.high %v1852, %v1852
        %v1855 = vcombine.high %v1753, %v1753
        %v1857 = vunpack.c.l.s4 1966171168
        %v1858 = vunpack.c.0.s8 %v1857
        %v1859 = vlaneseq
        %v1860 = vshrl.u32 %v1859, 7
        %v1861 = vsub.s32 %v1858, %v1860
        %v1862 = vrot.slane %v1753, %v1861
        %v1864 = vunpack.c.l.s4 1966171168
        %v1865 = vunpack.c.0.s8 %v1864
        %v1866 = vlaneseq
        %v1867 = vshrl.u32 %v1866, 7
        %v1868 = vsub.s32 %v1865, %v1867
        %v1869 = vrot.slane %v1855, %v1868
        %v1870 = vcombine.high %v1862, %v1862
        %v1871 = vcombine.high %v1869, %v1869
        %v1873 = vunpack.c.l.s4 1966171168
        %v1874 = vunpack.c.0.s8 %v1873
        %v1875 = vlaneseq
        %v1876 = vshrl.u32 %v1875, 7
        %v1877 = vsub.s32 %v1874, %v1876
        %v1878 = vrot.slane %v1862, %v1877
        %v1880 = vunpack.c.l.s4 1966171168
        %v1881 = vunpack.c.0.s8 %v1880
        %v1882 = vlaneseq
        %v1883 = vshrl.u32 %v1882, 7
        %v1884 = vsub.s32 %v1881, %v1883
        %v1885 = vrot.slane %v1869, %v1884
        %v1887 = vunpack.c.l.s4 1966171168
        %v1888 = vunpack.c.0.s8 %v1887
        %v1889 = vlaneseq
        %v1890 = vshrl.u32 %v1889, 7
        %v1891 = vsub.s32 %v1888, %v1890
        %v1892 = vrot.slane %v1870, %v1891
        %v1894 = vunpack.c.l.s4 1966171168
        %v1895 = vunpack.c.0.s8 %v1894
        %v1896 = vlaneseq
        %v1897 = vshrl.u32 %v1896, 7
        %v1898 = vsub.s32 %v1895, %v1897
        %v1899 = vrot.slane %v1871, %v1898
        %v1900 = vcombine.high %v1878, %v1878
        %v1901 = vcombine.high %v1885, %v1885
        %v1902 = vcombine.high %v1892, %v1892
        %v1903 = vcombine.high %v1899, %v1899
        %v1904 = vcombine.high %v1754, %v1754
        %v1906 = vunpack.c.l.s4 1966171168
        %v1907 = vunpack.c.0.s8 %v1906
        %v1908 = vlaneseq
        %v1909 = vshrl.u32 %v1908, 7
        %v1910 = vsub.s32 %v1907, %v1909
        %v1911 = vrot.slane %v1754, %v1910
        %v1913 = vunpack.c.l.s4 1966171168
        %v1914 = vunpack.c.0.s8 %v1913
        %v1915 = vlaneseq
        %v1916 = vshrl.u32 %v1915, 7
        %v1917 = vsub.s32 %v1914, %v1916
        %v1918 = vrot.slane %v1904, %v1917
        %v1919 = vcombine.high %v1911, %v1911
        %v1921 = vunpack.c.l.s4 1966171168
        %v1922 = vunpack.c.0.s8 %v1921
        %v1923 = vlaneseq
        %v1924 = vshrl.u32 %v1923, 7
        %v1925 = vsub.s32 %v1922, %v1924
        %v1926 = vrot.slane %v1911, %v1925
        %v1928 = vunpack.c.l.s4 1966171168
        %v1929 = vunpack.c.0.s8 %v1928
        %v1930 = vlaneseq
        %v1931 = vshrl.u32 %v1930, 7
        %v1932 = vsub.s32 %v1929, %v1931
        %v1933 = vrot.slane %v1918, %v1932
        %v1935 = vunpack.c.l.s4 1966171168
        %v1936 = vunpack.c.0.s8 %v1935
        %v1937 = vlaneseq
        %v1938 = vshrl.u32 %v1937, 7
        %v1939 = vsub.s32 %v1936, %v1938
        %v1940 = vrot.slane %v1919, %v1939
        %v1941 = vcombine.high %v1926, %v1926
        %v1942 = vcombine.high %v1940, %v1940
        %v1943 = vcombine.high %v1755, %v1755
        %v1945 = vunpack.c.l.s4 1966171168
        %v1946 = vunpack.c.0.s8 %v1945
        %v1947 = vlaneseq
        %v1948 = vshrl.u32 %v1947, 7
        %v1949 = vsub.s32 %v1946, %v1948
        %v1950 = vrot.slane %v1755, %v1949
        %v1952 = vunpack.c.l.s4 1966171168
        %v1953 = vunpack.c.0.s8 %v1952
        %v1954 = vlaneseq
        %v1955 = vshrl.u32 %v1954, 7
        %v1956 = vsub.s32 %v1953, %v1955
        %v1957 = vrot.slane %v1943, %v1956
        %v1958 = vcombine.high %v1950, %v1950
        %v1959 = vcombine.high %v1957, %v1957
        %v1961 = vunpack.c.l.s4 1966171168
        %v1962 = vunpack.c.0.s8 %v1961
        %v1963 = vlaneseq
        %v1964 = vshrl.u32 %v1963, 7
        %v1965 = vsub.s32 %v1962, %v1964
        %v1966 = vrot.slane %v1950, %v1965
        %v1968 = vunpack.c.l.s4 1966171168
        %v1969 = vunpack.c.0.s8 %v1968
        %v1970 = vlaneseq
        %v1971 = vshrl.u32 %v1970, 7
        %v1972 = vsub.s32 %v1969, %v1971
        %v1973 = vrot.slane %v1957, %v1972
        %v1975 = vunpack.c.l.s4 1966171168
        %v1976 = vunpack.c.0.s8 %v1975
        %v1977 = vlaneseq
        %v1978 = vshrl.u32 %v1977, 7
        %v1979 = vsub.s32 %v1976, %v1978
        %v1980 = vrot.slane %v1958, %v1979
        %v1982 = vunpack.c.l.s4 1966171168
        %v1983 = vunpack.c.0.s8 %v1982
        %v1984 = vlaneseq
        %v1985 = vshrl.u32 %v1984, 7
        %v1986 = vsub.s32 %v1983, %v1985
        %v1987 = vrot.slane %v1959, %v1986
        %v1988 = vcombine.high %v1966, %v1966
        %v1989 = vcombine.high %v1973, %v1973
        %v1990 = vcombine.high %v1980, %v1980
        %v1991 = vcombine.high %v1987, %v1987
        %v1992 = vcombine.high %v1756, %v1756
        %v1994 = vunpack.c.l.s4 1966171168
        %v1995 = vunpack.c.0.s8 %v1994
        %v1996 = vlaneseq
        %v1997 = vshrl.u32 %v1996, 7
        %v1998 = vsub.s32 %v1995, %v1997
        %v1999 = vrot.slane %v1756, %v1998
        %v2001 = vunpack.c.l.s4 1966171168
        %v2002 = vunpack.c.0.s8 %v2001
        %v2003 = vlaneseq
        %v2004 = vshrl.u32 %v2003, 7
        %v2005 = vsub.s32 %v2002, %v2004
        %v2006 = vrot.slane %v1992, %v2005
        %v2007 = vcombine.high %v1999, %v1999
        %v2009 = vunpack.c.l.s4 1966171168
        %v2010 = vunpack.c.0.s8 %v2009
        %v2011 = vlaneseq
        %v2012 = vshrl.u32 %v2011, 7
        %v2013 = vsub.s32 %v2010, %v2012
        %v2014 = vrot.slane %v1999, %v2013
        %v2016 = vunpack.c.l.s4 1966171168
        %v2017 = vunpack.c.0.s8 %v2016
        %v2018 = vlaneseq
        %v2019 = vshrl.u32 %v2018, 7
        %v2020 = vsub.s32 %v2017, %v2019
        %v2021 = vrot.slane %v2006, %v2020
        %v2023 = vunpack.c.l.s4 1966171168
        %v2024 = vunpack.c.0.s8 %v2023
        %v2025 = vlaneseq
        %v2026 = vshrl.u32 %v2025, 7
        %v2027 = vsub.s32 %v2024, %v2026
        %v2028 = vrot.slane %v2007, %v2027
        %v2029 = vcombine.high %v2014, %v2014
        %v2030 = vcombine.high %v2028, %v2028
        %v2031 = vcombine.high %v1757, %v1757
        %v2033 = vunpack.c.l.s4 1966171168
        %v2034 = vunpack.c.0.s8 %v2033
        %v2035 = vlaneseq
        %v2036 = vshrl.u32 %v2035, 7
        %v2037 = vsub.s32 %v2034, %v2036
        %v2038 = vrot.slane %v1757, %v2037
        %v2040 = vunpack.c.l.s4 1966171168
        %v2041 = vunpack.c.0.s8 %v2040
        %v2042 = vlaneseq
        %v2043 = vshrl.u32 %v2042, 7
        %v2044 = vsub.s32 %v2041, %v2043
        %v2045 = vrot.slane %v2031, %v2044
        %v2046 = vcombine.high %v2038, %v2038
        %v2047 = vcombine.high %v2045, %v2045
        %v2049 = vunpack.c.l.s4 1966171168
        %v2050 = vunpack.c.0.s8 %v2049
        %v2051 = vlaneseq
        %v2052 = vshrl.u32 %v2051, 7
        %v2053 = vsub.s32 %v2050, %v2052
        %v2054 = vrot.slane %v2038, %v2053
        %v2056 = vunpack.c.l.s4 1966171168
        %v2057 = vunpack.c.0.s8 %v2056
        %v2058 = vlaneseq
        %v2059 = vshrl.u32 %v2058, 7
        %v2060 = vsub.s32 %v2057, %v2059
        %v2061 = vrot.slane %v2045, %v2060
        %v2063 = vunpack.c.l.s4 1966171168
        %v2064 = vunpack.c.0.s8 %v2063
        %v2065 = vlaneseq
        %v2066 = vshrl.u32 %v2065, 7
        %v2067 = vsub.s32 %v2064, %v2066
        %v2068 = vrot.slane %v2046, %v2067
        %v2070 = vunpack.c.l.s4 1966171168
        %v2071 = vunpack.c.0.s8 %v2070
        %v2072 = vlaneseq
        %v2073 = vshrl.u32 %v2072, 7
        %v2074 = vsub.s32 %v2071, %v2073
        %v2075 = vrot.slane %v2047, %v2074
        %v2076 = vcombine.high %v2054, %v2054
        %v2077 = vcombine.high %v2061, %v2061
        %v2078 = vcombine.high %v2068, %v2068
        %v2079 = vcombine.high %v2075, %v2075
        %v2080 = vcombine.high %v1758, %v1758
        %v2082 = vunpack.c.l.s4 1966171168
        %v2083 = vunpack.c.0.s8 %v2082
        %v2084 = vlaneseq
        %v2085 = vshrl.u32 %v2084, 7
        %v2086 = vsub.s32 %v2083, %v2085
        %v2087 = vrot.slane %v1758, %v2086
        %v2089 = vunpack.c.l.s4 1966171168
        %v2090 = vunpack.c.0.s8 %v2089
        %v2091 = vlaneseq
        %v2092 = vshrl.u32 %v2091, 7
        %v2093 = vsub.s32 %v2090, %v2092
        %v2094 = vrot.slane %v2080, %v2093
        %v2095 = vcombine.high %v2087, %v2087
        %v2097 = vunpack.c.l.s4 1966171168
        %v2098 = vunpack.c.0.s8 %v2097
        %v2099 = vlaneseq
        %v2100 = vshrl.u32 %v2099, 7
        %v2101 = vsub.s32 %v2098, %v2100
        %v2102 = vrot.slane %v2087, %v2101
        %v2104 = vunpack.c.l.s4 1966171168
        %v2105 = vunpack.c.0.s8 %v2104
        %v2106 = vlaneseq
        %v2107 = vshrl.u32 %v2106, 7
        %v2108 = vsub.s32 %v2105, %v2107
        %v2109 = vrot.slane %v2094, %v2108
        %v2111 = vunpack.c.l.s4 1966171168
        %v2112 = vunpack.c.0.s8 %v2111
        %v2113 = vlaneseq
        %v2114 = vshrl.u32 %v2113, 7
        %v2115 = vsub.s32 %v2112, %v2114
        %v2116 = vrot.slane %v2095, %v2115
        %v2117 = vcombine.high %v2102, %v2102
        %v2118 = vcombine.high %v2116, %v2116
        %v2119 = vcombine.low %v1790, %v1804
        %v2120 = vcombine.low %v1812, %v1814
        %v2121 = vcombine.low %v1797, %v1811
        %v2122 = vcombine.low %v1813, %v1815
        %v2124 = vunpack.c.l.s4 1966171168
        %v2125 = vunpack.c.0.s8 %v2124
        %v2126 = vlaneseq
        %v2127 = vshrl.u32 %v2126, 7
        %v2128 = vsub.s32 %v2125, %v2127
        %v2129 = vrot.slane %v2119, %v2128
        %v2131 = vunpack.c.l.s4 1966171168
        %v2132 = vunpack.c.0.s8 %v2131
        %v2133 = vlaneseq
        %v2134 = vshrl.u32 %v2133, 7
        %v2135 = vsub.s32 %v2132, %v2134
        %v2136 = vrot.slane %v2120, %v2135
        %v2138 = vunpack.c.l.s4 1966171168
        %v2139 = vunpack.c.0.s8 %v2138
        %v2140 = vlaneseq
        %v2141 = vshrl.u32 %v2140, 7
        %v2142 = vsub.s32 %v2139, %v2141
        %v2143 = vrot.slane %v2121, %v2142
        %v2145 = vunpack.c.l.s4 1966171168
        %v2146 = vunpack.c.0.s8 %v2145
        %v2147 = vlaneseq
        %v2148 = vshrl.u32 %v2147, 7
        %v2149 = vsub.s32 %v2146, %v2148
        %v2150 = vrot.slane %v2122, %v2149
        %v2151 = vcombine.low %v2129, %v2136
        %v2152 = vcombine.low %v2143, %v2150
        %v2154 = vunpack.c.l.s4 1966171168
        %v2155 = vunpack.c.0.s8 %v2154
        %v2156 = vlaneseq
        %v2157 = vshrl.u32 %v2156, 7
        %v2158 = vsub.s32 %v2155, %v2157
        %v2159 = vrot.slane %v2151, %v2158
        %v2161 = vunpack.c.l.s4 1966171168
        %v2162 = vunpack.c.0.s8 %v2161
        %v2163 = vlaneseq
        %v2164 = vshrl.u32 %v2163, 7
        %v2165 = vsub.s32 %v2162, %v2164
        %v2166 = vrot.slane %v2152, %v2165
        %v2167 = vcombine.low %v2159, %v2166
        %v2168 = vcombine.low %v1838, %v1852
        %v2169 = vcombine.low %v1853, %v1854
        %v2170 = vcombine.low %v1845, %v1878
        %v2171 = vcombine.low %v1892, %v1900
        %v2173 = vunpack.c.l.s4 1966171168
        %v2174 = vunpack.c.0.s8 %v2173
        %v2175 = vlaneseq
        %v2176 = vshrl.u32 %v2175, 7
        %v2177 = vsub.s32 %v2174, %v2176
        %v2178 = vrot.slane %v2168, %v2177
        %v2180 = vunpack.c.l.s4 1966171168
        %v2181 = vunpack.c.0.s8 %v2180
        %v2182 = vlaneseq
        %v2183 = vshrl.u32 %v2182, 7
        %v2184 = vsub.s32 %v2181, %v2183
        %v2185 = vrot.slane %v2169, %v2184
        %v2187 = vunpack.c.l.s4 1966171168
        %v2188 = vunpack.c.0.s8 %v2187
        %v2189 = vlaneseq
        %v2190 = vshrl.u32 %v2189, 7
        %v2191 = vsub.s32 %v2188, %v2190
        %v2192 = vrot.slane %v2170, %v2191
        %v2194 = vunpack.c.l.s4 1966171168
        %v2195 = vunpack.c.0.s8 %v2194
        %v2196 = vlaneseq
        %v2197 = vshrl.u32 %v2196, 7
        %v2198 = vsub.s32 %v2195, %v2197
        %v2199 = vrot.slane %v2171, %v2198
        %v2200 = vcombine.low %v2178, %v2185
        %v2201 = vcombine.low %v2192, %v2199
        %v2203 = vunpack.c.l.s4 1966171168
        %v2204 = vunpack.c.0.s8 %v2203
        %v2205 = vlaneseq
        %v2206 = vshrl.u32 %v2205, 7
        %v2207 = vsub.s32 %v2204, %v2206
        %v2208 = vrot.slane %v2200, %v2207
        %v2210 = vunpack.c.l.s4 1966171168
        %v2211 = vunpack.c.0.s8 %v2210
        %v2212 = vlaneseq
        %v2213 = vshrl.u32 %v2212, 7
        %v2214 = vsub.s32 %v2211, %v2213
        %v2215 = vrot.slane %v2201, %v2214
        %v2216 = vcombine.low %v2208, %v2215
        %v2217 = vcombine.low %v1902, %v1885
        %v2218 = vcombine.low %v1899, %v1901
        %v2219 = vcombine.low %v1903, %v1926
        %v2220 = vcombine.low %v1940, %v1941
        %v2222 = vunpack.c.l.s4 1966171168
        %v2223 = vunpack.c.0.s8 %v2222
        %v2224 = vlaneseq
        %v2225 = vshrl.u32 %v2224, 7
        %v2226 = vsub.s32 %v2223, %v2225
        %v2227 = vrot.slane %v2217, %v2226
        %v2229 = vunpack.c.l.s4 1966171168
        %v2230 = vunpack.c.0.s8 %v2229
        %v2231 = vlaneseq
        %v2232 = vshrl.u32 %v2231, 7
        %v2233 = vsub.s32 %v2230, %v2232
        %v2234 = vrot.slane %v2218, %v2233
        %v2236 = vunpack.c.l.s4 1966171168
        %v2237 = vunpack.c.0.s8 %v2236
        %v2238 = vlaneseq
        %v2239 = vshrl.u32 %v2238, 7
        %v2240 = vsub.s32 %v2237, %v2239
        %v2241 = vrot.slane %v2219, %v2240
        %v2243 = vunpack.c.l.s4 1966171168
        %v2244 = vunpack.c.0.s8 %v2243
        %v2245 = vlaneseq
        %v2246 = vshrl.u32 %v2245, 7
        %v2247 = vsub.s32 %v2244, %v2246
        %v2248 = vrot.slane %v2220, %v2247
        %v2249 = vcombine.low %v2227, %v2234
        %v2250 = vcombine.low %v2241, %v2248
        %v2252 = vunpack.c.l.s4 1966171168
        %v2253 = vunpack.c.0.s8 %v2252
        %v2254 = vlaneseq
        %v2255 = vshrl.u32 %v2254, 7
        %v2256 = vsub.s32 %v2253, %v2255
        %v2257 = vrot.slane %v2249, %v2256
        %v2259 = vunpack.c.l.s4 1966171168
        %v2260 = vunpack.c.0.s8 %v2259
        %v2261 = vlaneseq
        %v2262 = vshrl.u32 %v2261, 7
        %v2263 = vsub.s32 %v2260, %v2262
        %v2264 = vrot.slane %v2250, %v2263
        %v2265 = vcombine.low %v2257, %v2264
        %v2266 = vcombine.low %v1942, %v1933
        %v2267 = vcombine.low %v1966, %v1980
        %v2268 = vcombine.low %v1988, %v1990
        %v2269 = vcombine.low %v1973, %v1987
        %v2271 = vunpack.c.l.s4 1966171168
        %v2272 = vunpack.c.0.s8 %v2271
        %v2273 = vlaneseq
        %v2274 = vshrl.u32 %v2273, 7
        %v2275 = vsub.s32 %v2272, %v2274
        %v2276 = vrot.slane %v2266, %v2275
        %v2278 = vunpack.c.l.s4 1966171168
        %v2279 = vunpack.c.0.s8 %v2278
        %v2280 = vlaneseq
        %v2281 = vshrl.u32 %v2280, 7
        %v2282 = vsub.s32 %v2279, %v2281
        %v2283 = vrot.slane %v2267, %v2282
        %v2285 = vunpack.c.l.s4 1966171168
        %v2286 = vunpack.c.0.s8 %v2285
        %v2287 = vlaneseq
        %v2288 = vshrl.u32 %v2287, 7
        %v2289 = vsub.s32 %v2286, %v2288
        %v2290 = vrot.slane %v2268, %v2289
        %v2292 = vunpack.c.l.s4 1966171168
        %v2293 = vunpack.c.0.s8 %v2292
        %v2294 = vlaneseq
        %v2295 = vshrl.u32 %v2294, 7
        %v2296 = vsub.s32 %v2293, %v2295
        %v2297 = vrot.slane %v2269, %v2296
        %v2298 = vcombine.low %v2276, %v2283
        %v2299 = vcombine.low %v2290, %v2297
        %v2301 = vunpack.c.l.s4 1966171168
        %v2302 = vunpack.c.0.s8 %v2301
        %v2303 = vlaneseq
        %v2304 = vshrl.u32 %v2303, 7
        %v2305 = vsub.s32 %v2302, %v2304
        %v2306 = vrot.slane %v2298, %v2305
        %v2308 = vunpack.c.l.s4 1966171168
        %v2309 = vunpack.c.0.s8 %v2308
        %v2310 = vlaneseq
        %v2311 = vshrl.u32 %v2310, 7
        %v2312 = vsub.s32 %v2309, %v2311
        %v2313 = vrot.slane %v2299, %v2312
        %v2314 = vcombine.low %v2306, %v2313
        %v2315 = vcombine.low %v1989, %v1991
        %v2316 = vcombine.low %v2014, %v2028
        %v2317 = vcombine.low %v2029, %v2030
        %v2318 = vcombine.low %v2021, %v2054
        %v2320 = vunpack.c.l.s4 1966171168
        %v2321 = vunpack.c.0.s8 %v2320
        %v2322 = vlaneseq
        %v2323 = vshrl.u32 %v2322, 7
        %v2324 = vsub.s32 %v2321, %v2323
        %v2325 = vrot.slane %v2315, %v2324
        %v2327 = vunpack.c.l.s4 1966171168
        %v2328 = vunpack.c.0.s8 %v2327
        %v2329 = vlaneseq
        %v2330 = vshrl.u32 %v2329, 7
        %v2331 = vsub.s32 %v2328, %v2330
        %v2332 = vrot.slane %v2316, %v2331
        %v2334 = vunpack.c.l.s4 1966171168
        %v2335 = vunpack.c.0.s8 %v2334
        %v2336 = vlaneseq
        %v2337 = vshrl.u32 %v2336, 7
        %v2338 = vsub.s32 %v2335, %v2337
        %v2339 = vrot.slane %v2317, %v2338
        %v2341 = vunpack.c.l.s4 1966171168
        %v2342 = vunpack.c.0.s8 %v2341
        %v2343 = vlaneseq
        %v2344 = vshrl.u32 %v2343, 7
        %v2345 = vsub.s32 %v2342, %v2344
        %v2346 = vrot.slane %v2318, %v2345
        %v2347 = vcombine.low %v2325, %v2332
        %v2348 = vcombine.low %v2339, %v2346
        %v2350 = vunpack.c.l.s4 1966171168
        %v2351 = vunpack.c.0.s8 %v2350
        %v2352 = vlaneseq
        %v2353 = vshrl.u32 %v2352, 7
        %v2354 = vsub.s32 %v2351, %v2353
        %v2355 = vrot.slane %v2347, %v2354
        %v2357 = vunpack.c.l.s4 1966171168
        %v2358 = vunpack.c.0.s8 %v2357
        %v2359 = vlaneseq
        %v2360 = vshrl.u32 %v2359, 7
        %v2361 = vsub.s32 %v2358, %v2360
        %v2362 = vrot.slane %v2348, %v2361
        %v2363 = vcombine.low %v2355, %v2362
        %v2364 = vcombine.low %v2068, %v2076
        %v2365 = vcombine.low %v2078, %v2061
        %v2366 = vcombine.low %v2075, %v2077
        %v2367 = vcombine.low %v2079, %v2102
        %v2369 = vunpack.c.l.s4 1966171168
        %v2370 = vunpack.c.0.s8 %v2369
        %v2371 = vlaneseq
        %v2372 = vshrl.u32 %v2371, 7
        %v2373 = vsub.s32 %v2370, %v2372
        %v2374 = vrot.slane %v2364, %v2373
        %v2376 = vunpack.c.l.s4 1966171168
        %v2377 = vunpack.c.0.s8 %v2376
        %v2378 = vlaneseq
        %v2379 = vshrl.u32 %v2378, 7
        %v2380 = vsub.s32 %v2377, %v2379
        %v2381 = vrot.slane %v2365, %v2380
        %v2383 = vunpack.c.l.s4 1966171168
        %v2384 = vunpack.c.0.s8 %v2383
        %v2385 = vlaneseq
        %v2386 = vshrl.u32 %v2385, 7
        %v2387 = vsub.s32 %v2384, %v2386
        %v2388 = vrot.slane %v2366, %v2387
        %v2390 = vunpack.c.l.s4 1966171168
        %v2391 = vunpack.c.0.s8 %v2390
        %v2392 = vlaneseq
        %v2393 = vshrl.u32 %v2392, 7
        %v2394 = vsub.s32 %v2391, %v2393
        %v2395 = vrot.slane %v2367, %v2394
        %v2396 = vcombine.low %v2374, %v2381
        %v2397 = vcombine.low %v2388, %v2395
        %v2399 = vunpack.c.l.s4 1966171168
        %v2400 = vunpack.c.0.s8 %v2399
        %v2401 = vlaneseq
        %v2402 = vshrl.u32 %v2401, 7
        %v2403 = vsub.s32 %v2400, %v2402
        %v2404 = vrot.slane %v2396, %v2403
        %v2406 = vunpack.c.l.s4 1966171168
        %v2407 = vunpack.c.0.s8 %v2406
        %v2408 = vlaneseq
        %v2409 = vshrl.u32 %v2408, 7
        %v2410 = vsub.s32 %v2407, %v2409
        %v2411 = vrot.slane %v2397, %v2410
        %v2412 = vcombine.low %v2404, %v2411
        %v2413 = vcombine.low %v2116, %v2117
        %v2414 = vcombine.low %v2118, %v2109
        %v2416 = vunpack.c.l.s4 1966171168
        %v2417 = vunpack.c.0.s8 %v2416
        %v2418 = vlaneseq
        %v2419 = vshrl.u32 %v2418, 7
        %v2420 = vsub.s32 %v2417, %v2419
        %v2421 = vrot.slane %v2413, %v2420
        %v2423 = vunpack.c.l.s4 1966171168
        %v2424 = vunpack.c.0.s8 %v2423
        %v2425 = vlaneseq
        %v2426 = vshrl.u32 %v2425, 7
        %v2427 = vsub.s32 %v2424, %v2426
        %v2428 = vrot.slane %v2414, %v2427
        %v2429 = vcombine.low %v2421, %v2428
        %v2431 = vunpack.c.l.s4 1966171168
        %v2432 = vunpack.c.0.s8 %v2431
        %v2433 = vlaneseq
        %v2434 = vshrl.u32 %v2433, 7
        %v2435 = vsub.s32 %v2432, %v2434
        %v2436 = vrot.slane %v2429, %v2435
        %2437 = vrot.lane.b32.xlu0 %v2167, 16
        %v2438 = vpop.permute.xlu0 %2437
        %2439 = vrot.lane.b32.xlu0 %v2216, 16
        %v2440 = vpop.permute.xlu0 %2439
        %2441 = vrot.lane.b32.xlu0 %v2265, 16
        %v2442 = vpop.permute.xlu0 %2441
        %2443 = vrot.lane.b32.xlu0 %v2314, 16
        %v2444 = vpop.permute.xlu0 %2443
        %2445 = vrot.lane.b32.xlu0 %v2363, 16
        %v2446 = vpop.permute.xlu0 %2445
        %2447 = vrot.lane.b32.xlu0 %v2412, 16
        %v2448 = vpop.permute.xlu0 %2447
        %2449 = vrot.lane.b32.xlu0 %v2436, 16
        %v2450 = vpop.permute.xlu0 %2449
        %vm2458 = vcmask 195712
        %2459 = vst.msk [vmem:[#allocation2] sm:$0xff] %vm2458, %v2438
        %2460 = vst.msk [vmem:[#allocation2 + $0x8] sm:$0xff] %vm2458, %v2440
        %2461 = vst.msk [vmem:[#allocation2 + $0x10] sm:$0xff] %vm2458, %v2442
        %2462 = vst.msk [vmem:[#allocation2 + $0x18] sm:$0xff] %vm2458, %v2444
        %2463 = vst.msk [vmem:[#allocation2 + $0x20] sm:$0xff] %vm2458, %v2446
        %2464 = vst.msk [vmem:[#allocation2 + $0x28] sm:$0xff] %vm2458, %v2448
        %vm2465 = vcmask 191616
        %2466 = vst.msk [vmem:[#allocation2 + $0x30] sm:$0xf] %vm2465, %v2450
        %v2467 = vld [vmem:[%s283 + $0x3] sm:$0xff]
        %v2468 = vld [vmem:[%s283 + $0xb] sm:$0x1f]
        %v2469 = vld [vmem:[%s283 + $0x1b] sm:$0xff]
        %v2470 = vld [vmem:[%s283 + $0x23] sm:$0x1f]
        %v2471 = vld [vmem:[%s283 + $0x33] sm:$0xff]
        %v2472 = vld [vmem:[%s283 + $0x3b] sm:$0x1f]
        %v2473 = vld [vmem:[%s283 + $0x4b] sm:$0xff]
        %v2474 = vld [vmem:[%s283 + $0x53] sm:$0x1f]
        %v2483 = vcombine.high %v2467, %v2467
        %v2485 = vunpack.c.l.s4 1966171168
        %v2486 = vunpack.c.0.s8 %v2485
        %v2487 = vlaneseq
        %v2488 = vshrl.u32 %v2487, 7
        %v2489 = vsub.s32 %v2486, %v2488
        %v2490 = vrot.slane %v2467, %v2489
        %v2492 = vunpack.c.l.s4 1966171168
        %v2493 = vunpack.c.0.s8 %v2492
        %v2494 = vlaneseq
        %v2495 = vshrl.u32 %v2494, 7
        %v2496 = vsub.s32 %v2493, %v2495
        %v2497 = vrot.slane %v2483, %v2496
        %v2498 = vcombine.high %v2490, %v2490
        %v2499 = vcombine.high %v2497, %v2497
        %v2501 = vunpack.c.l.s4 1966171168
        %v2502 = vunpack.c.0.s8 %v2501
        %v2503 = vlaneseq
        %v2504 = vshrl.u32 %v2503, 7
        %v2505 = vsub.s32 %v2502, %v2504
        %v2506 = vrot.slane %v2490, %v2505
        %v2508 = vunpack.c.l.s4 1966171168
        %v2509 = vunpack.c.0.s8 %v2508
        %v2510 = vlaneseq
        %v2511 = vshrl.u32 %v2510, 7
        %v2512 = vsub.s32 %v2509, %v2511
        %v2513 = vrot.slane %v2497, %v2512
        %v2515 = vunpack.c.l.s4 1966171168
        %v2516 = vunpack.c.0.s8 %v2515
        %v2517 = vlaneseq
        %v2518 = vshrl.u32 %v2517, 7
        %v2519 = vsub.s32 %v2516, %v2518
        %v2520 = vrot.slane %v2498, %v2519
        %v2522 = vunpack.c.l.s4 1966171168
        %v2523 = vunpack.c.0.s8 %v2522
        %v2524 = vlaneseq
        %v2525 = vshrl.u32 %v2524, 7
        %v2526 = vsub.s32 %v2523, %v2525
        %v2527 = vrot.slane %v2499, %v2526
        %v2528 = vcombine.high %v2506, %v2506
        %v2529 = vcombine.high %v2513, %v2513
        %v2530 = vcombine.high %v2520, %v2520
        %v2531 = vcombine.high %v2527, %v2527
        %v2532 = vcombine.high %v2468, %v2468
        %v2534 = vunpack.c.l.s4 1966171168
        %v2535 = vunpack.c.0.s8 %v2534
        %v2536 = vlaneseq
        %v2537 = vshrl.u32 %v2536, 7
        %v2538 = vsub.s32 %v2535, %v2537
        %v2539 = vrot.slane %v2468, %v2538
        %v2541 = vunpack.c.l.s4 1966171168
        %v2542 = vunpack.c.0.s8 %v2541
        %v2543 = vlaneseq
        %v2544 = vshrl.u32 %v2543, 7
        %v2545 = vsub.s32 %v2542, %v2544
        %v2546 = vrot.slane %v2532, %v2545
        %v2547 = vcombine.high %v2539, %v2539
        %v2549 = vunpack.c.l.s4 1966171168
        %v2550 = vunpack.c.0.s8 %v2549
        %v2551 = vlaneseq
        %v2552 = vshrl.u32 %v2551, 7
        %v2553 = vsub.s32 %v2550, %v2552
        %v2554 = vrot.slane %v2539, %v2553
        %v2556 = vunpack.c.l.s4 1966171168
        %v2557 = vunpack.c.0.s8 %v2556
        %v2558 = vlaneseq
        %v2559 = vshrl.u32 %v2558, 7
        %v2560 = vsub.s32 %v2557, %v2559
        %v2561 = vrot.slane %v2546, %v2560
        %v2563 = vunpack.c.l.s4 1966171168
        %v2564 = vunpack.c.0.s8 %v2563
        %v2565 = vlaneseq
        %v2566 = vshrl.u32 %v2565, 7
        %v2567 = vsub.s32 %v2564, %v2566
        %v2568 = vrot.slane %v2547, %v2567
        %v2569 = vcombine.high %v2554, %v2554
        %v2570 = vcombine.high %v2568, %v2568
        %v2571 = vcombine.high %v2469, %v2469
        %v2573 = vunpack.c.l.s4 1966171168
        %v2574 = vunpack.c.0.s8 %v2573
        %v2575 = vlaneseq
        %v2576 = vshrl.u32 %v2575, 7
        %v2577 = vsub.s32 %v2574, %v2576
        %v2578 = vrot.slane %v2469, %v2577
        %v2580 = vunpack.c.l.s4 1966171168
        %v2581 = vunpack.c.0.s8 %v2580
        %v2582 = vlaneseq
        %v2583 = vshrl.u32 %v2582, 7
        %v2584 = vsub.s32 %v2581, %v2583
        %v2585 = vrot.slane %v2571, %v2584
        %v2586 = vcombine.high %v2578, %v2578
        %v2587 = vcombine.high %v2585, %v2585
        %v2589 = vunpack.c.l.s4 1966171168
        %v2590 = vunpack.c.0.s8 %v2589
        %v2591 = vlaneseq
        %v2592 = vshrl.u32 %v2591, 7
        %v2593 = vsub.s32 %v2590, %v2592
        %v2594 = vrot.slane %v2578, %v2593
        %v2596 = vunpack.c.l.s4 1966171168
        %v2597 = vunpack.c.0.s8 %v2596
        %v2598 = vlaneseq
        %v2599 = vshrl.u32 %v2598, 7
        %v2600 = vsub.s32 %v2597, %v2599
        %v2601 = vrot.slane %v2585, %v2600
        %v2603 = vunpack.c.l.s4 1966171168
        %v2604 = vunpack.c.0.s8 %v2603
        %v2605 = vlaneseq
        %v2606 = vshrl.u32 %v2605, 7
        %v2607 = vsub.s32 %v2604, %v2606
        %v2608 = vrot.slane %v2586, %v2607
        %v2610 = vunpack.c.l.s4 1966171168
        %v2611 = vunpack.c.0.s8 %v2610
        %v2612 = vlaneseq
        %v2613 = vshrl.u32 %v2612, 7
        %v2614 = vsub.s32 %v2611, %v2613
        %v2615 = vrot.slane %v2587, %v2614
        %v2616 = vcombine.high %v2594, %v2594
        %v2617 = vcombine.high %v2601, %v2601
        %v2618 = vcombine.high %v2608, %v2608
        %v2619 = vcombine.high %v2615, %v2615
        %v2620 = vcombine.high %v2470, %v2470
        %v2622 = vunpack.c.l.s4 1966171168
        %v2623 = vunpack.c.0.s8 %v2622
        %v2624 = vlaneseq
        %v2625 = vshrl.u32 %v2624, 7
        %v2626 = vsub.s32 %v2623, %v2625
        %v2627 = vrot.slane %v2470, %v2626
        %v2629 = vunpack.c.l.s4 1966171168
        %v2630 = vunpack.c.0.s8 %v2629
        %v2631 = vlaneseq
        %v2632 = vshrl.u32 %v2631, 7
        %v2633 = vsub.s32 %v2630, %v2632
        %v2634 = vrot.slane %v2620, %v2633
        %v2635 = vcombine.high %v2627, %v2627
        %v2637 = vunpack.c.l.s4 1966171168
        %v2638 = vunpack.c.0.s8 %v2637
        %v2639 = vlaneseq
        %v2640 = vshrl.u32 %v2639, 7
        %v2641 = vsub.s32 %v2638, %v2640
        %v2642 = vrot.slane %v2627, %v2641
        %v2644 = vunpack.c.l.s4 1966171168
        %v2645 = vunpack.c.0.s8 %v2644
        %v2646 = vlaneseq
        %v2647 = vshrl.u32 %v2646, 7
        %v2648 = vsub.s32 %v2645, %v2647
        %v2649 = vrot.slane %v2634, %v2648
        %v2651 = vunpack.c.l.s4 1966171168
        %v2652 = vunpack.c.0.s8 %v2651
        %v2653 = vlaneseq
        %v2654 = vshrl.u32 %v2653, 7
        %v2655 = vsub.s32 %v2652, %v2654
        %v2656 = vrot.slane %v2635, %v2655
        %v2657 = vcombine.high %v2642, %v2642
        %v2658 = vcombine.high %v2656, %v2656
        %v2659 = vcombine.high %v2471, %v2471
        %v2661 = vunpack.c.l.s4 1966171168
        %v2662 = vunpack.c.0.s8 %v2661
        %v2663 = vlaneseq
        %v2664 = vshrl.u32 %v2663, 7
        %v2665 = vsub.s32 %v2662, %v2664
        %v2666 = vrot.slane %v2471, %v2665
        %v2668 = vunpack.c.l.s4 1966171168
        %v2669 = vunpack.c.0.s8 %v2668
        %v2670 = vlaneseq
        %v2671 = vshrl.u32 %v2670, 7
        %v2672 = vsub.s32 %v2669, %v2671
        %v2673 = vrot.slane %v2659, %v2672
        %v2674 = vcombine.high %v2666, %v2666
        %v2675 = vcombine.high %v2673, %v2673
        %v2677 = vunpack.c.l.s4 1966171168
        %v2678 = vunpack.c.0.s8 %v2677
        %v2679 = vlaneseq
        %v2680 = vshrl.u32 %v2679, 7
        %v2681 = vsub.s32 %v2678, %v2680
        %v2682 = vrot.slane %v2666, %v2681
        %v2684 = vunpack.c.l.s4 1966171168
        %v2685 = vunpack.c.0.s8 %v2684
        %v2686 = vlaneseq
        %v2687 = vshrl.u32 %v2686, 7
        %v2688 = vsub.s32 %v2685, %v2687
        %v2689 = vrot.slane %v2673, %v2688
        %v2691 = vunpack.c.l.s4 1966171168
        %v2692 = vunpack.c.0.s8 %v2691
        %v2693 = vlaneseq
        %v2694 = vshrl.u32 %v2693, 7
        %v2695 = vsub.s32 %v2692, %v2694
        %v2696 = vrot.slane %v2674, %v2695
        %v2698 = vunpack.c.l.s4 1966171168
        %v2699 = vunpack.c.0.s8 %v2698
        %v2700 = vlaneseq
        %v2701 = vshrl.u32 %v2700, 7
        %v2702 = vsub.s32 %v2699, %v2701
        %v2703 = vrot.slane %v2675, %v2702
        %v2704 = vcombine.high %v2682, %v2682
        %v2705 = vcombine.high %v2689, %v2689
        %v2706 = vcombine.high %v2696, %v2696
        %v2707 = vcombine.high %v2703, %v2703
        %v2708 = vcombine.high %v2472, %v2472
        %v2710 = vunpack.c.l.s4 1966171168
        %v2711 = vunpack.c.0.s8 %v2710
        %v2712 = vlaneseq
        %v2713 = vshrl.u32 %v2712, 7
        %v2714 = vsub.s32 %v2711, %v2713
        %v2715 = vrot.slane %v2472, %v2714
        %v2717 = vunpack.c.l.s4 1966171168
        %v2718 = vunpack.c.0.s8 %v2717
        %v2719 = vlaneseq
        %v2720 = vshrl.u32 %v2719, 7
        %v2721 = vsub.s32 %v2718, %v2720
        %v2722 = vrot.slane %v2708, %v2721
        %v2723 = vcombine.high %v2715, %v2715
        %v2725 = vunpack.c.l.s4 1966171168
        %v2726 = vunpack.c.0.s8 %v2725
        %v2727 = vlaneseq
        %v2728 = vshrl.u32 %v2727, 7
        %v2729 = vsub.s32 %v2726, %v2728
        %v2730 = vrot.slane %v2715, %v2729
        %v2732 = vunpack.c.l.s4 1966171168
        %v2733 = vunpack.c.0.s8 %v2732
        %v2734 = vlaneseq
        %v2735 = vshrl.u32 %v2734, 7
        %v2736 = vsub.s32 %v2733, %v2735
        %v2737 = vrot.slane %v2722, %v2736
        %v2739 = vunpack.c.l.s4 1966171168
        %v2740 = vunpack.c.0.s8 %v2739
        %v2741 = vlaneseq
        %v2742 = vshrl.u32 %v2741, 7
        %v2743 = vsub.s32 %v2740, %v2742
        %v2744 = vrot.slane %v2723, %v2743
        %v2745 = vcombine.high %v2730, %v2730
        %v2746 = vcombine.high %v2744, %v2744
        %v2747 = vcombine.high %v2473, %v2473
        %v2749 = vunpack.c.l.s4 1966171168
        %v2750 = vunpack.c.0.s8 %v2749
        %v2751 = vlaneseq
        %v2752 = vshrl.u32 %v2751, 7
        %v2753 = vsub.s32 %v2750, %v2752
        %v2754 = vrot.slane %v2473, %v2753
        %v2756 = vunpack.c.l.s4 1966171168
        %v2757 = vunpack.c.0.s8 %v2756
        %v2758 = vlaneseq
        %v2759 = vshrl.u32 %v2758, 7
        %v2760 = vsub.s32 %v2757, %v2759
        %v2761 = vrot.slane %v2747, %v2760
        %v2762 = vcombine.high %v2754, %v2754
        %v2763 = vcombine.high %v2761, %v2761
        %v2765 = vunpack.c.l.s4 1966171168
        %v2766 = vunpack.c.0.s8 %v2765
        %v2767 = vlaneseq
        %v2768 = vshrl.u32 %v2767, 7
        %v2769 = vsub.s32 %v2766, %v2768
        %v2770 = vrot.slane %v2754, %v2769
        %v2772 = vunpack.c.l.s4 1966171168
        %v2773 = vunpack.c.0.s8 %v2772
        %v2774 = vlaneseq
        %v2775 = vshrl.u32 %v2774, 7
        %v2776 = vsub.s32 %v2773, %v2775
        %v2777 = vrot.slane %v2761, %v2776
        %v2779 = vunpack.c.l.s4 1966171168
        %v2780 = vunpack.c.0.s8 %v2779
        %v2781 = vlaneseq
        %v2782 = vshrl.u32 %v2781, 7
        %v2783 = vsub.s32 %v2780, %v2782
        %v2784 = vrot.slane %v2762, %v2783
        %v2786 = vunpack.c.l.s4 1966171168
        %v2787 = vunpack.c.0.s8 %v2786
        %v2788 = vlaneseq
        %v2789 = vshrl.u32 %v2788, 7
        %v2790 = vsub.s32 %v2787, %v2789
        %v2791 = vrot.slane %v2763, %v2790
        %v2792 = vcombine.high %v2770, %v2770
        %v2793 = vcombine.high %v2777, %v2777
        %v2794 = vcombine.high %v2784, %v2784
        %v2795 = vcombine.high %v2791, %v2791
        %v2796 = vcombine.high %v2474, %v2474
        %v2798 = vunpack.c.l.s4 1966171168
        %v2799 = vunpack.c.0.s8 %v2798
        %v2800 = vlaneseq
        %v2801 = vshrl.u32 %v2800, 7
        %v2802 = vsub.s32 %v2799, %v2801
        %v2803 = vrot.slane %v2474, %v2802
        %v2805 = vunpack.c.l.s4 1966171168
        %v2806 = vunpack.c.0.s8 %v2805
        %v2807 = vlaneseq
        %v2808 = vshrl.u32 %v2807, 7
        %v2809 = vsub.s32 %v2806, %v2808
        %v2810 = vrot.slane %v2796, %v2809
        %v2811 = vcombine.high %v2803, %v2803
        %v2813 = vunpack.c.l.s4 1966171168
        %v2814 = vunpack.c.0.s8 %v2813
        %v2815 = vlaneseq
        %v2816 = vshrl.u32 %v2815, 7
        %v2817 = vsub.s32 %v2814, %v2816
        %v2818 = vrot.slane %v2803, %v2817
        %v2820 = vunpack.c.l.s4 1966171168
        %v2821 = vunpack.c.0.s8 %v2820
        %v2822 = vlaneseq
        %v2823 = vshrl.u32 %v2822, 7
        %v2824 = vsub.s32 %v2821, %v2823
        %v2825 = vrot.slane %v2810, %v2824
        %v2827 = vunpack.c.l.s4 1966171168
        %v2828 = vunpack.c.0.s8 %v2827
        %v2829 = vlaneseq
        %v2830 = vshrl.u32 %v2829, 7
        %v2831 = vsub.s32 %v2828, %v2830
        %v2832 = vrot.slane %v2811, %v2831
        %v2833 = vcombine.high %v2818, %v2818
        %v2834 = vcombine.high %v2832, %v2832
        %v2835 = vcombine.low %v2506, %v2520
        %v2836 = vcombine.low %v2528, %v2530
        %v2837 = vcombine.low %v2513, %v2527
        %v2838 = vcombine.low %v2529, %v2531
        %v2840 = vunpack.c.l.s4 1966171168
        %v2841 = vunpack.c.0.s8 %v2840
        %v2842 = vlaneseq
        %v2843 = vshrl.u32 %v2842, 7
        %v2844 = vsub.s32 %v2841, %v2843
        %v2845 = vrot.slane %v2835, %v2844
        %v2847 = vunpack.c.l.s4 1966171168
        %v2848 = vunpack.c.0.s8 %v2847
        %v2849 = vlaneseq
        %v2850 = vshrl.u32 %v2849, 7
        %v2851 = vsub.s32 %v2848, %v2850
        %v2852 = vrot.slane %v2836, %v2851
        %v2854 = vunpack.c.l.s4 1966171168
        %v2855 = vunpack.c.0.s8 %v2854
        %v2856 = vlaneseq
        %v2857 = vshrl.u32 %v2856, 7
        %v2858 = vsub.s32 %v2855, %v2857
        %v2859 = vrot.slane %v2837, %v2858
        %v2861 = vunpack.c.l.s4 1966171168
        %v2862 = vunpack.c.0.s8 %v2861
        %v2863 = vlaneseq
        %v2864 = vshrl.u32 %v2863, 7
        %v2865 = vsub.s32 %v2862, %v2864
        %v2866 = vrot.slane %v2838, %v2865
        %v2867 = vcombine.low %v2845, %v2852
        %v2868 = vcombine.low %v2859, %v2866
        %v2870 = vunpack.c.l.s4 1966171168
        %v2871 = vunpack.c.0.s8 %v2870
        %v2872 = vlaneseq
        %v2873 = vshrl.u32 %v2872, 7
        %v2874 = vsub.s32 %v2871, %v2873
        %v2875 = vrot.slane %v2867, %v2874
        %v2877 = vunpack.c.l.s4 1966171168
        %v2878 = vunpack.c.0.s8 %v2877
        %v2879 = vlaneseq
        %v2880 = vshrl.u32 %v2879, 7
        %v2881 = vsub.s32 %v2878, %v2880
        %v2882 = vrot.slane %v2868, %v2881
        %v2883 = vcombine.low %v2875, %v2882
        %v2884 = vcombine.low %v2554, %v2568
        %v2885 = vcombine.low %v2569, %v2570
        %v2886 = vcombine.low %v2561, %v2594
        %v2887 = vcombine.low %v2608, %v2616
        %v2889 = vunpack.c.l.s4 1966171168
        %v2890 = vunpack.c.0.s8 %v2889
        %v2891 = vlaneseq
        %v2892 = vshrl.u32 %v2891, 7
        %v2893 = vsub.s32 %v2890, %v2892
        %v2894 = vrot.slane %v2884, %v2893
        %v2896 = vunpack.c.l.s4 1966171168
        %v2897 = vunpack.c.0.s8 %v2896
        %v2898 = vlaneseq
        %v2899 = vshrl.u32 %v2898, 7
        %v2900 = vsub.s32 %v2897, %v2899
        %v2901 = vrot.slane %v2885, %v2900
        %v2903 = vunpack.c.l.s4 1966171168
        %v2904 = vunpack.c.0.s8 %v2903
        %v2905 = vlaneseq
        %v2906 = vshrl.u32 %v2905, 7
        %v2907 = vsub.s32 %v2904, %v2906
        %v2908 = vrot.slane %v2886, %v2907
        %v2910 = vunpack.c.l.s4 1966171168
        %v2911 = vunpack.c.0.s8 %v2910
        %v2912 = vlaneseq
        %v2913 = vshrl.u32 %v2912, 7
        %v2914 = vsub.s32 %v2911, %v2913
        %v2915 = vrot.slane %v2887, %v2914
        %v2916 = vcombine.low %v2894, %v2901
        %v2917 = vcombine.low %v2908, %v2915
        %v2919 = vunpack.c.l.s4 1966171168
        %v2920 = vunpack.c.0.s8 %v2919
        %v2921 = vlaneseq
        %v2922 = vshrl.u32 %v2921, 7
        %v2923 = vsub.s32 %v2920, %v2922
        %v2924 = vrot.slane %v2916, %v2923
        %v2926 = vunpack.c.l.s4 1966171168
        %v2927 = vunpack.c.0.s8 %v2926
        %v2928 = vlaneseq
        %v2929 = vshrl.u32 %v2928, 7
        %v2930 = vsub.s32 %v2927, %v2929
        %v2931 = vrot.slane %v2917, %v2930
        %v2932 = vcombine.low %v2924, %v2931
        %v2933 = vcombine.low %v2618, %v2601
        %v2934 = vcombine.low %v2615, %v2617
        %v2935 = vcombine.low %v2619, %v2642
        %v2936 = vcombine.low %v2656, %v2657
        %v2938 = vunpack.c.l.s4 1966171168
        %v2939 = vunpack.c.0.s8 %v2938
        %v2940 = vlaneseq
        %v2941 = vshrl.u32 %v2940, 7
        %v2942 = vsub.s32 %v2939, %v2941
        %v2943 = vrot.slane %v2933, %v2942
        %v2945 = vunpack.c.l.s4 1966171168
        %v2946 = vunpack.c.0.s8 %v2945
        %v2947 = vlaneseq
        %v2948 = vshrl.u32 %v2947, 7
        %v2949 = vsub.s32 %v2946, %v2948
        %v2950 = vrot.slane %v2934, %v2949
        %v2952 = vunpack.c.l.s4 1966171168
        %v2953 = vunpack.c.0.s8 %v2952
        %v2954 = vlaneseq
        %v2955 = vshrl.u32 %v2954, 7
        %v2956 = vsub.s32 %v2953, %v2955
        %v2957 = vrot.slane %v2935, %v2956
        %v2959 = vunpack.c.l.s4 1966171168
        %v2960 = vunpack.c.0.s8 %v2959
        %v2961 = vlaneseq
        %v2962 = vshrl.u32 %v2961, 7
        %v2963 = vsub.s32 %v2960, %v2962
        %v2964 = vrot.slane %v2936, %v2963
        %v2965 = vcombine.low %v2943, %v2950
        %v2966 = vcombine.low %v2957, %v2964
        %v2968 = vunpack.c.l.s4 1966171168
        %v2969 = vunpack.c.0.s8 %v2968
        %v2970 = vlaneseq
        %v2971 = vshrl.u32 %v2970, 7
        %v2972 = vsub.s32 %v2969, %v2971
        %v2973 = vrot.slane %v2965, %v2972
        %v2975 = vunpack.c.l.s4 1966171168
        %v2976 = vunpack.c.0.s8 %v2975
        %v2977 = vlaneseq
        %v2978 = vshrl.u32 %v2977, 7
        %v2979 = vsub.s32 %v2976, %v2978
        %v2980 = vrot.slane %v2966, %v2979
        %v2981 = vcombine.low %v2973, %v2980
        %v2982 = vcombine.low %v2658, %v2649
        %v2983 = vcombine.low %v2682, %v2696
        %v2984 = vcombine.low %v2704, %v2706
        %v2985 = vcombine.low %v2689, %v2703
        %v2987 = vunpack.c.l.s4 1966171168
        %v2988 = vunpack.c.0.s8 %v2987
        %v2989 = vlaneseq
        %v2990 = vshrl.u32 %v2989, 7
        %v2991 = vsub.s32 %v2988, %v2990
        %v2992 = vrot.slane %v2982, %v2991
        %v2994 = vunpack.c.l.s4 1966171168
        %v2995 = vunpack.c.0.s8 %v2994
        %v2996 = vlaneseq
        %v2997 = vshrl.u32 %v2996, 7
        %v2998 = vsub.s32 %v2995, %v2997
        %v2999 = vrot.slane %v2983, %v2998
        %v3001 = vunpack.c.l.s4 1966171168
        %v3002 = vunpack.c.0.s8 %v3001
        %v3003 = vlaneseq
        %v3004 = vshrl.u32 %v3003, 7
        %v3005 = vsub.s32 %v3002, %v3004
        %v3006 = vrot.slane %v2984, %v3005
        %v3008 = vunpack.c.l.s4 1966171168
        %v3009 = vunpack.c.0.s8 %v3008
        %v3010 = vlaneseq
        %v3011 = vshrl.u32 %v3010, 7
        %v3012 = vsub.s32 %v3009, %v3011
        %v3013 = vrot.slane %v2985, %v3012
        %v3014 = vcombine.low %v2992, %v2999
        %v3015 = vcombine.low %v3006, %v3013
        %v3017 = vunpack.c.l.s4 1966171168
        %v3018 = vunpack.c.0.s8 %v3017
        %v3019 = vlaneseq
        %v3020 = vshrl.u32 %v3019, 7
        %v3021 = vsub.s32 %v3018, %v3020
        %v3022 = vrot.slane %v3014, %v3021
        %v3024 = vunpack.c.l.s4 1966171168
        %v3025 = vunpack.c.0.s8 %v3024
        %v3026 = vlaneseq
        %v3027 = vshrl.u32 %v3026, 7
        %v3028 = vsub.s32 %v3025, %v3027
        %v3029 = vrot.slane %v3015, %v3028
        %v3030 = vcombine.low %v3022, %v3029
        %v3031 = vcombine.low %v2705, %v2707
        %v3032 = vcombine.low %v2730, %v2744
        %v3033 = vcombine.low %v2745, %v2746
        %v3034 = vcombine.low %v2737, %v2770
        %v3036 = vunpack.c.l.s4 1966171168
        %v3037 = vunpack.c.0.s8 %v3036
        %v3038 = vlaneseq
        %v3039 = vshrl.u32 %v3038, 7
        %v3040 = vsub.s32 %v3037, %v3039
        %v3041 = vrot.slane %v3031, %v3040
        %v3043 = vunpack.c.l.s4 1966171168
        %v3044 = vunpack.c.0.s8 %v3043
        %v3045 = vlaneseq
        %v3046 = vshrl.u32 %v3045, 7
        %v3047 = vsub.s32 %v3044, %v3046
        %v3048 = vrot.slane %v3032, %v3047
        %v3050 = vunpack.c.l.s4 1966171168
        %v3051 = vunpack.c.0.s8 %v3050
        %v3052 = vlaneseq
        %v3053 = vshrl.u32 %v3052, 7
        %v3054 = vsub.s32 %v3051, %v3053
        %v3055 = vrot.slane %v3033, %v3054
        %v3057 = vunpack.c.l.s4 1966171168
        %v3058 = vunpack.c.0.s8 %v3057
        %v3059 = vlaneseq
        %v3060 = vshrl.u32 %v3059, 7
        %v3061 = vsub.s32 %v3058, %v3060
        %v3062 = vrot.slane %v3034, %v3061
        %v3063 = vcombine.low %v3041, %v3048
        %v3064 = vcombine.low %v3055, %v3062
        %v3066 = vunpack.c.l.s4 1966171168
        %v3067 = vunpack.c.0.s8 %v3066
        %v3068 = vlaneseq
        %v3069 = vshrl.u32 %v3068, 7
        %v3070 = vsub.s32 %v3067, %v3069
        %v3071 = vrot.slane %v3063, %v3070
        %v3073 = vunpack.c.l.s4 1966171168
        %v3074 = vunpack.c.0.s8 %v3073
        %v3075 = vlaneseq
        %v3076 = vshrl.u32 %v3075, 7
        %v3077 = vsub.s32 %v3074, %v3076
        %v3078 = vrot.slane %v3064, %v3077
        %v3079 = vcombine.low %v3071, %v3078
        %v3080 = vcombine.low %v2784, %v2792
        %v3081 = vcombine.low %v2794, %v2777
        %v3082 = vcombine.low %v2791, %v2793
        %v3083 = vcombine.low %v2795, %v2818
        %v3085 = vunpack.c.l.s4 1966171168
        %v3086 = vunpack.c.0.s8 %v3085
        %v3087 = vlaneseq
        %v3088 = vshrl.u32 %v3087, 7
        %v3089 = vsub.s32 %v3086, %v3088
        %v3090 = vrot.slane %v3080, %v3089
        %v3092 = vunpack.c.l.s4 1966171168
        %v3093 = vunpack.c.0.s8 %v3092
        %v3094 = vlaneseq
        %v3095 = vshrl.u32 %v3094, 7
        %v3096 = vsub.s32 %v3093, %v3095
        %v3097 = vrot.slane %v3081, %v3096
        %v3099 = vunpack.c.l.s4 1966171168
        %v3100 = vunpack.c.0.s8 %v3099
        %v3101 = vlaneseq
        %v3102 = vshrl.u32 %v3101, 7
        %v3103 = vsub.s32 %v3100, %v3102
        %v3104 = vrot.slane %v3082, %v3103
        %v3106 = vunpack.c.l.s4 1966171168
        %v3107 = vunpack.c.0.s8 %v3106
        %v3108 = vlaneseq
        %v3109 = vshrl.u32 %v3108, 7
        %v3110 = vsub.s32 %v3107, %v3109
        %v3111 = vrot.slane %v3083, %v3110
        %v3112 = vcombine.low %v3090, %v3097
        %v3113 = vcombine.low %v3104, %v3111
        %v3115 = vunpack.c.l.s4 1966171168
        %v3116 = vunpack.c.0.s8 %v3115
        %v3117 = vlaneseq
        %v3118 = vshrl.u32 %v3117, 7
        %v3119 = vsub.s32 %v3116, %v3118
        %v3120 = vrot.slane %v3112, %v3119
        %v3122 = vunpack.c.l.s4 1966171168
        %v3123 = vunpack.c.0.s8 %v3122
        %v3124 = vlaneseq
        %v3125 = vshrl.u32 %v3124, 7
        %v3126 = vsub.s32 %v3123, %v3125
        %v3127 = vrot.slane %v3113, %v3126
        %v3128 = vcombine.low %v3120, %v3127
        %v3129 = vcombine.low %v2832, %v2833
        %v3130 = vcombine.low %v2834, %v2825
        %v3132 = vunpack.c.l.s4 1966171168
        %v3133 = vunpack.c.0.s8 %v3132
        %v3134 = vlaneseq
        %v3135 = vshrl.u32 %v3134, 7
        %v3136 = vsub.s32 %v3133, %v3135
        %v3137 = vrot.slane %v3129, %v3136
        %v3139 = vunpack.c.l.s4 1966171168
        %v3140 = vunpack.c.0.s8 %v3139
        %v3141 = vlaneseq
        %v3142 = vshrl.u32 %v3141, 7
        %v3143 = vsub.s32 %v3140, %v3142
        %v3144 = vrot.slane %v3130, %v3143
        %v3145 = vcombine.low %v3137, %v3144
        %v3147 = vunpack.c.l.s4 1966171168
        %v3148 = vunpack.c.0.s8 %v3147
        %v3149 = vlaneseq
        %v3150 = vshrl.u32 %v3149, 7
        %v3151 = vsub.s32 %v3148, %v3150
        %v3152 = vrot.slane %v3145, %v3151
        %3153 = vrot.lane.b32.xlu0 %v2883, 24
        %v3154 = vpop.permute.xlu0 %3153
        %3155 = vrot.lane.b32.xlu0 %v2932, 24
        %v3156 = vpop.permute.xlu0 %3155
        %3157 = vrot.lane.b32.xlu0 %v2981, 24
        %v3158 = vpop.permute.xlu0 %3157
        %3159 = vrot.lane.b32.xlu0 %v3030, 24
        %v3160 = vpop.permute.xlu0 %3159
        %3161 = vrot.lane.b32.xlu0 %v3079, 24
        %v3162 = vpop.permute.xlu0 %3161
        %3163 = vrot.lane.b32.xlu0 %v3128, 24
        %v3164 = vpop.permute.xlu0 %3163
        %3165 = vrot.lane.b32.xlu0 %v3152, 24
        %v3166 = vpop.permute.xlu0 %3165
        %vm3174 = vcmask 261312
        %3175 = vst.msk [vmem:[#allocation2] sm:$0xff] %vm3174, %v3154
        %3176 = vst.msk [vmem:[#allocation2 + $0x8] sm:$0xff] %vm3174, %v3156
        %3177 = vst.msk [vmem:[#allocation2 + $0x10] sm:$0xff] %vm3174, %v3158
        %3178 = vst.msk [vmem:[#allocation2 + $0x18] sm:$0xff] %vm3174, %v3160
        %3179 = vst.msk [vmem:[#allocation2 + $0x20] sm:$0xff] %vm3174, %v3162
        %3180 = vst.msk [vmem:[#allocation2 + $0x28] sm:$0xff] %vm3174, %v3164
        %vm3181 = vcmask 257216
        %3182 = vst.msk [vmem:[#allocation2 + $0x30] sm:$0xf] %vm3181, %v3166
        %v3183 = vld [vmem:[%s283 + $0x4] sm:$0xff]
        %v3184 = vld [vmem:[%s283 + $0xc] sm:$0x1f]
        %v3185 = vld [vmem:[%s283 + $0x1c] sm:$0xff]
        %v3186 = vld [vmem:[%s283 + $0x24] sm:$0x1f]
        %v3187 = vld [vmem:[%s283 + $0x34] sm:$0xff]
        %v3188 = vld [vmem:[%s283 + $0x3c] sm:$0x1f]
        %v3189 = vld [vmem:[%s283 + $0x4c] sm:$0xff]
        %v3190 = vld [vmem:[%s283 + $0x54] sm:$0x1f]
        %v3199 = vcombine.high %v3183, %v3183
        %v3201 = vunpack.c.l.s4 1966171168
        %v3202 = vunpack.c.0.s8 %v3201
        %v3203 = vlaneseq
        %v3204 = vshrl.u32 %v3203, 7
        %v3205 = vsub.s32 %v3202, %v3204
        %v3206 = vrot.slane %v3183, %v3205
        %v3208 = vunpack.c.l.s4 1966171168
        %v3209 = vunpack.c.0.s8 %v3208
        %v3210 = vlaneseq
        %v3211 = vshrl.u32 %v3210, 7
        %v3212 = vsub.s32 %v3209, %v3211
        %v3213 = vrot.slane %v3199, %v3212
        %v3214 = vcombine.high %v3206, %v3206
        %v3215 = vcombine.high %v3213, %v3213
        %v3217 = vunpack.c.l.s4 1966171168
        %v3218 = vunpack.c.0.s8 %v3217
        %v3219 = vlaneseq
        %v3220 = vshrl.u32 %v3219, 7
        %v3221 = vsub.s32 %v3218, %v3220
        %v3222 = vrot.slane %v3206, %v3221
        %v3224 = vunpack.c.l.s4 1966171168
        %v3225 = vunpack.c.0.s8 %v3224
        %v3226 = vlaneseq
        %v3227 = vshrl.u32 %v3226, 7
        %v3228 = vsub.s32 %v3225, %v3227
        %v3229 = vrot.slane %v3213, %v3228
        %v3231 = vunpack.c.l.s4 1966171168
        %v3232 = vunpack.c.0.s8 %v3231
        %v3233 = vlaneseq
        %v3234 = vshrl.u32 %v3233, 7
        %v3235 = vsub.s32 %v3232, %v3234
        %v3236 = vrot.slane %v3214, %v3235
        %v3238 = vunpack.c.l.s4 1966171168
        %v3239 = vunpack.c.0.s8 %v3238
        %v3240 = vlaneseq
        %v3241 = vshrl.u32 %v3240, 7
        %v3242 = vsub.s32 %v3239, %v3241
        %v3243 = vrot.slane %v3215, %v3242
        %v3244 = vcombine.high %v3222, %v3222
        %v3245 = vcombine.high %v3229, %v3229
        %v3246 = vcombine.high %v3236, %v3236
        %v3247 = vcombine.high %v3243, %v3243
        %v3248 = vcombine.high %v3184, %v3184
        %v3250 = vunpack.c.l.s4 1966171168
        %v3251 = vunpack.c.0.s8 %v3250
        %v3252 = vlaneseq
        %v3253 = vshrl.u32 %v3252, 7
        %v3254 = vsub.s32 %v3251, %v3253
        %v3255 = vrot.slane %v3184, %v3254
        %v3257 = vunpack.c.l.s4 1966171168
        %v3258 = vunpack.c.0.s8 %v3257
        %v3259 = vlaneseq
        %v3260 = vshrl.u32 %v3259, 7
        %v3261 = vsub.s32 %v3258, %v3260
        %v3262 = vrot.slane %v3248, %v3261
        %v3263 = vcombine.high %v3255, %v3255
        %v3265 = vunpack.c.l.s4 1966171168
        %v3266 = vunpack.c.0.s8 %v3265
        %v3267 = vlaneseq
        %v3268 = vshrl.u32 %v3267, 7
        %v3269 = vsub.s32 %v3266, %v3268
        %v3270 = vrot.slane %v3255, %v3269
        %v3272 = vunpack.c.l.s4 1966171168
        %v3273 = vunpack.c.0.s8 %v3272
        %v3274 = vlaneseq
        %v3275 = vshrl.u32 %v3274, 7
        %v3276 = vsub.s32 %v3273, %v3275
        %v3277 = vrot.slane %v3262, %v3276
        %v3279 = vunpack.c.l.s4 1966171168
        %v3280 = vunpack.c.0.s8 %v3279
        %v3281 = vlaneseq
        %v3282 = vshrl.u32 %v3281, 7
        %v3283 = vsub.s32 %v3280, %v3282
        %v3284 = vrot.slane %v3263, %v3283
        %v3285 = vcombine.high %v3270, %v3270
        %v3286 = vcombine.high %v3284, %v3284
        %v3287 = vcombine.high %v3185, %v3185
        %v3289 = vunpack.c.l.s4 1966171168
        %v3290 = vunpack.c.0.s8 %v3289
        %v3291 = vlaneseq
        %v3292 = vshrl.u32 %v3291, 7
        %v3293 = vsub.s32 %v3290, %v3292
        %v3294 = vrot.slane %v3185, %v3293
        %v3296 = vunpack.c.l.s4 1966171168
        %v3297 = vunpack.c.0.s8 %v3296
        %v3298 = vlaneseq
        %v3299 = vshrl.u32 %v3298, 7
        %v3300 = vsub.s32 %v3297, %v3299
        %v3301 = vrot.slane %v3287, %v3300
        %v3302 = vcombine.high %v3294, %v3294
        %v3303 = vcombine.high %v3301, %v3301
        %v3305 = vunpack.c.l.s4 1966171168
        %v3306 = vunpack.c.0.s8 %v3305
        %v3307 = vlaneseq
        %v3308 = vshrl.u32 %v3307, 7
        %v3309 = vsub.s32 %v3306, %v3308
        %v3310 = vrot.slane %v3294, %v3309
        %v3312 = vunpack.c.l.s4 1966171168
        %v3313 = vunpack.c.0.s8 %v3312
        %v3314 = vlaneseq
        %v3315 = vshrl.u32 %v3314, 7
        %v3316 = vsub.s32 %v3313, %v3315
        %v3317 = vrot.slane %v3301, %v3316
        %v3319 = vunpack.c.l.s4 1966171168
        %v3320 = vunpack.c.0.s8 %v3319
        %v3321 = vlaneseq
        %v3322 = vshrl.u32 %v3321, 7
        %v3323 = vsub.s32 %v3320, %v3322
        %v3324 = vrot.slane %v3302, %v3323
        %v3326 = vunpack.c.l.s4 1966171168
        %v3327 = vunpack.c.0.s8 %v3326
        %v3328 = vlaneseq
        %v3329 = vshrl.u32 %v3328, 7
        %v3330 = vsub.s32 %v3327, %v3329
        %v3331 = vrot.slane %v3303, %v3330
        %v3332 = vcombine.high %v3310, %v3310
        %v3333 = vcombine.high %v3317, %v3317
        %v3334 = vcombine.high %v3324, %v3324
        %v3335 = vcombine.high %v3331, %v3331
        %v3336 = vcombine.high %v3186, %v3186
        %v3338 = vunpack.c.l.s4 1966171168
        %v3339 = vunpack.c.0.s8 %v3338
        %v3340 = vlaneseq
        %v3341 = vshrl.u32 %v3340, 7
        %v3342 = vsub.s32 %v3339, %v3341
        %v3343 = vrot.slane %v3186, %v3342
        %v3345 = vunpack.c.l.s4 1966171168
        %v3346 = vunpack.c.0.s8 %v3345
        %v3347 = vlaneseq
        %v3348 = vshrl.u32 %v3347, 7
        %v3349 = vsub.s32 %v3346, %v3348
        %v3350 = vrot.slane %v3336, %v3349
        %v3351 = vcombine.high %v3343, %v3343
        %v3353 = vunpack.c.l.s4 1966171168
        %v3354 = vunpack.c.0.s8 %v3353
        %v3355 = vlaneseq
        %v3356 = vshrl.u32 %v3355, 7
        %v3357 = vsub.s32 %v3354, %v3356
        %v3358 = vrot.slane %v3343, %v3357
        %v3360 = vunpack.c.l.s4 1966171168
        %v3361 = vunpack.c.0.s8 %v3360
        %v3362 = vlaneseq
        %v3363 = vshrl.u32 %v3362, 7
        %v3364 = vsub.s32 %v3361, %v3363
        %v3365 = vrot.slane %v3350, %v3364
        %v3367 = vunpack.c.l.s4 1966171168
        %v3368 = vunpack.c.0.s8 %v3367
        %v3369 = vlaneseq
        %v3370 = vshrl.u32 %v3369, 7
        %v3371 = vsub.s32 %v3368, %v3370
        %v3372 = vrot.slane %v3351, %v3371
        %v3373 = vcombine.high %v3358, %v3358
        %v3374 = vcombine.high %v3372, %v3372
        %v3375 = vcombine.high %v3187, %v3187
        %v3377 = vunpack.c.l.s4 1966171168
        %v3378 = vunpack.c.0.s8 %v3377
        %v3379 = vlaneseq
        %v3380 = vshrl.u32 %v3379, 7
        %v3381 = vsub.s32 %v3378, %v3380
        %v3382 = vrot.slane %v3187, %v3381
        %v3384 = vunpack.c.l.s4 1966171168
        %v3385 = vunpack.c.0.s8 %v3384
        %v3386 = vlaneseq
        %v3387 = vshrl.u32 %v3386, 7
        %v3388 = vsub.s32 %v3385, %v3387
        %v3389 = vrot.slane %v3375, %v3388
        %v3390 = vcombine.high %v3382, %v3382
        %v3391 = vcombine.high %v3389, %v3389
        %v3393 = vunpack.c.l.s4 1966171168
        %v3394 = vunpack.c.0.s8 %v3393
        %v3395 = vlaneseq
        %v3396 = vshrl.u32 %v3395, 7
        %v3397 = vsub.s32 %v3394, %v3396
        %v3398 = vrot.slane %v3382, %v3397
        %v3400 = vunpack.c.l.s4 1966171168
        %v3401 = vunpack.c.0.s8 %v3400
        %v3402 = vlaneseq
        %v3403 = vshrl.u32 %v3402, 7
        %v3404 = vsub.s32 %v3401, %v3403
        %v3405 = vrot.slane %v3389, %v3404
        %v3407 = vunpack.c.l.s4 1966171168
        %v3408 = vunpack.c.0.s8 %v3407
        %v3409 = vlaneseq
        %v3410 = vshrl.u32 %v3409, 7
        %v3411 = vsub.s32 %v3408, %v3410
        %v3412 = vrot.slane %v3390, %v3411
        %v3414 = vunpack.c.l.s4 1966171168
        %v3415 = vunpack.c.0.s8 %v3414
        %v3416 = vlaneseq
        %v3417 = vshrl.u32 %v3416, 7
        %v3418 = vsub.s32 %v3415, %v3417
        %v3419 = vrot.slane %v3391, %v3418
        %v3420 = vcombine.high %v3398, %v3398
        %v3421 = vcombine.high %v3405, %v3405
        %v3422 = vcombine.high %v3412, %v3412
        %v3423 = vcombine.high %v3419, %v3419
        %v3424 = vcombine.high %v3188, %v3188
        %v3426 = vunpack.c.l.s4 1966171168
        %v3427 = vunpack.c.0.s8 %v3426
        %v3428 = vlaneseq
        %v3429 = vshrl.u32 %v3428, 7
        %v3430 = vsub.s32 %v3427, %v3429
        %v3431 = vrot.slane %v3188, %v3430
        %v3433 = vunpack.c.l.s4 1966171168
        %v3434 = vunpack.c.0.s8 %v3433
        %v3435 = vlaneseq
        %v3436 = vshrl.u32 %v3435, 7
        %v3437 = vsub.s32 %v3434, %v3436
        %v3438 = vrot.slane %v3424, %v3437
        %v3439 = vcombine.high %v3431, %v3431
        %v3441 = vunpack.c.l.s4 1966171168
        %v3442 = vunpack.c.0.s8 %v3441
        %v3443 = vlaneseq
        %v3444 = vshrl.u32 %v3443, 7
        %v3445 = vsub.s32 %v3442, %v3444
        %v3446 = vrot.slane %v3431, %v3445
        %v3448 = vunpack.c.l.s4 1966171168
        %v3449 = vunpack.c.0.s8 %v3448
        %v3450 = vlaneseq
        %v3451 = vshrl.u32 %v3450, 7
        %v3452 = vsub.s32 %v3449, %v3451
        %v3453 = vrot.slane %v3438, %v3452
        %v3455 = vunpack.c.l.s4 1966171168
        %v3456 = vunpack.c.0.s8 %v3455
        %v3457 = vlaneseq
        %v3458 = vshrl.u32 %v3457, 7
        %v3459 = vsub.s32 %v3456, %v3458
        %v3460 = vrot.slane %v3439, %v3459
        %v3461 = vcombine.high %v3446, %v3446
        %v3462 = vcombine.high %v3460, %v3460
        %v3463 = vcombine.high %v3189, %v3189
        %v3465 = vunpack.c.l.s4 1966171168
        %v3466 = vunpack.c.0.s8 %v3465
        %v3467 = vlaneseq
        %v3468 = vshrl.u32 %v3467, 7
        %v3469 = vsub.s32 %v3466, %v3468
        %v3470 = vrot.slane %v3189, %v3469
        %v3472 = vunpack.c.l.s4 1966171168
        %v3473 = vunpack.c.0.s8 %v3472
        %v3474 = vlaneseq
        %v3475 = vshrl.u32 %v3474, 7
        %v3476 = vsub.s32 %v3473, %v3475
        %v3477 = vrot.slane %v3463, %v3476
        %v3478 = vcombine.high %v3470, %v3470
        %v3479 = vcombine.high %v3477, %v3477
        %v3481 = vunpack.c.l.s4 1966171168
        %v3482 = vunpack.c.0.s8 %v3481
        %v3483 = vlaneseq
        %v3484 = vshrl.u32 %v3483, 7
        %v3485 = vsub.s32 %v3482, %v3484
        %v3486 = vrot.slane %v3470, %v3485
        %v3488 = vunpack.c.l.s4 1966171168
        %v3489 = vunpack.c.0.s8 %v3488
        %v3490 = vlaneseq
        %v3491 = vshrl.u32 %v3490, 7
        %v3492 = vsub.s32 %v3489, %v3491
        %v3493 = vrot.slane %v3477, %v3492
        %v3495 = vunpack.c.l.s4 1966171168
        %v3496 = vunpack.c.0.s8 %v3495
        %v3497 = vlaneseq
        %v3498 = vshrl.u32 %v3497, 7
        %v3499 = vsub.s32 %v3496, %v3498
        %v3500 = vrot.slane %v3478, %v3499
        %v3502 = vunpack.c.l.s4 1966171168
        %v3503 = vunpack.c.0.s8 %v3502
        %v3504 = vlaneseq
        %v3505 = vshrl.u32 %v3504, 7
        %v3506 = vsub.s32 %v3503, %v3505
        %v3507 = vrot.slane %v3479, %v3506
        %v3508 = vcombine.high %v3486, %v3486
        %v3509 = vcombine.high %v3493, %v3493
        %v3510 = vcombine.high %v3500, %v3500
        %v3511 = vcombine.high %v3507, %v3507
        %v3512 = vcombine.high %v3190, %v3190
        %v3514 = vunpack.c.l.s4 1966171168
        %v3515 = vunpack.c.0.s8 %v3514
        %v3516 = vlaneseq
        %v3517 = vshrl.u32 %v3516, 7
        %v3518 = vsub.s32 %v3515, %v3517
        %v3519 = vrot.slane %v3190, %v3518
        %v3521 = vunpack.c.l.s4 1966171168
        %v3522 = vunpack.c.0.s8 %v3521
        %v3523 = vlaneseq
        %v3524 = vshrl.u32 %v3523, 7
        %v3525 = vsub.s32 %v3522, %v3524
        %v3526 = vrot.slane %v3512, %v3525
        %v3527 = vcombine.high %v3519, %v3519
        %v3529 = vunpack.c.l.s4 1966171168
        %v3530 = vunpack.c.0.s8 %v3529
        %v3531 = vlaneseq
        %v3532 = vshrl.u32 %v3531, 7
        %v3533 = vsub.s32 %v3530, %v3532
        %v3534 = vrot.slane %v3519, %v3533
        %v3536 = vunpack.c.l.s4 1966171168
        %v3537 = vunpack.c.0.s8 %v3536
        %v3538 = vlaneseq
        %v3539 = vshrl.u32 %v3538, 7
        %v3540 = vsub.s32 %v3537, %v3539
        %v3541 = vrot.slane %v3526, %v3540
        %v3543 = vunpack.c.l.s4 1966171168
        %v3544 = vunpack.c.0.s8 %v3543
        %v3545 = vlaneseq
        %v3546 = vshrl.u32 %v3545, 7
        %v3547 = vsub.s32 %v3544, %v3546
        %v3548 = vrot.slane %v3527, %v3547
        %v3549 = vcombine.high %v3534, %v3534
        %v3550 = vcombine.high %v3548, %v3548
        %v3551 = vcombine.low %v3222, %v3236
        %v3552 = vcombine.low %v3244, %v3246
        %v3553 = vcombine.low %v3229, %v3243
        %v3554 = vcombine.low %v3245, %v3247
        %v3556 = vunpack.c.l.s4 1966171168
        %v3557 = vunpack.c.0.s8 %v3556
        %v3558 = vlaneseq
        %v3559 = vshrl.u32 %v3558, 7
        %v3560 = vsub.s32 %v3557, %v3559
        %v3561 = vrot.slane %v3551, %v3560
        %v3563 = vunpack.c.l.s4 1966171168
        %v3564 = vunpack.c.0.s8 %v3563
        %v3565 = vlaneseq
        %v3566 = vshrl.u32 %v3565, 7
        %v3567 = vsub.s32 %v3564, %v3566
        %v3568 = vrot.slane %v3552, %v3567
        %v3570 = vunpack.c.l.s4 1966171168
        %v3571 = vunpack.c.0.s8 %v3570
        %v3572 = vlaneseq
        %v3573 = vshrl.u32 %v3572, 7
        %v3574 = vsub.s32 %v3571, %v3573
        %v3575 = vrot.slane %v3553, %v3574
        %v3577 = vunpack.c.l.s4 1966171168
        %v3578 = vunpack.c.0.s8 %v3577
        %v3579 = vlaneseq
        %v3580 = vshrl.u32 %v3579, 7
        %v3581 = vsub.s32 %v3578, %v3580
        %v3582 = vrot.slane %v3554, %v3581
        %v3583 = vcombine.low %v3561, %v3568
        %v3584 = vcombine.low %v3575, %v3582
        %v3586 = vunpack.c.l.s4 1966171168
        %v3587 = vunpack.c.0.s8 %v3586
        %v3588 = vlaneseq
        %v3589 = vshrl.u32 %v3588, 7
        %v3590 = vsub.s32 %v3587, %v3589
        %v3591 = vrot.slane %v3583, %v3590
        %v3593 = vunpack.c.l.s4 1966171168
        %v3594 = vunpack.c.0.s8 %v3593
        %v3595 = vlaneseq
        %v3596 = vshrl.u32 %v3595, 7
        %v3597 = vsub.s32 %v3594, %v3596
        %v3598 = vrot.slane %v3584, %v3597
        %v3599 = vcombine.low %v3591, %v3598
        %v3600 = vcombine.low %v3270, %v3284
        %v3601 = vcombine.low %v3285, %v3286
        %v3602 = vcombine.low %v3277, %v3310
        %v3603 = vcombine.low %v3324, %v3332
        %v3605 = vunpack.c.l.s4 1966171168
        %v3606 = vunpack.c.0.s8 %v3605
        %v3607 = vlaneseq
        %v3608 = vshrl.u32 %v3607, 7
        %v3609 = vsub.s32 %v3606, %v3608
        %v3610 = vrot.slane %v3600, %v3609
        %v3612 = vunpack.c.l.s4 1966171168
        %v3613 = vunpack.c.0.s8 %v3612
        %v3614 = vlaneseq
        %v3615 = vshrl.u32 %v3614, 7
        %v3616 = vsub.s32 %v3613, %v3615
        %v3617 = vrot.slane %v3601, %v3616
        %v3619 = vunpack.c.l.s4 1966171168
        %v3620 = vunpack.c.0.s8 %v3619
        %v3621 = vlaneseq
        %v3622 = vshrl.u32 %v3621, 7
        %v3623 = vsub.s32 %v3620, %v3622
        %v3624 = vrot.slane %v3602, %v3623
        %v3626 = vunpack.c.l.s4 1966171168
        %v3627 = vunpack.c.0.s8 %v3626
        %v3628 = vlaneseq
        %v3629 = vshrl.u32 %v3628, 7
        %v3630 = vsub.s32 %v3627, %v3629
        %v3631 = vrot.slane %v3603, %v3630
        %v3632 = vcombine.low %v3610, %v3617
        %v3633 = vcombine.low %v3624, %v3631
        %v3635 = vunpack.c.l.s4 1966171168
        %v3636 = vunpack.c.0.s8 %v3635
        %v3637 = vlaneseq
        %v3638 = vshrl.u32 %v3637, 7
        %v3639 = vsub.s32 %v3636, %v3638
        %v3640 = vrot.slane %v3632, %v3639
        %v3642 = vunpack.c.l.s4 1966171168
        %v3643 = vunpack.c.0.s8 %v3642
        %v3644 = vlaneseq
        %v3645 = vshrl.u32 %v3644, 7
        %v3646 = vsub.s32 %v3643, %v3645
        %v3647 = vrot.slane %v3633, %v3646
        %v3648 = vcombine.low %v3640, %v3647
        %v3649 = vcombine.low %v3334, %v3317
        %v3650 = vcombine.low %v3331, %v3333
        %v3651 = vcombine.low %v3335, %v3358
        %v3652 = vcombine.low %v3372, %v3373
        %v3654 = vunpack.c.l.s4 1966171168
        %v3655 = vunpack.c.0.s8 %v3654
        %v3656 = vlaneseq
        %v3657 = vshrl.u32 %v3656, 7
        %v3658 = vsub.s32 %v3655, %v3657
        %v3659 = vrot.slane %v3649, %v3658
        %v3661 = vunpack.c.l.s4 1966171168
        %v3662 = vunpack.c.0.s8 %v3661
        %v3663 = vlaneseq
        %v3664 = vshrl.u32 %v3663, 7
        %v3665 = vsub.s32 %v3662, %v3664
        %v3666 = vrot.slane %v3650, %v3665
        %v3668 = vunpack.c.l.s4 1966171168
        %v3669 = vunpack.c.0.s8 %v3668
        %v3670 = vlaneseq
        %v3671 = vshrl.u32 %v3670, 7
        %v3672 = vsub.s32 %v3669, %v3671
        %v3673 = vrot.slane %v3651, %v3672
        %v3675 = vunpack.c.l.s4 1966171168
        %v3676 = vunpack.c.0.s8 %v3675
        %v3677 = vlaneseq
        %v3678 = vshrl.u32 %v3677, 7
        %v3679 = vsub.s32 %v3676, %v3678
        %v3680 = vrot.slane %v3652, %v3679
        %v3681 = vcombine.low %v3659, %v3666
        %v3682 = vcombine.low %v3673, %v3680
        %v3684 = vunpack.c.l.s4 1966171168
        %v3685 = vunpack.c.0.s8 %v3684
        %v3686 = vlaneseq
        %v3687 = vshrl.u32 %v3686, 7
        %v3688 = vsub.s32 %v3685, %v3687
        %v3689 = vrot.slane %v3681, %v3688
        %v3691 = vunpack.c.l.s4 1966171168
        %v3692 = vunpack.c.0.s8 %v3691
        %v3693 = vlaneseq
        %v3694 = vshrl.u32 %v3693, 7
        %v3695 = vsub.s32 %v3692, %v3694
        %v3696 = vrot.slane %v3682, %v3695
        %v3697 = vcombine.low %v3689, %v3696
        %v3698 = vcombine.low %v3374, %v3365
        %v3699 = vcombine.low %v3398, %v3412
        %v3700 = vcombine.low %v3420, %v3422
        %v3701 = vcombine.low %v3405, %v3419
        %v3703 = vunpack.c.l.s4 1966171168
        %v3704 = vunpack.c.0.s8 %v3703
        %v3705 = vlaneseq
        %v3706 = vshrl.u32 %v3705, 7
        %v3707 = vsub.s32 %v3704, %v3706
        %v3708 = vrot.slane %v3698, %v3707
        %v3710 = vunpack.c.l.s4 1966171168
        %v3711 = vunpack.c.0.s8 %v3710
        %v3712 = vlaneseq
        %v3713 = vshrl.u32 %v3712, 7
        %v3714 = vsub.s32 %v3711, %v3713
        %v3715 = vrot.slane %v3699, %v3714
        %v3717 = vunpack.c.l.s4 1966171168
        %v3718 = vunpack.c.0.s8 %v3717
        %v3719 = vlaneseq
        %v3720 = vshrl.u32 %v3719, 7
        %v3721 = vsub.s32 %v3718, %v3720
        %v3722 = vrot.slane %v3700, %v3721
        %v3724 = vunpack.c.l.s4 1966171168
        %v3725 = vunpack.c.0.s8 %v3724
        %v3726 = vlaneseq
        %v3727 = vshrl.u32 %v3726, 7
        %v3728 = vsub.s32 %v3725, %v3727
        %v3729 = vrot.slane %v3701, %v3728
        %v3730 = vcombine.low %v3708, %v3715
        %v3731 = vcombine.low %v3722, %v3729
        %v3733 = vunpack.c.l.s4 1966171168
        %v3734 = vunpack.c.0.s8 %v3733
        %v3735 = vlaneseq
        %v3736 = vshrl.u32 %v3735, 7
        %v3737 = vsub.s32 %v3734, %v3736
        %v3738 = vrot.slane %v3730, %v3737
        %v3740 = vunpack.c.l.s4 1966171168
        %v3741 = vunpack.c.0.s8 %v3740
        %v3742 = vlaneseq
        %v3743 = vshrl.u32 %v3742, 7
        %v3744 = vsub.s32 %v3741, %v3743
        %v3745 = vrot.slane %v3731, %v3744
        %v3746 = vcombine.low %v3738, %v3745
        %v3747 = vcombine.low %v3421, %v3423
        %v3748 = vcombine.low %v3446, %v3460
        %v3749 = vcombine.low %v3461, %v3462
        %v3750 = vcombine.low %v3453, %v3486
        %v3752 = vunpack.c.l.s4 1966171168
        %v3753 = vunpack.c.0.s8 %v3752
        %v3754 = vlaneseq
        %v3755 = vshrl.u32 %v3754, 7
        %v3756 = vsub.s32 %v3753, %v3755
        %v3757 = vrot.slane %v3747, %v3756
        %v3759 = vunpack.c.l.s4 1966171168
        %v3760 = vunpack.c.0.s8 %v3759
        %v3761 = vlaneseq
        %v3762 = vshrl.u32 %v3761, 7
        %v3763 = vsub.s32 %v3760, %v3762
        %v3764 = vrot.slane %v3748, %v3763
        %v3766 = vunpack.c.l.s4 1966171168
        %v3767 = vunpack.c.0.s8 %v3766
        %v3768 = vlaneseq
        %v3769 = vshrl.u32 %v3768, 7
        %v3770 = vsub.s32 %v3767, %v3769
        %v3771 = vrot.slane %v3749, %v3770
        %v3773 = vunpack.c.l.s4 1966171168
        %v3774 = vunpack.c.0.s8 %v3773
        %v3775 = vlaneseq
        %v3776 = vshrl.u32 %v3775, 7
        %v3777 = vsub.s32 %v3774, %v3776
        %v3778 = vrot.slane %v3750, %v3777
        %v3779 = vcombine.low %v3757, %v3764
        %v3780 = vcombine.low %v3771, %v3778
        %v3782 = vunpack.c.l.s4 1966171168
        %v3783 = vunpack.c.0.s8 %v3782
        %v3784 = vlaneseq
        %v3785 = vshrl.u32 %v3784, 7
        %v3786 = vsub.s32 %v3783, %v3785
        %v3787 = vrot.slane %v3779, %v3786
        %v3789 = vunpack.c.l.s4 1966171168
        %v3790 = vunpack.c.0.s8 %v3789
        %v3791 = vlaneseq
        %v3792 = vshrl.u32 %v3791, 7
        %v3793 = vsub.s32 %v3790, %v3792
        %v3794 = vrot.slane %v3780, %v3793
        %v3795 = vcombine.low %v3787, %v3794
        %v3796 = vcombine.low %v3500, %v3508
        %v3797 = vcombine.low %v3510, %v3493
        %v3798 = vcombine.low %v3507, %v3509
        %v3799 = vcombine.low %v3511, %v3534
        %v3801 = vunpack.c.l.s4 1966171168
        %v3802 = vunpack.c.0.s8 %v3801
        %v3803 = vlaneseq
        %v3804 = vshrl.u32 %v3803, 7
        %v3805 = vsub.s32 %v3802, %v3804
        %v3806 = vrot.slane %v3796, %v3805
        %v3808 = vunpack.c.l.s4 1966171168
        %v3809 = vunpack.c.0.s8 %v3808
        %v3810 = vlaneseq
        %v3811 = vshrl.u32 %v3810, 7
        %v3812 = vsub.s32 %v3809, %v3811
        %v3813 = vrot.slane %v3797, %v3812
        %v3815 = vunpack.c.l.s4 1966171168
        %v3816 = vunpack.c.0.s8 %v3815
        %v3817 = vlaneseq
        %v3818 = vshrl.u32 %v3817, 7
        %v3819 = vsub.s32 %v3816, %v3818
        %v3820 = vrot.slane %v3798, %v3819
        %v3822 = vunpack.c.l.s4 1966171168
        %v3823 = vunpack.c.0.s8 %v3822
        %v3824 = vlaneseq
        %v3825 = vshrl.u32 %v3824, 7
        %v3826 = vsub.s32 %v3823, %v3825
        %v3827 = vrot.slane %v3799, %v3826
        %v3828 = vcombine.low %v3806, %v3813
        %v3829 = vcombine.low %v3820, %v3827
        %v3831 = vunpack.c.l.s4 1966171168
        %v3832 = vunpack.c.0.s8 %v3831
        %v3833 = vlaneseq
        %v3834 = vshrl.u32 %v3833, 7
        %v3835 = vsub.s32 %v3832, %v3834
        %v3836 = vrot.slane %v3828, %v3835
        %v3838 = vunpack.c.l.s4 1966171168
        %v3839 = vunpack.c.0.s8 %v3838
        %v3840 = vlaneseq
        %v3841 = vshrl.u32 %v3840, 7
        %v3842 = vsub.s32 %v3839, %v3841
        %v3843 = vrot.slane %v3829, %v3842
        %v3844 = vcombine.low %v3836, %v3843
        %v3845 = vcombine.low %v3548, %v3549
        %v3846 = vcombine.low %v3550, %v3541
        %v3848 = vunpack.c.l.s4 1966171168
        %v3849 = vunpack.c.0.s8 %v3848
        %v3850 = vlaneseq
        %v3851 = vshrl.u32 %v3850, 7
        %v3852 = vsub.s32 %v3849, %v3851
        %v3853 = vrot.slane %v3845, %v3852
        %v3855 = vunpack.c.l.s4 1966171168
        %v3856 = vunpack.c.0.s8 %v3855
        %v3857 = vlaneseq
        %v3858 = vshrl.u32 %v3857, 7
        %v3859 = vsub.s32 %v3856, %v3858
        %v3860 = vrot.slane %v3846, %v3859
        %v3861 = vcombine.low %v3853, %v3860
        %v3863 = vunpack.c.l.s4 1966171168
        %v3864 = vunpack.c.0.s8 %v3863
        %v3865 = vlaneseq
        %v3866 = vshrl.u32 %v3865, 7
        %v3867 = vsub.s32 %v3864, %v3866
        %v3868 = vrot.slane %v3861, %v3867
        %3869 = vrot.lane.b32.xlu0 %v3599, 32
        %v3870 = vpop.permute.xlu0 %3869
        %3871 = vrot.lane.b32.xlu0 %v3648, 32
        %v3872 = vpop.permute.xlu0 %3871
        %3873 = vrot.lane.b32.xlu0 %v3697, 32
        %v3874 = vpop.permute.xlu0 %3873
        %3875 = vrot.lane.b32.xlu0 %v3746, 32
        %v3876 = vpop.permute.xlu0 %3875
        %3877 = vrot.lane.b32.xlu0 %v3795, 32
        %v3878 = vpop.permute.xlu0 %3877
        %3879 = vrot.lane.b32.xlu0 %v3844, 32
        %v3880 = vpop.permute.xlu0 %3879
        %3881 = vrot.lane.b32.xlu0 %v3868, 32
        %v3882 = vpop.permute.xlu0 %3881
        %vm3890 = vcmask 326912
        %3891 = vst.msk [vmem:[#allocation2] sm:$0xff] %vm3890, %v3870
        %3892 = vst.msk [vmem:[#allocation2 + $0x8] sm:$0xff] %vm3890, %v3872
        %3893 = vst.msk [vmem:[#allocation2 + $0x10] sm:$0xff] %vm3890, %v3874
        %3894 = vst.msk [vmem:[#allocation2 + $0x18] sm:$0xff] %vm3890, %v3876
        %3895 = vst.msk [vmem:[#allocation2 + $0x20] sm:$0xff] %vm3890, %v3878
        %3896 = vst.msk [vmem:[#allocation2 + $0x28] sm:$0xff] %vm3890, %v3880
        %vm3897 = vcmask 322816
        %3898 = vst.msk [vmem:[#allocation2 + $0x30] sm:$0xf] %vm3897, %v3882
        %v3899 = vld [vmem:[%s283 + $0x5] sm:$0xff]
        %v3900 = vld [vmem:[%s283 + $0xd] sm:$0x1f]
        %v3901 = vld [vmem:[%s283 + $0x1d] sm:$0xff]
        %v3902 = vld [vmem:[%s283 + $0x25] sm:$0x1f]
        %v3903 = vld [vmem:[%s283 + $0x35] sm:$0xff]
        %v3904 = vld [vmem:[%s283 + $0x3d] sm:$0x1f]
        %v3905 = vld [vmem:[%s283 + $0x4d] sm:$0xff]
        %v3906 = vld [vmem:[%s283 + $0x55] sm:$0x1f]
        %v3915 = vcombine.high %v3899, %v3899
        %v3917 = vunpack.c.l.s4 1966171168
        %v3918 = vunpack.c.0.s8 %v3917
        %v3919 = vlaneseq
        %v3920 = vshrl.u32 %v3919, 7
        %v3921 = vsub.s32 %v3918, %v3920
        %v3922 = vrot.slane %v3899, %v3921
        %v3924 = vunpack.c.l.s4 1966171168
        %v3925 = vunpack.c.0.s8 %v3924
        %v3926 = vlaneseq
        %v3927 = vshrl.u32 %v3926, 7
        %v3928 = vsub.s32 %v3925, %v3927
        %v3929 = vrot.slane %v3915, %v3928
        %v3930 = vcombine.high %v3922, %v3922
        %v3931 = vcombine.high %v3929, %v3929
        %v3933 = vunpack.c.l.s4 1966171168
        %v3934 = vunpack.c.0.s8 %v3933
        %v3935 = vlaneseq
        %v3936 = vshrl.u32 %v3935, 7
        %v3937 = vsub.s32 %v3934, %v3936
        %v3938 = vrot.slane %v3922, %v3937
        %v3940 = vunpack.c.l.s4 1966171168
        %v3941 = vunpack.c.0.s8 %v3940
        %v3942 = vlaneseq
        %v3943 = vshrl.u32 %v3942, 7
        %v3944 = vsub.s32 %v3941, %v3943
        %v3945 = vrot.slane %v3929, %v3944
        %v3947 = vunpack.c.l.s4 1966171168
        %v3948 = vunpack.c.0.s8 %v3947
        %v3949 = vlaneseq
        %v3950 = vshrl.u32 %v3949, 7
        %v3951 = vsub.s32 %v3948, %v3950
        %v3952 = vrot.slane %v3930, %v3951
        %v3954 = vunpack.c.l.s4 1966171168
        %v3955 = vunpack.c.0.s8 %v3954
        %v3956 = vlaneseq
        %v3957 = vshrl.u32 %v3956, 7
        %v3958 = vsub.s32 %v3955, %v3957
        %v3959 = vrot.slane %v3931, %v3958
        %v3960 = vcombine.high %v3938, %v3938
        %v3961 = vcombine.high %v3945, %v3945
        %v3962 = vcombine.high %v3952, %v3952
        %v3963 = vcombine.high %v3959, %v3959
        %v3964 = vcombine.high %v3900, %v3900
        %v3966 = vunpack.c.l.s4 1966171168
        %v3967 = vunpack.c.0.s8 %v3966
        %v3968 = vlaneseq
        %v3969 = vshrl.u32 %v3968, 7
        %v3970 = vsub.s32 %v3967, %v3969
        %v3971 = vrot.slane %v3900, %v3970
        %v3973 = vunpack.c.l.s4 1966171168
        %v3974 = vunpack.c.0.s8 %v3973
        %v3975 = vlaneseq
        %v3976 = vshrl.u32 %v3975, 7
        %v3977 = vsub.s32 %v3974, %v3976
        %v3978 = vrot.slane %v3964, %v3977
        %v3979 = vcombine.high %v3971, %v3971
        %v3981 = vunpack.c.l.s4 1966171168
        %v3982 = vunpack.c.0.s8 %v3981
        %v3983 = vlaneseq
        %v3984 = vshrl.u32 %v3983, 7
        %v3985 = vsub.s32 %v3982, %v3984
        %v3986 = vrot.slane %v3971, %v3985
        %v3988 = vunpack.c.l.s4 1966171168
        %v3989 = vunpack.c.0.s8 %v3988
        %v3990 = vlaneseq
        %v3991 = vshrl.u32 %v3990, 7
        %v3992 = vsub.s32 %v3989, %v3991
        %v3993 = vrot.slane %v3978, %v3992
        %v3995 = vunpack.c.l.s4 1966171168
        %v3996 = vunpack.c.0.s8 %v3995
        %v3997 = vlaneseq
        %v3998 = vshrl.u32 %v3997, 7
        %v3999 = vsub.s32 %v3996, %v3998
        %v4000 = vrot.slane %v3979, %v3999
        %v4001 = vcombine.high %v3986, %v3986
        %v4002 = vcombine.high %v4000, %v4000
        %v4003 = vcombine.high %v3901, %v3901
        %v4005 = vunpack.c.l.s4 1966171168
        %v4006 = vunpack.c.0.s8 %v4005
        %v4007 = vlaneseq
        %v4008 = vshrl.u32 %v4007, 7
        %v4009 = vsub.s32 %v4006, %v4008
        %v4010 = vrot.slane %v3901, %v4009
        %v4012 = vunpack.c.l.s4 1966171168
        %v4013 = vunpack.c.0.s8 %v4012
        %v4014 = vlaneseq
        %v4015 = vshrl.u32 %v4014, 7
        %v4016 = vsub.s32 %v4013, %v4015
        %v4017 = vrot.slane %v4003, %v4016
        %v4018 = vcombine.high %v4010, %v4010
        %v4019 = vcombine.high %v4017, %v4017
        %v4021 = vunpack.c.l.s4 1966171168
        %v4022 = vunpack.c.0.s8 %v4021
        %v4023 = vlaneseq
        %v4024 = vshrl.u32 %v4023, 7
        %v4025 = vsub.s32 %v4022, %v4024
        %v4026 = vrot.slane %v4010, %v4025
        %v4028 = vunpack.c.l.s4 1966171168
        %v4029 = vunpack.c.0.s8 %v4028
        %v4030 = vlaneseq
        %v4031 = vshrl.u32 %v4030, 7
        %v4032 = vsub.s32 %v4029, %v4031
        %v4033 = vrot.slane %v4017, %v4032
        %v4035 = vunpack.c.l.s4 1966171168
        %v4036 = vunpack.c.0.s8 %v4035
        %v4037 = vlaneseq
        %v4038 = vshrl.u32 %v4037, 7
        %v4039 = vsub.s32 %v4036, %v4038
        %v4040 = vrot.slane %v4018, %v4039
        %v4042 = vunpack.c.l.s4 1966171168
        %v4043 = vunpack.c.0.s8 %v4042
        %v4044 = vlaneseq
        %v4045 = vshrl.u32 %v4044, 7
        %v4046 = vsub.s32 %v4043, %v4045
        %v4047 = vrot.slane %v4019, %v4046
        %v4048 = vcombine.high %v4026, %v4026
        %v4049 = vcombine.high %v4033, %v4033
        %v4050 = vcombine.high %v4040, %v4040
        %v4051 = vcombine.high %v4047, %v4047
        %v4052 = vcombine.high %v3902, %v3902
        %v4054 = vunpack.c.l.s4 1966171168
        %v4055 = vunpack.c.0.s8 %v4054
        %v4056 = vlaneseq
        %v4057 = vshrl.u32 %v4056, 7
        %v4058 = vsub.s32 %v4055, %v4057
        %v4059 = vrot.slane %v3902, %v4058
        %v4061 = vunpack.c.l.s4 1966171168
        %v4062 = vunpack.c.0.s8 %v4061
        %v4063 = vlaneseq
        %v4064 = vshrl.u32 %v4063, 7
        %v4065 = vsub.s32 %v4062, %v4064
        %v4066 = vrot.slane %v4052, %v4065
        %v4067 = vcombine.high %v4059, %v4059
        %v4069 = vunpack.c.l.s4 1966171168
        %v4070 = vunpack.c.0.s8 %v4069
        %v4071 = vlaneseq
        %v4072 = vshrl.u32 %v4071, 7
        %v4073 = vsub.s32 %v4070, %v4072
        %v4074 = vrot.slane %v4059, %v4073
        %v4076 = vunpack.c.l.s4 1966171168
        %v4077 = vunpack.c.0.s8 %v4076
        %v4078 = vlaneseq
        %v4079 = vshrl.u32 %v4078, 7
        %v4080 = vsub.s32 %v4077, %v4079
        %v4081 = vrot.slane %v4066, %v4080
        %v4083 = vunpack.c.l.s4 1966171168
        %v4084 = vunpack.c.0.s8 %v4083
        %v4085 = vlaneseq
        %v4086 = vshrl.u32 %v4085, 7
        %v4087 = vsub.s32 %v4084, %v4086
        %v4088 = vrot.slane %v4067, %v4087
        %v4089 = vcombine.high %v4074, %v4074
        %v4090 = vcombine.high %v4088, %v4088
        %v4091 = vcombine.high %v3903, %v3903
        %v4093 = vunpack.c.l.s4 1966171168
        %v4094 = vunpack.c.0.s8 %v4093
        %v4095 = vlaneseq
        %v4096 = vshrl.u32 %v4095, 7
        %v4097 = vsub.s32 %v4094, %v4096
        %v4098 = vrot.slane %v3903, %v4097
        %v4100 = vunpack.c.l.s4 1966171168
        %v4101 = vunpack.c.0.s8 %v4100
        %v4102 = vlaneseq
        %v4103 = vshrl.u32 %v4102, 7
        %v4104 = vsub.s32 %v4101, %v4103
        %v4105 = vrot.slane %v4091, %v4104
        %v4106 = vcombine.high %v4098, %v4098
        %v4107 = vcombine.high %v4105, %v4105
        %v4109 = vunpack.c.l.s4 1966171168
        %v4110 = vunpack.c.0.s8 %v4109
        %v4111 = vlaneseq
        %v4112 = vshrl.u32 %v4111, 7
        %v4113 = vsub.s32 %v4110, %v4112
        %v4114 = vrot.slane %v4098, %v4113
        %v4116 = vunpack.c.l.s4 1966171168
        %v4117 = vunpack.c.0.s8 %v4116
        %v4118 = vlaneseq
        %v4119 = vshrl.u32 %v4118, 7
        %v4120 = vsub.s32 %v4117, %v4119
        %v4121 = vrot.slane %v4105, %v4120
        %v4123 = vunpack.c.l.s4 1966171168
        %v4124 = vunpack.c.0.s8 %v4123
        %v4125 = vlaneseq
        %v4126 = vshrl.u32 %v4125, 7
        %v4127 = vsub.s32 %v4124, %v4126
        %v4128 = vrot.slane %v4106, %v4127
        %v4130 = vunpack.c.l.s4 1966171168
        %v4131 = vunpack.c.0.s8 %v4130
        %v4132 = vlaneseq
        %v4133 = vshrl.u32 %v4132, 7
        %v4134 = vsub.s32 %v4131, %v4133
        %v4135 = vrot.slane %v4107, %v4134
        %v4136 = vcombine.high %v4114, %v4114
        %v4137 = vcombine.high %v4121, %v4121
        %v4138 = vcombine.high %v4128, %v4128
        %v4139 = vcombine.high %v4135, %v4135
        %v4140 = vcombine.high %v3904, %v3904
        %v4142 = vunpack.c.l.s4 1966171168
        %v4143 = vunpack.c.0.s8 %v4142
        %v4144 = vlaneseq
        %v4145 = vshrl.u32 %v4144, 7
        %v4146 = vsub.s32 %v4143, %v4145
        %v4147 = vrot.slane %v3904, %v4146
        %v4149 = vunpack.c.l.s4 1966171168
        %v4150 = vunpack.c.0.s8 %v4149
        %v4151 = vlaneseq
        %v4152 = vshrl.u32 %v4151, 7
        %v4153 = vsub.s32 %v4150, %v4152
        %v4154 = vrot.slane %v4140, %v4153
        %v4155 = vcombine.high %v4147, %v4147
        %v4157 = vunpack.c.l.s4 1966171168
        %v4158 = vunpack.c.0.s8 %v4157
        %v4159 = vlaneseq
        %v4160 = vshrl.u32 %v4159, 7
        %v4161 = vsub.s32 %v4158, %v4160
        %v4162 = vrot.slane %v4147, %v4161
        %v4164 = vunpack.c.l.s4 1966171168
        %v4165 = vunpack.c.0.s8 %v4164
        %v4166 = vlaneseq
        %v4167 = vshrl.u32 %v4166, 7
        %v4168 = vsub.s32 %v4165, %v4167
        %v4169 = vrot.slane %v4154, %v4168
        %v4171 = vunpack.c.l.s4 1966171168
        %v4172 = vunpack.c.0.s8 %v4171
        %v4173 = vlaneseq
        %v4174 = vshrl.u32 %v4173, 7
        %v4175 = vsub.s32 %v4172, %v4174
        %v4176 = vrot.slane %v4155, %v4175
        %v4177 = vcombine.high %v4162, %v4162
        %v4178 = vcombine.high %v4176, %v4176
        %v4179 = vcombine.high %v3905, %v3905
        %v4181 = vunpack.c.l.s4 1966171168
        %v4182 = vunpack.c.0.s8 %v4181
        %v4183 = vlaneseq
        %v4184 = vshrl.u32 %v4183, 7
        %v4185 = vsub.s32 %v4182, %v4184
        %v4186 = vrot.slane %v3905, %v4185
        %v4188 = vunpack.c.l.s4 1966171168
        %v4189 = vunpack.c.0.s8 %v4188
        %v4190 = vlaneseq
        %v4191 = vshrl.u32 %v4190, 7
        %v4192 = vsub.s32 %v4189, %v4191
        %v4193 = vrot.slane %v4179, %v4192
        %v4194 = vcombine.high %v4186, %v4186
        %v4195 = vcombine.high %v4193, %v4193
        %v4197 = vunpack.c.l.s4 1966171168
        %v4198 = vunpack.c.0.s8 %v4197
        %v4199 = vlaneseq
        %v4200 = vshrl.u32 %v4199, 7
        %v4201 = vsub.s32 %v4198, %v4200
        %v4202 = vrot.slane %v4186, %v4201
        %v4204 = vunpack.c.l.s4 1966171168
        %v4205 = vunpack.c.0.s8 %v4204
        %v4206 = vlaneseq
        %v4207 = vshrl.u32 %v4206, 7
        %v4208 = vsub.s32 %v4205, %v4207
        %v4209 = vrot.slane %v4193, %v4208
        %v4211 = vunpack.c.l.s4 1966171168
        %v4212 = vunpack.c.0.s8 %v4211
        %v4213 = vlaneseq
        %v4214 = vshrl.u32 %v4213, 7
        %v4215 = vsub.s32 %v4212, %v4214
        %v4216 = vrot.slane %v4194, %v4215
        %v4218 = vunpack.c.l.s4 1966171168
        %v4219 = vunpack.c.0.s8 %v4218
        %v4220 = vlaneseq
        %v4221 = vshrl.u32 %v4220, 7
        %v4222 = vsub.s32 %v4219, %v4221
        %v4223 = vrot.slane %v4195, %v4222
        %v4224 = vcombine.high %v4202, %v4202
        %v4225 = vcombine.high %v4209, %v4209
        %v4226 = vcombine.high %v4216, %v4216
        %v4227 = vcombine.high %v4223, %v4223
        %v4228 = vcombine.high %v3906, %v3906
        %v4230 = vunpack.c.l.s4 1966171168
        %v4231 = vunpack.c.0.s8 %v4230
        %v4232 = vlaneseq
        %v4233 = vshrl.u32 %v4232, 7
        %v4234 = vsub.s32 %v4231, %v4233
        %v4235 = vrot.slane %v3906, %v4234
        %v4237 = vunpack.c.l.s4 1966171168
        %v4238 = vunpack.c.0.s8 %v4237
        %v4239 = vlaneseq
        %v4240 = vshrl.u32 %v4239, 7
        %v4241 = vsub.s32 %v4238, %v4240
        %v4242 = vrot.slane %v4228, %v4241
        %v4243 = vcombine.high %v4235, %v4235
        %v4245 = vunpack.c.l.s4 1966171168
        %v4246 = vunpack.c.0.s8 %v4245
        %v4247 = vlaneseq
        %v4248 = vshrl.u32 %v4247, 7
        %v4249 = vsub.s32 %v4246, %v4248
        %v4250 = vrot.slane %v4235, %v4249
        %v4252 = vunpack.c.l.s4 1966171168
        %v4253 = vunpack.c.0.s8 %v4252
        %v4254 = vlaneseq
        %v4255 = vshrl.u32 %v4254, 7
        %v4256 = vsub.s32 %v4253, %v4255
        %v4257 = vrot.slane %v4242, %v4256
        %v4259 = vunpack.c.l.s4 1966171168
        %v4260 = vunpack.c.0.s8 %v4259
        %v4261 = vlaneseq
        %v4262 = vshrl.u32 %v4261, 7
        %v4263 = vsub.s32 %v4260, %v4262
        %v4264 = vrot.slane %v4243, %v4263
        %v4265 = vcombine.high %v4250, %v4250
        %v4266 = vcombine.high %v4264, %v4264
        %v4267 = vcombine.low %v3938, %v3952
        %v4268 = vcombine.low %v3960, %v3962
        %v4269 = vcombine.low %v3945, %v3959
        %v4270 = vcombine.low %v3961, %v3963
        %v4272 = vunpack.c.l.s4 1966171168
        %v4273 = vunpack.c.0.s8 %v4272
        %v4274 = vlaneseq
        %v4275 = vshrl.u32 %v4274, 7
        %v4276 = vsub.s32 %v4273, %v4275
        %v4277 = vrot.slane %v4267, %v4276
        %v4279 = vunpack.c.l.s4 1966171168
        %v4280 = vunpack.c.0.s8 %v4279
        %v4281 = vlaneseq
        %v4282 = vshrl.u32 %v4281, 7
        %v4283 = vsub.s32 %v4280, %v4282
        %v4284 = vrot.slane %v4268, %v4283
        %v4286 = vunpack.c.l.s4 1966171168
        %v4287 = vunpack.c.0.s8 %v4286
        %v4288 = vlaneseq
        %v4289 = vshrl.u32 %v4288, 7
        %v4290 = vsub.s32 %v4287, %v4289
        %v4291 = vrot.slane %v4269, %v4290
        %v4293 = vunpack.c.l.s4 1966171168
        %v4294 = vunpack.c.0.s8 %v4293
        %v4295 = vlaneseq
        %v4296 = vshrl.u32 %v4295, 7
        %v4297 = vsub.s32 %v4294, %v4296
        %v4298 = vrot.slane %v4270, %v4297
        %v4299 = vcombine.low %v4277, %v4284
        %v4300 = vcombine.low %v4291, %v4298
        %v4302 = vunpack.c.l.s4 1966171168
        %v4303 = vunpack.c.0.s8 %v4302
        %v4304 = vlaneseq
        %v4305 = vshrl.u32 %v4304, 7
        %v4306 = vsub.s32 %v4303, %v4305
        %v4307 = vrot.slane %v4299, %v4306
        %v4309 = vunpack.c.l.s4 1966171168
        %v4310 = vunpack.c.0.s8 %v4309
        %v4311 = vlaneseq
        %v4312 = vshrl.u32 %v4311, 7
        %v4313 = vsub.s32 %v4310, %v4312
        %v4314 = vrot.slane %v4300, %v4313
        %v4315 = vcombine.low %v4307, %v4314
        %v4316 = vcombine.low %v3986, %v4000
        %v4317 = vcombine.low %v4001, %v4002
        %v4318 = vcombine.low %v3993, %v4026
        %v4319 = vcombine.low %v4040, %v4048
        %v4321 = vunpack.c.l.s4 1966171168
        %v4322 = vunpack.c.0.s8 %v4321
        %v4323 = vlaneseq
        %v4324 = vshrl.u32 %v4323, 7
        %v4325 = vsub.s32 %v4322, %v4324
        %v4326 = vrot.slane %v4316, %v4325
        %v4328 = vunpack.c.l.s4 1966171168
        %v4329 = vunpack.c.0.s8 %v4328
        %v4330 = vlaneseq
        %v4331 = vshrl.u32 %v4330, 7
        %v4332 = vsub.s32 %v4329, %v4331
        %v4333 = vrot.slane %v4317, %v4332
        %v4335 = vunpack.c.l.s4 1966171168
        %v4336 = vunpack.c.0.s8 %v4335
        %v4337 = vlaneseq
        %v4338 = vshrl.u32 %v4337, 7
        %v4339 = vsub.s32 %v4336, %v4338
        %v4340 = vrot.slane %v4318, %v4339
        %v4342 = vunpack.c.l.s4 1966171168
        %v4343 = vunpack.c.0.s8 %v4342
        %v4344 = vlaneseq
        %v4345 = vshrl.u32 %v4344, 7
        %v4346 = vsub.s32 %v4343, %v4345
        %v4347 = vrot.slane %v4319, %v4346
        %v4348 = vcombine.low %v4326, %v4333
        %v4349 = vcombine.low %v4340, %v4347
        %v4351 = vunpack.c.l.s4 1966171168
        %v4352 = vunpack.c.0.s8 %v4351
        %v4353 = vlaneseq
        %v4354 = vshrl.u32 %v4353, 7
        %v4355 = vsub.s32 %v4352, %v4354
        %v4356 = vrot.slane %v4348, %v4355
        %v4358 = vunpack.c.l.s4 1966171168
        %v4359 = vunpack.c.0.s8 %v4358
        %v4360 = vlaneseq
        %v4361 = vshrl.u32 %v4360, 7
        %v4362 = vsub.s32 %v4359, %v4361
        %v4363 = vrot.slane %v4349, %v4362
        %v4364 = vcombine.low %v4356, %v4363
        %v4365 = vcombine.low %v4050, %v4033
        %v4366 = vcombine.low %v4047, %v4049
        %v4367 = vcombine.low %v4051, %v4074
        %v4368 = vcombine.low %v4088, %v4089
        %v4370 = vunpack.c.l.s4 1966171168
        %v4371 = vunpack.c.0.s8 %v4370
        %v4372 = vlaneseq
        %v4373 = vshrl.u32 %v4372, 7
        %v4374 = vsub.s32 %v4371, %v4373
        %v4375 = vrot.slane %v4365, %v4374
        %v4377 = vunpack.c.l.s4 1966171168
        %v4378 = vunpack.c.0.s8 %v4377
        %v4379 = vlaneseq
        %v4380 = vshrl.u32 %v4379, 7
        %v4381 = vsub.s32 %v4378, %v4380
        %v4382 = vrot.slane %v4366, %v4381
        %v4384 = vunpack.c.l.s4 1966171168
        %v4385 = vunpack.c.0.s8 %v4384
        %v4386 = vlaneseq
        %v4387 = vshrl.u32 %v4386, 7
        %v4388 = vsub.s32 %v4385, %v4387
        %v4389 = vrot.slane %v4367, %v4388
        %v4391 = vunpack.c.l.s4 1966171168
        %v4392 = vunpack.c.0.s8 %v4391
        %v4393 = vlaneseq
        %v4394 = vshrl.u32 %v4393, 7
        %v4395 = vsub.s32 %v4392, %v4394
        %v4396 = vrot.slane %v4368, %v4395
        %v4397 = vcombine.low %v4375, %v4382
        %v4398 = vcombine.low %v4389, %v4396
        %v4400 = vunpack.c.l.s4 1966171168
        %v4401 = vunpack.c.0.s8 %v4400
        %v4402 = vlaneseq
        %v4403 = vshrl.u32 %v4402, 7
        %v4404 = vsub.s32 %v4401, %v4403
        %v4405 = vrot.slane %v4397, %v4404
        %v4407 = vunpack.c.l.s4 1966171168
        %v4408 = vunpack.c.0.s8 %v4407
        %v4409 = vlaneseq
        %v4410 = vshrl.u32 %v4409, 7
        %v4411 = vsub.s32 %v4408, %v4410
        %v4412 = vrot.slane %v4398, %v4411
        %v4413 = vcombine.low %v4405, %v4412
        %v4414 = vcombine.low %v4090, %v4081
        %v4415 = vcombine.low %v4114, %v4128
        %v4416 = vcombine.low %v4136, %v4138
        %v4417 = vcombine.low %v4121, %v4135
        %v4419 = vunpack.c.l.s4 1966171168
        %v4420 = vunpack.c.0.s8 %v4419
        %v4421 = vlaneseq
        %v4422 = vshrl.u32 %v4421, 7
        %v4423 = vsub.s32 %v4420, %v4422
        %v4424 = vrot.slane %v4414, %v4423
        %v4426 = vunpack.c.l.s4 1966171168
        %v4427 = vunpack.c.0.s8 %v4426
        %v4428 = vlaneseq
        %v4429 = vshrl.u32 %v4428, 7
        %v4430 = vsub.s32 %v4427, %v4429
        %v4431 = vrot.slane %v4415, %v4430
        %v4433 = vunpack.c.l.s4 1966171168
        %v4434 = vunpack.c.0.s8 %v4433
        %v4435 = vlaneseq
        %v4436 = vshrl.u32 %v4435, 7
        %v4437 = vsub.s32 %v4434, %v4436
        %v4438 = vrot.slane %v4416, %v4437
        %v4440 = vunpack.c.l.s4 1966171168
        %v4441 = vunpack.c.0.s8 %v4440
        %v4442 = vlaneseq
        %v4443 = vshrl.u32 %v4442, 7
        %v4444 = vsub.s32 %v4441, %v4443
        %v4445 = vrot.slane %v4417, %v4444
        %v4446 = vcombine.low %v4424, %v4431
        %v4447 = vcombine.low %v4438, %v4445
        %v4449 = vunpack.c.l.s4 1966171168
        %v4450 = vunpack.c.0.s8 %v4449
        %v4451 = vlaneseq
        %v4452 = vshrl.u32 %v4451, 7
        %v4453 = vsub.s32 %v4450, %v4452
        %v4454 = vrot.slane %v4446, %v4453
        %v4456 = vunpack.c.l.s4 1966171168
        %v4457 = vunpack.c.0.s8 %v4456
        %v4458 = vlaneseq
        %v4459 = vshrl.u32 %v4458, 7
        %v4460 = vsub.s32 %v4457, %v4459
        %v4461 = vrot.slane %v4447, %v4460
        %v4462 = vcombine.low %v4454, %v4461
        %v4463 = vcombine.low %v4137, %v4139
        %v4464 = vcombine.low %v4162, %v4176
        %v4465 = vcombine.low %v4177, %v4178
        %v4466 = vcombine.low %v4169, %v4202
        %v4468 = vunpack.c.l.s4 1966171168
        %v4469 = vunpack.c.0.s8 %v4468
        %v4470 = vlaneseq
        %v4471 = vshrl.u32 %v4470, 7
        %v4472 = vsub.s32 %v4469, %v4471
        %v4473 = vrot.slane %v4463, %v4472
        %v4475 = vunpack.c.l.s4 1966171168
        %v4476 = vunpack.c.0.s8 %v4475
        %v4477 = vlaneseq
        %v4478 = vshrl.u32 %v4477, 7
        %v4479 = vsub.s32 %v4476, %v4478
        %v4480 = vrot.slane %v4464, %v4479
        %v4482 = vunpack.c.l.s4 1966171168
        %v4483 = vunpack.c.0.s8 %v4482
        %v4484 = vlaneseq
        %v4485 = vshrl.u32 %v4484, 7
        %v4486 = vsub.s32 %v4483, %v4485
        %v4487 = vrot.slane %v4465, %v4486
        %v4489 = vunpack.c.l.s4 1966171168
        %v4490 = vunpack.c.0.s8 %v4489
        %v4491 = vlaneseq
        %v4492 = vshrl.u32 %v4491, 7
        %v4493 = vsub.s32 %v4490, %v4492
        %v4494 = vrot.slane %v4466, %v4493
        %v4495 = vcombine.low %v4473, %v4480
        %v4496 = vcombine.low %v4487, %v4494
        %v4498 = vunpack.c.l.s4 1966171168
        %v4499 = vunpack.c.0.s8 %v4498
        %v4500 = vlaneseq
        %v4501 = vshrl.u32 %v4500, 7
        %v4502 = vsub.s32 %v4499, %v4501
        %v4503 = vrot.slane %v4495, %v4502
        %v4505 = vunpack.c.l.s4 1966171168
        %v4506 = vunpack.c.0.s8 %v4505
        %v4507 = vlaneseq
        %v4508 = vshrl.u32 %v4507, 7
        %v4509 = vsub.s32 %v4506, %v4508
        %v4510 = vrot.slane %v4496, %v4509
        %v4511 = vcombine.low %v4503, %v4510
        %v4512 = vcombine.low %v4216, %v4224
        %v4513 = vcombine.low %v4226, %v4209
        %v4514 = vcombine.low %v4223, %v4225
        %v4515 = vcombine.low %v4227, %v4250
        %v4517 = vunpack.c.l.s4 1966171168
        %v4518 = vunpack.c.0.s8 %v4517
        %v4519 = vlaneseq
        %v4520 = vshrl.u32 %v4519, 7
        %v4521 = vsub.s32 %v4518, %v4520
        %v4522 = vrot.slane %v4512, %v4521
        %v4524 = vunpack.c.l.s4 1966171168
        %v4525 = vunpack.c.0.s8 %v4524
        %v4526 = vlaneseq
        %v4527 = vshrl.u32 %v4526, 7
        %v4528 = vsub.s32 %v4525, %v4527
        %v4529 = vrot.slane %v4513, %v4528
        %v4531 = vunpack.c.l.s4 1966171168
        %v4532 = vunpack.c.0.s8 %v4531
        %v4533 = vlaneseq
        %v4534 = vshrl.u32 %v4533, 7
        %v4535 = vsub.s32 %v4532, %v4534
        %v4536 = vrot.slane %v4514, %v4535
        %v4538 = vunpack.c.l.s4 1966171168
        %v4539 = vunpack.c.0.s8 %v4538
        %v4540 = vlaneseq
        %v4541 = vshrl.u32 %v4540, 7
        %v4542 = vsub.s32 %v4539, %v4541
        %v4543 = vrot.slane %v4515, %v4542
        %v4544 = vcombine.low %v4522, %v4529
        %v4545 = vcombine.low %v4536, %v4543
        %v4547 = vunpack.c.l.s4 1966171168
        %v4548 = vunpack.c.0.s8 %v4547
        %v4549 = vlaneseq
        %v4550 = vshrl.u32 %v4549, 7
        %v4551 = vsub.s32 %v4548, %v4550
        %v4552 = vrot.slane %v4544, %v4551
        %v4554 = vunpack.c.l.s4 1966171168
        %v4555 = vunpack.c.0.s8 %v4554
        %v4556 = vlaneseq
        %v4557 = vshrl.u32 %v4556, 7
        %v4558 = vsub.s32 %v4555, %v4557
        %v4559 = vrot.slane %v4545, %v4558
        %v4560 = vcombine.low %v4552, %v4559
        %v4561 = vcombine.low %v4264, %v4265
        %v4562 = vcombine.low %v4266, %v4257
        %v4564 = vunpack.c.l.s4 1966171168
        %v4565 = vunpack.c.0.s8 %v4564
        %v4566 = vlaneseq
        %v4567 = vshrl.u32 %v4566, 7
        %v4568 = vsub.s32 %v4565, %v4567
        %v4569 = vrot.slane %v4561, %v4568
        %v4571 = vunpack.c.l.s4 1966171168
        %v4572 = vunpack.c.0.s8 %v4571
        %v4573 = vlaneseq
        %v4574 = vshrl.u32 %v4573, 7
        %v4575 = vsub.s32 %v4572, %v4574
        %v4576 = vrot.slane %v4562, %v4575
        %v4577 = vcombine.low %v4569, %v4576
        %v4579 = vunpack.c.l.s4 1966171168
        %v4580 = vunpack.c.0.s8 %v4579
        %v4581 = vlaneseq
        %v4582 = vshrl.u32 %v4581, 7
        %v4583 = vsub.s32 %v4580, %v4582
        %v4584 = vrot.slane %v4577, %v4583
        %4585 = vrot.lane.b32.xlu0 %v4315, 40
        %v4586 = vpop.permute.xlu0 %4585
        %4587 = vrot.lane.b32.xlu0 %v4364, 40
        %v4588 = vpop.permute.xlu0 %4587
        %4589 = vrot.lane.b32.xlu0 %v4413, 40
        %v4590 = vpop.permute.xlu0 %4589
        %4591 = vrot.lane.b32.xlu0 %v4462, 40
        %v4592 = vpop.permute.xlu0 %4591
        %4593 = vrot.lane.b32.xlu0 %v4511, 40
        %v4594 = vpop.permute.xlu0 %4593
        %4595 = vrot.lane.b32.xlu0 %v4560, 40
        %v4596 = vpop.permute.xlu0 %4595
        %4597 = vrot.lane.b32.xlu0 %v4584, 40
        %v4598 = vpop.permute.xlu0 %4597
        %vm4606 = vcmask 392512
        %4607 = vst.msk [vmem:[#allocation2] sm:$0xff] %vm4606, %v4586
        %4608 = vst.msk [vmem:[#allocation2 + $0x8] sm:$0xff] %vm4606, %v4588
        %4609 = vst.msk [vmem:[#allocation2 + $0x10] sm:$0xff] %vm4606, %v4590
        %4610 = vst.msk [vmem:[#allocation2 + $0x18] sm:$0xff] %vm4606, %v4592
        %4611 = vst.msk [vmem:[#allocation2 + $0x20] sm:$0xff] %vm4606, %v4594
        %4612 = vst.msk [vmem:[#allocation2 + $0x28] sm:$0xff] %vm4606, %v4596
        %vm4613 = vcmask 388416
        %4614 = vst.msk [vmem:[#allocation2 + $0x30] sm:$0xf] %vm4613, %v4598
        %v4615 = vld [vmem:[%s283 + $0x6] sm:$0xff]
        %v4616 = vld [vmem:[%s283 + $0xe] sm:$0x1f]
        %v4617 = vld [vmem:[%s283 + $0x1e] sm:$0xff]
        %v4618 = vld [vmem:[%s283 + $0x26] sm:$0x1f]
        %v4619 = vld [vmem:[%s283 + $0x36] sm:$0xff]
        %v4620 = vld [vmem:[%s283 + $0x3e] sm:$0x1f]
        %v4621 = vld [vmem:[%s283 + $0x4e] sm:$0xff]
        %v4622 = vld [vmem:[%s283 + $0x56] sm:$0x1f]
        %v4631 = vcombine.high %v4615, %v4615
        %v4633 = vunpack.c.l.s4 1966171168
        %v4634 = vunpack.c.0.s8 %v4633
        %v4635 = vlaneseq
        %v4636 = vshrl.u32 %v4635, 7
        %v4637 = vsub.s32 %v4634, %v4636
        %v4638 = vrot.slane %v4615, %v4637
        %v4640 = vunpack.c.l.s4 1966171168
        %v4641 = vunpack.c.0.s8 %v4640
        %v4642 = vlaneseq
        %v4643 = vshrl.u32 %v4642, 7
        %v4644 = vsub.s32 %v4641, %v4643
        %v4645 = vrot.slane %v4631, %v4644
        %v4646 = vcombine.high %v4638, %v4638
        %v4647 = vcombine.high %v4645, %v4645
        %v4649 = vunpack.c.l.s4 1966171168
        %v4650 = vunpack.c.0.s8 %v4649
        %v4651 = vlaneseq
        %v4652 = vshrl.u32 %v4651, 7
        %v4653 = vsub.s32 %v4650, %v4652
        %v4654 = vrot.slane %v4638, %v4653
        %v4656 = vunpack.c.l.s4 1966171168
        %v4657 = vunpack.c.0.s8 %v4656
        %v4658 = vlaneseq
        %v4659 = vshrl.u32 %v4658, 7
        %v4660 = vsub.s32 %v4657, %v4659
        %v4661 = vrot.slane %v4645, %v4660
        %v4663 = vunpack.c.l.s4 1966171168
        %v4664 = vunpack.c.0.s8 %v4663
        %v4665 = vlaneseq
        %v4666 = vshrl.u32 %v4665, 7
        %v4667 = vsub.s32 %v4664, %v4666
        %v4668 = vrot.slane %v4646, %v4667
        %v4670 = vunpack.c.l.s4 1966171168
        %v4671 = vunpack.c.0.s8 %v4670
        %v4672 = vlaneseq
        %v4673 = vshrl.u32 %v4672, 7
        %v4674 = vsub.s32 %v4671, %v4673
        %v4675 = vrot.slane %v4647, %v4674
        %v4676 = vcombine.high %v4654, %v4654
        %v4677 = vcombine.high %v4661, %v4661
        %v4678 = vcombine.high %v4668, %v4668
        %v4679 = vcombine.high %v4675, %v4675
        %v4680 = vcombine.high %v4616, %v4616
        %v4682 = vunpack.c.l.s4 1966171168
        %v4683 = vunpack.c.0.s8 %v4682
        %v4684 = vlaneseq
        %v4685 = vshrl.u32 %v4684, 7
        %v4686 = vsub.s32 %v4683, %v4685
        %v4687 = vrot.slane %v4616, %v4686
        %v4689 = vunpack.c.l.s4 1966171168
        %v4690 = vunpack.c.0.s8 %v4689
        %v4691 = vlaneseq
        %v4692 = vshrl.u32 %v4691, 7
        %v4693 = vsub.s32 %v4690, %v4692
        %v4694 = vrot.slane %v4680, %v4693
        %v4695 = vcombine.high %v4687, %v4687
        %v4697 = vunpack.c.l.s4 1966171168
        %v4698 = vunpack.c.0.s8 %v4697
        %v4699 = vlaneseq
        %v4700 = vshrl.u32 %v4699, 7
        %v4701 = vsub.s32 %v4698, %v4700
        %v4702 = vrot.slane %v4687, %v4701
        %v4704 = vunpack.c.l.s4 1966171168
        %v4705 = vunpack.c.0.s8 %v4704
        %v4706 = vlaneseq
        %v4707 = vshrl.u32 %v4706, 7
        %v4708 = vsub.s32 %v4705, %v4707
        %v4709 = vrot.slane %v4694, %v4708
        %v4711 = vunpack.c.l.s4 1966171168
        %v4712 = vunpack.c.0.s8 %v4711
        %v4713 = vlaneseq
        %v4714 = vshrl.u32 %v4713, 7
        %v4715 = vsub.s32 %v4712, %v4714
        %v4716 = vrot.slane %v4695, %v4715
        %v4717 = vcombine.high %v4702, %v4702
        %v4718 = vcombine.high %v4716, %v4716
        %v4719 = vcombine.high %v4617, %v4617
        %v4721 = vunpack.c.l.s4 1966171168
        %v4722 = vunpack.c.0.s8 %v4721
        %v4723 = vlaneseq
        %v4724 = vshrl.u32 %v4723, 7
        %v4725 = vsub.s32 %v4722, %v4724
        %v4726 = vrot.slane %v4617, %v4725
        %v4728 = vunpack.c.l.s4 1966171168
        %v4729 = vunpack.c.0.s8 %v4728
        %v4730 = vlaneseq
        %v4731 = vshrl.u32 %v4730, 7
        %v4732 = vsub.s32 %v4729, %v4731
        %v4733 = vrot.slane %v4719, %v4732
        %v4734 = vcombine.high %v4726, %v4726
        %v4735 = vcombine.high %v4733, %v4733
        %v4737 = vunpack.c.l.s4 1966171168
        %v4738 = vunpack.c.0.s8 %v4737
        %v4739 = vlaneseq
        %v4740 = vshrl.u32 %v4739, 7
        %v4741 = vsub.s32 %v4738, %v4740
        %v4742 = vrot.slane %v4726, %v4741
        %v4744 = vunpack.c.l.s4 1966171168
        %v4745 = vunpack.c.0.s8 %v4744
        %v4746 = vlaneseq
        %v4747 = vshrl.u32 %v4746, 7
        %v4748 = vsub.s32 %v4745, %v4747
        %v4749 = vrot.slane %v4733, %v4748
        %v4751 = vunpack.c.l.s4 1966171168
        %v4752 = vunpack.c.0.s8 %v4751
        %v4753 = vlaneseq
        %v4754 = vshrl.u32 %v4753, 7
        %v4755 = vsub.s32 %v4752, %v4754
        %v4756 = vrot.slane %v4734, %v4755
        %v4758 = vunpack.c.l.s4 1966171168
        %v4759 = vunpack.c.0.s8 %v4758
        %v4760 = vlaneseq
        %v4761 = vshrl.u32 %v4760, 7
        %v4762 = vsub.s32 %v4759, %v4761
        %v4763 = vrot.slane %v4735, %v4762
        %v4764 = vcombine.high %v4742, %v4742
        %v4765 = vcombine.high %v4749, %v4749
        %v4766 = vcombine.high %v4756, %v4756
        %v4767 = vcombine.high %v4763, %v4763
        %v4768 = vcombine.high %v4618, %v4618
        %v4770 = vunpack.c.l.s4 1966171168
        %v4771 = vunpack.c.0.s8 %v4770
        %v4772 = vlaneseq
        %v4773 = vshrl.u32 %v4772, 7
        %v4774 = vsub.s32 %v4771, %v4773
        %v4775 = vrot.slane %v4618, %v4774
        %v4777 = vunpack.c.l.s4 1966171168
        %v4778 = vunpack.c.0.s8 %v4777
        %v4779 = vlaneseq
        %v4780 = vshrl.u32 %v4779, 7
        %v4781 = vsub.s32 %v4778, %v4780
        %v4782 = vrot.slane %v4768, %v4781
        %v4783 = vcombine.high %v4775, %v4775
        %v4785 = vunpack.c.l.s4 1966171168
        %v4786 = vunpack.c.0.s8 %v4785
        %v4787 = vlaneseq
        %v4788 = vshrl.u32 %v4787, 7
        %v4789 = vsub.s32 %v4786, %v4788
        %v4790 = vrot.slane %v4775, %v4789
        %v4792 = vunpack.c.l.s4 1966171168
        %v4793 = vunpack.c.0.s8 %v4792
        %v4794 = vlaneseq
        %v4795 = vshrl.u32 %v4794, 7
        %v4796 = vsub.s32 %v4793, %v4795
        %v4797 = vrot.slane %v4782, %v4796
        %v4799 = vunpack.c.l.s4 1966171168
        %v4800 = vunpack.c.0.s8 %v4799
        %v4801 = vlaneseq
        %v4802 = vshrl.u32 %v4801, 7
        %v4803 = vsub.s32 %v4800, %v4802
        %v4804 = vrot.slane %v4783, %v4803
        %v4805 = vcombine.high %v4790, %v4790
        %v4806 = vcombine.high %v4804, %v4804
        %v4807 = vcombine.high %v4619, %v4619
        %v4809 = vunpack.c.l.s4 1966171168
        %v4810 = vunpack.c.0.s8 %v4809
        %v4811 = vlaneseq
        %v4812 = vshrl.u32 %v4811, 7
        %v4813 = vsub.s32 %v4810, %v4812
        %v4814 = vrot.slane %v4619, %v4813
        %v4816 = vunpack.c.l.s4 1966171168
        %v4817 = vunpack.c.0.s8 %v4816
        %v4818 = vlaneseq
        %v4819 = vshrl.u32 %v4818, 7
        %v4820 = vsub.s32 %v4817, %v4819
        %v4821 = vrot.slane %v4807, %v4820
        %v4822 = vcombine.high %v4814, %v4814
        %v4823 = vcombine.high %v4821, %v4821
        %v4825 = vunpack.c.l.s4 1966171168
        %v4826 = vunpack.c.0.s8 %v4825
        %v4827 = vlaneseq
        %v4828 = vshrl.u32 %v4827, 7
        %v4829 = vsub.s32 %v4826, %v4828
        %v4830 = vrot.slane %v4814, %v4829
        %v4832 = vunpack.c.l.s4 1966171168
        %v4833 = vunpack.c.0.s8 %v4832
        %v4834 = vlaneseq
        %v4835 = vshrl.u32 %v4834, 7
        %v4836 = vsub.s32 %v4833, %v4835
        %v4837 = vrot.slane %v4821, %v4836
        %v4839 = vunpack.c.l.s4 1966171168
        %v4840 = vunpack.c.0.s8 %v4839
        %v4841 = vlaneseq
        %v4842 = vshrl.u32 %v4841, 7
        %v4843 = vsub.s32 %v4840, %v4842
        %v4844 = vrot.slane %v4822, %v4843
        %v4846 = vunpack.c.l.s4 1966171168
        %v4847 = vunpack.c.0.s8 %v4846
        %v4848 = vlaneseq
        %v4849 = vshrl.u32 %v4848, 7
        %v4850 = vsub.s32 %v4847, %v4849
        %v4851 = vrot.slane %v4823, %v4850
        %v4852 = vcombine.high %v4830, %v4830
        %v4853 = vcombine.high %v4837, %v4837
        %v4854 = vcombine.high %v4844, %v4844
        %v4855 = vcombine.high %v4851, %v4851
        %v4856 = vcombine.high %v4620, %v4620
        %v4858 = vunpack.c.l.s4 1966171168
        %v4859 = vunpack.c.0.s8 %v4858
        %v4860 = vlaneseq
        %v4861 = vshrl.u32 %v4860, 7
        %v4862 = vsub.s32 %v4859, %v4861
        %v4863 = vrot.slane %v4620, %v4862
        %v4865 = vunpack.c.l.s4 1966171168
        %v4866 = vunpack.c.0.s8 %v4865
        %v4867 = vlaneseq
        %v4868 = vshrl.u32 %v4867, 7
        %v4869 = vsub.s32 %v4866, %v4868
        %v4870 = vrot.slane %v4856, %v4869
        %v4871 = vcombine.high %v4863, %v4863
        %v4873 = vunpack.c.l.s4 1966171168
        %v4874 = vunpack.c.0.s8 %v4873
        %v4875 = vlaneseq
        %v4876 = vshrl.u32 %v4875, 7
        %v4877 = vsub.s32 %v4874, %v4876
        %v4878 = vrot.slane %v4863, %v4877
        %v4880 = vunpack.c.l.s4 1966171168
        %v4881 = vunpack.c.0.s8 %v4880
        %v4882 = vlaneseq
        %v4883 = vshrl.u32 %v4882, 7
        %v4884 = vsub.s32 %v4881, %v4883
        %v4885 = vrot.slane %v4870, %v4884
        %v4887 = vunpack.c.l.s4 1966171168
        %v4888 = vunpack.c.0.s8 %v4887
        %v4889 = vlaneseq
        %v4890 = vshrl.u32 %v4889, 7
        %v4891 = vsub.s32 %v4888, %v4890
        %v4892 = vrot.slane %v4871, %v4891
        %v4893 = vcombine.high %v4878, %v4878
        %v4894 = vcombine.high %v4892, %v4892
        %v4895 = vcombine.high %v4621, %v4621
        %v4897 = vunpack.c.l.s4 1966171168
        %v4898 = vunpack.c.0.s8 %v4897
        %v4899 = vlaneseq
        %v4900 = vshrl.u32 %v4899, 7
        %v4901 = vsub.s32 %v4898, %v4900
        %v4902 = vrot.slane %v4621, %v4901
        %v4904 = vunpack.c.l.s4 1966171168
        %v4905 = vunpack.c.0.s8 %v4904
        %v4906 = vlaneseq
        %v4907 = vshrl.u32 %v4906, 7
        %v4908 = vsub.s32 %v4905, %v4907
        %v4909 = vrot.slane %v4895, %v4908
        %v4910 = vcombine.high %v4902, %v4902
        %v4911 = vcombine.high %v4909, %v4909
        %v4913 = vunpack.c.l.s4 1966171168
        %v4914 = vunpack.c.0.s8 %v4913
        %v4915 = vlaneseq
        %v4916 = vshrl.u32 %v4915, 7
        %v4917 = vsub.s32 %v4914, %v4916
        %v4918 = vrot.slane %v4902, %v4917
        %v4920 = vunpack.c.l.s4 1966171168
        %v4921 = vunpack.c.0.s8 %v4920
        %v4922 = vlaneseq
        %v4923 = vshrl.u32 %v4922, 7
        %v4924 = vsub.s32 %v4921, %v4923
        %v4925 = vrot.slane %v4909, %v4924
        %v4927 = vunpack.c.l.s4 1966171168
        %v4928 = vunpack.c.0.s8 %v4927
        %v4929 = vlaneseq
        %v4930 = vshrl.u32 %v4929, 7
        %v4931 = vsub.s32 %v4928, %v4930
        %v4932 = vrot.slane %v4910, %v4931
        %v4934 = vunpack.c.l.s4 1966171168
        %v4935 = vunpack.c.0.s8 %v4934
        %v4936 = vlaneseq
        %v4937 = vshrl.u32 %v4936, 7
        %v4938 = vsub.s32 %v4935, %v4937
        %v4939 = vrot.slane %v4911, %v4938
        %v4940 = vcombine.high %v4918, %v4918
        %v4941 = vcombine.high %v4925, %v4925
        %v4942 = vcombine.high %v4932, %v4932
        %v4943 = vcombine.high %v4939, %v4939
        %v4944 = vcombine.high %v4622, %v4622
        %v4946 = vunpack.c.l.s4 1966171168
        %v4947 = vunpack.c.0.s8 %v4946
        %v4948 = vlaneseq
        %v4949 = vshrl.u32 %v4948, 7
        %v4950 = vsub.s32 %v4947, %v4949
        %v4951 = vrot.slane %v4622, %v4950
        %v4953 = vunpack.c.l.s4 1966171168
        %v4954 = vunpack.c.0.s8 %v4953
        %v4955 = vlaneseq
        %v4956 = vshrl.u32 %v4955, 7
        %v4957 = vsub.s32 %v4954, %v4956
        %v4958 = vrot.slane %v4944, %v4957
        %v4959 = vcombine.high %v4951, %v4951
        %v4961 = vunpack.c.l.s4 1966171168
        %v4962 = vunpack.c.0.s8 %v4961
        %v4963 = vlaneseq
        %v4964 = vshrl.u32 %v4963, 7
        %v4965 = vsub.s32 %v4962, %v4964
        %v4966 = vrot.slane %v4951, %v4965
        %v4968 = vunpack.c.l.s4 1966171168
        %v4969 = vunpack.c.0.s8 %v4968
        %v4970 = vlaneseq
        %v4971 = vshrl.u32 %v4970, 7
        %v4972 = vsub.s32 %v4969, %v4971
        %v4973 = vrot.slane %v4958, %v4972
        %v4975 = vunpack.c.l.s4 1966171168
        %v4976 = vunpack.c.0.s8 %v4975
        %v4977 = vlaneseq
        %v4978 = vshrl.u32 %v4977, 7
        %v4979 = vsub.s32 %v4976, %v4978
        %v4980 = vrot.slane %v4959, %v4979
        %v4981 = vcombine.high %v4966, %v4966
        %v4982 = vcombine.high %v4980, %v4980
        %v4983 = vcombine.low %v4654, %v4668
        %v4984 = vcombine.low %v4676, %v4678
        %v4985 = vcombine.low %v4661, %v4675
        %v4986 = vcombine.low %v4677, %v4679
        %v4988 = vunpack.c.l.s4 1966171168
        %v4989 = vunpack.c.0.s8 %v4988
        %v4990 = vlaneseq
        %v4991 = vshrl.u32 %v4990, 7
        %v4992 = vsub.s32 %v4989, %v4991
        %v4993 = vrot.slane %v4983, %v4992
        %v4995 = vunpack.c.l.s4 1966171168
        %v4996 = vunpack.c.0.s8 %v4995
        %v4997 = vlaneseq
        %v4998 = vshrl.u32 %v4997, 7
        %v4999 = vsub.s32 %v4996, %v4998
        %v5000 = vrot.slane %v4984, %v4999
        %v5002 = vunpack.c.l.s4 1966171168
        %v5003 = vunpack.c.0.s8 %v5002
        %v5004 = vlaneseq
        %v5005 = vshrl.u32 %v5004, 7
        %v5006 = vsub.s32 %v5003, %v5005
        %v5007 = vrot.slane %v4985, %v5006
        %v5009 = vunpack.c.l.s4 1966171168
        %v5010 = vunpack.c.0.s8 %v5009
        %v5011 = vlaneseq
        %v5012 = vshrl.u32 %v5011, 7
        %v5013 = vsub.s32 %v5010, %v5012
        %v5014 = vrot.slane %v4986, %v5013
        %v5015 = vcombine.low %v4993, %v5000
        %v5016 = vcombine.low %v5007, %v5014
        %v5018 = vunpack.c.l.s4 1966171168
        %v5019 = vunpack.c.0.s8 %v5018
        %v5020 = vlaneseq
        %v5021 = vshrl.u32 %v5020, 7
        %v5022 = vsub.s32 %v5019, %v5021
        %v5023 = vrot.slane %v5015, %v5022
        %v5025 = vunpack.c.l.s4 1966171168
        %v5026 = vunpack.c.0.s8 %v5025
        %v5027 = vlaneseq
        %v5028 = vshrl.u32 %v5027, 7
        %v5029 = vsub.s32 %v5026, %v5028
        %v5030 = vrot.slane %v5016, %v5029
        %v5031 = vcombine.low %v5023, %v5030
        %v5032 = vcombine.low %v4702, %v4716
        %v5033 = vcombine.low %v4717, %v4718
        %v5034 = vcombine.low %v4709, %v4742
        %v5035 = vcombine.low %v4756, %v4764
        %v5037 = vunpack.c.l.s4 1966171168
        %v5038 = vunpack.c.0.s8 %v5037
        %v5039 = vlaneseq
        %v5040 = vshrl.u32 %v5039, 7
        %v5041 = vsub.s32 %v5038, %v5040
        %v5042 = vrot.slane %v5032, %v5041
        %v5044 = vunpack.c.l.s4 1966171168
        %v5045 = vunpack.c.0.s8 %v5044
        %v5046 = vlaneseq
        %v5047 = vshrl.u32 %v5046, 7
        %v5048 = vsub.s32 %v5045, %v5047
        %v5049 = vrot.slane %v5033, %v5048
        %v5051 = vunpack.c.l.s4 1966171168
        %v5052 = vunpack.c.0.s8 %v5051
        %v5053 = vlaneseq
        %v5054 = vshrl.u32 %v5053, 7
        %v5055 = vsub.s32 %v5052, %v5054
        %v5056 = vrot.slane %v5034, %v5055
        %v5058 = vunpack.c.l.s4 1966171168
        %v5059 = vunpack.c.0.s8 %v5058
        %v5060 = vlaneseq
        %v5061 = vshrl.u32 %v5060, 7
        %v5062 = vsub.s32 %v5059, %v5061
        %v5063 = vrot.slane %v5035, %v5062
        %v5064 = vcombine.low %v5042, %v5049
        %v5065 = vcombine.low %v5056, %v5063
        %v5067 = vunpack.c.l.s4 1966171168
        %v5068 = vunpack.c.0.s8 %v5067
        %v5069 = vlaneseq
        %v5070 = vshrl.u32 %v5069, 7
        %v5071 = vsub.s32 %v5068, %v5070
        %v5072 = vrot.slane %v5064, %v5071
        %v5074 = vunpack.c.l.s4 1966171168
        %v5075 = vunpack.c.0.s8 %v5074
        %v5076 = vlaneseq
        %v5077 = vshrl.u32 %v5076, 7
        %v5078 = vsub.s32 %v5075, %v5077
        %v5079 = vrot.slane %v5065, %v5078
        %v5080 = vcombine.low %v5072, %v5079
        %v5081 = vcombine.low %v4766, %v4749
        %v5082 = vcombine.low %v4763, %v4765
        %v5083 = vcombine.low %v4767, %v4790
        %v5084 = vcombine.low %v4804, %v4805
        %v5086 = vunpack.c.l.s4 1966171168
        %v5087 = vunpack.c.0.s8 %v5086
        %v5088 = vlaneseq
        %v5089 = vshrl.u32 %v5088, 7
        %v5090 = vsub.s32 %v5087, %v5089
        %v5091 = vrot.slane %v5081, %v5090
        %v5093 = vunpack.c.l.s4 1966171168
        %v5094 = vunpack.c.0.s8 %v5093
        %v5095 = vlaneseq
        %v5096 = vshrl.u32 %v5095, 7
        %v5097 = vsub.s32 %v5094, %v5096
        %v5098 = vrot.slane %v5082, %v5097
        %v5100 = vunpack.c.l.s4 1966171168
        %v5101 = vunpack.c.0.s8 %v5100
        %v5102 = vlaneseq
        %v5103 = vshrl.u32 %v5102, 7
        %v5104 = vsub.s32 %v5101, %v5103
        %v5105 = vrot.slane %v5083, %v5104
        %v5107 = vunpack.c.l.s4 1966171168
        %v5108 = vunpack.c.0.s8 %v5107
        %v5109 = vlaneseq
        %v5110 = vshrl.u32 %v5109, 7
        %v5111 = vsub.s32 %v5108, %v5110
        %v5112 = vrot.slane %v5084, %v5111
        %v5113 = vcombine.low %v5091, %v5098
        %v5114 = vcombine.low %v5105, %v5112
        %v5116 = vunpack.c.l.s4 1966171168
        %v5117 = vunpack.c.0.s8 %v5116
        %v5118 = vlaneseq
        %v5119 = vshrl.u32 %v5118, 7
        %v5120 = vsub.s32 %v5117, %v5119
        %v5121 = vrot.slane %v5113, %v5120
        %v5123 = vunpack.c.l.s4 1966171168
        %v5124 = vunpack.c.0.s8 %v5123
        %v5125 = vlaneseq
        %v5126 = vshrl.u32 %v5125, 7
        %v5127 = vsub.s32 %v5124, %v5126
        %v5128 = vrot.slane %v5114, %v5127
        %v5129 = vcombine.low %v5121, %v5128
        %v5130 = vcombine.low %v4806, %v4797
        %v5131 = vcombine.low %v4830, %v4844
        %v5132 = vcombine.low %v4852, %v4854
        %v5133 = vcombine.low %v4837, %v4851
        %v5135 = vunpack.c.l.s4 1966171168
        %v5136 = vunpack.c.0.s8 %v5135
        %v5137 = vlaneseq
        %v5138 = vshrl.u32 %v5137, 7
        %v5139 = vsub.s32 %v5136, %v5138
        %v5140 = vrot.slane %v5130, %v5139
        %v5142 = vunpack.c.l.s4 1966171168
        %v5143 = vunpack.c.0.s8 %v5142
        %v5144 = vlaneseq
        %v5145 = vshrl.u32 %v5144, 7
        %v5146 = vsub.s32 %v5143, %v5145
        %v5147 = vrot.slane %v5131, %v5146
        %v5149 = vunpack.c.l.s4 1966171168
        %v5150 = vunpack.c.0.s8 %v5149
        %v5151 = vlaneseq
        %v5152 = vshrl.u32 %v5151, 7
        %v5153 = vsub.s32 %v5150, %v5152
        %v5154 = vrot.slane %v5132, %v5153
        %v5156 = vunpack.c.l.s4 1966171168
        %v5157 = vunpack.c.0.s8 %v5156
        %v5158 = vlaneseq
        %v5159 = vshrl.u32 %v5158, 7
        %v5160 = vsub.s32 %v5157, %v5159
        %v5161 = vrot.slane %v5133, %v5160
        %v5162 = vcombine.low %v5140, %v5147
        %v5163 = vcombine.low %v5154, %v5161
        %v5165 = vunpack.c.l.s4 1966171168
        %v5166 = vunpack.c.0.s8 %v5165
        %v5167 = vlaneseq
        %v5168 = vshrl.u32 %v5167, 7
        %v5169 = vsub.s32 %v5166, %v5168
        %v5170 = vrot.slane %v5162, %v5169
        %v5172 = vunpack.c.l.s4 1966171168
        %v5173 = vunpack.c.0.s8 %v5172
        %v5174 = vlaneseq
        %v5175 = vshrl.u32 %v5174, 7
        %v5176 = vsub.s32 %v5173, %v5175
        %v5177 = vrot.slane %v5163, %v5176
        %v5178 = vcombine.low %v5170, %v5177
        %v5179 = vcombine.low %v4853, %v4855
        %v5180 = vcombine.low %v4878, %v4892
        %v5181 = vcombine.low %v4893, %v4894
        %v5182 = vcombine.low %v4885, %v4918
        %v5184 = vunpack.c.l.s4 1966171168
        %v5185 = vunpack.c.0.s8 %v5184
        %v5186 = vlaneseq
        %v5187 = vshrl.u32 %v5186, 7
        %v5188 = vsub.s32 %v5185, %v5187
        %v5189 = vrot.slane %v5179, %v5188
        %v5191 = vunpack.c.l.s4 1966171168
        %v5192 = vunpack.c.0.s8 %v5191
        %v5193 = vlaneseq
        %v5194 = vshrl.u32 %v5193, 7
        %v5195 = vsub.s32 %v5192, %v5194
        %v5196 = vrot.slane %v5180, %v5195
        %v5198 = vunpack.c.l.s4 1966171168
        %v5199 = vunpack.c.0.s8 %v5198
        %v5200 = vlaneseq
        %v5201 = vshrl.u32 %v5200, 7
        %v5202 = vsub.s32 %v5199, %v5201
        %v5203 = vrot.slane %v5181, %v5202
        %v5205 = vunpack.c.l.s4 1966171168
        %v5206 = vunpack.c.0.s8 %v5205
        %v5207 = vlaneseq
        %v5208 = vshrl.u32 %v5207, 7
        %v5209 = vsub.s32 %v5206, %v5208
        %v5210 = vrot.slane %v5182, %v5209
        %v5211 = vcombine.low %v5189, %v5196
        %v5212 = vcombine.low %v5203, %v5210
        %v5214 = vunpack.c.l.s4 1966171168
        %v5215 = vunpack.c.0.s8 %v5214
        %v5216 = vlaneseq
        %v5217 = vshrl.u32 %v5216, 7
        %v5218 = vsub.s32 %v5215, %v5217
        %v5219 = vrot.slane %v5211, %v5218
        %v5221 = vunpack.c.l.s4 1966171168
        %v5222 = vunpack.c.0.s8 %v5221
        %v5223 = vlaneseq
        %v5224 = vshrl.u32 %v5223, 7
        %v5225 = vsub.s32 %v5222, %v5224
        %v5226 = vrot.slane %v5212, %v5225
        %v5227 = vcombine.low %v5219, %v5226
        %v5228 = vcombine.low %v4932, %v4940
        %v5229 = vcombine.low %v4942, %v4925
        %v5230 = vcombine.low %v4939, %v4941
        %v5231 = vcombine.low %v4943, %v4966
        %v5233 = vunpack.c.l.s4 1966171168
        %v5234 = vunpack.c.0.s8 %v5233
        %v5235 = vlaneseq
        %v5236 = vshrl.u32 %v5235, 7
        %v5237 = vsub.s32 %v5234, %v5236
        %v5238 = vrot.slane %v5228, %v5237
        %v5240 = vunpack.c.l.s4 1966171168
        %v5241 = vunpack.c.0.s8 %v5240
        %v5242 = vlaneseq
        %v5243 = vshrl.u32 %v5242, 7
        %v5244 = vsub.s32 %v5241, %v5243
        %v5245 = vrot.slane %v5229, %v5244
        %v5247 = vunpack.c.l.s4 1966171168
        %v5248 = vunpack.c.0.s8 %v5247
        %v5249 = vlaneseq
        %v5250 = vshrl.u32 %v5249, 7
        %v5251 = vsub.s32 %v5248, %v5250
        %v5252 = vrot.slane %v5230, %v5251
        %v5254 = vunpack.c.l.s4 1966171168
        %v5255 = vunpack.c.0.s8 %v5254
        %v5256 = vlaneseq
        %v5257 = vshrl.u32 %v5256, 7
        %v5258 = vsub.s32 %v5255, %v5257
        %v5259 = vrot.slane %v5231, %v5258
        %v5260 = vcombine.low %v5238, %v5245
        %v5261 = vcombine.low %v5252, %v5259
        %v5263 = vunpack.c.l.s4 1966171168
        %v5264 = vunpack.c.0.s8 %v5263
        %v5265 = vlaneseq
        %v5266 = vshrl.u32 %v5265, 7
        %v5267 = vsub.s32 %v5264, %v5266
        %v5268 = vrot.slane %v5260, %v5267
        %v5270 = vunpack.c.l.s4 1966171168
        %v5271 = vunpack.c.0.s8 %v5270
        %v5272 = vlaneseq
        %v5273 = vshrl.u32 %v5272, 7
        %v5274 = vsub.s32 %v5271, %v5273
        %v5275 = vrot.slane %v5261, %v5274
        %v5276 = vcombine.low %v5268, %v5275
        %v5277 = vcombine.low %v4980, %v4981
        %v5278 = vcombine.low %v4982, %v4973
        %v5280 = vunpack.c.l.s4 1966171168
        %v5281 = vunpack.c.0.s8 %v5280
        %v5282 = vlaneseq
        %v5283 = vshrl.u32 %v5282, 7
        %v5284 = vsub.s32 %v5281, %v5283
        %v5285 = vrot.slane %v5277, %v5284
        %v5287 = vunpack.c.l.s4 1966171168
        %v5288 = vunpack.c.0.s8 %v5287
        %v5289 = vlaneseq
        %v5290 = vshrl.u32 %v5289, 7
        %v5291 = vsub.s32 %v5288, %v5290
        %v5292 = vrot.slane %v5278, %v5291
        %v5293 = vcombine.low %v5285, %v5292
        %v5295 = vunpack.c.l.s4 1966171168
        %v5296 = vunpack.c.0.s8 %v5295
        %v5297 = vlaneseq
        %v5298 = vshrl.u32 %v5297, 7
        %v5299 = vsub.s32 %v5296, %v5298
        %v5300 = vrot.slane %v5293, %v5299
        %5301 = vrot.lane.b32.xlu0 %v5031, 48
        %v5302 = vpop.permute.xlu0 %5301
        %5303 = vrot.lane.b32.xlu0 %v5080, 48
        %v5304 = vpop.permute.xlu0 %5303
        %5305 = vrot.lane.b32.xlu0 %v5129, 48
        %v5306 = vpop.permute.xlu0 %5305
        %5307 = vrot.lane.b32.xlu0 %v5178, 48
        %v5308 = vpop.permute.xlu0 %5307
        %5309 = vrot.lane.b32.xlu0 %v5227, 48
        %v5310 = vpop.permute.xlu0 %5309
        %5311 = vrot.lane.b32.xlu0 %v5276, 48
        %v5312 = vpop.permute.xlu0 %5311
        %5313 = vrot.lane.b32.xlu0 %v5300, 48
        %v5314 = vpop.permute.xlu0 %5313
        %vm5322 = vcmask 458112
        %5323 = vst.msk [vmem:[#allocation2] sm:$0xff] %vm5322, %v5302
        %5324 = vst.msk [vmem:[#allocation2 + $0x8] sm:$0xff] %vm5322, %v5304
        %5325 = vst.msk [vmem:[#allocation2 + $0x10] sm:$0xff] %vm5322, %v5306
        %5326 = vst.msk [vmem:[#allocation2 + $0x18] sm:$0xff] %vm5322, %v5308
        %5327 = vst.msk [vmem:[#allocation2 + $0x20] sm:$0xff] %vm5322, %v5310
        %5328 = vst.msk [vmem:[#allocation2 + $0x28] sm:$0xff] %vm5322, %v5312
        %vm5329 = vcmask 454016
        %5330 = vst.msk [vmem:[#allocation2 + $0x30] sm:$0xf] %vm5329, %v5314
        %v5331 = vld [vmem:[#allocation2] sm:$0xff]
        %v5332 = vld [vmem:[#allocation2 + $0x8] sm:$0xff]
        %v5333 = vld [vmem:[#allocation2 + $0x10] sm:$0xff]
        %v5334 = vld [vmem:[#allocation2 + $0x18] sm:$0xff]
        %v5335 = vld [vmem:[#allocation2 + $0x20] sm:$0xff]
        %v5336 = vld [vmem:[#allocation2 + $0x28] sm:$0xff]
        %v5337 = vld [vmem:[#allocation2 + $0x30] sm:$0xf]
        %v5338 = vld [vmem:[#allocation6] sm:$0xff]
        %v5339 = vld [vmem:[#allocation6 + $0x8] sm:$0xff]
        %v5340 = vld [vmem:[#allocation6 + $0x10] sm:$0xff]
        %v5341 = vld [vmem:[#allocation6 + $0x18] sm:$0xff]
        %v5342 = vld [vmem:[#allocation6 + $0x20] sm:$0xff]
        %v5343 = vld [vmem:[#allocation6 + $0x28] sm:$0xff]
        %v5344 = vld [vmem:[#allocation6 + $0x30] sm:$0xff]
        %v5345 = vld [vmem:[#allocation8] sm:$0x1]
        %v5347 = vlaneseq
        %v5348 = vshrl.u32 %v5347, 7
        %v5349 = vsub.s32 0, %v5348
        %v5350 = vrot.slane %v5345, %v5349
        %vm5352 = vcmask 457728
        %v5354 = vsel %vm5352, %v5331, 0
        %v5357 = vsel %vm5352, %v5332, 0
        %v5360 = vsel %vm5352, %v5333, 0
        %v5363 = vsel %vm5352, %v5334, 0
        %v5366 = vsel %vm5352, %v5335, 0
        %v5369 = vsel %vm5352, %v5336, 0
        %v5372 = vsel %vm5352, %v5337, 0
        %5374 = vmatprep.subr.mxu0 0.0
        %5375 = vmatpush1.msra.mxu0 %v5338
        %5376 = vmatprep.subr.mxu0 0.0
        %5377 = vmatpush1.msra.mxu0 %v5339
        %5378 = vmatprep.subr.mxu0 0.0
        %5379 = vmatpush1.msra.mxu0 %v5340
        %5380 = vmatprep.subr.mxu0 0.0
        %5381 = vmatpush1.msra.mxu0 %v5341
        %5382 = vmatprep.subr.mxu0 0.0
        %5383 = vmatpush1.msra.mxu0 %v5342
        %5384 = vmatprep.subr.mxu0 0.0
        %5385 = vmatpush1.msra.mxu0 %v5343
        %5386 = vmatprep.subr.mxu0 0.0
        %5387 = vmatpush1.msra.mxu0 %v5344
        %5388 = vmatprep.subr.mxu0 0.0
        %5389 = vmatpush1.msra.mxu0 0.0
        %5390 = vmatprep.subr.mxu0 0.0
        %5391 = vmatpush1.msra.mxu0 0.0
        %5392 = vmatprep.subr.mxu0 0.0
        %5393 = vmatpush1.msra.mxu0 0.0
        %5394 = vmatprep.subr.mxu0 0.0
        %5395 = vmatpush1.msra.mxu0 0.0
        %5396 = vmatprep.subr.mxu0 0.0
        %5397 = vmatpush1.msra.mxu0 0.0
        %5398 = vmatprep.subr.mxu0 0.0
        %5399 = vmatpush1.msra.mxu0 0.0
        %5400 = vmatprep.subr.mxu0 0.0
        %5401 = vmatpush1.msra.mxu0 0.0
        %5402 = vmatprep.subr.mxu0 0.0
        %5403 = vmatpush1.msra.mxu0 0.0
        %5404 = vmatprep.subr.mxu0 0.0
        %5405 = vmatpush1.msra.mxu0 0.0
        %5406 = vmatprep.subr.mxu0 0.0
        %5407 = vmatpush1.msra.mxu0 0.0
        %5408 = vmatprep.subr.mxu0 0.0
        %5409 = vmatpush1.msra.mxu0 0.0
        %5410 = vmatprep.subr.mxu0 0.0
        %5411 = vmatpush1.msra.mxu0 0.0
        %5412 = vmatprep.subr.mxu0 0.0
        %5413 = vmatpush1.msra.mxu0 0.0
        %5414 = vmatprep.subr.mxu0 0.0
        %5415 = vmatpush1.msra.mxu0 0.0
        %5416 = vmatprep.subr.mxu0 0.0
        %5417 = vmatpush1.msra.mxu0 0.0
        %5418 = vmatprep.subr.mxu0 0.0
        %5419 = vmatpush1.msra.mxu0 0.0
        %5420 = vmatprep.subr.mxu0 0.0
        %5421 = vmatpush1.msra.mxu0 0.0
        %5422 = vmatprep.subr.mxu0 0.0
        %5423 = vmatpush1.msra.mxu0 0.0
        %5424 = vmatprep.subr.mxu0 0.0
        %5425 = vmatpush1.msra.mxu0 0.0
        %5426 = vmatprep.subr.mxu0 0.0
        %5427 = vmatpush1.msra.mxu0 0.0
        %5428 = vmatprep.subr.mxu0 0.0
        %5429 = vmatpush1.msra.mxu0 0.0
        %5430 = vmatprep.subr.mxu0 0.0
        %5431 = vmatpush1.msra.mxu0 0.0
        %5432 = vmatprep.subr.mxu0 0.0
        %5433 = vmatpush1.msra.mxu0 0.0
        %5434 = vmatprep.subr.mxu0 0.0
        %5435 = vmatpush1.msra.mxu0 0.0
        %5436 = vmatprep.subr.mxu0 0.0
        %5437 = vmatpush1.msra.mxu0 0.0
        %5438 = vmatprep.mubr.f32.mxu0 0.0
        %5439 = vmatmul.mubr.f32.gmra.mrb[0].mxu0 %v5354
        %v5440 = vpop.f32.mrb[0].mxu0
        %v5441 = vadd.f32 %v5350, %v5440
        %v5442 = vpop.f32.mrb[0].mxu0
        %5443 = vmatprep.mubr.f32.mxu0 0.0
        %5444 = vmatmul.mubr.f32.gmra.mrb[0].mxu0 %v5357
        %v5445 = vpop.f32.mrb[0].mxu0
        %v5446 = vadd.f32 %v5350, %v5445
        %v5447 = vpop.f32.mrb[0].mxu0
        %5448 = vmatprep.mubr.f32.mxu0 0.0
        %5449 = vmatmul.mubr.f32.gmra.mrb[0].mxu0 %v5360
        %v5450 = vpop.f32.mrb[0].mxu0
        %v5451 = vadd.f32 %v5350, %v5450
        %v5452 = vpop.f32.mrb[0].mxu0
        %5453 = vmatprep.mubr.f32.mxu0 0.0
        %5454 = vmatmul.mubr.f32.gmra.mrb[0].mxu0 %v5363
        %v5455 = vpop.f32.mrb[0].mxu0
        %v5456 = vadd.f32 %v5350, %v5455
        %v5457 = vpop.f32.mrb[0].mxu0
        %5458 = vmatprep.mubr.f32.mxu0 0.0
        %5459 = vmatmul.mubr.f32.gmra.mrb[0].mxu0 %v5366
        %v5460 = vpop.f32.mrb[0].mxu0
        %v5461 = vadd.f32 %v5350, %v5460
        %v5462 = vpop.f32.mrb[0].mxu0
        %5463 = vmatprep.mubr.f32.mxu0 0.0
        %5464 = vmatmul.mubr.f32.gmra.mrb[0].mxu0 %v5369
        %v5465 = vpop.f32.mrb[0].mxu0
        %v5466 = vadd.f32 %v5350, %v5465
        %v5467 = vpop.f32.mrb[0].mxu0
        %5468 = vmatprep.mubr.f32.mxu0 0.0
        %5469 = vmatmul.mubr.f32.gmra.mrb[0].mxu0 %v5372
        %v5470 = vpop.f32.mrb[0].mxu0
        %v5471 = vadd.f32 %v5350, %v5470
        %v5472 = vpop.f32.mrb[0].mxu0
        %5473 = vdwg.mxu0
        %v5474 = vtanh.pop %v5441
        %v5475 = vtanh.pop %v5446
        %v5476 = vtanh.pop %v5451
        %v5477 = vtanh.pop %v5456
        %v5478 = vtanh.pop %v5461
        %v5479 = vtanh.pop %v5466
        %v5480 = vtanh.pop %v5471
        %v5481 = vxor.u32 %v5441, 2147483648
        %v5482 = vxor.u32 %v5446, 2147483648
        %v5483 = vxor.u32 %v5451, 2147483648
        %v5484 = vxor.u32 %v5456, 2147483648
        %v5485 = vxor.u32 %v5461, 2147483648
        %v5486 = vxor.u32 %v5466, 2147483648
        %v5487 = vxor.u32 %v5471, 2147483648
        %v5488 = vmul.f32 %v5481, 1.442695
        %v5489 = vpow.pop %v5488
        %v5490 = vmul.f32 %v5482, 1.442695
        %v5491 = vpow.pop %v5490
        %v5492 = vmul.f32 %v5483, 1.442695
        %v5493 = vpow.pop %v5492
        %v5494 = vmul.f32 %v5484, 1.442695
        %v5495 = vpow.pop %v5494
        %v5496 = vmul.f32 %v5485, 1.442695
        %v5497 = vpow.pop %v5496
        %v5498 = vmul.f32 %v5486, 1.442695
        %v5499 = vpow.pop %v5498
        %v5500 = vmul.f32 %v5487, 1.442695
        %v5501 = vpow.pop %v5500
        %v5502 = vadd.f32 %v5489, 1.0
        %v5503 = vadd.f32 %v5491, 1.0
        %v5504 = vadd.f32 %v5493, 1.0
        %v5505 = vadd.f32 %v5495, 1.0
        %v5506 = vadd.f32 %v5497, 1.0
        %v5507 = vadd.f32 %v5499, 1.0
        %v5508 = vadd.f32 %v5501, 1.0
        %v5509 = vrcp.pop %v5502
        %v5510 = vmul.f32 1.0, %v5509
        %v5511 = vrcp.pop %v5503
        %v5512 = vmul.f32 1.0, %v5511
        %v5513 = vrcp.pop %v5504
        %v5514 = vmul.f32 1.0, %v5513
        %v5515 = vrcp.pop %v5505
        %v5516 = vmul.f32 1.0, %v5515
        %v5517 = vrcp.pop %v5506
        %v5518 = vmul.f32 1.0, %v5517
        %v5519 = vrcp.pop %v5507
        %v5520 = vmul.f32 1.0, %v5519
        %v5521 = vrcp.pop %v5508
        %v5522 = vmul.f32 1.0, %v5521
        %5530 = vrot.lane.b32.xlu0 %v5510, 120
        %v5531 = vpop.permute.xlu0 %5530
        %5532 = vrot.lane.b32.xlu0 %v5512, 120
        %v5533 = vpop.permute.xlu0 %5532
        %5534 = vrot.lane.b32.xlu0 %v5514, 120
        %v5535 = vpop.permute.xlu0 %5534
        %5536 = vrot.lane.b32.xlu0 %v5516, 120
        %v5537 = vpop.permute.xlu0 %5536
        %5538 = vrot.lane.b32.xlu0 %v5518, 120
        %v5539 = vpop.permute.xlu0 %5538
        %5540 = vrot.lane.b32.xlu0 %v5520, 120
        %v5541 = vpop.permute.xlu0 %5540
        %5542 = vrot.lane.b32.xlu0 %v5522, 120
        %v5543 = vpop.permute.xlu0 %5542
        %v5551 = vmul.f32 %v5474, %v5531
        %v5552 = vmul.f32 %v5475, %v5533
        %v5553 = vmul.f32 %v5476, %v5535
        %v5554 = vmul.f32 %v5477, %v5537
        %v5555 = vmul.f32 %v5478, %v5539
        %v5556 = vmul.f32 %v5479, %v5541
        %v5557 = vmul.f32 %v5480, %v5543
        %v5565 = vcombine.high %v5551, %v5551
        %v5567 = vunpack.c.l.s4 1966171168
        %v5568 = vunpack.c.0.s8 %v5567
        %v5569 = vlaneseq
        %v5570 = vshrl.u32 %v5569, 7
        %v5571 = vsub.s32 %v5568, %v5570
        %v5572 = vrot.slane %v5551, %v5571
        %v5574 = vunpack.c.l.s4 1966171168
        %v5575 = vunpack.c.0.s8 %v5574
        %v5576 = vlaneseq
        %v5577 = vshrl.u32 %v5576, 7
        %v5578 = vsub.s32 %v5575, %v5577
        %v5579 = vrot.slane %v5565, %v5578
        %v5580 = vcombine.high %v5572, %v5572
        %v5581 = vcombine.high %v5579, %v5579
        %v5583 = vunpack.c.l.s4 1966171168
        %v5584 = vunpack.c.0.s8 %v5583
        %v5585 = vlaneseq
        %v5586 = vshrl.u32 %v5585, 7
        %v5587 = vsub.s32 %v5584, %v5586
        %v5588 = vrot.slane %v5572, %v5587
        %v5590 = vunpack.c.l.s4 1966171168
        %v5591 = vunpack.c.0.s8 %v5590
        %v5592 = vlaneseq
        %v5593 = vshrl.u32 %v5592, 7
        %v5594 = vsub.s32 %v5591, %v5593
        %v5595 = vrot.slane %v5579, %v5594
        %v5597 = vunpack.c.l.s4 1966171168
        %v5598 = vunpack.c.0.s8 %v5597
        %v5599 = vlaneseq
        %v5600 = vshrl.u32 %v5599, 7
        %v5601 = vsub.s32 %v5598, %v5600
        %v5602 = vrot.slane %v5580, %v5601
        %v5604 = vunpack.c.l.s4 1966171168
        %v5605 = vunpack.c.0.s8 %v5604
        %v5606 = vlaneseq
        %v5607 = vshrl.u32 %v5606, 7
        %v5608 = vsub.s32 %v5605, %v5607
        %v5609 = vrot.slane %v5581, %v5608
        %v5610 = vcombine.high %v5588, %v5588
        %v5611 = vcombine.high %v5595, %v5595
        %v5612 = vcombine.high %v5602, %v5602
        %v5613 = vcombine.high %v5609, %v5609
        %v5614 = vcombine.high %v5552, %v5552
        %v5616 = vunpack.c.l.s4 1966171168
        %v5617 = vunpack.c.0.s8 %v5616
        %v5618 = vlaneseq
        %v5619 = vshrl.u32 %v5618, 7
        %v5620 = vsub.s32 %v5617, %v5619
        %v5621 = vrot.slane %v5552, %v5620
        %v5623 = vunpack.c.l.s4 1966171168
        %v5624 = vunpack.c.0.s8 %v5623
        %v5625 = vlaneseq
        %v5626 = vshrl.u32 %v5625, 7
        %v5627 = vsub.s32 %v5624, %v5626
        %v5628 = vrot.slane %v5614, %v5627
        %v5629 = vcombine.high %v5621, %v5621
        %v5630 = vcombine.high %v5628, %v5628
        %v5632 = vunpack.c.l.s4 1966171168
        %v5633 = vunpack.c.0.s8 %v5632
        %v5634 = vlaneseq
        %v5635 = vshrl.u32 %v5634, 7
        %v5636 = vsub.s32 %v5633, %v5635
        %v5637 = vrot.slane %v5621, %v5636
        %v5639 = vunpack.c.l.s4 1966171168
        %v5640 = vunpack.c.0.s8 %v5639
        %v5641 = vlaneseq
        %v5642 = vshrl.u32 %v5641, 7
        %v5643 = vsub.s32 %v5640, %v5642
        %v5644 = vrot.slane %v5628, %v5643
        %v5646 = vunpack.c.l.s4 1966171168
        %v5647 = vunpack.c.0.s8 %v5646
        %v5648 = vlaneseq
        %v5649 = vshrl.u32 %v5648, 7
        %v5650 = vsub.s32 %v5647, %v5649
        %v5651 = vrot.slane %v5629, %v5650
        %v5653 = vunpack.c.l.s4 1966171168
        %v5654 = vunpack.c.0.s8 %v5653
        %v5655 = vlaneseq
        %v5656 = vshrl.u32 %v5655, 7
        %v5657 = vsub.s32 %v5654, %v5656
        %v5658 = vrot.slane %v5630, %v5657
        %v5659 = vcombine.high %v5637, %v5637
        %v5660 = vcombine.high %v5644, %v5644
        %v5661 = vcombine.high %v5651, %v5651
        %v5662 = vcombine.high %v5658, %v5658
        %v5663 = vcombine.high %v5553, %v5553
        %v5665 = vunpack.c.l.s4 1966171168
        %v5666 = vunpack.c.0.s8 %v5665
        %v5667 = vlaneseq
        %v5668 = vshrl.u32 %v5667, 7
        %v5669 = vsub.s32 %v5666, %v5668
        %v5670 = vrot.slane %v5553, %v5669
        %v5672 = vunpack.c.l.s4 1966171168
        %v5673 = vunpack.c.0.s8 %v5672
        %v5674 = vlaneseq
        %v5675 = vshrl.u32 %v5674, 7
        %v5676 = vsub.s32 %v5673, %v5675
        %v5677 = vrot.slane %v5663, %v5676
        %v5678 = vcombine.high %v5670, %v5670
        %v5679 = vcombine.high %v5677, %v5677
        %v5681 = vunpack.c.l.s4 1966171168
        %v5682 = vunpack.c.0.s8 %v5681
        %v5683 = vlaneseq
        %v5684 = vshrl.u32 %v5683, 7
        %v5685 = vsub.s32 %v5682, %v5684
        %v5686 = vrot.slane %v5670, %v5685
        %v5688 = vunpack.c.l.s4 1966171168
        %v5689 = vunpack.c.0.s8 %v5688
        %v5690 = vlaneseq
        %v5691 = vshrl.u32 %v5690, 7
        %v5692 = vsub.s32 %v5689, %v5691
        %v5693 = vrot.slane %v5677, %v5692
        %v5695 = vunpack.c.l.s4 1966171168
        %v5696 = vunpack.c.0.s8 %v5695
        %v5697 = vlaneseq
        %v5698 = vshrl.u32 %v5697, 7
        %v5699 = vsub.s32 %v5696, %v5698
        %v5700 = vrot.slane %v5678, %v5699
        %v5702 = vunpack.c.l.s4 1966171168
        %v5703 = vunpack.c.0.s8 %v5702
        %v5704 = vlaneseq
        %v5705 = vshrl.u32 %v5704, 7
        %v5706 = vsub.s32 %v5703, %v5705
        %v5707 = vrot.slane %v5679, %v5706
        %v5708 = vcombine.high %v5686, %v5686
        %v5709 = vcombine.high %v5693, %v5693
        %v5710 = vcombine.high %v5700, %v5700
        %v5711 = vcombine.high %v5707, %v5707
        %v5712 = vcombine.high %v5554, %v5554
        %v5714 = vunpack.c.l.s4 1966171168
        %v5715 = vunpack.c.0.s8 %v5714
        %v5716 = vlaneseq
        %v5717 = vshrl.u32 %v5716, 7
        %v5718 = vsub.s32 %v5715, %v5717
        %v5719 = vrot.slane %v5554, %v5718
        %v5721 = vunpack.c.l.s4 1966171168
        %v5722 = vunpack.c.0.s8 %v5721
        %v5723 = vlaneseq
        %v5724 = vshrl.u32 %v5723, 7
        %v5725 = vsub.s32 %v5722, %v5724
        %v5726 = vrot.slane %v5712, %v5725
        %v5727 = vcombine.high %v5719, %v5719
        %v5728 = vcombine.high %v5726, %v5726
        %v5730 = vunpack.c.l.s4 1966171168
        %v5731 = vunpack.c.0.s8 %v5730
        %v5732 = vlaneseq
        %v5733 = vshrl.u32 %v5732, 7
        %v5734 = vsub.s32 %v5731, %v5733
        %v5735 = vrot.slane %v5719, %v5734
        %v5737 = vunpack.c.l.s4 1966171168
        %v5738 = vunpack.c.0.s8 %v5737
        %v5739 = vlaneseq
        %v5740 = vshrl.u32 %v5739, 7
        %v5741 = vsub.s32 %v5738, %v5740
        %v5742 = vrot.slane %v5726, %v5741
        %v5744 = vunpack.c.l.s4 1966171168
        %v5745 = vunpack.c.0.s8 %v5744
        %v5746 = vlaneseq
        %v5747 = vshrl.u32 %v5746, 7
        %v5748 = vsub.s32 %v5745, %v5747
        %v5749 = vrot.slane %v5727, %v5748
        %v5751 = vunpack.c.l.s4 1966171168
        %v5752 = vunpack.c.0.s8 %v5751
        %v5753 = vlaneseq
        %v5754 = vshrl.u32 %v5753, 7
        %v5755 = vsub.s32 %v5752, %v5754
        %v5756 = vrot.slane %v5728, %v5755
        %v5757 = vcombine.high %v5735, %v5735
        %v5758 = vcombine.high %v5742, %v5742
        %v5759 = vcombine.high %v5749, %v5749
        %v5760 = vcombine.high %v5756, %v5756
        %v5761 = vcombine.high %v5555, %v5555
        %v5763 = vunpack.c.l.s4 1966171168
        %v5764 = vunpack.c.0.s8 %v5763
        %v5765 = vlaneseq
        %v5766 = vshrl.u32 %v5765, 7
        %v5767 = vsub.s32 %v5764, %v5766
        %v5768 = vrot.slane %v5555, %v5767
        %v5770 = vunpack.c.l.s4 1966171168
        %v5771 = vunpack.c.0.s8 %v5770
        %v5772 = vlaneseq
        %v5773 = vshrl.u32 %v5772, 7
        %v5774 = vsub.s32 %v5771, %v5773
        %v5775 = vrot.slane %v5761, %v5774
        %v5776 = vcombine.high %v5768, %v5768
        %v5777 = vcombine.high %v5775, %v5775
        %v5779 = vunpack.c.l.s4 1966171168
        %v5780 = vunpack.c.0.s8 %v5779
        %v5781 = vlaneseq
        %v5782 = vshrl.u32 %v5781, 7
        %v5783 = vsub.s32 %v5780, %v5782
        %v5784 = vrot.slane %v5768, %v5783
        %v5786 = vunpack.c.l.s4 1966171168
        %v5787 = vunpack.c.0.s8 %v5786
        %v5788 = vlaneseq
        %v5789 = vshrl.u32 %v5788, 7
        %v5790 = vsub.s32 %v5787, %v5789
        %v5791 = vrot.slane %v5775, %v5790
        %v5793 = vunpack.c.l.s4 1966171168
        %v5794 = vunpack.c.0.s8 %v5793
        %v5795 = vlaneseq
        %v5796 = vshrl.u32 %v5795, 7
        %v5797 = vsub.s32 %v5794, %v5796
        %v5798 = vrot.slane %v5776, %v5797
        %v5800 = vunpack.c.l.s4 1966171168
        %v5801 = vunpack.c.0.s8 %v5800
        %v5802 = vlaneseq
        %v5803 = vshrl.u32 %v5802, 7
        %v5804 = vsub.s32 %v5801, %v5803
        %v5805 = vrot.slane %v5777, %v5804
        %v5806 = vcombine.high %v5784, %v5784
        %v5807 = vcombine.high %v5791, %v5791
        %v5808 = vcombine.high %v5798, %v5798
        %v5809 = vcombine.high %v5805, %v5805
        %v5810 = vcombine.high %v5556, %v5556
        %v5812 = vunpack.c.l.s4 1966171168
        %v5813 = vunpack.c.0.s8 %v5812
        %v5814 = vlaneseq
        %v5815 = vshrl.u32 %v5814, 7
        %v5816 = vsub.s32 %v5813, %v5815
        %v5817 = vrot.slane %v5556, %v5816
        %v5819 = vunpack.c.l.s4 1966171168
        %v5820 = vunpack.c.0.s8 %v5819
        %v5821 = vlaneseq
        %v5822 = vshrl.u32 %v5821, 7
        %v5823 = vsub.s32 %v5820, %v5822
        %v5824 = vrot.slane %v5810, %v5823
        %v5825 = vcombine.high %v5817, %v5817
        %v5826 = vcombine.high %v5824, %v5824
        %v5828 = vunpack.c.l.s4 1966171168
        %v5829 = vunpack.c.0.s8 %v5828
        %v5830 = vlaneseq
        %v5831 = vshrl.u32 %v5830, 7
        %v5832 = vsub.s32 %v5829, %v5831
        %v5833 = vrot.slane %v5817, %v5832
        %v5835 = vunpack.c.l.s4 1966171168
        %v5836 = vunpack.c.0.s8 %v5835
        %v5837 = vlaneseq
        %v5838 = vshrl.u32 %v5837, 7
        %v5839 = vsub.s32 %v5836, %v5838
        %v5840 = vrot.slane %v5824, %v5839
        %v5842 = vunpack.c.l.s4 1966171168
        %v5843 = vunpack.c.0.s8 %v5842
        %v5844 = vlaneseq
        %v5845 = vshrl.u32 %v5844, 7
        %v5846 = vsub.s32 %v5843, %v5845
        %v5847 = vrot.slane %v5825, %v5846
        %v5849 = vunpack.c.l.s4 1966171168
        %v5850 = vunpack.c.0.s8 %v5849
        %v5851 = vlaneseq
        %v5852 = vshrl.u32 %v5851, 7
        %v5853 = vsub.s32 %v5850, %v5852
        %v5854 = vrot.slane %v5826, %v5853
        %v5855 = vcombine.high %v5833, %v5833
        %v5856 = vcombine.high %v5840, %v5840
        %v5857 = vcombine.high %v5847, %v5847
        %v5858 = vcombine.high %v5854, %v5854
        %v5860 = vunpack.c.l.s4 1966171168
        %v5861 = vunpack.c.0.s8 %v5860
        %v5862 = vlaneseq
        %v5863 = vshrl.u32 %v5862, 7
        %v5864 = vsub.s32 %v5861, %v5863
        %v5865 = vrot.slane %v5557, %v5864
        %v5866 = vcombine.high %v5865, %v5865
        %v5868 = vunpack.c.l.s4 1966171168
        %v5869 = vunpack.c.0.s8 %v5868
        %v5870 = vlaneseq
        %v5871 = vshrl.u32 %v5870, 7
        %v5872 = vsub.s32 %v5869, %v5871
        %v5873 = vrot.slane %v5865, %v5872
        %v5875 = vunpack.c.l.s4 1966171168
        %v5876 = vunpack.c.0.s8 %v5875
        %v5877 = vlaneseq
        %v5878 = vshrl.u32 %v5877, 7
        %v5879 = vsub.s32 %v5876, %v5878
        %v5880 = vrot.slane %v5866, %v5879
        %v5881 = vcombine.high %v5873, %v5873
        %v5882 = vcombine.high %v5880, %v5880
        %v5883 = vcombine.low %v5588, %v5602
        %v5884 = vcombine.low %v5610, %v5612
        %v5885 = vcombine.low %v5595, %v5609
        %v5886 = vcombine.low %v5611, %v5613
        %v5888 = vunpack.c.l.s4 1966171168
        %v5889 = vunpack.c.0.s8 %v5888
        %v5890 = vlaneseq
        %v5891 = vshrl.u32 %v5890, 7
        %v5892 = vsub.s32 %v5889, %v5891
        %v5893 = vrot.slane %v5883, %v5892
        %v5895 = vunpack.c.l.s4 1966171168
        %v5896 = vunpack.c.0.s8 %v5895
        %v5897 = vlaneseq
        %v5898 = vshrl.u32 %v5897, 7
        %v5899 = vsub.s32 %v5896, %v5898
        %v5900 = vrot.slane %v5884, %v5899
        %v5902 = vunpack.c.l.s4 1966171168
        %v5903 = vunpack.c.0.s8 %v5902
        %v5904 = vlaneseq
        %v5905 = vshrl.u32 %v5904, 7
        %v5906 = vsub.s32 %v5903, %v5905
        %v5907 = vrot.slane %v5885, %v5906
        %v5909 = vunpack.c.l.s4 1966171168
        %v5910 = vunpack.c.0.s8 %v5909
        %v5911 = vlaneseq
        %v5912 = vshrl.u32 %v5911, 7
        %v5913 = vsub.s32 %v5910, %v5912
        %v5914 = vrot.slane %v5886, %v5913
        %v5915 = vcombine.low %v5893, %v5900
        %v5916 = vcombine.low %v5907, %v5914
        %v5918 = vunpack.c.l.s4 1966171168
        %v5919 = vunpack.c.0.s8 %v5918
        %v5920 = vlaneseq
        %v5921 = vshrl.u32 %v5920, 7
        %v5922 = vsub.s32 %v5919, %v5921
        %v5923 = vrot.slane %v5915, %v5922
        %v5925 = vunpack.c.l.s4 1966171168
        %v5926 = vunpack.c.0.s8 %v5925
        %v5927 = vlaneseq
        %v5928 = vshrl.u32 %v5927, 7
        %v5929 = vsub.s32 %v5926, %v5928
        %v5930 = vrot.slane %v5916, %v5929
        %v5931 = vcombine.low %v5923, %v5930
        %v5932 = vcombine.low %v5637, %v5651
        %v5933 = vcombine.low %v5659, %v5661
        %v5935 = vunpack.c.l.s4 1966171168
        %v5936 = vunpack.c.0.s8 %v5935
        %v5937 = vlaneseq
        %v5938 = vshrl.u32 %v5937, 7
        %v5939 = vsub.s32 %v5936, %v5938
        %v5940 = vrot.slane %v5932, %v5939
        %v5942 = vunpack.c.l.s4 1966171168
        %v5943 = vunpack.c.0.s8 %v5942
        %v5944 = vlaneseq
        %v5945 = vshrl.u32 %v5944, 7
        %v5946 = vsub.s32 %v5943, %v5945
        %v5947 = vrot.slane %v5933, %v5946
        %v5949 = vunpack.c.l.s4 1966171168
        %v5950 = vunpack.c.0.s8 %v5949
        %v5951 = vlaneseq
        %v5952 = vshrl.u32 %v5951, 7
        %v5953 = vsub.s32 %v5950, %v5952
        %v5954 = vrot.slane %v5644, %v5953
        %v5955 = vcombine.low %v5940, %v5947
        %v5957 = vunpack.c.l.s4 1966171168
        %v5958 = vunpack.c.0.s8 %v5957
        %v5959 = vlaneseq
        %v5960 = vshrl.u32 %v5959, 7
        %v5961 = vsub.s32 %v5958, %v5960
        %v5962 = vrot.slane %v5955, %v5961
        %v5964 = vunpack.c.l.s4 1966171168
        %v5965 = vunpack.c.0.s8 %v5964
        %v5966 = vlaneseq
        %v5967 = vshrl.u32 %v5966, 7
        %v5968 = vsub.s32 %v5965, %v5967
        %v5969 = vrot.slane %v5954, %v5968
        %v5970 = vcombine.low %v5962, %v5969
        %v5971 = vcombine.low %v5658, %v5660
        %v5972 = vcombine.low %v5662, %v5686
        %v5973 = vcombine.low %v5700, %v5708
        %v5974 = vcombine.low %v5710, %v5693
        %v5976 = vunpack.c.l.s4 1966171168
        %v5977 = vunpack.c.0.s8 %v5976
        %v5978 = vlaneseq
        %v5979 = vshrl.u32 %v5978, 7
        %v5980 = vsub.s32 %v5977, %v5979
        %v5981 = vrot.slane %v5971, %v5980
        %v5983 = vunpack.c.l.s4 1966171168
        %v5984 = vunpack.c.0.s8 %v5983
        %v5985 = vlaneseq
        %v5986 = vshrl.u32 %v5985, 7
        %v5987 = vsub.s32 %v5984, %v5986
        %v5988 = vrot.slane %v5972, %v5987
        %v5990 = vunpack.c.l.s4 1966171168
        %v5991 = vunpack.c.0.s8 %v5990
        %v5992 = vlaneseq
        %v5993 = vshrl.u32 %v5992, 7
        %v5994 = vsub.s32 %v5991, %v5993
        %v5995 = vrot.slane %v5973, %v5994
        %v5997 = vunpack.c.l.s4 1966171168
        %v5998 = vunpack.c.0.s8 %v5997
        %v5999 = vlaneseq
        %v6000 = vshrl.u32 %v5999, 7
        %v6001 = vsub.s32 %v5998, %v6000
        %v6002 = vrot.slane %v5974, %v6001
        %v6003 = vcombine.low %v5981, %v5988
        %v6004 = vcombine.low %v5995, %v6002
        %v6006 = vunpack.c.l.s4 1966171168
        %v6007 = vunpack.c.0.s8 %v6006
        %v6008 = vlaneseq
        %v6009 = vshrl.u32 %v6008, 7
        %v6010 = vsub.s32 %v6007, %v6009
        %v6011 = vrot.slane %v6003, %v6010
        %v6013 = vunpack.c.l.s4 1966171168
        %v6014 = vunpack.c.0.s8 %v6013
        %v6015 = vlaneseq
        %v6016 = vshrl.u32 %v6015, 7
        %v6017 = vsub.s32 %v6014, %v6016
        %v6018 = vrot.slane %v6004, %v6017
        %v6019 = vcombine.low %v6011, %v6018
        %v6020 = vcombine.low %v5707, %v5709
        %v6021 = vcombine.low %v5711, %v5735
        %v6023 = vunpack.c.l.s4 1966171168
        %v6024 = vunpack.c.0.s8 %v6023
        %v6025 = vlaneseq
        %v6026 = vshrl.u32 %v6025, 7
        %v6027 = vsub.s32 %v6024, %v6026
        %v6028 = vrot.slane %v6020, %v6027
        %v6030 = vunpack.c.l.s4 1966171168
        %v6031 = vunpack.c.0.s8 %v6030
        %v6032 = vlaneseq
        %v6033 = vshrl.u32 %v6032, 7
        %v6034 = vsub.s32 %v6031, %v6033
        %v6035 = vrot.slane %v6021, %v6034
        %v6037 = vunpack.c.l.s4 1966171168
        %v6038 = vunpack.c.0.s8 %v6037
        %v6039 = vlaneseq
        %v6040 = vshrl.u32 %v6039, 7
        %v6041 = vsub.s32 %v6038, %v6040
        %v6042 = vrot.slane %v5749, %v6041
        %v6043 = vcombine.low %v6028, %v6035
        %v6045 = vunpack.c.l.s4 1966171168
        %v6046 = vunpack.c.0.s8 %v6045
        %v6047 = vlaneseq
        %v6048 = vshrl.u32 %v6047, 7
        %v6049 = vsub.s32 %v6046, %v6048
        %v6050 = vrot.slane %v6043, %v6049
        %v6052 = vunpack.c.l.s4 1966171168
        %v6053 = vunpack.c.0.s8 %v6052
        %v6054 = vlaneseq
        %v6055 = vshrl.u32 %v6054, 7
        %v6056 = vsub.s32 %v6053, %v6055
        %v6057 = vrot.slane %v6042, %v6056
        %v6058 = vcombine.low %v6050, %v6057
        %v6059 = vcombine.low %v5757, %v5759
        %v6060 = vcombine.low %v5742, %v5756
        %v6061 = vcombine.low %v5758, %v5760
        %v6062 = vcombine.low %v5784, %v5798
        %v6064 = vunpack.c.l.s4 1966171168
        %v6065 = vunpack.c.0.s8 %v6064
        %v6066 = vlaneseq
        %v6067 = vshrl.u32 %v6066, 7
        %v6068 = vsub.s32 %v6065, %v6067
        %v6069 = vrot.slane %v6059, %v6068
        %v6071 = vunpack.c.l.s4 1966171168
        %v6072 = vunpack.c.0.s8 %v6071
        %v6073 = vlaneseq
        %v6074 = vshrl.u32 %v6073, 7
        %v6075 = vsub.s32 %v6072, %v6074
        %v6076 = vrot.slane %v6060, %v6075
        %v6078 = vunpack.c.l.s4 1966171168
        %v6079 = vunpack.c.0.s8 %v6078
        %v6080 = vlaneseq
        %v6081 = vshrl.u32 %v6080, 7
        %v6082 = vsub.s32 %v6079, %v6081
        %v6083 = vrot.slane %v6061, %v6082
        %v6085 = vunpack.c.l.s4 1966171168
        %v6086 = vunpack.c.0.s8 %v6085
        %v6087 = vlaneseq
        %v6088 = vshrl.u32 %v6087, 7
        %v6089 = vsub.s32 %v6086, %v6088
        %v6090 = vrot.slane %v6062, %v6089
        %v6091 = vcombine.low %v6069, %v6076
        %v6092 = vcombine.low %v6083, %v6090
        %v6094 = vunpack.c.l.s4 1966171168
        %v6095 = vunpack.c.0.s8 %v6094
        %v6096 = vlaneseq
        %v6097 = vshrl.u32 %v6096, 7
        %v6098 = vsub.s32 %v6095, %v6097
        %v6099 = vrot.slane %v6091, %v6098
        %v6101 = vunpack.c.l.s4 1966171168
        %v6102 = vunpack.c.0.s8 %v6101
        %v6103 = vlaneseq
        %v6104 = vshrl.u32 %v6103, 7
        %v6105 = vsub.s32 %v6102, %v6104
        %v6106 = vrot.slane %v6092, %v6105
        %v6107 = vcombine.low %v6099, %v6106
        %v6108 = vcombine.low %v5806, %v5808
        %v6109 = vcombine.low %v5791, %v5805
        %v6111 = vunpack.c.l.s4 1966171168
        %v6112 = vunpack.c.0.s8 %v6111
        %v6113 = vlaneseq
        %v6114 = vshrl.u32 %v6113, 7
        %v6115 = vsub.s32 %v6112, %v6114
        %v6116 = vrot.slane %v6108, %v6115
        %v6118 = vunpack.c.l.s4 1966171168
        %v6119 = vunpack.c.0.s8 %v6118
        %v6120 = vlaneseq
        %v6121 = vshrl.u32 %v6120, 7
        %v6122 = vsub.s32 %v6119, %v6121
        %v6123 = vrot.slane %v6109, %v6122
        %v6125 = vunpack.c.l.s4 1966171168
        %v6126 = vunpack.c.0.s8 %v6125
        %v6127 = vlaneseq
        %v6128 = vshrl.u32 %v6127, 7
        %v6129 = vsub.s32 %v6126, %v6128
        %v6130 = vrot.slane %v5807, %v6129
        %v6131 = vcombine.low %v6116, %v6123
        %v6133 = vunpack.c.l.s4 1966171168
        %v6134 = vunpack.c.0.s8 %v6133
        %v6135 = vlaneseq
        %v6136 = vshrl.u32 %v6135, 7
        %v6137 = vsub.s32 %v6134, %v6136
        %v6138 = vrot.slane %v6131, %v6137
        %v6140 = vunpack.c.l.s4 1966171168
        %v6141 = vunpack.c.0.s8 %v6140
        %v6142 = vlaneseq
        %v6143 = vshrl.u32 %v6142, 7
        %v6144 = vsub.s32 %v6141, %v6143
        %v6145 = vrot.slane %v6130, %v6144
        %v6146 = vcombine.low %v6138, %v6145
        %v6147 = vcombine.low %v5809, %v5833
        %v6148 = vcombine.low %v5847, %v5855
        %v6149 = vcombine.low %v5857, %v5840
        %v6150 = vcombine.low %v5854, %v5856
        %v6152 = vunpack.c.l.s4 1966171168
        %v6153 = vunpack.c.0.s8 %v6152
        %v6154 = vlaneseq
        %v6155 = vshrl.u32 %v6154, 7
        %v6156 = vsub.s32 %v6153, %v6155
        %v6157 = vrot.slane %v6147, %v6156
        %v6159 = vunpack.c.l.s4 1966171168
        %v6160 = vunpack.c.0.s8 %v6159
        %v6161 = vlaneseq
        %v6162 = vshrl.u32 %v6161, 7
        %v6163 = vsub.s32 %v6160, %v6162
        %v6164 = vrot.slane %v6148, %v6163
        %v6166 = vunpack.c.l.s4 1966171168
        %v6167 = vunpack.c.0.s8 %v6166
        %v6168 = vlaneseq
        %v6169 = vshrl.u32 %v6168, 7
        %v6170 = vsub.s32 %v6167, %v6169
        %v6171 = vrot.slane %v6149, %v6170
        %v6173 = vunpack.c.l.s4 1966171168
        %v6174 = vunpack.c.0.s8 %v6173
        %v6175 = vlaneseq
        %v6176 = vshrl.u32 %v6175, 7
        %v6177 = vsub.s32 %v6174, %v6176
        %v6178 = vrot.slane %v6150, %v6177
        %v6179 = vcombine.low %v6157, %v6164
        %v6180 = vcombine.low %v6171, %v6178
        %v6182 = vunpack.c.l.s4 1966171168
        %v6183 = vunpack.c.0.s8 %v6182
        %v6184 = vlaneseq
        %v6185 = vshrl.u32 %v6184, 7
        %v6186 = vsub.s32 %v6183, %v6185
        %v6187 = vrot.slane %v6179, %v6186
        %v6189 = vunpack.c.l.s4 1966171168
        %v6190 = vunpack.c.0.s8 %v6189
        %v6191 = vlaneseq
        %v6192 = vshrl.u32 %v6191, 7
        %v6193 = vsub.s32 %v6190, %v6192
        %v6194 = vrot.slane %v6180, %v6193
        %v6195 = vcombine.low %v6187, %v6194
        %v6196 = vcombine.low %v5858, %v5873
        %v6197 = vcombine.low %v5880, %v5881
        %v6199 = vunpack.c.l.s4 1966171168
        %v6200 = vunpack.c.0.s8 %v6199
        %v6201 = vlaneseq
        %v6202 = vshrl.u32 %v6201, 7
        %v6203 = vsub.s32 %v6200, %v6202
        %v6204 = vrot.slane %v6196, %v6203
        %v6206 = vunpack.c.l.s4 1966171168
        %v6207 = vunpack.c.0.s8 %v6206
        %v6208 = vlaneseq
        %v6209 = vshrl.u32 %v6208, 7
        %v6210 = vsub.s32 %v6207, %v6209
        %v6211 = vrot.slane %v6197, %v6210
        %v6213 = vunpack.c.l.s4 1966171168
        %v6214 = vunpack.c.0.s8 %v6213
        %v6215 = vlaneseq
        %v6216 = vshrl.u32 %v6215, 7
        %v6217 = vsub.s32 %v6214, %v6216
        %v6218 = vrot.slane %v5882, %v6217
        %v6219 = vcombine.low %v6204, %v6211
        %v6221 = vunpack.c.l.s4 1966171168
        %v6222 = vunpack.c.0.s8 %v6221
        %v6223 = vlaneseq
        %v6224 = vshrl.u32 %v6223, 7
        %v6225 = vsub.s32 %v6222, %v6224
        %v6226 = vrot.slane %v6219, %v6225
        %v6228 = vunpack.c.l.s4 1966171168
        %v6229 = vunpack.c.0.s8 %v6228
        %v6230 = vlaneseq
        %v6231 = vshrl.u32 %v6230, 7
        %v6232 = vsub.s32 %v6229, %v6231
        %v6233 = vrot.slane %v6218, %v6232
        %v6234 = vcombine.low %v6226, %v6233
        %6243 = vst.msk [vmem:[%s325] sm:$0xff] %vm1026, %v5931
        %vm6244 = vcmask 61440
        %6245 = vst.msk [vmem:[%s325 + $0x8] sm:$0x1f] %vm6244, %v5970
        %6246 = vst.msk [vmem:[%s325 + $0x10] sm:$0xff] %vm1026, %v6019
        %6247 = vst.msk [vmem:[%s325 + $0x18] sm:$0x1f] %vm6244, %v6058
        %6248 = vst.msk [vmem:[%s325 + $0x20] sm:$0xff] %vm1026, %v6107
        %6249 = vst.msk [vmem:[%s325 + $0x28] sm:$0x1f] %vm6244, %v6146
        %6250 = vst.msk [vmem:[%s325 + $0x30] sm:$0xff] %vm1026, %v6195
        %6251 = vst.msk [vmem:[%s325 + $0x38] sm:$0x1f] %vm6244, %v6234
        %v6252 = vld [vmem:[#allocation2] sm:$0xff]
        %v6253 = vld [vmem:[#allocation2 + $0x8] sm:$0xff]
        %v6254 = vld [vmem:[#allocation2 + $0x10] sm:$0xff]
        %v6255 = vld [vmem:[#allocation2 + $0x18] sm:$0xff]
        %v6256 = vld [vmem:[#allocation2 + $0x20] sm:$0xff]
        %v6257 = vld [vmem:[#allocation2 + $0x28] sm:$0xff]
        %v6258 = vld [vmem:[#allocation2 + $0x30] sm:$0xf]
        %v6259 = vld [vmem:[#allocation9] sm:$0xff]
        %v6260 = vld [vmem:[#allocation11] sm:$0x1]
        %v6262 = vlaneseq
        %v6263 = vshrl.u32 %v6262, 7
        %v6264 = vsub.s32 0, %v6263
        %v6265 = vrot.slane %v6260, %v6264
        %v6267 = vsel %vm1026, %v5551, 0
        %v6269 = vsel %vm1026, %v5552, 0
        %v6271 = vsel %vm1026, %v5553, 0
        %v6273 = vsel %vm1026, %v5554, 0
        %v6275 = vsel %vm1026, %v5555, 0
        %v6277 = vsel %vm1026, %v5556, 0
        %v6279 = vsel %vm1026, %v5557, 0
        %6281 = vmatprep.subr.mxu0 0.0
        %6282 = vmatpush1.msra.mxu0 %v6259
        %6283 = vmatprep.subr.mxu0 0.0
        %6284 = vmatpush1.msra.mxu0 0.0
        %6285 = vmatprep.subr.mxu0 0.0
        %6286 = vmatpush1.msra.mxu0 0.0
        %6287 = vmatprep.subr.mxu0 0.0
        %6288 = vmatpush1.msra.mxu0 0.0
        %6289 = vmatprep.subr.mxu0 0.0
        %6290 = vmatpush1.msra.mxu0 0.0
        %6291 = vmatprep.subr.mxu0 0.0
        %6292 = vmatpush1.msra.mxu0 0.0
        %6293 = vmatprep.subr.mxu0 0.0
        %6294 = vmatpush1.msra.mxu0 0.0
        %6295 = vmatprep.subr.mxu0 0.0
        %6296 = vmatpush1.msra.mxu0 0.0
        %6297 = vmatprep.subr.mxu0 0.0
        %6298 = vmatpush1.msra.mxu0 0.0
        %6299 = vmatprep.subr.mxu0 0.0
        %6300 = vmatpush1.msra.mxu0 0.0
        %6301 = vmatprep.subr.mxu0 0.0
        %6302 = vmatpush1.msra.mxu0 0.0
        %6303 = vmatprep.subr.mxu0 0.0
        %6304 = vmatpush1.msra.mxu0 0.0
        %6305 = vmatprep.subr.mxu0 0.0
        %6306 = vmatpush1.msra.mxu0 0.0
        %6307 = vmatprep.subr.mxu0 0.0
        %6308 = vmatpush1.msra.mxu0 0.0
        %6309 = vmatprep.subr.mxu0 0.0
        %6310 = vmatpush1.msra.mxu0 0.0
        %6311 = vmatprep.subr.mxu0 0.0
        %6312 = vmatpush1.msra.mxu0 0.0
        %6313 = vmatprep.subr.mxu0 0.0
        %6314 = vmatpush1.msra.mxu0 0.0
        %6315 = vmatprep.subr.mxu0 0.0
        %6316 = vmatpush1.msra.mxu0 0.0
        %6317 = vmatprep.subr.mxu0 0.0
        %6318 = vmatpush1.msra.mxu0 0.0
        %6319 = vmatprep.subr.mxu0 0.0
        %6320 = vmatpush1.msra.mxu0 0.0
        %6321 = vmatprep.subr.mxu0 0.0
        %6322 = vmatpush1.msra.mxu0 0.0
        %6323 = vmatprep.subr.mxu0 0.0
        %6324 = vmatpush1.msra.mxu0 0.0
        %6325 = vmatprep.subr.mxu0 0.0
        %6326 = vmatpush1.msra.mxu0 0.0
        %6327 = vmatprep.subr.mxu0 0.0
        %6328 = vmatpush1.msra.mxu0 0.0
        %6329 = vmatprep.subr.mxu0 0.0
        %6330 = vmatpush1.msra.mxu0 0.0
        %6331 = vmatprep.subr.mxu0 0.0
        %6332 = vmatpush1.msra.mxu0 0.0
        %6333 = vmatprep.subr.mxu0 0.0
        %6334 = vmatpush1.msra.mxu0 0.0
        %6335 = vmatprep.subr.mxu0 0.0
        %6336 = vmatpush1.msra.mxu0 0.0
        %6337 = vmatprep.subr.mxu0 0.0
        %6338 = vmatpush1.msra.mxu0 0.0
        %6339 = vmatprep.subr.mxu0 0.0
        %6340 = vmatpush1.msra.mxu0 0.0
        %6341 = vmatprep.subr.mxu0 0.0
        %6342 = vmatpush1.msra.mxu0 0.0
        %6343 = vmatprep.subr.mxu0 0.0
        %6344 = vmatpush1.msra.mxu0 0.0
        %6345 = vmatprep.mubr.f32.mxu0 0.0
        %6346 = vmatmul.mubr.f32.gmra.mrb[0].mxu0 %v6267
        %v6347 = vpop.f32.mrb[0].mxu0
        %v6348 = vadd.f32 %v6265, %v6347
        %v6349 = vpop.f32.mrb[0].mxu0
        %6350 = vmatprep.mubr.f32.mxu0 0.0
        %6351 = vmatmul.mubr.f32.gmra.mrb[0].mxu0 %v6269
        %v6352 = vpop.f32.mrb[0].mxu0
        %v6353 = vadd.f32 %v6265, %v6352
        %v6354 = vpop.f32.mrb[0].mxu0
        %6355 = vmatprep.mubr.f32.mxu0 0.0
        %6356 = vmatmul.mubr.f32.gmra.mrb[0].mxu0 %v6271
        %v6357 = vpop.f32.mrb[0].mxu0
        %v6358 = vadd.f32 %v6265, %v6357
        %v6359 = vpop.f32.mrb[0].mxu0
        %6360 = vmatprep.mubr.f32.mxu0 0.0
        %6361 = vmatmul.mubr.f32.gmra.mrb[0].mxu0 %v6273
        %v6362 = vpop.f32.mrb[0].mxu0
        %v6363 = vadd.f32 %v6265, %v6362
        %v6364 = vpop.f32.mrb[0].mxu0
        %6365 = vmatprep.mubr.f32.mxu0 0.0
        %6366 = vmatmul.mubr.f32.gmra.mrb[0].mxu0 %v6275
        %v6367 = vpop.f32.mrb[0].mxu0
        %v6368 = vadd.f32 %v6265, %v6367
        %v6369 = vpop.f32.mrb[0].mxu0
        %6370 = vmatprep.mubr.f32.mxu0 0.0
        %6371 = vmatmul.mubr.f32.gmra.mrb[0].mxu0 %v6277
        %v6372 = vpop.f32.mrb[0].mxu0
        %v6373 = vadd.f32 %v6265, %v6372
        %v6374 = vpop.f32.mrb[0].mxu0
        %6375 = vmatprep.mubr.f32.mxu0 0.0
        %6376 = vmatmul.mubr.f32.gmra.mrb[0].mxu0 %v6279
        %v6377 = vpop.f32.mrb[0].mxu0
        %v6378 = vadd.f32 %v6265, %v6377
        %v6379 = vpop.f32.mrb[0].mxu0
        %6380 = vdwg.mxu0
        %6388 = vrot.lane.b32.xlu0 %v6252, 80
        %v6389 = vpop.permute.xlu0 %6388
        %6390 = vrot.lane.b32.xlu0 %v6253, 80
        %v6391 = vpop.permute.xlu0 %6390
        %6392 = vrot.lane.b32.xlu0 %v6254, 80
        %v6393 = vpop.permute.xlu0 %6392
        %6394 = vrot.lane.b32.xlu0 %v6255, 80
        %v6395 = vpop.permute.xlu0 %6394
        %6396 = vrot.lane.b32.xlu0 %v6256, 80
        %v6397 = vpop.permute.xlu0 %6396
        %6398 = vrot.lane.b32.xlu0 %v6257, 80
        %v6399 = vpop.permute.xlu0 %6398
        %6400 = vrot.lane.b32.xlu0 %v6258, 80
        %v6401 = vpop.permute.xlu0 %6400
        %v6409 = vadd.f32 %v6348, %v6389
        %v6410 = vadd.f32 %v6353, %v6391
        %v6411 = vadd.f32 %v6358, %v6393
        %v6412 = vadd.f32 %v6363, %v6395
        %v6413 = vadd.f32 %v6368, %v6397
        %v6414 = vadd.f32 %v6373, %v6399
        %v6415 = vadd.f32 %v6378, %v6401
        %v6416 = vsel %vm1026, %v6409, 0.0
        %v6417 = vsel %vm1026, %v6410, 0.0
        %v6418 = vadd.f32 %v6416, %v6417
        %v6419 = vsel %vm1026, %v6411, 0.0
        %v6420 = vadd.f32 %v6418, %v6419
        %v6421 = vsel %vm1026, %v6412, 0.0
        %v6422 = vadd.f32 %v6420, %v6421
        %v6423 = vsel %vm1026, %v6413, 0.0
        %v6424 = vadd.f32 %v6422, %v6423
        %v6425 = vsel %vm1026, %v6414, 0.0
        %v6426 = vadd.f32 %v6424, %v6425
        %v6427 = vsel %vm1033, %v6415, 0.0
        %v6428 = vadd.f32 %v6426, %v6427
        %6429 = vadd.xlane.f32.xlu0 %v6428
        %v6430 = vpop.xlane.xlu0 %6429
        %v6431 = vrot.slane %v6430, 4
        %v6432 = vadd.f32 %v6430, %v6431
        %v6433 = vrot.slane %v6432, 2
        %v6434 = vadd.f32 %v6432, %v6433
        %v6435 = vrot.slane %v6434, 1
        %v6436 = vadd.f32 %v6434, %v6435
        %s6437 = vtos %v6436
        %v6438 = vrcp.pop 416.0
        %s6439 = vtos %v6438
        %s6440 = smul.f32 %s6437, %s6439
        %v6441 = vmul.f32 %v6409, %v6409
        %v6442 = vmul.f32 %v6410, %v6410
        %v6443 = vmul.f32 %v6411, %v6411
        %v6444 = vmul.f32 %v6412, %v6412
        %v6445 = vmul.f32 %v6413, %v6413
        %v6446 = vmul.f32 %v6414, %v6414
        %v6447 = vmul.f32 %v6415, %v6415
        %v6448 = vsel %vm1026, %v6441, 0.0
        %v6449 = vsel %vm1026, %v6442, 0.0
        %v6450 = vadd.f32 %v6448, %v6449
        %v6451 = vsel %vm1026, %v6443, 0.0
        %v6452 = vadd.f32 %v6450, %v6451
        %v6453 = vsel %vm1026, %v6444, 0.0
        %v6454 = vadd.f32 %v6452, %v6453
        %v6455 = vsel %vm1026, %v6445, 0.0
        %v6456 = vadd.f32 %v6454, %v6455
        %v6457 = vsel %vm1026, %v6446, 0.0
        %v6458 = vadd.f32 %v6456, %v6457
        %v6459 = vsel %vm1033, %v6447, 0.0
        %v6460 = vadd.f32 %v6458, %v6459
        %6461 = vadd.xlane.f32.xlu0 %v6460
        %v6462 = vpop.xlane.xlu0 %6461
        %v6463 = vrot.slane %v6462, 4
        %v6464 = vadd.f32 %v6462, %v6463
        %v6465 = vrot.slane %v6464, 2
        %v6466 = vadd.f32 %v6464, %v6465
        %v6467 = vrot.slane %v6466, 1
        %v6468 = vadd.f32 %v6466, %v6467
        %s6469 = vtos %v6468
        %v6470 = vrcp.pop 416.0
        %s6471 = vtos %v6470
        %s6472 = smul.f32 %s6469, %s6471
        %s6473 = smul.f32 %s6440, %s6440
        %s6474 = ssub.f32 %s6472, %s6473
        %v6475 = vstv %s6440
        %v6476 = vsub.f32 %v6409, %v6475
        %v6477 = vsub.f32 %v6410, %v6475
        %v6478 = vsub.f32 %v6411, %v6475
        %v6479 = vsub.f32 %v6412, %v6475
        %v6480 = vsub.f32 %v6413, %v6475
        %v6481 = vsub.f32 %v6414, %v6475
        %v6482 = vsub.f32 %v6415, %v6475
        %s6483 = sadd.f32 %s6474, 1e-05
        %v6484 = vstv %s6483
        %v6485 = vrsqrt.pop %v6484
        %s6486 = vtos %v6485
        %v6487 = vstv %s6486
        %v6488 = vmul.f32 %v6476, %v6487
        %v6489 = vmul.f32 %v6477, %v6487
        %v6490 = vmul.f32 %v6478, %v6487
        %v6491 = vmul.f32 %v6479, %v6487
        %v6492 = vmul.f32 %v6480, %v6487
        %v6493 = vmul.f32 %v6481, %v6487
        %v6494 = vmul.f32 %v6482, %v6487
        %v6502 = vcombine.high %v6488, %v6488
        %v6504 = vunpack.c.l.s4 1966171168
        %v6505 = vunpack.c.0.s8 %v6504
        %v6506 = vlaneseq
        %v6507 = vshrl.u32 %v6506, 7
        %v6508 = vsub.s32 %v6505, %v6507
        %v6509 = vrot.slane %v6488, %v6508
        %v6511 = vunpack.c.l.s4 1966171168
        %v6512 = vunpack.c.0.s8 %v6511
        %v6513 = vlaneseq
        %v6514 = vshrl.u32 %v6513, 7
        %v6515 = vsub.s32 %v6512, %v6514
        %v6516 = vrot.slane %v6502, %v6515
        %v6517 = vcombine.high %v6509, %v6509
        %v6518 = vcombine.high %v6516, %v6516
        %v6520 = vunpack.c.l.s4 1966171168
        %v6521 = vunpack.c.0.s8 %v6520
        %v6522 = vlaneseq
        %v6523 = vshrl.u32 %v6522, 7
        %v6524 = vsub.s32 %v6521, %v6523
        %v6525 = vrot.slane %v6509, %v6524
        %v6527 = vunpack.c.l.s4 1966171168
        %v6528 = vunpack.c.0.s8 %v6527
        %v6529 = vlaneseq
        %v6530 = vshrl.u32 %v6529, 7
        %v6531 = vsub.s32 %v6528, %v6530
        %v6532 = vrot.slane %v6516, %v6531
        %v6534 = vunpack.c.l.s4 1966171168
        %v6535 = vunpack.c.0.s8 %v6534
        %v6536 = vlaneseq
        %v6537 = vshrl.u32 %v6536, 7
        %v6538 = vsub.s32 %v6535, %v6537
        %v6539 = vrot.slane %v6517, %v6538
        %v6541 = vunpack.c.l.s4 1966171168
        %v6542 = vunpack.c.0.s8 %v6541
        %v6543 = vlaneseq
        %v6544 = vshrl.u32 %v6543, 7
        %v6545 = vsub.s32 %v6542, %v6544
        %v6546 = vrot.slane %v6518, %v6545
        %v6547 = vcombine.high %v6525, %v6525
        %v6548 = vcombine.high %v6532, %v6532
        %v6549 = vcombine.high %v6539, %v6539
        %v6550 = vcombine.high %v6546, %v6546
        %v6551 = vcombine.high %v6489, %v6489
        %v6553 = vunpack.c.l.s4 1966171168
        %v6554 = vunpack.c.0.s8 %v6553
        %v6555 = vlaneseq
        %v6556 = vshrl.u32 %v6555, 7
        %v6557 = vsub.s32 %v6554, %v6556
        %v6558 = vrot.slane %v6489, %v6557
        %v6560 = vunpack.c.l.s4 1966171168
        %v6561 = vunpack.c.0.s8 %v6560
        %v6562 = vlaneseq
        %v6563 = vshrl.u32 %v6562, 7
        %v6564 = vsub.s32 %v6561, %v6563
        %v6565 = vrot.slane %v6551, %v6564
        %v6566 = vcombine.high %v6558, %v6558
        %v6567 = vcombine.high %v6565, %v6565
        %v6569 = vunpack.c.l.s4 1966171168
        %v6570 = vunpack.c.0.s8 %v6569
        %v6571 = vlaneseq
        %v6572 = vshrl.u32 %v6571, 7
        %v6573 = vsub.s32 %v6570, %v6572
        %v6574 = vrot.slane %v6558, %v6573
        %v6576 = vunpack.c.l.s4 1966171168
        %v6577 = vunpack.c.0.s8 %v6576
        %v6578 = vlaneseq
        %v6579 = vshrl.u32 %v6578, 7
        %v6580 = vsub.s32 %v6577, %v6579
        %v6581 = vrot.slane %v6565, %v6580
        %v6583 = vunpack.c.l.s4 1966171168
        %v6584 = vunpack.c.0.s8 %v6583
        %v6585 = vlaneseq
        %v6586 = vshrl.u32 %v6585, 7
        %v6587 = vsub.s32 %v6584, %v6586
        %v6588 = vrot.slane %v6566, %v6587
        %v6590 = vunpack.c.l.s4 1966171168
        %v6591 = vunpack.c.0.s8 %v6590
        %v6592 = vlaneseq
        %v6593 = vshrl.u32 %v6592, 7
        %v6594 = vsub.s32 %v6591, %v6593
        %v6595 = vrot.slane %v6567, %v6594
        %v6596 = vcombine.high %v6574, %v6574
        %v6597 = vcombine.high %v6581, %v6581
        %v6598 = vcombine.high %v6588, %v6588
        %v6599 = vcombine.high %v6595, %v6595
        %v6600 = vcombine.high %v6490, %v6490
        %v6602 = vunpack.c.l.s4 1966171168
        %v6603 = vunpack.c.0.s8 %v6602
        %v6604 = vlaneseq
        %v6605 = vshrl.u32 %v6604, 7
        %v6606 = vsub.s32 %v6603, %v6605
        %v6607 = vrot.slane %v6490, %v6606
        %v6609 = vunpack.c.l.s4 1966171168
        %v6610 = vunpack.c.0.s8 %v6609
        %v6611 = vlaneseq
        %v6612 = vshrl.u32 %v6611, 7
        %v6613 = vsub.s32 %v6610, %v6612
        %v6614 = vrot.slane %v6600, %v6613
        %v6615 = vcombine.high %v6607, %v6607
        %v6616 = vcombine.high %v6614, %v6614
        %v6618 = vunpack.c.l.s4 1966171168
        %v6619 = vunpack.c.0.s8 %v6618
        %v6620 = vlaneseq
        %v6621 = vshrl.u32 %v6620, 7
        %v6622 = vsub.s32 %v6619, %v6621
        %v6623 = vrot.slane %v6607, %v6622
        %v6625 = vunpack.c.l.s4 1966171168
        %v6626 = vunpack.c.0.s8 %v6625
        %v6627 = vlaneseq
        %v6628 = vshrl.u32 %v6627, 7
        %v6629 = vsub.s32 %v6626, %v6628
        %v6630 = vrot.slane %v6614, %v6629
        %v6632 = vunpack.c.l.s4 1966171168
        %v6633 = vunpack.c.0.s8 %v6632
        %v6634 = vlaneseq
        %v6635 = vshrl.u32 %v6634, 7
        %v6636 = vsub.s32 %v6633, %v6635
        %v6637 = vrot.slane %v6615, %v6636
        %v6639 = vunpack.c.l.s4 1966171168
        %v6640 = vunpack.c.0.s8 %v6639
        %v6641 = vlaneseq
        %v6642 = vshrl.u32 %v6641, 7
        %v6643 = vsub.s32 %v6640, %v6642
        %v6644 = vrot.slane %v6616, %v6643
        %v6645 = vcombine.high %v6623, %v6623
        %v6646 = vcombine.high %v6630, %v6630
        %v6647 = vcombine.high %v6637, %v6637
        %v6648 = vcombine.high %v6644, %v6644
        %v6649 = vcombine.high %v6491, %v6491
        %v6651 = vunpack.c.l.s4 1966171168
        %v6652 = vunpack.c.0.s8 %v6651
        %v6653 = vlaneseq
        %v6654 = vshrl.u32 %v6653, 7
        %v6655 = vsub.s32 %v6652, %v6654
        %v6656 = vrot.slane %v6491, %v6655
        %v6658 = vunpack.c.l.s4 1966171168
        %v6659 = vunpack.c.0.s8 %v6658
        %v6660 = vlaneseq
        %v6661 = vshrl.u32 %v6660, 7
        %v6662 = vsub.s32 %v6659, %v6661
        %v6663 = vrot.slane %v6649, %v6662
        %v6664 = vcombine.high %v6656, %v6656
        %v6665 = vcombine.high %v6663, %v6663
        %v6667 = vunpack.c.l.s4 1966171168
        %v6668 = vunpack.c.0.s8 %v6667
        %v6669 = vlaneseq
        %v6670 = vshrl.u32 %v6669, 7
        %v6671 = vsub.s32 %v6668, %v6670
        %v6672 = vrot.slane %v6656, %v6671
        %v6674 = vunpack.c.l.s4 1966171168
        %v6675 = vunpack.c.0.s8 %v6674
        %v6676 = vlaneseq
        %v6677 = vshrl.u32 %v6676, 7
        %v6678 = vsub.s32 %v6675, %v6677
        %v6679 = vrot.slane %v6663, %v6678
        %v6681 = vunpack.c.l.s4 1966171168
        %v6682 = vunpack.c.0.s8 %v6681
        %v6683 = vlaneseq
        %v6684 = vshrl.u32 %v6683, 7
        %v6685 = vsub.s32 %v6682, %v6684
        %v6686 = vrot.slane %v6664, %v6685
        %v6688 = vunpack.c.l.s4 1966171168
        %v6689 = vunpack.c.0.s8 %v6688
        %v6690 = vlaneseq
        %v6691 = vshrl.u32 %v6690, 7
        %v6692 = vsub.s32 %v6689, %v6691
        %v6693 = vrot.slane %v6665, %v6692
        %v6694 = vcombine.high %v6672, %v6672
        %v6695 = vcombine.high %v6679, %v6679
        %v6696 = vcombine.high %v6686, %v6686
        %v6697 = vcombine.high %v6693, %v6693
        %v6698 = vcombine.high %v6492, %v6492
        %v6700 = vunpack.c.l.s4 1966171168
        %v6701 = vunpack.c.0.s8 %v6700
        %v6702 = vlaneseq
        %v6703 = vshrl.u32 %v6702, 7
        %v6704 = vsub.s32 %v6701, %v6703
        %v6705 = vrot.slane %v6492, %v6704
        %v6707 = vunpack.c.l.s4 1966171168
        %v6708 = vunpack.c.0.s8 %v6707
        %v6709 = vlaneseq
        %v6710 = vshrl.u32 %v6709, 7
        %v6711 = vsub.s32 %v6708, %v6710
        %v6712 = vrot.slane %v6698, %v6711
        %v6713 = vcombine.high %v6705, %v6705
        %v6714 = vcombine.high %v6712, %v6712
        %v6716 = vunpack.c.l.s4 1966171168
        %v6717 = vunpack.c.0.s8 %v6716
        %v6718 = vlaneseq
        %v6719 = vshrl.u32 %v6718, 7
        %v6720 = vsub.s32 %v6717, %v6719
        %v6721 = vrot.slane %v6705, %v6720
        %v6723 = vunpack.c.l.s4 1966171168
        %v6724 = vunpack.c.0.s8 %v6723
        %v6725 = vlaneseq
        %v6726 = vshrl.u32 %v6725, 7
        %v6727 = vsub.s32 %v6724, %v6726
        %v6728 = vrot.slane %v6712, %v6727
        %v6730 = vunpack.c.l.s4 1966171168
        %v6731 = vunpack.c.0.s8 %v6730
        %v6732 = vlaneseq
        %v6733 = vshrl.u32 %v6732, 7
        %v6734 = vsub.s32 %v6731, %v6733
        %v6735 = vrot.slane %v6713, %v6734
        %v6737 = vunpack.c.l.s4 1966171168
        %v6738 = vunpack.c.0.s8 %v6737
        %v6739 = vlaneseq
        %v6740 = vshrl.u32 %v6739, 7
        %v6741 = vsub.s32 %v6738, %v6740
        %v6742 = vrot.slane %v6714, %v6741
        %v6743 = vcombine.high %v6721, %v6721
        %v6744 = vcombine.high %v6728, %v6728
        %v6745 = vcombine.high %v6735, %v6735
        %v6746 = vcombine.high %v6742, %v6742
        %v6747 = vcombine.high %v6493, %v6493
        %v6749 = vunpack.c.l.s4 1966171168
        %v6750 = vunpack.c.0.s8 %v6749
        %v6751 = vlaneseq
        %v6752 = vshrl.u32 %v6751, 7
        %v6753 = vsub.s32 %v6750, %v6752
        %v6754 = vrot.slane %v6493, %v6753
        %v6756 = vunpack.c.l.s4 1966171168
        %v6757 = vunpack.c.0.s8 %v6756
        %v6758 = vlaneseq
        %v6759 = vshrl.u32 %v6758, 7
        %v6760 = vsub.s32 %v6757, %v6759
        %v6761 = vrot.slane %v6747, %v6760
        %v6762 = vcombine.high %v6754, %v6754
        %v6763 = vcombine.high %v6761, %v6761
        %v6765 = vunpack.c.l.s4 1966171168
        %v6766 = vunpack.c.0.s8 %v6765
        %v6767 = vlaneseq
        %v6768 = vshrl.u32 %v6767, 7
        %v6769 = vsub.s32 %v6766, %v6768
        %v6770 = vrot.slane %v6754, %v6769
        %v6772 = vunpack.c.l.s4 1966171168
        %v6773 = vunpack.c.0.s8 %v6772
        %v6774 = vlaneseq
        %v6775 = vshrl.u32 %v6774, 7
        %v6776 = vsub.s32 %v6773, %v6775
        %v6777 = vrot.slane %v6761, %v6776
        %v6779 = vunpack.c.l.s4 1966171168
        %v6780 = vunpack.c.0.s8 %v6779
        %v6781 = vlaneseq
        %v6782 = vshrl.u32 %v6781, 7
        %v6783 = vsub.s32 %v6780, %v6782
        %v6784 = vrot.slane %v6762, %v6783
        %v6786 = vunpack.c.l.s4 1966171168
        %v6787 = vunpack.c.0.s8 %v6786
        %v6788 = vlaneseq
        %v6789 = vshrl.u32 %v6788, 7
        %v6790 = vsub.s32 %v6787, %v6789
        %v6791 = vrot.slane %v6763, %v6790
        %v6792 = vcombine.high %v6770, %v6770
        %v6793 = vcombine.high %v6777, %v6777
        %v6794 = vcombine.high %v6784, %v6784
        %v6795 = vcombine.high %v6791, %v6791
        %v6797 = vunpack.c.l.s4 1966171168
        %v6798 = vunpack.c.0.s8 %v6797
        %v6799 = vlaneseq
        %v6800 = vshrl.u32 %v6799, 7
        %v6801 = vsub.s32 %v6798, %v6800
        %v6802 = vrot.slane %v6494, %v6801
        %v6803 = vcombine.high %v6802, %v6802
        %v6805 = vunpack.c.l.s4 1966171168
        %v6806 = vunpack.c.0.s8 %v6805
        %v6807 = vlaneseq
        %v6808 = vshrl.u32 %v6807, 7
        %v6809 = vsub.s32 %v6806, %v6808
        %v6810 = vrot.slane %v6802, %v6809
        %v6812 = vunpack.c.l.s4 1966171168
        %v6813 = vunpack.c.0.s8 %v6812
        %v6814 = vlaneseq
        %v6815 = vshrl.u32 %v6814, 7
        %v6816 = vsub.s32 %v6813, %v6815
        %v6817 = vrot.slane %v6803, %v6816
        %v6818 = vcombine.high %v6810, %v6810
        %v6819 = vcombine.high %v6817, %v6817
        %v6820 = vcombine.low %v6525, %v6539
        %v6821 = vcombine.low %v6547, %v6549
        %v6822 = vcombine.low %v6532, %v6546
        %v6823 = vcombine.low %v6548, %v6550
        %v6825 = vunpack.c.l.s4 1966171168
        %v6826 = vunpack.c.0.s8 %v6825
        %v6827 = vlaneseq
        %v6828 = vshrl.u32 %v6827, 7
        %v6829 = vsub.s32 %v6826, %v6828
        %v6830 = vrot.slane %v6820, %v6829
        %v6832 = vunpack.c.l.s4 1966171168
        %v6833 = vunpack.c.0.s8 %v6832
        %v6834 = vlaneseq
        %v6835 = vshrl.u32 %v6834, 7
        %v6836 = vsub.s32 %v6833, %v6835
        %v6837 = vrot.slane %v6821, %v6836
        %v6839 = vunpack.c.l.s4 1966171168
        %v6840 = vunpack.c.0.s8 %v6839
        %v6841 = vlaneseq
        %v6842 = vshrl.u32 %v6841, 7
        %v6843 = vsub.s32 %v6840, %v6842
        %v6844 = vrot.slane %v6822, %v6843
        %v6846 = vunpack.c.l.s4 1966171168
        %v6847 = vunpack.c.0.s8 %v6846
        %v6848 = vlaneseq
        %v6849 = vshrl.u32 %v6848, 7
        %v6850 = vsub.s32 %v6847, %v6849
        %v6851 = vrot.slane %v6823, %v6850
        %v6852 = vcombine.low %v6830, %v6837
        %v6853 = vcombine.low %v6844, %v6851
        %v6855 = vunpack.c.l.s4 1966171168
        %v6856 = vunpack.c.0.s8 %v6855
        %v6857 = vlaneseq
        %v6858 = vshrl.u32 %v6857, 7
        %v6859 = vsub.s32 %v6856, %v6858
        %v6860 = vrot.slane %v6852, %v6859
        %v6862 = vunpack.c.l.s4 1966171168
        %v6863 = vunpack.c.0.s8 %v6862
        %v6864 = vlaneseq
        %v6865 = vshrl.u32 %v6864, 7
        %v6866 = vsub.s32 %v6863, %v6865
        %v6867 = vrot.slane %v6853, %v6866
        %v6868 = vcombine.low %v6860, %v6867
        %v6869 = vcombine.low %v6574, %v6588
        %v6870 = vcombine.low %v6596, %v6598
        %v6872 = vunpack.c.l.s4 1966171168
        %v6873 = vunpack.c.0.s8 %v6872
        %v6874 = vlaneseq
        %v6875 = vshrl.u32 %v6874, 7
        %v6876 = vsub.s32 %v6873, %v6875
        %v6877 = vrot.slane %v6869, %v6876
        %v6879 = vunpack.c.l.s4 1966171168
        %v6880 = vunpack.c.0.s8 %v6879
        %v6881 = vlaneseq
        %v6882 = vshrl.u32 %v6881, 7
        %v6883 = vsub.s32 %v6880, %v6882
        %v6884 = vrot.slane %v6870, %v6883
        %v6886 = vunpack.c.l.s4 1966171168
        %v6887 = vunpack.c.0.s8 %v6886
        %v6888 = vlaneseq
        %v6889 = vshrl.u32 %v6888, 7
        %v6890 = vsub.s32 %v6887, %v6889
        %v6891 = vrot.slane %v6581, %v6890
        %v6892 = vcombine.low %v6877, %v6884
        %v6894 = vunpack.c.l.s4 1966171168
        %v6895 = vunpack.c.0.s8 %v6894
        %v6896 = vlaneseq
        %v6897 = vshrl.u32 %v6896, 7
        %v6898 = vsub.s32 %v6895, %v6897
        %v6899 = vrot.slane %v6892, %v6898
        %v6901 = vunpack.c.l.s4 1966171168
        %v6902 = vunpack.c.0.s8 %v6901
        %v6903 = vlaneseq
        %v6904 = vshrl.u32 %v6903, 7
        %v6905 = vsub.s32 %v6902, %v6904
        %v6906 = vrot.slane %v6891, %v6905
        %v6907 = vcombine.low %v6899, %v6906
        %v6908 = vcombine.low %v6595, %v6597
        %v6909 = vcombine.low %v6599, %v6623
        %v6910 = vcombine.low %v6637, %v6645
        %v6911 = vcombine.low %v6647, %v6630
        %v6913 = vunpack.c.l.s4 1966171168
        %v6914 = vunpack.c.0.s8 %v6913
        %v6915 = vlaneseq
        %v6916 = vshrl.u32 %v6915, 7
        %v6917 = vsub.s32 %v6914, %v6916
        %v6918 = vrot.slane %v6908, %v6917
        %v6920 = vunpack.c.l.s4 1966171168
        %v6921 = vunpack.c.0.s8 %v6920
        %v6922 = vlaneseq
        %v6923 = vshrl.u32 %v6922, 7
        %v6924 = vsub.s32 %v6921, %v6923
        %v6925 = vrot.slane %v6909, %v6924
        %v6927 = vunpack.c.l.s4 1966171168
        %v6928 = vunpack.c.0.s8 %v6927
        %v6929 = vlaneseq
        %v6930 = vshrl.u32 %v6929, 7
        %v6931 = vsub.s32 %v6928, %v6930
        %v6932 = vrot.slane %v6910, %v6931
        %v6934 = vunpack.c.l.s4 1966171168
        %v6935 = vunpack.c.0.s8 %v6934
        %v6936 = vlaneseq
        %v6937 = vshrl.u32 %v6936, 7
        %v6938 = vsub.s32 %v6935, %v6937
        %v6939 = vrot.slane %v6911, %v6938
        %v6940 = vcombine.low %v6918, %v6925
        %v6941 = vcombine.low %v6932, %v6939
        %v6943 = vunpack.c.l.s4 1966171168
        %v6944 = vunpack.c.0.s8 %v6943
        %v6945 = vlaneseq
        %v6946 = vshrl.u32 %v6945, 7
        %v6947 = vsub.s32 %v6944, %v6946
        %v6948 = vrot.slane %v6940, %v6947
        %v6950 = vunpack.c.l.s4 1966171168
        %v6951 = vunpack.c.0.s8 %v6950
        %v6952 = vlaneseq
        %v6953 = vshrl.u32 %v6952, 7
        %v6954 = vsub.s32 %v6951, %v6953
        %v6955 = vrot.slane %v6941, %v6954
        %v6956 = vcombine.low %v6948, %v6955
        %v6957 = vcombine.low %v6644, %v6646
        %v6958 = vcombine.low %v6648, %v6672
        %v6960 = vunpack.c.l.s4 1966171168
        %v6961 = vunpack.c.0.s8 %v6960
        %v6962 = vlaneseq
        %v6963 = vshrl.u32 %v6962, 7
        %v6964 = vsub.s32 %v6961, %v6963
        %v6965 = vrot.slane %v6957, %v6964
        %v6967 = vunpack.c.l.s4 1966171168
        %v6968 = vunpack.c.0.s8 %v6967
        %v6969 = vlaneseq
        %v6970 = vshrl.u32 %v6969, 7
        %v6971 = vsub.s32 %v6968, %v6970
        %v6972 = vrot.slane %v6958, %v6971
        %v6974 = vunpack.c.l.s4 1966171168
        %v6975 = vunpack.c.0.s8 %v6974
        %v6976 = vlaneseq
        %v6977 = vshrl.u32 %v6976, 7
        %v6978 = vsub.s32 %v6975, %v6977
        %v6979 = vrot.slane %v6686, %v6978
        %v6980 = vcombine.low %v6965, %v6972
        %v6982 = vunpack.c.l.s4 1966171168
        %v6983 = vunpack.c.0.s8 %v6982
        %v6984 = vlaneseq
        %v6985 = vshrl.u32 %v6984, 7
        %v6986 = vsub.s32 %v6983, %v6985
        %v6987 = vrot.slane %v6980, %v6986
        %v6989 = vunpack.c.l.s4 1966171168
        %v6990 = vunpack.c.0.s8 %v6989
        %v6991 = vlaneseq
        %v6992 = vshrl.u32 %v6991, 7
        %v6993 = vsub.s32 %v6990, %v6992
        %v6994 = vrot.slane %v6979, %v6993
        %v6995 = vcombine.low %v6987, %v6994
        %v6996 = vcombine.low %v6694, %v6696
        %v6997 = vcombine.low %v6679, %v6693
        %v6998 = vcombine.low %v6695, %v6697
        %v6999 = vcombine.low %v6721, %v6735
        %v7001 = vunpack.c.l.s4 1966171168
        %v7002 = vunpack.c.0.s8 %v7001
        %v7003 = vlaneseq
        %v7004 = vshrl.u32 %v7003, 7
        %v7005 = vsub.s32 %v7002, %v7004
        %v7006 = vrot.slane %v6996, %v7005
        %v7008 = vunpack.c.l.s4 1966171168
        %v7009 = vunpack.c.0.s8 %v7008
        %v7010 = vlaneseq
        %v7011 = vshrl.u32 %v7010, 7
        %v7012 = vsub.s32 %v7009, %v7011
        %v7013 = vrot.slane %v6997, %v7012
        %v7015 = vunpack.c.l.s4 1966171168
        %v7016 = vunpack.c.0.s8 %v7015
        %v7017 = vlaneseq
        %v7018 = vshrl.u32 %v7017, 7
        %v7019 = vsub.s32 %v7016, %v7018
        %v7020 = vrot.slane %v6998, %v7019
        %v7022 = vunpack.c.l.s4 1966171168
        %v7023 = vunpack.c.0.s8 %v7022
        %v7024 = vlaneseq
        %v7025 = vshrl.u32 %v7024, 7
        %v7026 = vsub.s32 %v7023, %v7025
        %v7027 = vrot.slane %v6999, %v7026
        %v7028 = vcombine.low %v7006, %v7013
        %v7029 = vcombine.low %v7020, %v7027
        %v7031 = vunpack.c.l.s4 1966171168
        %v7032 = vunpack.c.0.s8 %v7031
        %v7033 = vlaneseq
        %v7034 = vshrl.u32 %v7033, 7
        %v7035 = vsub.s32 %v7032, %v7034
        %v7036 = vrot.slane %v7028, %v7035
        %v7038 = vunpack.c.l.s4 1966171168
        %v7039 = vunpack.c.0.s8 %v7038
        %v7040 = vlaneseq
        %v7041 = vshrl.u32 %v7040, 7
        %v7042 = vsub.s32 %v7039, %v7041
        %v7043 = vrot.slane %v7029, %v7042
        %v7044 = vcombine.low %v7036, %v7043
        %v7045 = vcombine.low %v6743, %v6745
        %v7046 = vcombine.low %v6728, %v6742
        %v7048 = vunpack.c.l.s4 1966171168
        %v7049 = vunpack.c.0.s8 %v7048
        %v7050 = vlaneseq
        %v7051 = vshrl.u32 %v7050, 7
        %v7052 = vsub.s32 %v7049, %v7051
        %v7053 = vrot.slane %v7045, %v7052
        %v7055 = vunpack.c.l.s4 1966171168
        %v7056 = vunpack.c.0.s8 %v7055
        %v7057 = vlaneseq
        %v7058 = vshrl.u32 %v7057, 7
        %v7059 = vsub.s32 %v7056, %v7058
        %v7060 = vrot.slane %v7046, %v7059
        %v7062 = vunpack.c.l.s4 1966171168
        %v7063 = vunpack.c.0.s8 %v7062
        %v7064 = vlaneseq
        %v7065 = vshrl.u32 %v7064, 7
        %v7066 = vsub.s32 %v7063, %v7065
        %v7067 = vrot.slane %v6744, %v7066
        %v7068 = vcombine.low %v7053, %v7060
        %v7070 = vunpack.c.l.s4 1966171168
        %v7071 = vunpack.c.0.s8 %v7070
        %v7072 = vlaneseq
        %v7073 = vshrl.u32 %v7072, 7
        %v7074 = vsub.s32 %v7071, %v7073
        %v7075 = vrot.slane %v7068, %v7074
        %v7077 = vunpack.c.l.s4 1966171168
        %v7078 = vunpack.c.0.s8 %v7077
        %v7079 = vlaneseq
        %v7080 = vshrl.u32 %v7079, 7
        %v7081 = vsub.s32 %v7078, %v7080
        %v7082 = vrot.slane %v7067, %v7081
        %v7083 = vcombine.low %v7075, %v7082
        %v7084 = vcombine.low %v6746, %v6770
        %v7085 = vcombine.low %v6784, %v6792
        %v7086 = vcombine.low %v6794, %v6777
        %v7087 = vcombine.low %v6791, %v6793
        %v7089 = vunpack.c.l.s4 1966171168
        %v7090 = vunpack.c.0.s8 %v7089
        %v7091 = vlaneseq
        %v7092 = vshrl.u32 %v7091, 7
        %v7093 = vsub.s32 %v7090, %v7092
        %v7094 = vrot.slane %v7084, %v7093
        %v7096 = vunpack.c.l.s4 1966171168
        %v7097 = vunpack.c.0.s8 %v7096
        %v7098 = vlaneseq
        %v7099 = vshrl.u32 %v7098, 7
        %v7100 = vsub.s32 %v7097, %v7099
        %v7101 = vrot.slane %v7085, %v7100
        %v7103 = vunpack.c.l.s4 1966171168
        %v7104 = vunpack.c.0.s8 %v7103
        %v7105 = vlaneseq
        %v7106 = vshrl.u32 %v7105, 7
        %v7107 = vsub.s32 %v7104, %v7106
        %v7108 = vrot.slane %v7086, %v7107
        %v7110 = vunpack.c.l.s4 1966171168
        %v7111 = vunpack.c.0.s8 %v7110
        %v7112 = vlaneseq
        %v7113 = vshrl.u32 %v7112, 7
        %v7114 = vsub.s32 %v7111, %v7113
        %v7115 = vrot.slane %v7087, %v7114
        %v7116 = vcombine.low %v7094, %v7101
        %v7117 = vcombine.low %v7108, %v7115
        %v7119 = vunpack.c.l.s4 1966171168
        %v7120 = vunpack.c.0.s8 %v7119
        %v7121 = vlaneseq
        %v7122 = vshrl.u32 %v7121, 7
        %v7123 = vsub.s32 %v7120, %v7122
        %v7124 = vrot.slane %v7116, %v7123
        %v7126 = vunpack.c.l.s4 1966171168
        %v7127 = vunpack.c.0.s8 %v7126
        %v7128 = vlaneseq
        %v7129 = vshrl.u32 %v7128, 7
        %v7130 = vsub.s32 %v7127, %v7129
        %v7131 = vrot.slane %v7117, %v7130
        %v7132 = vcombine.low %v7124, %v7131
        %v7133 = vcombine.low %v6795, %v6810
        %v7134 = vcombine.low %v6817, %v6818
        %v7136 = vunpack.c.l.s4 1966171168
        %v7137 = vunpack.c.0.s8 %v7136
        %v7138 = vlaneseq
        %v7139 = vshrl.u32 %v7138, 7
        %v7140 = vsub.s32 %v7137, %v7139
        %v7141 = vrot.slane %v7133, %v7140
        %v7143 = vunpack.c.l.s4 1966171168
        %v7144 = vunpack.c.0.s8 %v7143
        %v7145 = vlaneseq
        %v7146 = vshrl.u32 %v7145, 7
        %v7147 = vsub.s32 %v7144, %v7146
        %v7148 = vrot.slane %v7134, %v7147
        %v7150 = vunpack.c.l.s4 1966171168
        %v7151 = vunpack.c.0.s8 %v7150
        %v7152 = vlaneseq
        %v7153 = vshrl.u32 %v7152, 7
        %v7154 = vsub.s32 %v7151, %v7153
        %v7155 = vrot.slane %v6819, %v7154
        %v7156 = vcombine.low %v7141, %v7148
        %v7158 = vunpack.c.l.s4 1966171168
        %v7159 = vunpack.c.0.s8 %v7158
        %v7160 = vlaneseq
        %v7161 = vshrl.u32 %v7160, 7
        %v7162 = vsub.s32 %v7159, %v7161
        %v7163 = vrot.slane %v7156, %v7162
        %v7165 = vunpack.c.l.s4 1966171168
        %v7166 = vunpack.c.0.s8 %v7165
        %v7167 = vlaneseq
        %v7168 = vshrl.u32 %v7167, 7
        %v7169 = vsub.s32 %v7166, %v7168
        %v7170 = vrot.slane %v7155, %v7169
        %v7171 = vcombine.low %v7163, %v7170
        %7180 = vst.msk [vmem:[%s332] sm:$0xff] %vm1026, %v6868
        %7181 = vst.msk [vmem:[%s332 + $0x8] sm:$0x1f] %vm6244, %v6907
        %7182 = vst.msk [vmem:[%s332 + $0x10] sm:$0xff] %vm1026, %v6956
        %7183 = vst.msk [vmem:[%s332 + $0x18] sm:$0x1f] %vm6244, %v6995
        %7184 = vst.msk [vmem:[%s332 + $0x20] sm:$0xff] %vm1026, %v7044
        %7185 = vst.msk [vmem:[%s332 + $0x28] sm:$0x1f] %vm6244, %v7083
        %7186 = vst.msk [vmem:[%s332 + $0x30] sm:$0xff] %vm1026, %v7132
        %7187 = vst.msk [vmem:[%s332 + $0x38] sm:$0x1f] %vm6244, %v7171
        %s7188 = sand.u32 %s147, 1
        %s7189 = scalar_lea.sflag [#allocation5], %s7188
        %s7190 = sand.u32 %s147, 1
        %s7191 = smul.addr %s7190, 64
        %s7192 = scalar_lea.vmem [#allocation12], %s7191
        %s7193 = sand.u32 %s173, 1
        %s7194 = scalar_lea.sflag [#allocation14], %s7193
        %s7195 = sand.u32 %s173, 1
        %s7196 = smul.addr %s7195, 64
        %s7197 = scalar_lea.vmem [#allocation13], %s7196
        // Predicated region
        $region61: #{tcn_pallas.7} parent=39 // pred_check
          %p7198 = pneg %p157
        $region62: #{tcn_pallas.7} parent=39 // pred_check_branch
          %7200 = sbr.rel (%p7198) target = $region64
        $region63: #{tcn_pallas.7} parent=39 // pred_region
          %s7202 = ssub.s32 1024, 1024
          %7203 = vsyncadd %s7189, %s7202
          %s7204 = smul.addr %s29, 8
          %s7205 = smul.addr %s7204, 128
          %s7206 = scalar_lea.hbm %s5, %s7205
          %s7207 = sshll.u32 %s7192, 4
          %s7208 = int_to_ptr.vmem [resolvable:$true] %s7207
          %7213 = dma.vmem_to_hbm [thread:$0]  %s7208, 1024, %s7206, %s7189, 128, 128, 8
        $region64: #{tcn_pallas.7} parent=39 // pred_fallthru
          _
        // Predicated region
        $region65: #{tcn_pallas.7} parent=39 // pred_check
          %p7214 = pneg %p183
        $region66: #{tcn_pallas.7} parent=39 // pred_check_branch
          %7216 = sbr.rel (%p7214) target = $region68
        $region67: #{tcn_pallas.7} parent=39 // pred_region
          %s7218 = ssub.s32 1024, 1024
          %7219 = vsyncadd %s7194, %s7218
          %s7220 = smul.addr %s29, 8
          %s7221 = smul.addr %s7220, 128
          %s7222 = scalar_lea.hbm %s6, %s7221
          %s7223 = sshll.u32 %s7197, 4
          %s7224 = int_to_ptr.vmem [resolvable:$true] %s7223
          %7229 = dma.vmem_to_hbm [thread:$0]  %s7224, 1024, %s7222, %s7194, 128, 128, 8
        $region68: #{tcn_pallas.7} parent=39 // pred_fallthru
          _
      $region40: #{tcn_pallas.7} parent=5 // pred_fallthru
        _
      %p7230 = scmp.le.s32.totalorder 2, %s24
      // Predicated region
      $region69: #{tcn_pallas.7} parent=5 // pred_check
        %p7231 = pneg %p7230
      $region70: #{tcn_pallas.7} parent=5 // pred_check_branch
        %7233 = sbr.rel (%p7231) target = $region72
      $region71: #{tcn_pallas.7} parent=5 // pred_region
        %s7234 = ssub.s32 %s24, 2
        // Predicated region
        $region73: #{tcn_pallas.7} parent=71 // pred_check
          %p7235 = pneg %p163
        $region74: #{tcn_pallas.7} parent=71 // pred_check_branch
          %7237 = sbr.rel (%p7235) target = $region76
        $region75: #{tcn_pallas.7} parent=71 // pred_region
          %s7238 = sand.u32 %s148, 1
          %s7239 = scalar_lea.sflag [#allocation5], %s7238
          %s7240 = sand.u32 %s148, 1
          %s7241 = smul.addr %s7240, 64
          %s7242 = scalar_lea.vmem [#allocation12], %s7241
          %7243 = dma.done %s7239, 1024
        $region76: #{tcn_pallas.7} parent=71 // pred_fallthru
          _
        // Predicated region
        $region77: #{tcn_pallas.7} parent=71 // pred_check
          %p7244 = pneg %p189
        $region78: #{tcn_pallas.7} parent=71 // pred_check_branch
          %7246 = sbr.rel (%p7244) target = $region80
        $region79: #{tcn_pallas.7} parent=71 // pred_region
          %s7247 = sand.u32 %s174, 1
          %s7248 = scalar_lea.sflag [#allocation14], %s7247
          %s7249 = sand.u32 %s174, 1
          %s7250 = smul.addr %s7249, 64
          %s7251 = scalar_lea.vmem [#allocation13], %s7250
          %7252 = dma.done %s7248, 1024
        $region80: #{tcn_pallas.7} parent=71 // pred_fallthru
          _
      $region72: #{tcn_pallas.7} parent=5 // pred_fallthru
        _
    $region6: #{tcn_pallas.7} parent=1 // loop_footer
      %s28 = sadd.s32 1, %s24
    $region7: #{tcn_pallas.7} parent=1 // loop_footer_branch
      %23 = sbr.rel target = $region3
    $region8: #{tcn_pallas.7} parent=1 // loop_exit
      _
    %7253 = vsyncpa [#allocation4], 1
    %s7254 = scalar_lea.sflag [#allocation4], 1
    %7255 = vsyncpa %s7254, 1
    %7256 = vsyncpa [#allocation7], 1
    %7257 = vsyncpa [#allocation10], 1
    %7258 = vsyncpa [#allocation5], 1
    %s7259 = scalar_lea.sflag [#allocation5], 1
    %7260 = vsyncpa %s7259, 1
    %7261 = vsyncpa [#allocation14], 1
    %s7262 = scalar_lea.sflag [#allocation14], 1
    %7263 = vsyncpa %s7262, 1

</llo_original>
